<compile_context>
chip_gen: v5e
topology: v5e:2x2
jax: 0.10.0
libtpu: 0.0.40
codegen_flags: <defaults>
</compile_context>

<pallas_src>
import numpy as np

import jax
import jax.numpy as jnp
from jax.experimental import pallas as pl
from jax.experimental.pallas import tpu as pltpu


PLANE = 128  # lane-aligned padded-plane block: (H+2)*(W+2) lanes, padded to 128


def _tap_offsets(row_stride):
    # flat lane offset of tap (kd, kh, kw) on the padded, 128-lane-plane grid
    return [kd * PLANE + kh * row_stride + kw
            for kd in range(3) for kh in range(3) for kw in range(3)]


def _make_u3dnet_kernel(cin, c1, c2, c3, cf, d, wp1, wp2,
                        m1_out, m1_in, m2_out, m2_in):
    """One grid step == one batch element; runs the whole U3DNet forward."""
    d2n = d // 2
    offs1 = _tap_offsets(wp1)          # fine grid (enc1 / dec1)
    offs2 = _tap_offsets(wp2)          # coarse grid (enc2)
    shift1 = PLANE + wp1 + 1           # +1 voxel in (d, h, w) == halo re-pad
    nk1 = 27 * cin + 1
    nk2 = 27 * c1 + 1
    nk3 = 27 * (c2 + c1) + 1

    def kernel(xp_ref, w1_ref, w2_ref, w3_ref, w4_ref, msk_ref, pmat_ref,
               umat_ref, o_ref, e1p, p1p, u1p, col1, col2, col3, d1s):
        ones1 = jnp.ones((1, m1_out), jnp.bfloat16)
        ones2 = jnp.ones((1, m2_out), jnp.bfloat16)

        # ---- enc1: fused im2col (27 shifted lane slices) + one MXU matmul --
        for t, off in enumerate(offs1):
            col1[t * cin:(t + 1) * cin, :] = xp_ref[0, :, pl.ds(off, m1_out)]
        col1[nk1 - 1:nk1, :] = ones1                    # bias row
        z1 = jnp.dot(w1_ref[...], col1[...],
                     preferred_element_type=jnp.float32)
        z1 = jnp.maximum(z1, 0.0)

        # e1 re-padded (halo = 0) for the decoder skip path: one masked,
        # lane-shifted store (the +shift1 shift IS the spatial halo pad).
        e1p[...] = jnp.zeros_like(e1p)
        e1p[:, pl.ds(shift1, m1_out)] = (z1 * msk_ref[...]).astype(jnp.bfloat16)

        # ---- fused 2x2x2 maxpool: 8 shifted window maxes, then stride-2 ----
        # ---- plane compaction + coarse halo pad via a (128,128) selection --
        m1 = e1p[:, pl.ds(shift1, m1_out)]
        for dd in range(2):
            for dh in range(2):
                for dw in range(2):
                    if dd == 0 and dh == 0 and dw == 0:
                        continue
                    sh = shift1 + dd * PLANE + dh * wp1 + dw
                    m1 = jnp.maximum(m1, e1p[:, pl.ds(sh, m1_out)])
        p1p[...] = jnp.zeros_like(p1p)
        for dc in range(d2n):
            blk = m1[:, 2 * dc * PLANE:(2 * dc + 1) * PLANE]
            pooled = jnp.dot(blk, pmat_ref[...],
                             preferred_element_type=jnp.float32)
            p1p[:, (dc + 1) * PLANE:(dc + 2) * PLANE] = (
                pooled.astype(jnp.bfloat16))

        # ---- enc2 ----------------------------------------------------------
        for t, off in enumerate(offs2):
            col2[t * c1:(t + 1) * c1, :] = p1p[:, pl.ds(off, m2_out)]
        col2[nk2 - 1:nk2, :] = ones2
        z2 = jnp.dot(w2_ref[...], col2[...],
                     preferred_element_type=jnp.float32)
        z2 = jnp.maximum(z2, 0.0).astype(jnp.bfloat16)

        # ---- fused nearest 2x upsample + fine halo pad (selection matmul) --
        u1p[...] = jnp.zeros_like(u1p)
        for dc in range(d2n):
            blk = z2[:, dc * PLANE:(dc + 1) * PLANE]
            up = jnp.dot(blk, umat_ref[...],
                         preferred_element_type=jnp.float32)
            up = up.astype(jnp.bfloat16)
            u1p[:, (2 * dc + 1) * PLANE:(2 * dc + 2) * PLANE] = up
            u1p[:, (2 * dc + 2) * PLANE:(2 * dc + 3) * PLANE] = up

        # ---- dec1: skip concat [u1, e1] as K-split im2col rows -------------
        base_e = 27 * c2
        for t, off in enumerate(offs1):
            sl = pl.ds(off, m1_out)
            col3[t * c2:(t + 1) * c2, :] = u1p[:, sl]
            col3[base_e + t * c1:base_e + (t + 1) * c1, :] = e1p[:, sl]
        col3[nk3 - 1:nk3, :] = ones1
        z3 = jnp.dot(w3_ref[...], col3[...],
                     preferred_element_type=jnp.float32)
        z3 = jnp.maximum(z3, 0.0)

        # ---- fused 1x1x1 output conv (bias via ones row) --------------------
        d1s[0:c3, :] = z3.astype(jnp.bfloat16)
        d1s[c3:c3 + 1, :] = ones1
        out = jnp.dot(w4_ref[...], d1s[...],
                      preferred_element_type=jnp.float32)
        o_ref[0] = out.astype(o_ref.dtype)

    return kernel


def _layout_constants(d, h, w):
    hp, wp = h + 2, w + 2
    d2, h2, w2 = d // 2, h // 2, w // 2
    hp2, wp2 = h2 + 2, w2 + 2
    assert hp * wp <= PLANE and hp2 * wp2 <= PLANE, (
        "TODO(synk): plane tiling needed for (H+2)*(W+2) > 128")

    m1_out = d * PLANE                 # fine-grid outputs (lane-dense)
    m1_in = (d + 3) * PLANE            # padded depth + one slack block
    m2_out = d2 * PLANE
    m2_in = (d2 + 3) * PLANE

    # mask of valid fine-grid output lanes (zeroes the wrap/garbage lanes so
    # the halo of the re-padded e1 stays exactly zero)
    msk = np.zeros((1, m1_out), np.float32)
    for dd in range(d):
        for hh in range(h):
            for ww in range(w):
                msk[0, dd * PLANE + hh * wp + ww] = 1.0

    # stride-2 plane compaction (fine plane -> halo-padded coarse plane)
    pmat = np.zeros((PLANE, PLANE), np.float32)
    # nearest 2x plane expansion (coarse plane -> halo-padded fine plane)
    umat = np.zeros((PLANE, PLANE), np.float32)
    for hh in range(h2):
        for ww in range(w2):
            pmat[2 * hh * wp + 2 * ww, (hh + 1) * wp2 + (ww + 1)] = 1.0
            for sh in range(2):
                for sw in range(2):
                    umat[hh * wp2 + ww,
                         (2 * hh + sh + 1) * wp + (2 * ww + sw + 1)] = 1.0

    return (wp, wp2, m1_out, m1_in, m2_out, m2_in,
            jnp.asarray(msk),
            jnp.asarray(pmat, dtype=jnp.bfloat16),
            jnp.asarray(umat, dtype=jnp.bfloat16))


def _conv_taps(wgt):
    # (Cout, Cin, 3, 3, 3) -> (Cout, 27*Cin) with column order (tap, cin),
    # tap = kd*9 + kh*3 + kw, matching the im2col row order in the kernel.
    co, ci = wgt.shape[:2]
    return wgt.transpose(0, 2, 3, 4, 1).reshape(co, 27 * ci)


def u3dnet_forward(params, x):
    n, cin, d, h, w = x.shape
    w1, b1 = params["enc1"]
    w2, b2 = params["enc2"]
    w3, b3 = params["dec1"]
    w4, b4 = params["out"]
    c1, c2, c3, cf = w1.shape[0], w2.shape[0], w3.shape[0], w4.shape[0]
    assert w1.shape[1] == cin and w2.shape[1] == c1 and w3.shape[1] == c1 + c2
    assert d % 2 == 0 and h % 2 == 0 and w % 2 == 0

    (wp1, wp2, m1_out, m1_in, m2_out, m2_in,
     msk, pmat, umat) = _layout_constants(d, h, w)
    hp = h + 2

    # weights: (Cout, 27*Cin [K-split for dec1] + 1), bias as last column
    w1e = jnp.concatenate([_conv_taps(w1), b1[:, None]], 1).astype(jnp.bfloat16)
    w2e = jnp.concatenate([_conv_taps(w2), b2[:, None]], 1).astype(jnp.bfloat16)
    w3e = jnp.concatenate([_conv_taps(w3[:, :c2]), _conv_taps(w3[:, c2:]),
                           b3[:, None]], 1).astype(jnp.bfloat16)
    w4e = jnp.concatenate([w4.reshape(cf, c3), b4[:, None]],
                          1).astype(jnp.bfloat16)

    # halo-pad the input once and flatten to the 128-lane-plane layout
    xp = jnp.pad(x, ((0, 0), (0, 0), (1, 1), (1, 1), (1, 1)))
    xp = xp.reshape(n, cin, d + 2, hp * wp1)
    xp = jnp.pad(xp, ((0, 0), (0, 0), (0, 0), (0, PLANE - hp * wp1)))
    xp = xp.reshape(n, cin, (d + 2) * PLANE)
    xp = jnp.pad(xp, ((0, 0), (0, 0), (0, m1_in - (d + 2) * PLANE)))
    xp = xp.astype(jnp.bfloat16)

    nk1, nk2, nk3 = 27 * cin + 1, 27 * c1 + 1, 27 * (c2 + c1) + 1
    kernel = _make_u3dnet_kernel(cin, c1, c2, c3, cf, d, wp1, wp2,
                                 m1_out, m1_in, m2_out, m2_in)

    out = pl.pallas_call(
        kernel,
        out_shape=jax.ShapeDtypeStruct((n, cf, m1_out), jnp.float32),
        grid=(n,),
        in_specs=[
            pl.BlockSpec((1, cin, m1_in), lambda b: (b, 0, 0)),   # padded x
            pl.BlockSpec((c1, nk1), lambda b: (0, 0)),            # enc1 W|b
            pl.BlockSpec((c2, nk2), lambda b: (0, 0)),            # enc2 W|b
            pl.BlockSpec((c3, nk3), lambda b: (0, 0)),            # dec1 W|b
            pl.BlockSpec((cf, c3 + 1), lambda b: (0, 0)),         # 1x1x1 W|b
            pl.BlockSpec((1, m1_out), lambda b: (0, 0)),          # valid mask
            pl.BlockSpec((PLANE, PLANE), lambda b: (0, 0)),       # pool sel
            pl.BlockSpec((PLANE, PLANE), lambda b: (0, 0)),       # upsample sel
        ],
        out_specs=pl.BlockSpec((1, cf, m1_out), lambda b: (b, 0, 0)),
        scratch_shapes=[
            pltpu.VMEM((c1, m1_in), jnp.bfloat16),       # e1, halo re-padded
            pltpu.VMEM((c1, m2_in), jnp.bfloat16),       # pooled, halo-padded
            pltpu.VMEM((c2, m1_in), jnp.bfloat16),       # upsampled e2
            pltpu.VMEM((nk1, m1_out), jnp.bfloat16),     # enc1 im2col
            pltpu.VMEM((nk2, m2_out), jnp.bfloat16),     # enc2 im2col
            pltpu.VMEM((nk3, m1_out), jnp.bfloat16),     # dec1 im2col
            pltpu.VMEM((c3 + 1, m1_out), jnp.bfloat16),  # relu(d1) + ones row
        ],
        compiler_params=pltpu.CompilerParams(
            dimension_semantics=("parallel",),
        ),
    )(xp, w1e, w2e, w3e, w4e, msk, pmat, umat)

    # drop the wrap/garbage lanes and go back to NCDHW
    out = out.reshape(n, cf, d, PLANE)[:, :, :, :hp * wp1]
    out = out.reshape(n, cf, d, hp, wp1)[:, :, :, :h, :w]
    return out


def tms_net_forward(params, x):
    """TmsNet.forward == U3DNet.forward on the input volume."""
    return u3dnet_forward(params, x)


# --------------------------------------------------------------------------
# Parameters & pure-JAX reference (float32) for a sanity check.
# --------------------------------------------------------------------------
def init_params(key, input_nc, output_nc, base=8):
    def conv_init(k, cout, cin, ks):
        kw_, kb_ = jax.random.split(k)
        fan_in = cin * ks ** 3
        scale = 1.0 / jnp.sqrt(fan_in)
        wgt = jax.random.uniform(kw_, (cout, cin, ks, ks, ks),
                                 jnp.float32, -scale, scale)
        b = jax.random.uniform(kb_, (cout,), jnp.float32, -scale, scale)
        return wgt, b

    keys = jax.random.split(key, 4)
    return {
        "enc1": conv_init(keys[0], base, input_nc, 3),
        "enc2": conv_init(keys[1], 2 * base, base, 3),
        "dec1": conv_init(keys[2], base, 3 * base, 3),
        "out": conv_init(keys[3], output_nc, base, 1),
    }


def _reference_forward(params, x):
    def conv(v, wgt, b, pad):
        out = jax.lax.conv_general_dilated(
            v, wgt, window_strides=(1, 1, 1), padding=[(pad, pad)] * 3,
            dimension_numbers=("NCDHW", "OIDHW", "NCDHW"))
        return out + b.reshape(1, -1, 1, 1, 1)

    w1, b1 = params["enc1"]
    w2, b2 = params["enc2"]
    w3, b3 = params["dec1"]
    w4, b4 = params["out"]
    e1 = jax.nn.relu(conv(x, w1, b1, 1))
    n, c, d, h, w = e1.shape
    p1 = e1.reshape(n, c, d // 2, 2, h // 2, 2, w // 2, 2).max(axis=(3, 5, 7))
    e2 = jax.nn.relu(conv(p1, w2, b2, 1))
    u1 = jnp.repeat(jnp.repeat(jnp.repeat(e2, 2, axis=2), 2, axis=3), 2, axis=4)
    d1 = jax.nn.relu(conv(jnp.concatenate([u1, e1], axis=1), w3, b3, 1))
    return conv(d1, w4, b4, 0)


if __name__ == "__main__":
    input_nc, output_nc = 2, 2
    key = jax.random.PRNGKey(0)
    k_params, k_x = jax.random.split(key)

    params = init_params(k_params, input_nc, output_nc, base=8)
    x = jax.random.normal(k_x, (2, input_nc, 8, 8, 8), dtype=jnp.float32)

    fwd = jax.jit(tms_net_forward)
    out = fwd(params, x)
    jax.block_until_ready(out)
    assert out.shape == (2, output_nc, 8, 8, 8), out.shape

    # sanity check vs. a pure-JAX float32 reference (bf16 MXU tolerance)
    ref = jax.jit(_reference_forward)(params, x)
    err = float(jnp.max(jnp.abs(out - ref)) / (jnp.max(jnp.abs(ref)) + 1e-6))
    assert err < 0.1, f"kernel/reference mismatch: normalized max err {err:.4f}"

    print("KERNEL_OK")
</pallas_src>

<mosaic_0001>
module attributes {stable_mosaic.version = 11 : i64} {
  func.func @kernel(%arg0: i32, %arg1: memref<1x2x1408xbf16, #tpu.memory_space<vmem>>, %arg2: memref<8x55xbf16, #tpu.memory_space<vmem>>, %arg3: memref<16x217xbf16, #tpu.memory_space<vmem>>, %arg4: memref<8x649xbf16, #tpu.memory_space<vmem>>, %arg5: memref<2x9xbf16, #tpu.memory_space<vmem>>, %arg6: memref<1x1024xf32, #tpu.memory_space<vmem>>, %arg7: memref<128x128xbf16, #tpu.memory_space<vmem>>, %arg8: memref<128x128xbf16, #tpu.memory_space<vmem>>, %arg9: memref<1x2x1024xf32, #tpu.memory_space<vmem>>, %arg10: memref<8x1408xbf16, #tpu.memory_space<vmem>>, %arg11: memref<8x896xbf16, #tpu.memory_space<vmem>>, %arg12: memref<16x1408xbf16, #tpu.memory_space<vmem>>, %arg13: memref<55x1024xbf16, #tpu.memory_space<vmem>>, %arg14: memref<217x512xbf16, #tpu.memory_space<vmem>>, %arg15: memref<649x1024xbf16, #tpu.memory_space<vmem>>, %arg16: memref<9x1024xbf16, #tpu.memory_space<vmem>>) attributes {dimension_semantics = [#tpu.dimension_semantics<parallel>], iteration_bounds = array<i64: 2>, scalar_prefetch = 0 : i64, scratch_operands = 7 : i64, tpu.core_type = #tpu.core_type<tc>, window_params = [{transform_indices = @transform_0, window_bounds = array<i64: 1, 2, 1408>}, {pipeline_mode = #tpu.pipeline_mode<synchronous>, transform_indices = @transform_1, window_bounds = array<i64: 8, 55>}, {pipeline_mode = #tpu.pipeline_mode<synchronous>, transform_indices = @transform_2, window_bounds = array<i64: 16, 217>}, {pipeline_mode = #tpu.pipeline_mode<synchronous>, transform_indices = @transform_3, window_bounds = array<i64: 8, 649>}, {pipeline_mode = #tpu.pipeline_mode<synchronous>, transform_indices = @transform_4, window_bounds = array<i64: 2, 9>}, {pipeline_mode = #tpu.pipeline_mode<synchronous>, transform_indices = @transform_5, window_bounds = array<i64: 1, 1024>}, {pipeline_mode = #tpu.pipeline_mode<synchronous>, transform_indices = @transform_6, window_bounds = array<i64: 128, 128>}, {pipeline_mode = #tpu.pipeline_mode<synchronous>, transform_indices = @transform_7, window_bounds = array<i64: 128, 128>}, {transform_indices = @transform_8, window_bounds = array<i64: 1, 2, 1024>}]} {
    %cst = arith.constant 1.000000e+00 : bf16
    %0 = vector.broadcast %cst : bf16 to vector<1x1024xbf16>
    %cst_0 = arith.constant 1.000000e+00 : bf16
    %1 = vector.broadcast %cst_0 : bf16 to vector<1x512xbf16>
    %c0 = arith.constant 0 : index
    %c0_1 = arith.constant 0 : index
    %c0_2 = arith.constant 0 : index
    %2 = vector.load %arg1[%c0, %c0_1, %c0_2] : memref<1x2x1408xbf16, #tpu.memory_space<vmem>>, vector<1x2x1024xbf16>
    %3 = vector.shape_cast %2 : vector<1x2x1024xbf16> to vector<2x1024xbf16>
    %c0_3 = arith.constant 0 : index
    %c0_4 = arith.constant 0 : index
    %4 = vector.load %arg13[%c0_3, %c0_4] : memref<55x1024xbf16, #tpu.memory_space<vmem>>, vector<2x1024xbf16>
    tpu.vector_store %arg13[%c0_3, %c0_4], %3 {strides = array<i32>} : memref<55x1024xbf16, #tpu.memory_space<vmem>>, vector<2x1024xbf16>,
    %c0_5 = arith.constant 0 : index
    %c0_6 = arith.constant 0 : index
    %c1 = arith.constant 1 : index
    %5 = vector.load %arg1[%c0_5, %c0_6, %c1] : memref<1x2x1408xbf16, #tpu.memory_space<vmem>>, vector<1x2x1024xbf16>
    %6 = vector.shape_cast %5 : vector<1x2x1024xbf16> to vector<2x1024xbf16>
    %c2 = arith.constant 2 : index
    %c0_7 = arith.constant 0 : index
    %7 = vector.load %arg13[%c2, %c0_7] : memref<55x1024xbf16, #tpu.memory_space<vmem>>, vector<2x1024xbf16>
    tpu.vector_store %arg13[%c2, %c0_7], %6 {strides = array<i32>} : memref<55x1024xbf16, #tpu.memory_space<vmem>>, vector<2x1024xbf16>,
    %c0_8 = arith.constant 0 : index
    %c0_9 = arith.constant 0 : index
    %c2_10 = arith.constant 2 : index
    %8 = vector.load %arg1[%c0_8, %c0_9, %c2_10] : memref<1x2x1408xbf16, #tpu.memory_space<vmem>>, vector<1x2x1024xbf16>
    %9 = vector.shape_cast %8 : vector<1x2x1024xbf16> to vector<2x1024xbf16>
    %c4 = arith.constant 4 : index
    %c0_11 = arith.constant 0 : index
    %10 = vector.load %arg13[%c4, %c0_11] : memref<55x1024xbf16, #tpu.memory_space<vmem>>, vector<2x1024xbf16>
    tpu.vector_store %arg13[%c4, %c0_11], %9 {strides = array<i32>} : memref<55x1024xbf16, #tpu.memory_space<vmem>>, vector<2x1024xbf16>,
    %c0_12 = arith.constant 0 : index
    %c0_13 = arith.constant 0 : index
    %c10 = arith.constant 10 : index
    %11 = vector.load %arg1[%c0_12, %c0_13, %c10] : memref<1x2x1408xbf16, #tpu.memory_space<vmem>>, vector<1x2x1024xbf16>
    %12 = vector.shape_cast %11 : vector<1x2x1024xbf16> to vector<2x1024xbf16>
    %c6 = arith.constant 6 : index
    %c0_14 = arith.constant 0 : index
    %13 = vector.load %arg13[%c6, %c0_14] : memref<55x1024xbf16, #tpu.memory_space<vmem>>, vector<2x1024xbf16>
    tpu.vector_store %arg13[%c6, %c0_14], %12 {strides = array<i32>} : memref<55x1024xbf16, #tpu.memory_space<vmem>>, vector<2x1024xbf16>,
    %c0_15 = arith.constant 0 : index
    %c0_16 = arith.constant 0 : index
    %c11 = arith.constant 11 : index
    %14 = vector.load %arg1[%c0_15, %c0_16, %c11] : memref<1x2x1408xbf16, #tpu.memory_space<vmem>>, vector<1x2x1024xbf16>
    %15 = vector.shape_cast %14 : vector<1x2x1024xbf16> to vector<2x1024xbf16>
    %c8 = arith.constant 8 : index
    %c0_17 = arith.constant 0 : index
    %16 = vector.load %arg13[%c8, %c0_17] : memref<55x1024xbf16, #tpu.memory_space<vmem>>, vector<2x1024xbf16>
    tpu.vector_store %arg13[%c8, %c0_17], %15 {strides = array<i32>} : memref<55x1024xbf16, #tpu.memory_space<vmem>>, vector<2x1024xbf16>,
    %c0_18 = arith.constant 0 : index
    %c0_19 = arith.constant 0 : index
    %c12 = arith.constant 12 : index
    %17 = vector.load %arg1[%c0_18, %c0_19, %c12] : memref<1x2x1408xbf16, #tpu.memory_space<vmem>>, vector<1x2x1024xbf16>
    %18 = vector.shape_cast %17 : vector<1x2x1024xbf16> to vector<2x1024xbf16>
    %c10_20 = arith.constant 10 : index
    %c0_21 = arith.constant 0 : index
    %19 = vector.load %arg13[%c10_20, %c0_21] : memref<55x1024xbf16, #tpu.memory_space<vmem>>, vector<2x1024xbf16>
    tpu.vector_store %arg13[%c10_20, %c0_21], %18 {strides = array<i32>} : memref<55x1024xbf16, #tpu.memory_space<vmem>>, vector<2x1024xbf16>,
    %c0_22 = arith.constant 0 : index
    %c0_23 = arith.constant 0 : index
    %c20 = arith.constant 20 : index
    %20 = vector.load %arg1[%c0_22, %c0_23, %c20] : memref<1x2x1408xbf16, #tpu.memory_space<vmem>>, vector<1x2x1024xbf16>
    %21 = vector.shape_cast %20 : vector<1x2x1024xbf16> to vector<2x1024xbf16>
    %c12_24 = arith.constant 12 : index
    %c0_25 = arith.constant 0 : index
    %22 = vector.load %arg13[%c12_24, %c0_25] : memref<55x1024xbf16, #tpu.memory_space<vmem>>, vector<2x1024xbf16>
    tpu.vector_store %arg13[%c12_24, %c0_25], %21 {strides = array<i32>} : memref<55x1024xbf16, #tpu.memory_space<vmem>>, vector<2x1024xbf16>,
    %c0_26 = arith.constant 0 : index
    %c0_27 = arith.constant 0 : index
    %c21 = arith.constant 21 : index
    %23 = vector.load %arg1[%c0_26, %c0_27, %c21] : memref<1x2x1408xbf16, #tpu.memory_space<vmem>>, vector<1x2x1024xbf16>
    %24 = vector.shape_cast %23 : vector<1x2x1024xbf16> to vector<2x1024xbf16>
    %c14 = arith.constant 14 : index
    %c0_28 = arith.constant 0 : index
    %25 = vector.load %arg13[%c14, %c0_28] : memref<55x1024xbf16, #tpu.memory_space<vmem>>, vector<2x1024xbf16>
    tpu.vector_store %arg13[%c14, %c0_28], %24 {strides = array<i32>} : memref<55x1024xbf16, #tpu.memory_space<vmem>>, vector<2x1024xbf16>,
    %c0_29 = arith.constant 0 : index
    %c0_30 = arith.constant 0 : index
    %c22 = arith.constant 22 : index
    %26 = vector.load %arg1[%c0_29, %c0_30, %c22] : memref<1x2x1408xbf16, #tpu.memory_space<vmem>>, vector<1x2x1024xbf16>
    %27 = vector.shape_cast %26 : vector<1x2x1024xbf16> to vector<2x1024xbf16>
    %c16 = arith.constant 16 : index
    %c0_31 = arith.constant 0 : index
    %28 = vector.load %arg13[%c16, %c0_31] : memref<55x1024xbf16, #tpu.memory_space<vmem>>, vector<2x1024xbf16>
    tpu.vector_store %arg13[%c16, %c0_31], %27 {strides = array<i32>} : memref<55x1024xbf16, #tpu.memory_space<vmem>>, vector<2x1024xbf16>,
    %c0_32 = arith.constant 0 : index
    %c0_33 = arith.constant 0 : index
    %c128 = arith.constant 128 : index
    %29 = vector.load %arg1[%c0_32, %c0_33, %c128] : memref<1x2x1408xbf16, #tpu.memory_space<vmem>>, vector<1x2x1024xbf16>
    %30 = vector.shape_cast %29 : vector<1x2x1024xbf16> to vector<2x1024xbf16>
    %c18 = arith.constant 18 : index
    %c0_34 = arith.constant 0 : index
    %31 = vector.load %arg13[%c18, %c0_34] : memref<55x1024xbf16, #tpu.memory_space<vmem>>, vector<2x1024xbf16>
    tpu.vector_store %arg13[%c18, %c0_34], %30 {strides = array<i32>} : memref<55x1024xbf16, #tpu.memory_space<vmem>>, vector<2x1024xbf16>,
    %c0_35 = arith.constant 0 : index
    %c0_36 = arith.constant 0 : index
    %c129 = arith.constant 129 : index
    %32 = vector.load %arg1[%c0_35, %c0_36, %c129] : memref<1x2x1408xbf16, #tpu.memory_space<vmem>>, vector<1x2x1024xbf16>
    %33 = vector.shape_cast %32 : vector<1x2x1024xbf16> to vector<2x1024xbf16>
    %c20_37 = arith.constant 20 : index
    %c0_38 = arith.constant 0 : index
    %34 = vector.load %arg13[%c20_37, %c0_38] : memref<55x1024xbf16, #tpu.memory_space<vmem>>, vector<2x1024xbf16>
    tpu.vector_store %arg13[%c20_37, %c0_38], %33 {strides = array<i32>} : memref<55x1024xbf16, #tpu.memory_space<vmem>>, vector<2x1024xbf16>,
    %c0_39 = arith.constant 0 : index
    %c0_40 = arith.constant 0 : index
    %c130 = arith.constant 130 : index
    %35 = vector.load %arg1[%c0_39, %c0_40, %c130] : memref<1x2x1408xbf16, #tpu.memory_space<vmem>>, vector<1x2x1024xbf16>
    %36 = vector.shape_cast %35 : vector<1x2x1024xbf16> to vector<2x1024xbf16>
    %c22_41 = arith.constant 22 : index
    %c0_42 = arith.constant 0 : index
    %37 = vector.load %arg13[%c22_41, %c0_42] : memref<55x1024xbf16, #tpu.memory_space<vmem>>, vector<2x1024xbf16>
    tpu.vector_store %arg13[%c22_41, %c0_42], %36 {strides = array<i32>} : memref<55x1024xbf16, #tpu.memory_space<vmem>>, vector<2x1024xbf16>,
    %c0_43 = arith.constant 0 : index
    %c0_44 = arith.constant 0 : index
    %c138 = arith.constant 138 : index
    %38 = vector.load %arg1[%c0_43, %c0_44, %c138] : memref<1x2x1408xbf16, #tpu.memory_space<vmem>>, vector<1x2x1024xbf16>
    %39 = vector.shape_cast %38 : vector<1x2x1024xbf16> to vector<2x1024xbf16>
    %c24 = arith.constant 24 : index
    %c0_45 = arith.constant 0 : index
    %40 = vector.load %arg13[%c24, %c0_45] : memref<55x1024xbf16, #tpu.memory_space<vmem>>, vector<2x1024xbf16>
    tpu.vector_store %arg13[%c24, %c0_45], %39 {strides = array<i32>} : memref<55x1024xbf16, #tpu.memory_space<vmem>>, vector<2x1024xbf16>,
    %c0_46 = arith.constant 0 : index
    %c0_47 = arith.constant 0 : index
    %c139 = arith.constant 139 : index
    %41 = vector.load %arg1[%c0_46, %c0_47, %c139] : memref<1x2x1408xbf16, #tpu.memory_space<vmem>>, vector<1x2x1024xbf16>
    %42 = vector.shape_cast %41 : vector<1x2x1024xbf16> to vector<2x1024xbf16>
    %c26 = arith.constant 26 : index
    %c0_48 = arith.constant 0 : index
    %43 = vector.load %arg13[%c26, %c0_48] : memref<55x1024xbf16, #tpu.memory_space<vmem>>, vector<2x1024xbf16>
    tpu.vector_store %arg13[%c26, %c0_48], %42 {strides = array<i32>} : memref<55x1024xbf16, #tpu.memory_space<vmem>>, vector<2x1024xbf16>,
    %c0_49 = arith.constant 0 : index
    %c0_50 = arith.constant 0 : index
    %c140 = arith.constant 140 : index
    %44 = vector.load %arg1[%c0_49, %c0_50, %c140] : memref<1x2x1408xbf16, #tpu.memory_space<vmem>>, vector<1x2x1024xbf16>
    %45 = vector.shape_cast %44 : vector<1x2x1024xbf16> to vector<2x1024xbf16>
    %c28 = arith.constant 28 : index
    %c0_51 = arith.constant 0 : index
    %46 = vector.load %arg13[%c28, %c0_51] : memref<55x1024xbf16, #tpu.memory_space<vmem>>, vector<2x1024xbf16>
    tpu.vector_store %arg13[%c28, %c0_51], %45 {strides = array<i32>} : memref<55x1024xbf16, #tpu.memory_space<vmem>>, vector<2x1024xbf16>,
    %c0_52 = arith.constant 0 : index
    %c0_53 = arith.constant 0 : index
    %c148 = arith.constant 148 : index
    %47 = vector.load %arg1[%c0_52, %c0_53, %c148] : memref<1x2x1408xbf16, #tpu.memory_space<vmem>>, vector<1x2x1024xbf16>
    %48 = vector.shape_cast %47 : vector<1x2x1024xbf16> to vector<2x1024xbf16>
    %c30 = arith.constant 30 : index
    %c0_54 = arith.constant 0 : index
    %49 = vector.load %arg13[%c30, %c0_54] : memref<55x1024xbf16, #tpu.memory_space<vmem>>, vector<2x1024xbf16>
    tpu.vector_store %arg13[%c30, %c0_54], %48 {strides = array<i32>} : memref<55x1024xbf16, #tpu.memory_space<vmem>>, vector<2x1024xbf16>,
    %c0_55 = arith.constant 0 : index
    %c0_56 = arith.constant 0 : index
    %c149 = arith.constant 149 : index
    %50 = vector.load %arg1[%c0_55, %c0_56, %c149] : memref<1x2x1408xbf16, #tpu.memory_space<vmem>>, vector<1x2x1024xbf16>
    %51 = vector.shape_cast %50 : vector<1x2x1024xbf16> to vector<2x1024xbf16>
    %c32 = arith.constant 32 : index
    %c0_57 = arith.constant 0 : index
    %52 = vector.load %arg13[%c32, %c0_57] : memref<55x1024xbf16, #tpu.memory_space<vmem>>, vector<2x1024xbf16>
    tpu.vector_store %arg13[%c32, %c0_57], %51 {strides = array<i32>} : memref<55x1024xbf16, #tpu.memory_space<vmem>>, vector<2x1024xbf16>,
    %c0_58 = arith.constant 0 : index
    %c0_59 = arith.constant 0 : index
    %c150 = arith.constant 150 : index
    %53 = vector.load %arg1[%c0_58, %c0_59, %c150] : memref<1x2x1408xbf16, #tpu.memory_space<vmem>>, vector<1x2x1024xbf16>
    %54 = vector.shape_cast %53 : vector<1x2x1024xbf16> to vector<2x1024xbf16>
    %c34 = arith.constant 34 : index
    %c0_60 = arith.constant 0 : index
    %55 = vector.load %arg13[%c34, %c0_60] : memref<55x1024xbf16, #tpu.memory_space<vmem>>, vector<2x1024xbf16>
    tpu.vector_store %arg13[%c34, %c0_60], %54 {strides = array<i32>} : memref<55x1024xbf16, #tpu.memory_space<vmem>>, vector<2x1024xbf16>,
    %c0_61 = arith.constant 0 : index
    %c0_62 = arith.constant 0 : index
    %c256 = arith.constant 256 : index
    %56 = vector.load %arg1[%c0_61, %c0_62, %c256] : memref<1x2x1408xbf16, #tpu.memory_space<vmem>>, vector<1x2x1024xbf16>
    %57 = vector.shape_cast %56 : vector<1x2x1024xbf16> to vector<2x1024xbf16>
    %c36 = arith.constant 36 : index
    %c0_63 = arith.constant 0 : index
    %58 = vector.load %arg13[%c36, %c0_63] : memref<55x1024xbf16, #tpu.memory_space<vmem>>, vector<2x1024xbf16>
    tpu.vector_store %arg13[%c36, %c0_63], %57 {strides = array<i32>} : memref<55x1024xbf16, #tpu.memory_space<vmem>>, vector<2x1024xbf16>,
    %c0_64 = arith.constant 0 : index
    %c0_65 = arith.constant 0 : index
    %c257 = arith.constant 257 : index
    %59 = vector.load %arg1[%c0_64, %c0_65, %c257] : memref<1x2x1408xbf16, #tpu.memory_space<vmem>>, vector<1x2x1024xbf16>
    %60 = vector.shape_cast %59 : vector<1x2x1024xbf16> to vector<2x1024xbf16>
    %c38 = arith.constant 38 : index
    %c0_66 = arith.constant 0 : index
    %61 = vector.load %arg13[%c38, %c0_66] : memref<55x1024xbf16, #tpu.memory_space<vmem>>, vector<2x1024xbf16>
    tpu.vector_store %arg13[%c38, %c0_66], %60 {strides = array<i32>} : memref<55x1024xbf16, #tpu.memory_space<vmem>>, vector<2x1024xbf16>,
    %c0_67 = arith.constant 0 : index
    %c0_68 = arith.constant 0 : index
    %c258 = arith.constant 258 : index
    %62 = vector.load %arg1[%c0_67, %c0_68, %c258] : memref<1x2x1408xbf16, #tpu.memory_space<vmem>>, vector<1x2x1024xbf16>
    %63 = vector.shape_cast %62 : vector<1x2x1024xbf16> to vector<2x1024xbf16>
    %c40 = arith.constant 40 : index
    %c0_69 = arith.constant 0 : index
    %64 = vector.load %arg13[%c40, %c0_69] : memref<55x1024xbf16, #tpu.memory_space<vmem>>, vector<2x1024xbf16>
    tpu.vector_store %arg13[%c40, %c0_69], %63 {strides = array<i32>} : memref<55x1024xbf16, #tpu.memory_space<vmem>>, vector<2x1024xbf16>,
    %c0_70 = arith.constant 0 : index
    %c0_71 = arith.constant 0 : index
    %c266 = arith.constant 266 : index
    %65 = vector.load %arg1[%c0_70, %c0_71, %c266] : memref<1x2x1408xbf16, #tpu.memory_space<vmem>>, vector<1x2x1024xbf16>
    %66 = vector.shape_cast %65 : vector<1x2x1024xbf16> to vector<2x1024xbf16>
    %c42 = arith.constant 42 : index
    %c0_72 = arith.constant 0 : index
    %67 = vector.load %arg13[%c42, %c0_72] : memref<55x1024xbf16, #tpu.memory_space<vmem>>, vector<2x1024xbf16>
    tpu.vector_store %arg13[%c42, %c0_72], %66 {strides = array<i32>} : memref<55x1024xbf16, #tpu.memory_space<vmem>>, vector<2x1024xbf16>,
    %c0_73 = arith.constant 0 : index
    %c0_74 = arith.constant 0 : index
    %c267 = arith.constant 267 : index
    %68 = vector.load %arg1[%c0_73, %c0_74, %c267] : memref<1x2x1408xbf16, #tpu.memory_space<vmem>>, vector<1x2x1024xbf16>
    %69 = vector.shape_cast %68 : vector<1x2x1024xbf16> to vector<2x1024xbf16>
    %c44 = arith.constant 44 : index
    %c0_75 = arith.constant 0 : index
    %70 = vector.load %arg13[%c44, %c0_75] : memref<55x1024xbf16, #tpu.memory_space<vmem>>, vector<2x1024xbf16>
    tpu.vector_store %arg13[%c44, %c0_75], %69 {strides = array<i32>} : memref<55x1024xbf16, #tpu.memory_space<vmem>>, vector<2x1024xbf16>,
    %c0_76 = arith.constant 0 : index
    %c0_77 = arith.constant 0 : index
    %c268 = arith.constant 268 : index
    %71 = vector.load %arg1[%c0_76, %c0_77, %c268] : memref<1x2x1408xbf16, #tpu.memory_space<vmem>>, vector<1x2x1024xbf16>
    %72 = vector.shape_cast %71 : vector<1x2x1024xbf16> to vector<2x1024xbf16>
    %c46 = arith.constant 46 : index
    %c0_78 = arith.constant 0 : index
    %73 = vector.load %arg13[%c46, %c0_78] : memref<55x1024xbf16, #tpu.memory_space<vmem>>, vector<2x1024xbf16>
    tpu.vector_store %arg13[%c46, %c0_78], %72 {strides = array<i32>} : memref<55x1024xbf16, #tpu.memory_space<vmem>>, vector<2x1024xbf16>,
    %c0_79 = arith.constant 0 : index
    %c0_80 = arith.constant 0 : index
    %c276 = arith.constant 276 : index
    %74 = vector.load %arg1[%c0_79, %c0_80, %c276] : memref<1x2x1408xbf16, #tpu.memory_space<vmem>>, vector<1x2x1024xbf16>
    %75 = vector.shape_cast %74 : vector<1x2x1024xbf16> to vector<2x1024xbf16>
    %c48 = arith.constant 48 : index
    %c0_81 = arith.constant 0 : index
    %76 = vector.load %arg13[%c48, %c0_81] : memref<55x1024xbf16, #tpu.memory_space<vmem>>, vector<2x1024xbf16>
    tpu.vector_store %arg13[%c48, %c0_81], %75 {strides = array<i32>} : memref<55x1024xbf16, #tpu.memory_space<vmem>>, vector<2x1024xbf16>,
    %c0_82 = arith.constant 0 : index
    %c0_83 = arith.constant 0 : index
    %c277 = arith.constant 277 : index
    %77 = vector.load %arg1[%c0_82, %c0_83, %c277] : memref<1x2x1408xbf16, #tpu.memory_space<vmem>>, vector<1x2x1024xbf16>
    %78 = vector.shape_cast %77 : vector<1x2x1024xbf16> to vector<2x1024xbf16>
    %c50 = arith.constant 50 : index
    %c0_84 = arith.constant 0 : index
    %79 = vector.load %arg13[%c50, %c0_84] : memref<55x1024xbf16, #tpu.memory_space<vmem>>, vector<2x1024xbf16>
    tpu.vector_store %arg13[%c50, %c0_84], %78 {strides = array<i32>} : memref<55x1024xbf16, #tpu.memory_space<vmem>>, vector<2x1024xbf16>,
    %c0_85 = arith.constant 0 : index
    %c0_86 = arith.constant 0 : index
    %c278 = arith.constant 278 : index
    %80 = vector.load %arg1[%c0_85, %c0_86, %c278] : memref<1x2x1408xbf16, #tpu.memory_space<vmem>>, vector<1x2x1024xbf16>
    %81 = vector.shape_cast %80 : vector<1x2x1024xbf16> to vector<2x1024xbf16>
    %c52 = arith.constant 52 : index
    %c0_87 = arith.constant 0 : index
    %82 = vector.load %arg13[%c52, %c0_87] : memref<55x1024xbf16, #tpu.memory_space<vmem>>, vector<2x1024xbf16>
    tpu.vector_store %arg13[%c52, %c0_87], %81 {strides = array<i32>} : memref<55x1024xbf16, #tpu.memory_space<vmem>>, vector<2x1024xbf16>,
    %c54 = arith.constant 54 : index
    %c0_88 = arith.constant 0 : index
    %83 = vector.load %arg13[%c54, %c0_88] : memref<55x1024xbf16, #tpu.memory_space<vmem>>, vector<1x1024xbf16>
    tpu.vector_store %arg13[%c54, %c0_88], %0 {strides = array<i32>} : memref<55x1024xbf16, #tpu.memory_space<vmem>>, vector<1x1024xbf16>,
    %c0_89 = arith.constant 0 : index
    %c0_90 = arith.constant 0 : index
    %84 = vector.load %arg2[%c0_89, %c0_90] : memref<8x55xbf16, #tpu.memory_space<vmem>>, vector<8x55xbf16>
    %c0_91 = arith.constant 0 : index
    %c0_92 = arith.constant 0 : index
    %85 = vector.load %arg13[%c0_91, %c0_92] : memref<55x1024xbf16, #tpu.memory_space<vmem>>, vector<55x1024xbf16>
    %cst_93 = arith.constant dense<0.000000e+00> : vector<8x1024xf32>
    %86 = tpu.matmul %84, %85, %cst_93 {dimension_numbers = #tpu.dot_dimension_numbers<[1], [0], [0], [1], [0, 0, 1, 1], [], []>} : vector<8x55xbf16>, vector<55x1024xbf16>, vector<8x1024xf32> -> vector<8x1024xf32>
    %cst_94 = arith.constant 0.000000e+00 : f32
    %87 = vector.broadcast %cst_94 : f32 to vector<8x1024xf32>
    %88 = arith.maximumf %86, %87 : vector<8x1024xf32>
    %cst_95 = arith.constant 0.000000e+00 : bf16
    %89 = vector.broadcast %cst_95 : bf16 to vector<8x1408xbf16>
    %c0_96 = arith.constant 0 : index
    %c0_97 = arith.constant 0 : index
    %90 = vector.load %arg10[%c0_96, %c0_97] : memref<8x1408xbf16, #tpu.memory_space<vmem>>, vector<8x1408xbf16>
    tpu.vector_store %arg10[%c0_96, %c0_97], %89 {strides = array<i32>} : memref<8x1408xbf16, #tpu.memory_space<vmem>>, vector<8x1408xbf16>,
    %c0_98 = arith.constant 0 : index
    %c0_99 = arith.constant 0 : index
    %91 = vector.load %arg6[%c0_98, %c0_99] : memref<1x1024xf32, #tpu.memory_space<vmem>>, vector<1x1024xf32>
    %92 = vector.broadcast %91 : vector<1x1024xf32> to vector<8x1024xf32>
    %93 = arith.mulf %88, %92 : vector<8x1024xf32>
    %94 = arith.truncf %93 : vector<8x1024xf32> to vector<8x1024xbf16>
    %c0_100 = arith.constant 0 : index
    %c139_101 = arith.constant 139 : index
    %95 = vector.load %arg10[%c0_100, %c139_101] : memref<8x1408xbf16, #tpu.memory_space<vmem>>, vector<8x1024xbf16>
    tpu.vector_store %arg10[%c0_100, %c139_101], %94 {strides = array<i32>} : memref<8x1408xbf16, #tpu.memory_space<vmem>>, vector<8x1024xbf16>,
    %c0_102 = arith.constant 0 : index
    %c139_103 = arith.constant 139 : index
    %96 = vector.load %arg10[%c0_102, %c139_103] : memref<8x1408xbf16, #tpu.memory_space<vmem>>, vector<8x1024xbf16>
    %c0_104 = arith.constant 0 : index
    %c140_105 = arith.constant 140 : index
    %97 = vector.load %arg10[%c0_104, %c140_105] : memref<8x1408xbf16, #tpu.memory_space<vmem>>, vector<8x1024xbf16>
    %98 = arith.maximumf %96, %97 : vector<8x1024xbf16>
    %c0_106 = arith.constant 0 : index
    %c149_107 = arith.constant 149 : index
    %99 = vector.load %arg10[%c0_106, %c149_107] : memref<8x1408xbf16, #tpu.memory_space<vmem>>, vector<8x1024xbf16>
    %100 = arith.maximumf %98, %99 : vector<8x1024xbf16>
    %c0_108 = arith.constant 0 : index
    %c150_109 = arith.constant 150 : index
    %101 = vector.load %arg10[%c0_108, %c150_109] : memref<8x1408xbf16, #tpu.memory_space<vmem>>, vector<8x1024xbf16>
    %102 = arith.maximumf %100, %101 : vector<8x1024xbf16>
    %c0_110 = arith.constant 0 : index
    %c267_111 = arith.constant 267 : index
    %103 = vector.load %arg10[%c0_110, %c267_111] : memref<8x1408xbf16, #tpu.memory_space<vmem>>, vector<8x1024xbf16>
    %104 = arith.maximumf %102, %103 : vector<8x1024xbf16>
    %c0_112 = arith.constant 0 : index
    %c268_113 = arith.constant 268 : index
    %105 = vector.load %arg10[%c0_112, %c268_113] : memref<8x1408xbf16, #tpu.memory_space<vmem>>, vector<8x1024xbf16>
    %106 = arith.maximumf %104, %105 : vector<8x1024xbf16>
    %c0_114 = arith.constant 0 : index
    %c277_115 = arith.constant 277 : index
    %107 = vector.load %arg10[%c0_114, %c277_115] : memref<8x1408xbf16, #tpu.memory_space<vmem>>, vector<8x1024xbf16>
    %108 = arith.maximumf %106, %107 : vector<8x1024xbf16>
    %c0_116 = arith.constant 0 : index
    %c278_117 = arith.constant 278 : index
    %109 = vector.load %arg10[%c0_116, %c278_117] : memref<8x1408xbf16, #tpu.memory_space<vmem>>, vector<8x1024xbf16>
    %110 = arith.maximumf %108, %109 : vector<8x1024xbf16>
    %cst_118 = arith.constant 0.000000e+00 : bf16
    %111 = vector.broadcast %cst_118 : bf16 to vector<8x896xbf16>
    %c0_119 = arith.constant 0 : index
    %c0_120 = arith.constant 0 : index
    %112 = vector.load %arg11[%c0_119, %c0_120] : memref<8x896xbf16, #tpu.memory_space<vmem>>, vector<8x896xbf16>
    tpu.vector_store %arg11[%c0_119, %c0_120], %111 {strides = array<i32>} : memref<8x896xbf16, #tpu.memory_space<vmem>>, vector<8x896xbf16>,
    %113 = vector.extract_strided_slice %110 {offsets = [0, 0], sizes = [8, 128], strides = [1, 1]} : vector<8x1024xbf16> to vector<8x128xbf16>
    %c0_121 = arith.constant 0 : index
    %c0_122 = arith.constant 0 : index
    %114 = vector.load %arg7[%c0_121, %c0_122] : memref<128x128xbf16, #tpu.memory_space<vmem>>, vector<128x128xbf16>
    %cst_123 = arith.constant dense<0.000000e+00> : vector<8x128xf32>
    %115 = tpu.matmul %113, %114, %cst_123 {dimension_numbers = #tpu.dot_dimension_numbers<[1], [0], [0], [1], [0, 0, 1, 1], [], []>} : vector<8x128xbf16>, vector<128x128xbf16>, vector<8x128xf32> -> vector<8x128xf32>
    %116 = arith.truncf %115 : vector<8x128xf32> to vector<8x128xbf16>
    %c0_124 = arith.constant 0 : index
    %c128_125 = arith.constant 128 : index
    %117 = vector.load %arg11[%c0_124, %c128_125] : memref<8x896xbf16, #tpu.memory_space<vmem>>, vector<8x128xbf16>
    tpu.vector_store %arg11[%c0_124, %c128_125], %116 {strides = array<i32>} : memref<8x896xbf16, #tpu.memory_space<vmem>>, vector<8x128xbf16>,
    %118 = vector.extract_strided_slice %110 {offsets = [0, 256], sizes = [8, 128], strides = [1, 1]} : vector<8x1024xbf16> to vector<8x128xbf16>
    %c0_126 = arith.constant 0 : index
    %c0_127 = arith.constant 0 : index
    %119 = vector.load %arg7[%c0_126, %c0_127] : memref<128x128xbf16, #tpu.memory_space<vmem>>, vector<128x128xbf16>
    %cst_128 = arith.constant dense<0.000000e+00> : vector<8x128xf32>
    %120 = tpu.matmul %118, %119, %cst_128 {dimension_numbers = #tpu.dot_dimension_numbers<[1], [0], [0], [1], [0, 0, 1, 1], [], []>} : vector<8x128xbf16>, vector<128x128xbf16>, vector<8x128xf32> -> vector<8x128xf32>
    %121 = arith.truncf %120 : vector<8x128xf32> to vector<8x128xbf16>
    %c0_129 = arith.constant 0 : index
    %c256_130 = arith.constant 256 : index
    %122 = vector.load %arg11[%c0_129, %c256_130] : memref<8x896xbf16, #tpu.memory_space<vmem>>, vector<8x128xbf16>
    tpu.vector_store %arg11[%c0_129, %c256_130], %121 {strides = array<i32>} : memref<8x896xbf16, #tpu.memory_space<vmem>>, vector<8x128xbf16>,
    %123 = vector.extract_strided_slice %110 {offsets = [0, 512], sizes = [8, 128], strides = [1, 1]} : vector<8x1024xbf16> to vector<8x128xbf16>
    %c0_131 = arith.constant 0 : index
    %c0_132 = arith.constant 0 : index
    %124 = vector.load %arg7[%c0_131, %c0_132] : memref<128x128xbf16, #tpu.memory_space<vmem>>, vector<128x128xbf16>
    %cst_133 = arith.constant dense<0.000000e+00> : vector<8x128xf32>
    %125 = tpu.matmul %123, %124, %cst_133 {dimension_numbers = #tpu.dot_dimension_numbers<[1], [0], [0], [1], [0, 0, 1, 1], [], []>} : vector<8x128xbf16>, vector<128x128xbf16>, vector<8x128xf32> -> vector<8x128xf32>
    %126 = arith.truncf %125 : vector<8x128xf32> to vector<8x128xbf16>
    %c0_134 = arith.constant 0 : index
    %c384 = arith.constant 384 : index
    %127 = vector.load %arg11[%c0_134, %c384] : memref<8x896xbf16, #tpu.memory_space<vmem>>, vector<8x128xbf16>
    tpu.vector_store %arg11[%c0_134, %c384], %126 {strides = array<i32>} : memref<8x896xbf16, #tpu.memory_space<vmem>>, vector<8x128xbf16>,
    %128 = vector.extract_strided_slice %110 {offsets = [0, 768], sizes = [8, 128], strides = [1, 1]} : vector<8x1024xbf16> to vector<8x128xbf16>
    %c0_135 = arith.constant 0 : index
    %c0_136 = arith.constant 0 : index
    %129 = vector.load %arg7[%c0_135, %c0_136] : memref<128x128xbf16, #tpu.memory_space<vmem>>, vector<128x128xbf16>
    %cst_137 = arith.constant dense<0.000000e+00> : vector<8x128xf32>
    %130 = tpu.matmul %128, %129, %cst_137 {dimension_numbers = #tpu.dot_dimension_numbers<[1], [0], [0], [1], [0, 0, 1, 1], [], []>} : vector<8x128xbf16>, vector<128x128xbf16>, vector<8x128xf32> -> vector<8x128xf32>
    %131 = arith.truncf %130 : vector<8x128xf32> to vector<8x128xbf16>
    %c0_138 = arith.constant 0 : index
    %c512 = arith.constant 512 : index
    %132 = vector.load %arg11[%c0_138, %c512] : memref<8x896xbf16, #tpu.memory_space<vmem>>, vector<8x128xbf16>
    tpu.vector_store %arg11[%c0_138, %c512], %131 {strides = array<i32>} : memref<8x896xbf16, #tpu.memory_space<vmem>>, vector<8x128xbf16>,
    %c0_139 = arith.constant 0 : index
    %c0_140 = arith.constant 0 : index
    %133 = vector.load %arg11[%c0_139, %c0_140] : memref<8x896xbf16, #tpu.memory_space<vmem>>, vector<8x512xbf16>
    %c0_141 = arith.constant 0 : index
    %c0_142 = arith.constant 0 : index
    %134 = vector.load %arg14[%c0_141, %c0_142] : memref<217x512xbf16, #tpu.memory_space<vmem>>, vector<8x512xbf16>
    tpu.vector_store %arg14[%c0_141, %c0_142], %133 {strides = array<i32>} : memref<217x512xbf16, #tpu.memory_space<vmem>>, vector<8x512xbf16>,
    %c0_143 = arith.constant 0 : index
    %c1_144 = arith.constant 1 : index
    %135 = vector.load %arg11[%c0_143, %c1_144] : memref<8x896xbf16, #tpu.memory_space<vmem>>, vector<8x512xbf16>
    %c8_145 = arith.constant 8 : index
    %c0_146 = arith.constant 0 : index
    %136 = vector.load %arg14[%c8_145, %c0_146] : memref<217x512xbf16, #tpu.memory_space<vmem>>, vector<8x512xbf16>
    tpu.vector_store %arg14[%c8_145, %c0_146], %135 {strides = array<i32>} : memref<217x512xbf16, #tpu.memory_space<vmem>>, vector<8x512xbf16>,
    %c0_147 = arith.constant 0 : index
    %c2_148 = arith.constant 2 : index
    %137 = vector.load %arg11[%c0_147, %c2_148] : memref<8x896xbf16, #tpu.memory_space<vmem>>, vector<8x512xbf16>
    %c16_149 = arith.constant 16 : index
    %c0_150 = arith.constant 0 : index
    %138 = vector.load %arg14[%c16_149, %c0_150] : memref<217x512xbf16, #tpu.memory_space<vmem>>, vector<8x512xbf16>
    tpu.vector_store %arg14[%c16_149, %c0_150], %137 {strides = array<i32>} : memref<217x512xbf16, #tpu.memory_space<vmem>>, vector<8x512xbf16>,
    %c0_151 = arith.constant 0 : index
    %c6_152 = arith.constant 6 : index
    %139 = vector.load %arg11[%c0_151, %c6_152] : memref<8x896xbf16, #tpu.memory_space<vmem>>, vector<8x512xbf16>
    %c24_153 = arith.constant 24 : index
    %c0_154 = arith.constant 0 : index
    %140 = vector.load %arg14[%c24_153, %c0_154] : memref<217x512xbf16, #tpu.memory_space<vmem>>, vector<8x512xbf16>
    tpu.vector_store %arg14[%c24_153, %c0_154], %139 {strides = array<i32>} : memref<217x512xbf16, #tpu.memory_space<vmem>>, vector<8x512xbf16>,
    %c0_155 = arith.constant 0 : index
    %c7 = arith.constant 7 : index
    %141 = vector.load %arg11[%c0_155, %c7] : memref<8x896xbf16, #tpu.memory_space<vmem>>, vector<8x512xbf16>
    %c32_156 = arith.constant 32 : index
    %c0_157 = arith.constant 0 : index
    %142 = vector.load %arg14[%c32_156, %c0_157] : memref<217x512xbf16, #tpu.memory_space<vmem>>, vector<8x512xbf16>
    tpu.vector_store %arg14[%c32_156, %c0_157], %141 {strides = array<i32>} : memref<217x512xbf16, #tpu.memory_space<vmem>>, vector<8x512xbf16>,
    %c0_158 = arith.constant 0 : index
    %c8_159 = arith.constant 8 : index
    %143 = vector.load %arg11[%c0_158, %c8_159] : memref<8x896xbf16, #tpu.memory_space<vmem>>, vector<8x512xbf16>
    %c40_160 = arith.constant 40 : index
    %c0_161 = arith.constant 0 : index
    %144 = vector.load %arg14[%c40_160, %c0_161] : memref<217x512xbf16, #tpu.memory_space<vmem>>, vector<8x512xbf16>
    tpu.vector_store %arg14[%c40_160, %c0_161], %143 {strides = array<i32>} : memref<217x512xbf16, #tpu.memory_space<vmem>>, vector<8x512xbf16>,
    %c0_162 = arith.constant 0 : index
    %c12_163 = arith.constant 12 : index
    %145 = vector.load %arg11[%c0_162, %c12_163] : memref<8x896xbf16, #tpu.memory_space<vmem>>, vector<8x512xbf16>
    %c48_164 = arith.constant 48 : index
    %c0_165 = arith.constant 0 : index
    %146 = vector.load %arg14[%c48_164, %c0_165] : memref<217x512xbf16, #tpu.memory_space<vmem>>, vector<8x512xbf16>
    tpu.vector_store %arg14[%c48_164, %c0_165], %145 {strides = array<i32>} : memref<217x512xbf16, #tpu.memory_space<vmem>>, vector<8x512xbf16>,
    %c0_166 = arith.constant 0 : index
    %c13 = arith.constant 13 : index
    %147 = vector.load %arg11[%c0_166, %c13] : memref<8x896xbf16, #tpu.memory_space<vmem>>, vector<8x512xbf16>
    %c56 = arith.constant 56 : index
    %c0_167 = arith.constant 0 : index
    %148 = vector.load %arg14[%c56, %c0_167] : memref<217x512xbf16, #tpu.memory_space<vmem>>, vector<8x512xbf16>
    tpu.vector_store %arg14[%c56, %c0_167], %147 {strides = array<i32>} : memref<217x512xbf16, #tpu.memory_space<vmem>>, vector<8x512xbf16>,
    %c0_168 = arith.constant 0 : index
    %c14_169 = arith.constant 14 : index
    %149 = vector.load %arg11[%c0_168, %c14_169] : memref<8x896xbf16, #tpu.memory_space<vmem>>, vector<8x512xbf16>
    %c64 = arith.constant 64 : index
    %c0_170 = arith.constant 0 : index
    %150 = vector.load %arg14[%c64, %c0_170] : memref<217x512xbf16, #tpu.memory_space<vmem>>, vector<8x512xbf16>
    tpu.vector_store %arg14[%c64, %c0_170], %149 {strides = array<i32>} : memref<217x512xbf16, #tpu.memory_space<vmem>>, vector<8x512xbf16>,
    %c0_171 = arith.constant 0 : index
    %c128_172 = arith.constant 128 : index
    %151 = vector.load %arg11[%c0_171, %c128_172] : memref<8x896xbf16, #tpu.memory_space<vmem>>, vector<8x512xbf16>
    %c72 = arith.constant 72 : index
    %c0_173 = arith.constant 0 : index
    %152 = vector.load %arg14[%c72, %c0_173] : memref<217x512xbf16, #tpu.memory_space<vmem>>, vector<8x512xbf16>
    tpu.vector_store %arg14[%c72, %c0_173], %151 {strides = array<i32>} : memref<217x512xbf16, #tpu.memory_space<vmem>>, vector<8x512xbf16>,
    %c0_174 = arith.constant 0 : index
    %c129_175 = arith.constant 129 : index
    %153 = vector.load %arg11[%c0_174, %c129_175] : memref<8x896xbf16, #tpu.memory_space<vmem>>, vector<8x512xbf16>
    %c80 = arith.constant 80 : index
    %c0_176 = arith.constant 0 : index
    %154 = vector.load %arg14[%c80, %c0_176] : memref<217x512xbf16, #tpu.memory_space<vmem>>, vector<8x512xbf16>
    tpu.vector_store %arg14[%c80, %c0_176], %153 {strides = array<i32>} : memref<217x512xbf16, #tpu.memory_space<vmem>>, vector<8x512xbf16>,
    %c0_177 = arith.constant 0 : index
    %c130_178 = arith.constant 130 : index
    %155 = vector.load %arg11[%c0_177, %c130_178] : memref<8x896xbf16, #tpu.memory_space<vmem>>, vector<8x512xbf16>
    %c88 = arith.constant 88 : index
    %c0_179 = arith.constant 0 : index
    %156 = vector.load %arg14[%c88, %c0_179] : memref<217x512xbf16, #tpu.memory_space<vmem>>, vector<8x512xbf16>
    tpu.vector_store %arg14[%c88, %c0_179], %155 {strides = array<i32>} : memref<217x512xbf16, #tpu.memory_space<vmem>>, vector<8x512xbf16>,
    %c0_180 = arith.constant 0 : index
    %c134 = arith.constant 134 : index
    %157 = vector.load %arg11[%c0_180, %c134] : memref<8x896xbf16, #tpu.memory_space<vmem>>, vector<8x512xbf16>
    %c96 = arith.constant 96 : index
    %c0_181 = arith.constant 0 : index
    %158 = vector.load %arg14[%c96, %c0_181] : memref<217x512xbf16, #tpu.memory_space<vmem>>, vector<8x512xbf16>
    tpu.vector_store %arg14[%c96, %c0_181], %157 {strides = array<i32>} : memref<217x512xbf16, #tpu.memory_space<vmem>>, vector<8x512xbf16>,
    %c0_182 = arith.constant 0 : index
    %c135 = arith.constant 135 : index
    %159 = vector.load %arg11[%c0_182, %c135] : memref<8x896xbf16, #tpu.memory_space<vmem>>, vector<8x512xbf16>
    %c104 = arith.constant 104 : index
    %c0_183 = arith.constant 0 : index
    %160 = vector.load %arg14[%c104, %c0_183] : memref<217x512xbf16, #tpu.memory_space<vmem>>, vector<8x512xbf16>
    tpu.vector_store %arg14[%c104, %c0_183], %159 {strides = array<i32>} : memref<217x512xbf16, #tpu.memory_space<vmem>>, vector<8x512xbf16>,
    %c0_184 = arith.constant 0 : index
    %c136 = arith.constant 136 : index
    %161 = vector.load %arg11[%c0_184, %c136] : memref<8x896xbf16, #tpu.memory_space<vmem>>, vector<8x512xbf16>
    %c112 = arith.constant 112 : index
    %c0_185 = arith.constant 0 : index
    %162 = vector.load %arg14[%c112, %c0_185] : memref<217x512xbf16, #tpu.memory_space<vmem>>, vector<8x512xbf16>
    tpu.vector_store %arg14[%c112, %c0_185], %161 {strides = array<i32>} : memref<217x512xbf16, #tpu.memory_space<vmem>>, vector<8x512xbf16>,
    %c0_186 = arith.constant 0 : index
    %c140_187 = arith.constant 140 : index
    %163 = vector.load %arg11[%c0_186, %c140_187] : memref<8x896xbf16, #tpu.memory_space<vmem>>, vector<8x512xbf16>
    %c120 = arith.constant 120 : index
    %c0_188 = arith.constant 0 : index
    %164 = vector.load %arg14[%c120, %c0_188] : memref<217x512xbf16, #tpu.memory_space<vmem>>, vector<8x512xbf16>
    tpu.vector_store %arg14[%c120, %c0_188], %163 {strides = array<i32>} : memref<217x512xbf16, #tpu.memory_space<vmem>>, vector<8x512xbf16>,
    %c0_189 = arith.constant 0 : index
    %c141 = arith.constant 141 : index
    %165 = vector.load %arg11[%c0_189, %c141] : memref<8x896xbf16, #tpu.memory_space<vmem>>, vector<8x512xbf16>
    %c128_190 = arith.constant 128 : index
    %c0_191 = arith.constant 0 : index
    %166 = vector.load %arg14[%c128_190, %c0_191] : memref<217x512xbf16, #tpu.memory_space<vmem>>, vector<8x512xbf16>
    tpu.vector_store %arg14[%c128_190, %c0_191], %165 {strides = array<i32>} : memref<217x512xbf16, #tpu.memory_space<vmem>>, vector<8x512xbf16>,
    %c0_192 = arith.constant 0 : index
    %c142 = arith.constant 142 : index
    %167 = vector.load %arg11[%c0_192, %c142] : memref<8x896xbf16, #tpu.memory_space<vmem>>, vector<8x512xbf16>
    %c136_193 = arith.constant 136 : index
    %c0_194 = arith.constant 0 : index
    %168 = vector.load %arg14[%c136_193, %c0_194] : memref<217x512xbf16, #tpu.memory_space<vmem>>, vector<8x512xbf16>
    tpu.vector_store %arg14[%c136_193, %c0_194], %167 {strides = array<i32>} : memref<217x512xbf16, #tpu.memory_space<vmem>>, vector<8x512xbf16>,
    %c0_195 = arith.constant 0 : index
    %c256_196 = arith.constant 256 : index
    %169 = vector.load %arg11[%c0_195, %c256_196] : memref<8x896xbf16, #tpu.memory_space<vmem>>, vector<8x512xbf16>
    %c144 = arith.constant 144 : index
    %c0_197 = arith.constant 0 : index
    %170 = vector.load %arg14[%c144, %c0_197] : memref<217x512xbf16, #tpu.memory_space<vmem>>, vector<8x512xbf16>
    tpu.vector_store %arg14[%c144, %c0_197], %169 {strides = array<i32>} : memref<217x512xbf16, #tpu.memory_space<vmem>>, vector<8x512xbf16>,
    %c0_198 = arith.constant 0 : index
    %c257_199 = arith.constant 257 : index
    %171 = vector.load %arg11[%c0_198, %c257_199] : memref<8x896xbf16, #tpu.memory_space<vmem>>, vector<8x512xbf16>
    %c152 = arith.constant 152 : index
    %c0_200 = arith.constant 0 : index
    %172 = vector.load %arg14[%c152, %c0_200] : memref<217x512xbf16, #tpu.memory_space<vmem>>, vector<8x512xbf16>
    tpu.vector_store %arg14[%c152, %c0_200], %171 {strides = array<i32>} : memref<217x512xbf16, #tpu.memory_space<vmem>>, vector<8x512xbf16>,
    %c0_201 = arith.constant 0 : index
    %c258_202 = arith.constant 258 : index
    %173 = vector.load %arg11[%c0_201, %c258_202] : memref<8x896xbf16, #tpu.memory_space<vmem>>, vector<8x512xbf16>
    %c160 = arith.constant 160 : index
    %c0_203 = arith.constant 0 : index
    %174 = vector.load %arg14[%c160, %c0_203] : memref<217x512xbf16, #tpu.memory_space<vmem>>, vector<8x512xbf16>
    tpu.vector_store %arg14[%c160, %c0_203], %173 {strides = array<i32>} : memref<217x512xbf16, #tpu.memory_space<vmem>>, vector<8x512xbf16>,
    %c0_204 = arith.constant 0 : index
    %c262 = arith.constant 262 : index
    %175 = vector.load %arg11[%c0_204, %c262] : memref<8x896xbf16, #tpu.memory_space<vmem>>, vector<8x512xbf16>
    %c168 = arith.constant 168 : index
    %c0_205 = arith.constant 0 : index
    %176 = vector.load %arg14[%c168, %c0_205] : memref<217x512xbf16, #tpu.memory_space<vmem>>, vector<8x512xbf16>
    tpu.vector_store %arg14[%c168, %c0_205], %175 {strides = array<i32>} : memref<217x512xbf16, #tpu.memory_space<vmem>>, vector<8x512xbf16>,
    %c0_206 = arith.constant 0 : index
    %c263 = arith.constant 263 : index
    %177 = vector.load %arg11[%c0_206, %c263] : memref<8x896xbf16, #tpu.memory_space<vmem>>, vector<8x512xbf16>
    %c176 = arith.constant 176 : index
    %c0_207 = arith.constant 0 : index
    %178 = vector.load %arg14[%c176, %c0_207] : memref<217x512xbf16, #tpu.memory_space<vmem>>, vector<8x512xbf16>
    tpu.vector_store %arg14[%c176, %c0_207], %177 {strides = array<i32>} : memref<217x512xbf16, #tpu.memory_space<vmem>>, vector<8x512xbf16>,
    %c0_208 = arith.constant 0 : index
    %c264 = arith.constant 264 : index
    %179 = vector.load %arg11[%c0_208, %c264] : memref<8x896xbf16, #tpu.memory_space<vmem>>, vector<8x512xbf16>
    %c184 = arith.constant 184 : index
    %c0_209 = arith.constant 0 : index
    %180 = vector.load %arg14[%c184, %c0_209] : memref<217x512xbf16, #tpu.memory_space<vmem>>, vector<8x512xbf16>
    tpu.vector_store %arg14[%c184, %c0_209], %179 {strides = array<i32>} : memref<217x512xbf16, #tpu.memory_space<vmem>>, vector<8x512xbf16>,
    %c0_210 = arith.constant 0 : index
    %c268_211 = arith.constant 268 : index
    %181 = vector.load %arg11[%c0_210, %c268_211] : memref<8x896xbf16, #tpu.memory_space<vmem>>, vector<8x512xbf16>
    %c192 = arith.constant 192 : index
    %c0_212 = arith.constant 0 : index
    %182 = vector.load %arg14[%c192, %c0_212] : memref<217x512xbf16, #tpu.memory_space<vmem>>, vector<8x512xbf16>
    tpu.vector_store %arg14[%c192, %c0_212], %181 {strides = array<i32>} : memref<217x512xbf16, #tpu.memory_space<vmem>>, vector<8x512xbf16>,
    %c0_213 = arith.constant 0 : index
    %c269 = arith.constant 269 : index
    %183 = vector.load %arg11[%c0_213, %c269] : memref<8x896xbf16, #tpu.memory_space<vmem>>, vector<8x512xbf16>
    %c200 = arith.constant 200 : index
    %c0_214 = arith.constant 0 : index
    %184 = vector.load %arg14[%c200, %c0_214] : memref<217x512xbf16, #tpu.memory_space<vmem>>, vector<8x512xbf16>
    tpu.vector_store %arg14[%c200, %c0_214], %183 {strides = array<i32>} : memref<217x512xbf16, #tpu.memory_space<vmem>>, vector<8x512xbf16>,
    %c0_215 = arith.constant 0 : index
    %c270 = arith.constant 270 : index
    %185 = vector.load %arg11[%c0_215, %c270] : memref<8x896xbf16, #tpu.memory_space<vmem>>, vector<8x512xbf16>
    %c208 = arith.constant 208 : index
    %c0_216 = arith.constant 0 : index
    %186 = vector.load %arg14[%c208, %c0_216] : memref<217x512xbf16, #tpu.memory_space<vmem>>, vector<8x512xbf16>
    tpu.vector_store %arg14[%c208, %c0_216], %185 {strides = array<i32>} : memref<217x512xbf16, #tpu.memory_space<vmem>>, vector<8x512xbf16>,
    %c216 = arith.constant 216 : index
    %c0_217 = arith.constant 0 : index
    %187 = vector.load %arg14[%c216, %c0_217] : memref<217x512xbf16, #tpu.memory_space<vmem>>, vector<1x512xbf16>
    tpu.vector_store %arg14[%c216, %c0_217], %1 {strides = array<i32>} : memref<217x512xbf16, #tpu.memory_space<vmem>>, vector<1x512xbf16>,
    %c0_218 = arith.constant 0 : index
    %c0_219 = arith.constant 0 : index
    %188 = vector.load %arg3[%c0_218, %c0_219] : memref<16x217xbf16, #tpu.memory_space<vmem>>, vector<16x217xbf16>
    %c0_220 = arith.constant 0 : index
    %c0_221 = arith.constant 0 : index
    %189 = vector.load %arg14[%c0_220, %c0_221] : memref<217x512xbf16, #tpu.memory_space<vmem>>, vector<217x512xbf16>
    %cst_222 = arith.constant dense<0.000000e+00> : vector<16x512xf32>
    %190 = tpu.matmul %188, %189, %cst_222 {dimension_numbers = #tpu.dot_dimension_numbers<[1], [0], [0], [1], [0, 0, 1, 1], [], []>} : vector<16x217xbf16>, vector<217x512xbf16>, vector<16x512xf32> -> vector<16x512xf32>
    %cst_223 = arith.constant 0.000000e+00 : f32
    %191 = vector.broadcast %cst_223 : f32 to vector<16x512xf32>
    %192 = arith.maximumf %190, %191 : vector<16x512xf32>
    %193 = arith.truncf %192 : vector<16x512xf32> to vector<16x512xbf16>
    %cst_224 = arith.constant 0.000000e+00 : bf16
    %194 = vector.broadcast %cst_224 : bf16 to vector<16x1408xbf16>
    %c0_225 = arith.constant 0 : index
    %c0_226 = arith.constant 0 : index
    %195 = vector.load %arg12[%c0_225, %c0_226] : memref<16x1408xbf16, #tpu.memory_space<vmem>>, vector<16x1408xbf16>
    tpu.vector_store %arg12[%c0_225, %c0_226], %194 {strides = array<i32>} : memref<16x1408xbf16, #tpu.memory_space<vmem>>, vector<16x1408xbf16>,
    %196 = vector.extract_strided_slice %193 {offsets = [0, 0], sizes = [16, 128], strides = [1, 1]} : vector<16x512xbf16> to vector<16x128xbf16>
    %c0_227 = arith.constant 0 : index
    %c0_228 = arith.constant 0 : index
    %197 = vector.load %arg8[%c0_227, %c0_228] : memref<128x128xbf16, #tpu.memory_space<vmem>>, vector<128x128xbf16>
    %cst_229 = arith.constant dense<0.000000e+00> : vector<16x128xf32>
    %198 = tpu.matmul %196, %197, %cst_229 {dimension_numbers = #tpu.dot_dimension_numbers<[1], [0], [0], [1], [0, 0, 1, 1], [], []>} : vector<16x128xbf16>, vector<128x128xbf16>, vector<16x128xf32> -> vector<16x128xf32>
    %199 = arith.truncf %198 : vector<16x128xf32> to vector<16x128xbf16>
    %c0_230 = arith.constant 0 : index
    %c128_231 = arith.constant 128 : index
    %200 = vector.load %arg12[%c0_230, %c128_231] : memref<16x1408xbf16, #tpu.memory_space<vmem>>, vector<16x128xbf16>
    tpu.vector_store %arg12[%c0_230, %c128_231], %199 {strides = array<i32>} : memref<16x1408xbf16, #tpu.memory_space<vmem>>, vector<16x128xbf16>,
    %c0_232 = arith.constant 0 : index
    %c256_233 = arith.constant 256 : index
    %201 = vector.load %arg12[%c0_232, %c256_233] : memref<16x1408xbf16, #tpu.memory_space<vmem>>, vector<16x128xbf16>
    tpu.vector_store %arg12[%c0_232, %c256_233], %199 {strides = array<i32>} : memref<16x1408xbf16, #tpu.memory_space<vmem>>, vector<16x128xbf16>,
    %202 = vector.extract_strided_slice %193 {offsets = [0, 128], sizes = [16, 128], strides = [1, 1]} : vector<16x512xbf16> to vector<16x128xbf16>
    %c0_234 = arith.constant 0 : index
    %c0_235 = arith.constant 0 : index
    %203 = vector.load %arg8[%c0_234, %c0_235] : memref<128x128xbf16, #tpu.memory_space<vmem>>, vector<128x128xbf16>
    %cst_236 = arith.constant dense<0.000000e+00> : vector<16x128xf32>
    %204 = tpu.matmul %202, %203, %cst_236 {dimension_numbers = #tpu.dot_dimension_numbers<[1], [0], [0], [1], [0, 0, 1, 1], [], []>} : vector<16x128xbf16>, vector<128x128xbf16>, vector<16x128xf32> -> vector<16x128xf32>
    %205 = arith.truncf %204 : vector<16x128xf32> to vector<16x128xbf16>
    %c0_237 = arith.constant 0 : index
    %c384_238 = arith.constant 384 : index
    %206 = vector.load %arg12[%c0_237, %c384_238] : memref<16x1408xbf16, #tpu.memory_space<vmem>>, vector<16x128xbf16>
    tpu.vector_store %arg12[%c0_237, %c384_238], %205 {strides = array<i32>} : memref<16x1408xbf16, #tpu.memory_space<vmem>>, vector<16x128xbf16>,
    %c0_239 = arith.constant 0 : index
    %c512_240 = arith.constant 512 : index
    %207 = vector.load %arg12[%c0_239, %c512_240] : memref<16x1408xbf16, #tpu.memory_space<vmem>>, vector<16x128xbf16>
    tpu.vector_store %arg12[%c0_239, %c512_240], %205 {strides = array<i32>} : memref<16x1408xbf16, #tpu.memory_space<vmem>>, vector<16x128xbf16>,
    %208 = vector.extract_strided_slice %193 {offsets = [0, 256], sizes = [16, 128], strides = [1, 1]} : vector<16x512xbf16> to vector<16x128xbf16>
    %c0_241 = arith.constant 0 : index
    %c0_242 = arith.constant 0 : index
    %209 = vector.load %arg8[%c0_241, %c0_242] : memref<128x128xbf16, #tpu.memory_space<vmem>>, vector<128x128xbf16>
    %cst_243 = arith.constant dense<0.000000e+00> : vector<16x128xf32>
    %210 = tpu.matmul %208, %209, %cst_243 {dimension_numbers = #tpu.dot_dimension_numbers<[1], [0], [0], [1], [0, 0, 1, 1], [], []>} : vector<16x128xbf16>, vector<128x128xbf16>, vector<16x128xf32> -> vector<16x128xf32>
    %211 = arith.truncf %210 : vector<16x128xf32> to vector<16x128xbf16>
    %c0_244 = arith.constant 0 : index
    %c640 = arith.constant 640 : index
    %212 = vector.load %arg12[%c0_244, %c640] : memref<16x1408xbf16, #tpu.memory_space<vmem>>, vector<16x128xbf16>
    tpu.vector_store %arg12[%c0_244, %c640], %211 {strides = array<i32>} : memref<16x1408xbf16, #tpu.memory_space<vmem>>, vector<16x128xbf16>,
    %c0_245 = arith.constant 0 : index
    %c768 = arith.constant 768 : index
    %213 = vector.load %arg12[%c0_245, %c768] : memref<16x1408xbf16, #tpu.memory_space<vmem>>, vector<16x128xbf16>
    tpu.vector_store %arg12[%c0_245, %c768], %211 {strides = array<i32>} : memref<16x1408xbf16, #tpu.memory_space<vmem>>, vector<16x128xbf16>,
    %214 = vector.extract_strided_slice %193 {offsets = [0, 384], sizes = [16, 128], strides = [1, 1]} : vector<16x512xbf16> to vector<16x128xbf16>
    %c0_246 = arith.constant 0 : index
    %c0_247 = arith.constant 0 : index
    %215 = vector.load %arg8[%c0_246, %c0_247] : memref<128x128xbf16, #tpu.memory_space<vmem>>, vector<128x128xbf16>
    %cst_248 = arith.constant dense<0.000000e+00> : vector<16x128xf32>
    %216 = tpu.matmul %214, %215, %cst_248 {dimension_numbers = #tpu.dot_dimension_numbers<[1], [0], [0], [1], [0, 0, 1, 1], [], []>} : vector<16x128xbf16>, vector<128x128xbf16>, vector<16x128xf32> -> vector<16x128xf32>
    %217 = arith.truncf %216 : vector<16x128xf32> to vector<16x128xbf16>
    %c0_249 = arith.constant 0 : index
    %c896 = arith.constant 896 : index
    %218 = vector.load %arg12[%c0_249, %c896] : memref<16x1408xbf16, #tpu.memory_space<vmem>>, vector<16x128xbf16>
    tpu.vector_store %arg12[%c0_249, %c896], %217 {strides = array<i32>} : memref<16x1408xbf16, #tpu.memory_space<vmem>>, vector<16x128xbf16>,
    %c0_250 = arith.constant 0 : index
    %c1024 = arith.constant 1024 : index
    %219 = vector.load %arg12[%c0_250, %c1024] : memref<16x1408xbf16, #tpu.memory_space<vmem>>, vector<16x128xbf16>
    tpu.vector_store %arg12[%c0_250, %c1024], %217 {strides = array<i32>} : memref<16x1408xbf16, #tpu.memory_space<vmem>>, vector<16x128xbf16>,
    %c0_251 = arith.constant 0 : index
    %c0_252 = arith.constant 0 : index
    %220 = vector.load %arg12[%c0_251, %c0_252] : memref<16x1408xbf16, #tpu.memory_space<vmem>>, vector<16x1024xbf16>
    %c0_253 = arith.constant 0 : index
    %c0_254 = arith.constant 0 : index
    %221 = vector.load %arg15[%c0_253, %c0_254] : memref<649x1024xbf16, #tpu.memory_space<vmem>>, vector<16x1024xbf16>
    tpu.vector_store %arg15[%c0_253, %c0_254], %220 {strides = array<i32>} : memref<649x1024xbf16, #tpu.memory_space<vmem>>, vector<16x1024xbf16>,
    %c0_255 = arith.constant 0 : index
    %c0_256 = arith.constant 0 : index
    %222 = vector.load %arg10[%c0_255, %c0_256] : memref<8x1408xbf16, #tpu.memory_space<vmem>>, vector<8x1024xbf16>
    %c432 = arith.constant 432 : index
    %c0_257 = arith.constant 0 : index
    %223 = vector.load %arg15[%c432, %c0_257] : memref<649x1024xbf16, #tpu.memory_space<vmem>>, vector<8x1024xbf16>
    tpu.vector_store %arg15[%c432, %c0_257], %222 {strides = array<i32>} : memref<649x1024xbf16, #tpu.memory_space<vmem>>, vector<8x1024xbf16>,
    %c0_258 = arith.constant 0 : index
    %c1_259 = arith.constant 1 : index
    %224 = vector.load %arg12[%c0_258, %c1_259] : memref<16x1408xbf16, #tpu.memory_space<vmem>>, vector<16x1024xbf16>
    %c16_260 = arith.constant 16 : index
    %c0_261 = arith.constant 0 : index
    %225 = vector.load %arg15[%c16_260, %c0_261] : memref<649x1024xbf16, #tpu.memory_space<vmem>>, vector<16x1024xbf16>
    tpu.vector_store %arg15[%c16_260, %c0_261], %224 {strides = array<i32>} : memref<649x1024xbf16, #tpu.memory_space<vmem>>, vector<16x1024xbf16>,
    %c0_262 = arith.constant 0 : index
    %c1_263 = arith.constant 1 : index
    %226 = vector.load %arg10[%c0_262, %c1_263] : memref<8x1408xbf16, #tpu.memory_space<vmem>>, vector<8x1024xbf16>
    %c440 = arith.constant 440 : index
    %c0_264 = arith.constant 0 : index
    %227 = vector.load %arg15[%c440, %c0_264] : memref<649x1024xbf16, #tpu.memory_space<vmem>>, vector<8x1024xbf16>
    tpu.vector_store %arg15[%c440, %c0_264], %226 {strides = array<i32>} : memref<649x1024xbf16, #tpu.memory_space<vmem>>, vector<8x1024xbf16>,
    %c0_265 = arith.constant 0 : index
    %c2_266 = arith.constant 2 : index
    %228 = vector.load %arg12[%c0_265, %c2_266] : memref<16x1408xbf16, #tpu.memory_space<vmem>>, vector<16x1024xbf16>
    %c32_267 = arith.constant 32 : index
    %c0_268 = arith.constant 0 : index
    %229 = vector.load %arg15[%c32_267, %c0_268] : memref<649x1024xbf16, #tpu.memory_space<vmem>>, vector<16x1024xbf16>
    tpu.vector_store %arg15[%c32_267, %c0_268], %228 {strides = array<i32>} : memref<649x1024xbf16, #tpu.memory_space<vmem>>, vector<16x1024xbf16>,
    %c0_269 = arith.constant 0 : index
    %c2_270 = arith.constant 2 : index
    %230 = vector.load %arg10[%c0_269, %c2_270] : memref<8x1408xbf16, #tpu.memory_space<vmem>>, vector<8x1024xbf16>
    %c448 = arith.constant 448 : index
    %c0_271 = arith.constant 0 : index
    %231 = vector.load %arg15[%c448, %c0_271] : memref<649x1024xbf16, #tpu.memory_space<vmem>>, vector<8x1024xbf16>
    tpu.vector_store %arg15[%c448, %c0_271], %230 {strides = array<i32>} : memref<649x1024xbf16, #tpu.memory_space<vmem>>, vector<8x1024xbf16>,
    %c0_272 = arith.constant 0 : index
    %c10_273 = arith.constant 10 : index
    %232 = vector.load %arg12[%c0_272, %c10_273] : memref<16x1408xbf16, #tpu.memory_space<vmem>>, vector<16x1024xbf16>
    %c48_274 = arith.constant 48 : index
    %c0_275 = arith.constant 0 : index
    %233 = vector.load %arg15[%c48_274, %c0_275] : memref<649x1024xbf16, #tpu.memory_space<vmem>>, vector<16x1024xbf16>
    tpu.vector_store %arg15[%c48_274, %c0_275], %232 {strides = array<i32>} : memref<649x1024xbf16, #tpu.memory_space<vmem>>, vector<16x1024xbf16>,
    %c0_276 = arith.constant 0 : index
    %c10_277 = arith.constant 10 : index
    %234 = vector.load %arg10[%c0_276, %c10_277] : memref<8x1408xbf16, #tpu.memory_space<vmem>>, vector<8x1024xbf16>
    %c456 = arith.constant 456 : index
    %c0_278 = arith.constant 0 : index
    %235 = vector.load %arg15[%c456, %c0_278] : memref<649x1024xbf16, #tpu.memory_space<vmem>>, vector<8x1024xbf16>
    tpu.vector_store %arg15[%c456, %c0_278], %234 {strides = array<i32>} : memref<649x1024xbf16, #tpu.memory_space<vmem>>, vector<8x1024xbf16>,
    %c0_279 = arith.constant 0 : index
    %c11_280 = arith.constant 11 : index
    %236 = vector.load %arg12[%c0_279, %c11_280] : memref<16x1408xbf16, #tpu.memory_space<vmem>>, vector<16x1024xbf16>
    %c64_281 = arith.constant 64 : index
    %c0_282 = arith.constant 0 : index
    %237 = vector.load %arg15[%c64_281, %c0_282] : memref<649x1024xbf16, #tpu.memory_space<vmem>>, vector<16x1024xbf16>
    tpu.vector_store %arg15[%c64_281, %c0_282], %236 {strides = array<i32>} : memref<649x1024xbf16, #tpu.memory_space<vmem>>, vector<16x1024xbf16>,
    %c0_283 = arith.constant 0 : index
    %c11_284 = arith.constant 11 : index
    %238 = vector.load %arg10[%c0_283, %c11_284] : memref<8x1408xbf16, #tpu.memory_space<vmem>>, vector<8x1024xbf16>
    %c464 = arith.constant 464 : index
    %c0_285 = arith.constant 0 : index
    %239 = vector.load %arg15[%c464, %c0_285] : memref<649x1024xbf16, #tpu.memory_space<vmem>>, vector<8x1024xbf16>
    tpu.vector_store %arg15[%c464, %c0_285], %238 {strides = array<i32>} : memref<649x1024xbf16, #tpu.memory_space<vmem>>, vector<8x1024xbf16>,
    %c0_286 = arith.constant 0 : index
    %c12_287 = arith.constant 12 : index
    %240 = vector.load %arg12[%c0_286, %c12_287] : memref<16x1408xbf16, #tpu.memory_space<vmem>>, vector<16x1024xbf16>
    %c80_288 = arith.constant 80 : index
    %c0_289 = arith.constant 0 : index
    %241 = vector.load %arg15[%c80_288, %c0_289] : memref<649x1024xbf16, #tpu.memory_space<vmem>>, vector<16x1024xbf16>
    tpu.vector_store %arg15[%c80_288, %c0_289], %240 {strides = array<i32>} : memref<649x1024xbf16, #tpu.memory_space<vmem>>, vector<16x1024xbf16>,
    %c0_290 = arith.constant 0 : index
    %c12_291 = arith.constant 12 : index
    %242 = vector.load %arg10[%c0_290, %c12_291] : memref<8x1408xbf16, #tpu.memory_space<vmem>>, vector<8x1024xbf16>
    %c472 = arith.constant 472 : index
    %c0_292 = arith.constant 0 : index
    %243 = vector.load %arg15[%c472, %c0_292] : memref<649x1024xbf16, #tpu.memory_space<vmem>>, vector<8x1024xbf16>
    tpu.vector_store %arg15[%c472, %c0_292], %242 {strides = array<i32>} : memref<649x1024xbf16, #tpu.memory_space<vmem>>, vector<8x1024xbf16>,
    %c0_293 = arith.constant 0 : index
    %c20_294 = arith.constant 20 : index
    %244 = vector.load %arg12[%c0_293, %c20_294] : memref<16x1408xbf16, #tpu.memory_space<vmem>>, vector<16x1024xbf16>
    %c96_295 = arith.constant 96 : index
    %c0_296 = arith.constant 0 : index
    %245 = vector.load %arg15[%c96_295, %c0_296] : memref<649x1024xbf16, #tpu.memory_space<vmem>>, vector<16x1024xbf16>
    tpu.vector_store %arg15[%c96_295, %c0_296], %244 {strides = array<i32>} : memref<649x1024xbf16, #tpu.memory_space<vmem>>, vector<16x1024xbf16>,
    %c0_297 = arith.constant 0 : index
    %c20_298 = arith.constant 20 : index
    %246 = vector.load %arg10[%c0_297, %c20_298] : memref<8x1408xbf16, #tpu.memory_space<vmem>>, vector<8x1024xbf16>
    %c480 = arith.constant 480 : index
    %c0_299 = arith.constant 0 : index
    %247 = vector.load %arg15[%c480, %c0_299] : memref<649x1024xbf16, #tpu.memory_space<vmem>>, vector<8x1024xbf16>
    tpu.vector_store %arg15[%c480, %c0_299], %246 {strides = array<i32>} : memref<649x1024xbf16, #tpu.memory_space<vmem>>, vector<8x1024xbf16>,
    %c0_300 = arith.constant 0 : index
    %c21_301 = arith.constant 21 : index
    %248 = vector.load %arg12[%c0_300, %c21_301] : memref<16x1408xbf16, #tpu.memory_space<vmem>>, vector<16x1024xbf16>
    %c112_302 = arith.constant 112 : index
    %c0_303 = arith.constant 0 : index
    %249 = vector.load %arg15[%c112_302, %c0_303] : memref<649x1024xbf16, #tpu.memory_space<vmem>>, vector<16x1024xbf16>
    tpu.vector_store %arg15[%c112_302, %c0_303], %248 {strides = array<i32>} : memref<649x1024xbf16, #tpu.memory_space<vmem>>, vector<16x1024xbf16>,
    %c0_304 = arith.constant 0 : index
    %c21_305 = arith.constant 21 : index
    %250 = vector.load %arg10[%c0_304, %c21_305] : memref<8x1408xbf16, #tpu.memory_space<vmem>>, vector<8x1024xbf16>
    %c488 = arith.constant 488 : index
    %c0_306 = arith.constant 0 : index
    %251 = vector.load %arg15[%c488, %c0_306] : memref<649x1024xbf16, #tpu.memory_space<vmem>>, vector<8x1024xbf16>
    tpu.vector_store %arg15[%c488, %c0_306], %250 {strides = array<i32>} : memref<649x1024xbf16, #tpu.memory_space<vmem>>, vector<8x1024xbf16>,
    %c0_307 = arith.constant 0 : index
    %c22_308 = arith.constant 22 : index
    %252 = vector.load %arg12[%c0_307, %c22_308] : memref<16x1408xbf16, #tpu.memory_space<vmem>>, vector<16x1024xbf16>
    %c128_309 = arith.constant 128 : index
    %c0_310 = arith.constant 0 : index
    %253 = vector.load %arg15[%c128_309, %c0_310] : memref<649x1024xbf16, #tpu.memory_space<vmem>>, vector<16x1024xbf16>
    tpu.vector_store %arg15[%c128_309, %c0_310], %252 {strides = array<i32>} : memref<649x1024xbf16, #tpu.memory_space<vmem>>, vector<16x1024xbf16>,
    %c0_311 = arith.constant 0 : index
    %c22_312 = arith.constant 22 : index
    %254 = vector.load %arg10[%c0_311, %c22_312] : memref<8x1408xbf16, #tpu.memory_space<vmem>>, vector<8x1024xbf16>
    %c496 = arith.constant 496 : index
    %c0_313 = arith.constant 0 : index
    %255 = vector.load %arg15[%c496, %c0_313] : memref<649x1024xbf16, #tpu.memory_space<vmem>>, vector<8x1024xbf16>
    tpu.vector_store %arg15[%c496, %c0_313], %254 {strides = array<i32>} : memref<649x1024xbf16, #tpu.memory_space<vmem>>, vector<8x1024xbf16>,
    %c0_314 = arith.constant 0 : index
    %c128_315 = arith.constant 128 : index
    %256 = vector.load %arg12[%c0_314, %c128_315] : memref<16x1408xbf16, #tpu.memory_space<vmem>>, vector<16x1024xbf16>
    %c144_316 = arith.constant 144 : index
    %c0_317 = arith.constant 0 : index
    %257 = vector.load %arg15[%c144_316, %c0_317] : memref<649x1024xbf16, #tpu.memory_space<vmem>>, vector<16x1024xbf16>
    tpu.vector_store %arg15[%c144_316, %c0_317], %256 {strides = array<i32>} : memref<649x1024xbf16, #tpu.memory_space<vmem>>, vector<16x1024xbf16>,
    %c0_318 = arith.constant 0 : index
    %c128_319 = arith.constant 128 : index
    %258 = vector.load %arg10[%c0_318, %c128_319] : memref<8x1408xbf16, #tpu.memory_space<vmem>>, vector<8x1024xbf16>
    %c504 = arith.constant 504 : index
    %c0_320 = arith.constant 0 : index
    %259 = vector.load %arg15[%c504, %c0_320] : memref<649x1024xbf16, #tpu.memory_space<vmem>>, vector<8x1024xbf16>
    tpu.vector_store %arg15[%c504, %c0_320], %258 {strides = array<i32>} : memref<649x1024xbf16, #tpu.memory_space<vmem>>, vector<8x1024xbf16>,
    %c0_321 = arith.constant 0 : index
    %c129_322 = arith.constant 129 : index
    %260 = vector.load %arg12[%c0_321, %c129_322] : memref<16x1408xbf16, #tpu.memory_space<vmem>>, vector<16x1024xbf16>
    %c160_323 = arith.constant 160 : index
    %c0_324 = arith.constant 0 : index
    %261 = vector.load %arg15[%c160_323, %c0_324] : memref<649x1024xbf16, #tpu.memory_space<vmem>>, vector<16x1024xbf16>
    tpu.vector_store %arg15[%c160_323, %c0_324], %260 {strides = array<i32>} : memref<649x1024xbf16, #tpu.memory_space<vmem>>, vector<16x1024xbf16>,
    %c0_325 = arith.constant 0 : index
    %c129_326 = arith.constant 129 : index
    %262 = vector.load %arg10[%c0_325, %c129_326] : memref<8x1408xbf16, #tpu.memory_space<vmem>>, vector<8x1024xbf16>
    %c512_327 = arith.constant 512 : index
    %c0_328 = arith.constant 0 : index
    %263 = vector.load %arg15[%c512_327, %c0_328] : memref<649x1024xbf16, #tpu.memory_space<vmem>>, vector<8x1024xbf16>
    tpu.vector_store %arg15[%c512_327, %c0_328], %262 {strides = array<i32>} : memref<649x1024xbf16, #tpu.memory_space<vmem>>, vector<8x1024xbf16>,
    %c0_329 = arith.constant 0 : index
    %c130_330 = arith.constant 130 : index
    %264 = vector.load %arg12[%c0_329, %c130_330] : memref<16x1408xbf16, #tpu.memory_space<vmem>>, vector<16x1024xbf16>
    %c176_331 = arith.constant 176 : index
    %c0_332 = arith.constant 0 : index
    %265 = vector.load %arg15[%c176_331, %c0_332] : memref<649x1024xbf16, #tpu.memory_space<vmem>>, vector<16x1024xbf16>
    tpu.vector_store %arg15[%c176_331, %c0_332], %264 {strides = array<i32>} : memref<649x1024xbf16, #tpu.memory_space<vmem>>, vector<16x1024xbf16>,
    %c0_333 = arith.constant 0 : index
    %c130_334 = arith.constant 130 : index
    %266 = vector.load %arg10[%c0_333, %c130_334] : memref<8x1408xbf16, #tpu.memory_space<vmem>>, vector<8x1024xbf16>
    %c520 = arith.constant 520 : index
    %c0_335 = arith.constant 0 : index
    %267 = vector.load %arg15[%c520, %c0_335] : memref<649x1024xbf16, #tpu.memory_space<vmem>>, vector<8x1024xbf16>
    tpu.vector_store %arg15[%c520, %c0_335], %266 {strides = array<i32>} : memref<649x1024xbf16, #tpu.memory_space<vmem>>, vector<8x1024xbf16>,
    %c0_336 = arith.constant 0 : index
    %c138_337 = arith.constant 138 : index
    %268 = vector.load %arg12[%c0_336, %c138_337] : memref<16x1408xbf16, #tpu.memory_space<vmem>>, vector<16x1024xbf16>
    %c192_338 = arith.constant 192 : index
    %c0_339 = arith.constant 0 : index
    %269 = vector.load %arg15[%c192_338, %c0_339] : memref<649x1024xbf16, #tpu.memory_space<vmem>>, vector<16x1024xbf16>
    tpu.vector_store %arg15[%c192_338, %c0_339], %268 {strides = array<i32>} : memref<649x1024xbf16, #tpu.memory_space<vmem>>, vector<16x1024xbf16>,
    %c0_340 = arith.constant 0 : index
    %c138_341 = arith.constant 138 : index
    %270 = vector.load %arg10[%c0_340, %c138_341] : memref<8x1408xbf16, #tpu.memory_space<vmem>>, vector<8x1024xbf16>
    %c528 = arith.constant 528 : index
    %c0_342 = arith.constant 0 : index
    %271 = vector.load %arg15[%c528, %c0_342] : memref<649x1024xbf16, #tpu.memory_space<vmem>>, vector<8x1024xbf16>
    tpu.vector_store %arg15[%c528, %c0_342], %270 {strides = array<i32>} : memref<649x1024xbf16, #tpu.memory_space<vmem>>, vector<8x1024xbf16>,
    %c0_343 = arith.constant 0 : index
    %c139_344 = arith.constant 139 : index
    %272 = vector.load %arg12[%c0_343, %c139_344] : memref<16x1408xbf16, #tpu.memory_space<vmem>>, vector<16x1024xbf16>
    %c208_345 = arith.constant 208 : index
    %c0_346 = arith.constant 0 : index
    %273 = vector.load %arg15[%c208_345, %c0_346] : memref<649x1024xbf16, #tpu.memory_space<vmem>>, vector<16x1024xbf16>
    tpu.vector_store %arg15[%c208_345, %c0_346], %272 {strides = array<i32>} : memref<649x1024xbf16, #tpu.memory_space<vmem>>, vector<16x1024xbf16>,
    %c0_347 = arith.constant 0 : index
    %c139_348 = arith.constant 139 : index
    %274 = vector.load %arg10[%c0_347, %c139_348] : memref<8x1408xbf16, #tpu.memory_space<vmem>>, vector<8x1024xbf16>
    %c536 = arith.constant 536 : index
    %c0_349 = arith.constant 0 : index
    %275 = vector.load %arg15[%c536, %c0_349] : memref<649x1024xbf16, #tpu.memory_space<vmem>>, vector<8x1024xbf16>
    tpu.vector_store %arg15[%c536, %c0_349], %274 {strides = array<i32>} : memref<649x1024xbf16, #tpu.memory_space<vmem>>, vector<8x1024xbf16>,
    %c0_350 = arith.constant 0 : index
    %c140_351 = arith.constant 140 : index
    %276 = vector.load %arg12[%c0_350, %c140_351] : memref<16x1408xbf16, #tpu.memory_space<vmem>>, vector<16x1024xbf16>
    %c224 = arith.constant 224 : index
    %c0_352 = arith.constant 0 : index
    %277 = vector.load %arg15[%c224, %c0_352] : memref<649x1024xbf16, #tpu.memory_space<vmem>>, vector<16x1024xbf16>
    tpu.vector_store %arg15[%c224, %c0_352], %276 {strides = array<i32>} : memref<649x1024xbf16, #tpu.memory_space<vmem>>, vector<16x1024xbf16>,
    %c0_353 = arith.constant 0 : index
    %c140_354 = arith.constant 140 : index
    %278 = vector.load %arg10[%c0_353, %c140_354] : memref<8x1408xbf16, #tpu.memory_space<vmem>>, vector<8x1024xbf16>
    %c544 = arith.constant 544 : index
    %c0_355 = arith.constant 0 : index
    %279 = vector.load %arg15[%c544, %c0_355] : memref<649x1024xbf16, #tpu.memory_space<vmem>>, vector<8x1024xbf16>
    tpu.vector_store %arg15[%c544, %c0_355], %278 {strides = array<i32>} : memref<649x1024xbf16, #tpu.memory_space<vmem>>, vector<8x1024xbf16>,
    %c0_356 = arith.constant 0 : index
    %c148_357 = arith.constant 148 : index
    %280 = vector.load %arg12[%c0_356, %c148_357] : memref<16x1408xbf16, #tpu.memory_space<vmem>>, vector<16x1024xbf16>
    %c240 = arith.constant 240 : index
    %c0_358 = arith.constant 0 : index
    %281 = vector.load %arg15[%c240, %c0_358] : memref<649x1024xbf16, #tpu.memory_space<vmem>>, vector<16x1024xbf16>
    tpu.vector_store %arg15[%c240, %c0_358], %280 {strides = array<i32>} : memref<649x1024xbf16, #tpu.memory_space<vmem>>, vector<16x1024xbf16>,
    %c0_359 = arith.constant 0 : index
    %c148_360 = arith.constant 148 : index
    %282 = vector.load %arg10[%c0_359, %c148_360] : memref<8x1408xbf16, #tpu.memory_space<vmem>>, vector<8x1024xbf16>
    %c552 = arith.constant 552 : index
    %c0_361 = arith.constant 0 : index
    %283 = vector.load %arg15[%c552, %c0_361] : memref<649x1024xbf16, #tpu.memory_space<vmem>>, vector<8x1024xbf16>
    tpu.vector_store %arg15[%c552, %c0_361], %282 {strides = array<i32>} : memref<649x1024xbf16, #tpu.memory_space<vmem>>, vector<8x1024xbf16>,
    %c0_362 = arith.constant 0 : index
    %c149_363 = arith.constant 149 : index
    %284 = vector.load %arg12[%c0_362, %c149_363] : memref<16x1408xbf16, #tpu.memory_space<vmem>>, vector<16x1024xbf16>
    %c256_364 = arith.constant 256 : index
    %c0_365 = arith.constant 0 : index
    %285 = vector.load %arg15[%c256_364, %c0_365] : memref<649x1024xbf16, #tpu.memory_space<vmem>>, vector<16x1024xbf16>
    tpu.vector_store %arg15[%c256_364, %c0_365], %284 {strides = array<i32>} : memref<649x1024xbf16, #tpu.memory_space<vmem>>, vector<16x1024xbf16>,
    %c0_366 = arith.constant 0 : index
    %c149_367 = arith.constant 149 : index
    %286 = vector.load %arg10[%c0_366, %c149_367] : memref<8x1408xbf16, #tpu.memory_space<vmem>>, vector<8x1024xbf16>
    %c560 = arith.constant 560 : index
    %c0_368 = arith.constant 0 : index
    %287 = vector.load %arg15[%c560, %c0_368] : memref<649x1024xbf16, #tpu.memory_space<vmem>>, vector<8x1024xbf16>
    tpu.vector_store %arg15[%c560, %c0_368], %286 {strides = array<i32>} : memref<649x1024xbf16, #tpu.memory_space<vmem>>, vector<8x1024xbf16>,
    %c0_369 = arith.constant 0 : index
    %c150_370 = arith.constant 150 : index
    %288 = vector.load %arg12[%c0_369, %c150_370] : memref<16x1408xbf16, #tpu.memory_space<vmem>>, vector<16x1024xbf16>
    %c272 = arith.constant 272 : index
    %c0_371 = arith.constant 0 : index
    %289 = vector.load %arg15[%c272, %c0_371] : memref<649x1024xbf16, #tpu.memory_space<vmem>>, vector<16x1024xbf16>
    tpu.vector_store %arg15[%c272, %c0_371], %288 {strides = array<i32>} : memref<649x1024xbf16, #tpu.memory_space<vmem>>, vector<16x1024xbf16>,
    %c0_372 = arith.constant 0 : index
    %c150_373 = arith.constant 150 : index
    %290 = vector.load %arg10[%c0_372, %c150_373] : memref<8x1408xbf16, #tpu.memory_space<vmem>>, vector<8x1024xbf16>
    %c568 = arith.constant 568 : index
    %c0_374 = arith.constant 0 : index
    %291 = vector.load %arg15[%c568, %c0_374] : memref<649x1024xbf16, #tpu.memory_space<vmem>>, vector<8x1024xbf16>
    tpu.vector_store %arg15[%c568, %c0_374], %290 {strides = array<i32>} : memref<649x1024xbf16, #tpu.memory_space<vmem>>, vector<8x1024xbf16>,
    %c0_375 = arith.constant 0 : index
    %c256_376 = arith.constant 256 : index
    %292 = vector.load %arg12[%c0_375, %c256_376] : memref<16x1408xbf16, #tpu.memory_space<vmem>>, vector<16x1024xbf16>
    %c288 = arith.constant 288 : index
    %c0_377 = arith.constant 0 : index
    %293 = vector.load %arg15[%c288, %c0_377] : memref<649x1024xbf16, #tpu.memory_space<vmem>>, vector<16x1024xbf16>
    tpu.vector_store %arg15[%c288, %c0_377], %292 {strides = array<i32>} : memref<649x1024xbf16, #tpu.memory_space<vmem>>, vector<16x1024xbf16>,
    %c0_378 = arith.constant 0 : index
    %c256_379 = arith.constant 256 : index
    %294 = vector.load %arg10[%c0_378, %c256_379] : memref<8x1408xbf16, #tpu.memory_space<vmem>>, vector<8x1024xbf16>
    %c576 = arith.constant 576 : index
    %c0_380 = arith.constant 0 : index
    %295 = vector.load %arg15[%c576, %c0_380] : memref<649x1024xbf16, #tpu.memory_space<vmem>>, vector<8x1024xbf16>
    tpu.vector_store %arg15[%c576, %c0_380], %294 {strides = array<i32>} : memref<649x1024xbf16, #tpu.memory_space<vmem>>, vector<8x1024xbf16>,
    %c0_381 = arith.constant 0 : index
    %c257_382 = arith.constant 257 : index
    %296 = vector.load %arg12[%c0_381, %c257_382] : memref<16x1408xbf16, #tpu.memory_space<vmem>>, vector<16x1024xbf16>
    %c304 = arith.constant 304 : index
    %c0_383 = arith.constant 0 : index
    %297 = vector.load %arg15[%c304, %c0_383] : memref<649x1024xbf16, #tpu.memory_space<vmem>>, vector<16x1024xbf16>
    tpu.vector_store %arg15[%c304, %c0_383], %296 {strides = array<i32>} : memref<649x1024xbf16, #tpu.memory_space<vmem>>, vector<16x1024xbf16>,
    %c0_384 = arith.constant 0 : index
    %c257_385 = arith.constant 257 : index
    %298 = vector.load %arg10[%c0_384, %c257_385] : memref<8x1408xbf16, #tpu.memory_space<vmem>>, vector<8x1024xbf16>
    %c584 = arith.constant 584 : index
    %c0_386 = arith.constant 0 : index
    %299 = vector.load %arg15[%c584, %c0_386] : memref<649x1024xbf16, #tpu.memory_space<vmem>>, vector<8x1024xbf16>
    tpu.vector_store %arg15[%c584, %c0_386], %298 {strides = array<i32>} : memref<649x1024xbf16, #tpu.memory_space<vmem>>, vector<8x1024xbf16>,
    %c0_387 = arith.constant 0 : index
    %c258_388 = arith.constant 258 : index
    %300 = vector.load %arg12[%c0_387, %c258_388] : memref<16x1408xbf16, #tpu.memory_space<vmem>>, vector<16x1024xbf16>
    %c320 = arith.constant 320 : index
    %c0_389 = arith.constant 0 : index
    %301 = vector.load %arg15[%c320, %c0_389] : memref<649x1024xbf16, #tpu.memory_space<vmem>>, vector<16x1024xbf16>
    tpu.vector_store %arg15[%c320, %c0_389], %300 {strides = array<i32>} : memref<649x1024xbf16, #tpu.memory_space<vmem>>, vector<16x1024xbf16>,
    %c0_390 = arith.constant 0 : index
    %c258_391 = arith.constant 258 : index
    %302 = vector.load %arg10[%c0_390, %c258_391] : memref<8x1408xbf16, #tpu.memory_space<vmem>>, vector<8x1024xbf16>
    %c592 = arith.constant 592 : index
    %c0_392 = arith.constant 0 : index
    %303 = vector.load %arg15[%c592, %c0_392] : memref<649x1024xbf16, #tpu.memory_space<vmem>>, vector<8x1024xbf16>
    tpu.vector_store %arg15[%c592, %c0_392], %302 {strides = array<i32>} : memref<649x1024xbf16, #tpu.memory_space<vmem>>, vector<8x1024xbf16>,
    %c0_393 = arith.constant 0 : index
    %c266_394 = arith.constant 266 : index
    %304 = vector.load %arg12[%c0_393, %c266_394] : memref<16x1408xbf16, #tpu.memory_space<vmem>>, vector<16x1024xbf16>
    %c336 = arith.constant 336 : index
    %c0_395 = arith.constant 0 : index
    %305 = vector.load %arg15[%c336, %c0_395] : memref<649x1024xbf16, #tpu.memory_space<vmem>>, vector<16x1024xbf16>
    tpu.vector_store %arg15[%c336, %c0_395], %304 {strides = array<i32>} : memref<649x1024xbf16, #tpu.memory_space<vmem>>, vector<16x1024xbf16>,
    %c0_396 = arith.constant 0 : index
    %c266_397 = arith.constant 266 : index
    %306 = vector.load %arg10[%c0_396, %c266_397] : memref<8x1408xbf16, #tpu.memory_space<vmem>>, vector<8x1024xbf16>
    %c600 = arith.constant 600 : index
    %c0_398 = arith.constant 0 : index
    %307 = vector.load %arg15[%c600, %c0_398] : memref<649x1024xbf16, #tpu.memory_space<vmem>>, vector<8x1024xbf16>
    tpu.vector_store %arg15[%c600, %c0_398], %306 {strides = array<i32>} : memref<649x1024xbf16, #tpu.memory_space<vmem>>, vector<8x1024xbf16>,
    %c0_399 = arith.constant 0 : index
    %c267_400 = arith.constant 267 : index
    %308 = vector.load %arg12[%c0_399, %c267_400] : memref<16x1408xbf16, #tpu.memory_space<vmem>>, vector<16x1024xbf16>
    %c352 = arith.constant 352 : index
    %c0_401 = arith.constant 0 : index
    %309 = vector.load %arg15[%c352, %c0_401] : memref<649x1024xbf16, #tpu.memory_space<vmem>>, vector<16x1024xbf16>
    tpu.vector_store %arg15[%c352, %c0_401], %308 {strides = array<i32>} : memref<649x1024xbf16, #tpu.memory_space<vmem>>, vector<16x1024xbf16>,
    %c0_402 = arith.constant 0 : index
    %c267_403 = arith.constant 267 : index
    %310 = vector.load %arg10[%c0_402, %c267_403] : memref<8x1408xbf16, #tpu.memory_space<vmem>>, vector<8x1024xbf16>
    %c608 = arith.constant 608 : index
    %c0_404 = arith.constant 0 : index
    %311 = vector.load %arg15[%c608, %c0_404] : memref<649x1024xbf16, #tpu.memory_space<vmem>>, vector<8x1024xbf16>
    tpu.vector_store %arg15[%c608, %c0_404], %310 {strides = array<i32>} : memref<649x1024xbf16, #tpu.memory_space<vmem>>, vector<8x1024xbf16>,
    %c0_405 = arith.constant 0 : index
    %c268_406 = arith.constant 268 : index
    %312 = vector.load %arg12[%c0_405, %c268_406] : memref<16x1408xbf16, #tpu.memory_space<vmem>>, vector<16x1024xbf16>
    %c368 = arith.constant 368 : index
    %c0_407 = arith.constant 0 : index
    %313 = vector.load %arg15[%c368, %c0_407] : memref<649x1024xbf16, #tpu.memory_space<vmem>>, vector<16x1024xbf16>
    tpu.vector_store %arg15[%c368, %c0_407], %312 {strides = array<i32>} : memref<649x1024xbf16, #tpu.memory_space<vmem>>, vector<16x1024xbf16>,
    %c0_408 = arith.constant 0 : index
    %c268_409 = arith.constant 268 : index
    %314 = vector.load %arg10[%c0_408, %c268_409] : memref<8x1408xbf16, #tpu.memory_space<vmem>>, vector<8x1024xbf16>
    %c616 = arith.constant 616 : index
    %c0_410 = arith.constant 0 : index
    %315 = vector.load %arg15[%c616, %c0_410] : memref<649x1024xbf16, #tpu.memory_space<vmem>>, vector<8x1024xbf16>
    tpu.vector_store %arg15[%c616, %c0_410], %314 {strides = array<i32>} : memref<649x1024xbf16, #tpu.memory_space<vmem>>, vector<8x1024xbf16>,
    %c0_411 = arith.constant 0 : index
    %c276_412 = arith.constant 276 : index
    %316 = vector.load %arg12[%c0_411, %c276_412] : memref<16x1408xbf16, #tpu.memory_space<vmem>>, vector<16x1024xbf16>
    %c384_413 = arith.constant 384 : index
    %c0_414 = arith.constant 0 : index
    %317 = vector.load %arg15[%c384_413, %c0_414] : memref<649x1024xbf16, #tpu.memory_space<vmem>>, vector<16x1024xbf16>
    tpu.vector_store %arg15[%c384_413, %c0_414], %316 {strides = array<i32>} : memref<649x1024xbf16, #tpu.memory_space<vmem>>, vector<16x1024xbf16>,
    %c0_415 = arith.constant 0 : index
    %c276_416 = arith.constant 276 : index
    %318 = vector.load %arg10[%c0_415, %c276_416] : memref<8x1408xbf16, #tpu.memory_space<vmem>>, vector<8x1024xbf16>
    %c624 = arith.constant 624 : index
    %c0_417 = arith.constant 0 : index
    %319 = vector.load %arg15[%c624, %c0_417] : memref<649x1024xbf16, #tpu.memory_space<vmem>>, vector<8x1024xbf16>
    tpu.vector_store %arg15[%c624, %c0_417], %318 {strides = array<i32>} : memref<649x1024xbf16, #tpu.memory_space<vmem>>, vector<8x1024xbf16>,
    %c0_418 = arith.constant 0 : index
    %c277_419 = arith.constant 277 : index
    %320 = vector.load %arg12[%c0_418, %c277_419] : memref<16x1408xbf16, #tpu.memory_space<vmem>>, vector<16x1024xbf16>
    %c400 = arith.constant 400 : index
    %c0_420 = arith.constant 0 : index
    %321 = vector.load %arg15[%c400, %c0_420] : memref<649x1024xbf16, #tpu.memory_space<vmem>>, vector<16x1024xbf16>
    tpu.vector_store %arg15[%c400, %c0_420], %320 {strides = array<i32>} : memref<649x1024xbf16, #tpu.memory_space<vmem>>, vector<16x1024xbf16>,
    %c0_421 = arith.constant 0 : index
    %c277_422 = arith.constant 277 : index
    %322 = vector.load %arg10[%c0_421, %c277_422] : memref<8x1408xbf16, #tpu.memory_space<vmem>>, vector<8x1024xbf16>
    %c632 = arith.constant 632 : index
    %c0_423 = arith.constant 0 : index
    %323 = vector.load %arg15[%c632, %c0_423] : memref<649x1024xbf16, #tpu.memory_space<vmem>>, vector<8x1024xbf16>
    tpu.vector_store %arg15[%c632, %c0_423], %322 {strides = array<i32>} : memref<649x1024xbf16, #tpu.memory_space<vmem>>, vector<8x1024xbf16>,
    %c0_424 = arith.constant 0 : index
    %c278_425 = arith.constant 278 : index
    %324 = vector.load %arg12[%c0_424, %c278_425] : memref<16x1408xbf16, #tpu.memory_space<vmem>>, vector<16x1024xbf16>
    %c416 = arith.constant 416 : index
    %c0_426 = arith.constant 0 : index
    %325 = vector.load %arg15[%c416, %c0_426] : memref<649x1024xbf16, #tpu.memory_space<vmem>>, vector<16x1024xbf16>
    tpu.vector_store %arg15[%c416, %c0_426], %324 {strides = array<i32>} : memref<649x1024xbf16, #tpu.memory_space<vmem>>, vector<16x1024xbf16>,
    %c0_427 = arith.constant 0 : index
    %c278_428 = arith.constant 278 : index
    %326 = vector.load %arg10[%c0_427, %c278_428] : memref<8x1408xbf16, #tpu.memory_space<vmem>>, vector<8x1024xbf16>
    %c640_429 = arith.constant 640 : index
    %c0_430 = arith.constant 0 : index
    %327 = vector.load %arg15[%c640_429, %c0_430] : memref<649x1024xbf16, #tpu.memory_space<vmem>>, vector<8x1024xbf16>
    tpu.vector_store %arg15[%c640_429, %c0_430], %326 {strides = array<i32>} : memref<649x1024xbf16, #tpu.memory_space<vmem>>, vector<8x1024xbf16>,
    %c648 = arith.constant 648 : index
    %c0_431 = arith.constant 0 : index
    %328 = vector.load %arg15[%c648, %c0_431] : memref<649x1024xbf16, #tpu.memory_space<vmem>>, vector<1x1024xbf16>
    tpu.vector_store %arg15[%c648, %c0_431], %0 {strides = array<i32>} : memref<649x1024xbf16, #tpu.memory_space<vmem>>, vector<1x1024xbf16>,
    %c0_432 = arith.constant 0 : index
    %c0_433 = arith.constant 0 : index
    %329 = vector.load %arg4[%c0_432, %c0_433] : memref<8x649xbf16, #tpu.memory_space<vmem>>, vector<8x649xbf16>
    %c0_434 = arith.constant 0 : index
    %c0_435 = arith.constant 0 : index
    %330 = vector.load %arg15[%c0_434, %c0_435] : memref<649x1024xbf16, #tpu.memory_space<vmem>>, vector<649x1024xbf16>
    %cst_436 = arith.constant dense<0.000000e+00> : vector<8x1024xf32>
    %331 = tpu.matmul %329, %330, %cst_436 {dimension_numbers = #tpu.dot_dimension_numbers<[1], [0], [0], [1], [0, 0, 1, 1], [], []>} : vector<8x649xbf16>, vector<649x1024xbf16>, vector<8x1024xf32> -> vector<8x1024xf32>
    %cst_437 = arith.constant 0.000000e+00 : f32
    %332 = vector.broadcast %cst_437 : f32 to vector<8x1024xf32>
    %333 = arith.maximumf %331, %332 : vector<8x1024xf32>
    %334 = arith.truncf %333 : vector<8x1024xf32> to vector<8x1024xbf16>
    %c0_438 = arith.constant 0 : index
    %c0_439 = arith.constant 0 : index
    %335 = vector.load %arg16[%c0_438, %c0_439] : memref<9x1024xbf16, #tpu.memory_space<vmem>>, vector<8x1024xbf16>
    tpu.vector_store %arg16[%c0_438, %c0_439], %334 {strides = array<i32>} : memref<9x1024xbf16, #tpu.memory_space<vmem>>, vector<8x1024xbf16>,
    %c8_440 = arith.constant 8 : index
    %c0_441 = arith.constant 0 : index
    %336 = vector.load %arg16[%c8_440, %c0_441] : memref<9x1024xbf16, #tpu.memory_space<vmem>>, vector<1x1024xbf16>
    tpu.vector_store %arg16[%c8_440, %c0_441], %0 {strides = array<i32>} : memref<9x1024xbf16, #tpu.memory_space<vmem>>, vector<1x1024xbf16>,
    %c0_442 = arith.constant 0 : index
    %c0_443 = arith.constant 0 : index
    %337 = vector.load %arg5[%c0_442, %c0_443] : memref<2x9xbf16, #tpu.memory_space<vmem>>, vector<2x9xbf16>
    %c0_444 = arith.constant 0 : index
    %c0_445 = arith.constant 0 : index
    %338 = vector.load %arg16[%c0_444, %c0_445] : memref<9x1024xbf16, #tpu.memory_space<vmem>>, vector<9x1024xbf16>
    %cst_446 = arith.constant dense<0.000000e+00> : vector<2x1024xf32>
    %339 = tpu.matmul %337, %338, %cst_446 {dimension_numbers = #tpu.dot_dimension_numbers<[1], [0], [0], [1], [0, 0, 1, 1], [], []>} : vector<2x9xbf16>, vector<9x1024xbf16>, vector<2x1024xf32> -> vector<2x1024xf32>
    %c0_447 = arith.constant 0 : index
    %c0_448 = arith.constant 0 : index
    %c0_449 = arith.constant 0 : index
    %340 = vector.load %arg9[%c0_447, %c0_448, %c0_449] : memref<1x2x1024xf32, #tpu.memory_space<vmem>>, vector<1x2x1024xf32>
    %341 = vector.shape_cast %340 : vector<1x2x1024xf32> to vector<2x1024xf32>
    %342 = vector.shape_cast %339 : vector<2x1024xf32> to vector<1x2x1024xf32>
    tpu.vector_store %arg9[%c0_447, %c0_448, %c0_449], %342 {strides = array<i32>} : memref<1x2x1024xf32, #tpu.memory_space<vmem>>, vector<1x2x1024xf32>,
    return
  }
  func.func @transform_0(%arg0: i32) -> (i32, i32, i32) {
    %c0_i32 = arith.constant 0 : i32
    %c0_i32_0 = arith.constant 0 : i32
    %c0_i32_1 = arith.constant 0 : i32
    return %arg0, %c0_i32, %c0_i32_0 : i32, i32, i32
  }
  func.func @transform_1(%arg0: i32) -> (i32, i32) {
    %c0_i32 = arith.constant 0 : i32
    %c0_i32_0 = arith.constant 0 : i32
    %c0_i32_1 = arith.constant 0 : i32
    return %c0_i32, %c0_i32_0 : i32, i32
  }
  func.func @transform_2(%arg0: i32) -> (i32, i32) {
    %c0_i32 = arith.constant 0 : i32
    %c0_i32_0 = arith.constant 0 : i32
    %c0_i32_1 = arith.constant 0 : i32
    return %c0_i32, %c0_i32_0 : i32, i32
  }
  func.func @transform_3(%arg0: i32) -> (i32, i32) {
    %c0_i32 = arith.constant 0 : i32
    %c0_i32_0 = arith.constant 0 : i32
    %c0_i32_1 = arith.constant 0 : i32
    return %c0_i32, %c0_i32_0 : i32, i32
  }
  func.func @transform_4(%arg0: i32) -> (i32, i32) {
    %c0_i32 = arith.constant 0 : i32
    %c0_i32_0 = arith.constant 0 : i32
    %c0_i32_1 = arith.constant 0 : i32
    return %c0_i32, %c0_i32_0 : i32, i32
  }
  func.func @transform_5(%arg0: i32) -> (i32, i32) {
    %c0_i32 = arith.constant 0 : i32
    %c0_i32_0 = arith.constant 0 : i32
    %c0_i32_1 = arith.constant 0 : i32
    return %c0_i32, %c0_i32_0 : i32, i32
  }
  func.func @transform_6(%arg0: i32) -> (i32, i32) {
    %c0_i32 = arith.constant 0 : i32
    %c0_i32_0 = arith.constant 0 : i32
    %c0_i32_1 = arith.constant 0 : i32
    return %c0_i32, %c0_i32_0 : i32, i32
  }
  func.func @transform_7(%arg0: i32) -> (i32, i32) {
    %c0_i32 = arith.constant 0 : i32
    %c0_i32_0 = arith.constant 0 : i32
    %c0_i32_1 = arith.constant 0 : i32
    return %c0_i32, %c0_i32_0 : i32, i32
  }
  func.func @transform_8(%arg0: i32) -> (i32, i32, i32) {
    %c0_i32 = arith.constant 0 : i32
    %c0_i32_0 = arith.constant 0 : i32
    %c0_i32_1 = arith.constant 0 : i32
    return %arg0, %c0_i32, %c0_i32_0 : i32, i32, i32
  }
}

</mosaic_0001>

<llo_original>
// kernel: tms_net_forward.1
$region0: #{tms_net_forward.1}
  #allocation0 [shape = 'u32[]', space=smem, size = 0x4, offset = 0x4, fixed_abs, tag = 'smem constant byte address 0x4 - core index']
  #allocation1 [shape = 'u32[72,128]{1,0:T(1,128)}', space=vmem, size = 0x9000, scoped, tag = 'internal scratch']
  #allocation2 [shape = 'bf16[8,1408]{1,0:T(8,128)(2,1)}', space=vmem, size = 0x5800, scoped, tag = 'scratch operand']
  #allocation3 [shape = 'bf16[8,896]{1,0:T(8,128)(2,1)}', space=vmem, size = 0x3800, scoped, tag = 'scratch operand']
  #allocation4 [shape = 'bf16[16,1408]{1,0:T(8,128)(2,1)}', space=vmem, size = 0xb000, scoped, tag = 'scratch operand']
  #allocation5 [shape = 'bf16[55,1024]{1,0:T(8,128)(2,1)}', space=vmem, size = 0x1c000, scoped, tag = 'scratch operand']
  #allocation6 [shape = 'bf16[217,512]{1,0:T(8,128)(2,1)}', space=vmem, size = 0x38000, scoped, tag = 'scratch operand']
  #allocation7 [shape = 'bf16[649,1024]{1,0:T(8,128)(2,1)}', space=vmem, size = 0x148000, scoped, tag = 'scratch operand']
  #allocation8 [shape = 'bf16[9,1024]{1,0:T(8,128)(2,1)}', space=vmem, size = 0x8000, scoped, tag = 'scratch operand']
  %s0 = inlined_call_operand.vmem [shape: bf16[2,2,1408], index: 0, kind: input, shape index: {}]
  %s1 = inlined_call_operand.vmem [shape: bf16[8,55], index: 1, kind: input, shape index: {}]
  %s2 = inlined_call_operand.vmem [shape: bf16[16,217], index: 2, kind: input, shape index: {}]
  %s3 = inlined_call_operand.vmem [shape: bf16[8,649], index: 3, kind: input, shape index: {}]
  %s4 = inlined_call_operand.vmem [shape: bf16[2,9], index: 4, kind: input, shape index: {}]
  %s5 = inlined_call_operand.vmem [shape: f32[1,1024], index: 5, kind: input, shape index: {}]
  %s6 = inlined_call_operand.vmem [shape: bf16[128,128], index: 6, kind: input, shape index: {}]
  %s7 = inlined_call_operand.vmem [shape: bf16[128,128], index: 7, kind: input, shape index: {}]
  %s8 = inlined_call_operand.vmem [shape: f32[2,2,1024], index: 8, kind: output, shape index: {}]
  %s9 = sld [smem:[#allocation0]]
  $region65: #{tms_net_forward.1} parent=0
    _
  %s11 = ssub.s32 1, %s9
  %s12 = scalar_select 0, %s11, %s9
  loop: start=0, step=1, limit=4
  $region2: #{tms_net_forward.1} parent=0 // loop_pre_header
    _
  $region3: #{tms_net_forward.1} parent=0 // loop_header
    %s14 = sphi 0, %s18
    %p15 = scmp.ge.s32.totalorder %s14, 4
    %s24 = sphi 0, %s26
    %s27 = sphi 0, %s24
    %s28 = sphi 0, %s27
    %s44 = sphi 0, %s28
    %s48 = sphi 0, %s48
    %s50 = sphi 0, %s48
    %s51 = sphi 0, %s50
    %s65 = sphi 0, %s51
    %s69 = sphi 0, %s69
    %s71 = sphi 0, %s69
    %s72 = sphi 0, %s71
    %s86 = sphi 0, %s72
    %s90 = sphi 0, %s90
    %s92 = sphi 0, %s90
    %s93 = sphi 0, %s92
    %s107 = sphi 0, %s93
    %s111 = sphi 0, %s111
    %s113 = sphi 0, %s111
    %s114 = sphi 0, %s113
    %s128 = sphi 0, %s114
    %s132 = sphi 0, %s132
    %s134 = sphi 0, %s132
    %s135 = sphi 0, %s134
    %s149 = sphi 0, %s135
    %s153 = sphi 0, %s153
    %s155 = sphi 0, %s153
    %s156 = sphi 0, %s155
    %s170 = sphi 0, %s156
    %s174 = sphi 0, %s174
    %s176 = sphi 0, %s174
    %s177 = sphi 0, %s176
    %s191 = sphi 0, %s177
    %s197 = sphi 0, %s199
    %s200 = sphi 0, %s197
    %s201 = sphi 0, %s200
    %s217 = sphi 0, %s201
  $region4: #{tms_net_forward.1} parent=0 // loop_header_branch
    %17 = sbr.rel (%p15) target = $region8
  $region5: #{tms_net_forward.1} parent=0 // loop_body
    %s19 = ssub.s32 %s14, 1
    %s20 = ssub.s32 %s14, 2
    %s21 = sadd.s32 %s14, 1
    %s22 = ssub.s32 %s14, %s21
    %p23 = scmp.eq.s32.totalorder %s22, 0
    %s25 = sadd.s32 %s24, 1
    %s26 = scalar_select %p23, %s24, %s25
    %p29 = pneg %p23
    %p30 = scmp.eq.s32.totalorder %s14, 1
    %p31 = por %p29, %p30
    %p32 = scmp.ne.s32.totalorder %s24, %s27
    %p33 = scmp.eq.s32.totalorder %s14, 0
    %p34 = por %p32, %p33
    %p35 = scmp.ne.s32.totalorder %s24, %s27
    %p36 = scmp.eq.s32.totalorder %s19, 1
    %p37 = por %p35, %p36
    %p38 = scmp.ne.s32.totalorder %s27, %s28
    %p39 = scmp.eq.s32.totalorder %s19, 0
    %p40 = por %p38, %p39
    %p41 = scmp.ne.s32.totalorder %s27, %s28
    %p42 = scmp.eq.s32.totalorder %s20, 1
    %p43 = por %p41, %p42
    %p45 = scmp.ne.s32.totalorder %s28, %s44
    %p46 = scmp.eq.s32.totalorder %s20, 0
    %p47 = por %p45, %p46
    %s49 = sadd.s32 %s48, 1
    %p52 = scmp.eq.s32.totalorder %s14, 1
    %p53 = scmp.ne.s32.totalorder %s48, %s50
    %p54 = scmp.eq.s32.totalorder %s14, 0
    %p55 = por %p53, %p54
    %p56 = scmp.ne.s32.totalorder %s48, %s50
    %p57 = scmp.eq.s32.totalorder %s19, 1
    %p58 = por %p56, %p57
    %p59 = scmp.ne.s32.totalorder %s50, %s51
    %p60 = scmp.eq.s32.totalorder %s19, 0
    %p61 = por %p59, %p60
    %p62 = scmp.ne.s32.totalorder %s50, %s51
    %p63 = scmp.eq.s32.totalorder %s20, 1
    %p64 = por %p62, %p63
    %p66 = scmp.ne.s32.totalorder %s51, %s65
    %p67 = scmp.eq.s32.totalorder %s20, 0
    %p68 = por %p66, %p67
    %s70 = sadd.s32 %s69, 1
    %p73 = scmp.eq.s32.totalorder %s14, 1
    %p74 = scmp.ne.s32.totalorder %s69, %s71
    %p75 = scmp.eq.s32.totalorder %s14, 0
    %p76 = por %p74, %p75
    %p77 = scmp.ne.s32.totalorder %s69, %s71
    %p78 = scmp.eq.s32.totalorder %s19, 1
    %p79 = por %p77, %p78
    %p80 = scmp.ne.s32.totalorder %s71, %s72
    %p81 = scmp.eq.s32.totalorder %s19, 0
    %p82 = por %p80, %p81
    %p83 = scmp.ne.s32.totalorder %s71, %s72
    %p84 = scmp.eq.s32.totalorder %s20, 1
    %p85 = por %p83, %p84
    %p87 = scmp.ne.s32.totalorder %s72, %s86
    %p88 = scmp.eq.s32.totalorder %s20, 0
    %p89 = por %p87, %p88
    %s91 = sadd.s32 %s90, 1
    %p94 = scmp.eq.s32.totalorder %s14, 1
    %p95 = scmp.ne.s32.totalorder %s90, %s92
    %p96 = scmp.eq.s32.totalorder %s14, 0
    %p97 = por %p95, %p96
    %p98 = scmp.ne.s32.totalorder %s90, %s92
    %p99 = scmp.eq.s32.totalorder %s19, 1
    %p100 = por %p98, %p99
    %p101 = scmp.ne.s32.totalorder %s92, %s93
    %p102 = scmp.eq.s32.totalorder %s19, 0
    %p103 = por %p101, %p102
    %p104 = scmp.ne.s32.totalorder %s92, %s93
    %p105 = scmp.eq.s32.totalorder %s20, 1
    %p106 = por %p104, %p105
    %p108 = scmp.ne.s32.totalorder %s93, %s107
    %p109 = scmp.eq.s32.totalorder %s20, 0
    %p110 = por %p108, %p109
    %s112 = sadd.s32 %s111, 1
    %p115 = scmp.eq.s32.totalorder %s14, 1
    %p116 = scmp.ne.s32.totalorder %s111, %s113
    %p117 = scmp.eq.s32.totalorder %s14, 0
    %p118 = por %p116, %p117
    %p119 = scmp.ne.s32.totalorder %s111, %s113
    %p120 = scmp.eq.s32.totalorder %s19, 1
    %p121 = por %p119, %p120
    %p122 = scmp.ne.s32.totalorder %s113, %s114
    %p123 = scmp.eq.s32.totalorder %s19, 0
    %p124 = por %p122, %p123
    %p125 = scmp.ne.s32.totalorder %s113, %s114
    %p126 = scmp.eq.s32.totalorder %s20, 1
    %p127 = por %p125, %p126
    %p129 = scmp.ne.s32.totalorder %s114, %s128
    %p130 = scmp.eq.s32.totalorder %s20, 0
    %p131 = por %p129, %p130
    %s133 = sadd.s32 %s132, 1
    %p136 = scmp.eq.s32.totalorder %s14, 1
    %p137 = scmp.ne.s32.totalorder %s132, %s134
    %p138 = scmp.eq.s32.totalorder %s14, 0
    %p139 = por %p137, %p138
    %p140 = scmp.ne.s32.totalorder %s132, %s134
    %p141 = scmp.eq.s32.totalorder %s19, 1
    %p142 = por %p140, %p141
    %p143 = scmp.ne.s32.totalorder %s134, %s135
    %p144 = scmp.eq.s32.totalorder %s19, 0
    %p145 = por %p143, %p144
    %p146 = scmp.ne.s32.totalorder %s134, %s135
    %p147 = scmp.eq.s32.totalorder %s20, 1
    %p148 = por %p146, %p147
    %p150 = scmp.ne.s32.totalorder %s135, %s149
    %p151 = scmp.eq.s32.totalorder %s20, 0
    %p152 = por %p150, %p151
    %s154 = sadd.s32 %s153, 1
    %p157 = scmp.eq.s32.totalorder %s14, 1
    %p158 = scmp.ne.s32.totalorder %s153, %s155
    %p159 = scmp.eq.s32.totalorder %s14, 0
    %p160 = por %p158, %p159
    %p161 = scmp.ne.s32.totalorder %s153, %s155
    %p162 = scmp.eq.s32.totalorder %s19, 1
    %p163 = por %p161, %p162
    %p164 = scmp.ne.s32.totalorder %s155, %s156
    %p165 = scmp.eq.s32.totalorder %s19, 0
    %p166 = por %p164, %p165
    %p167 = scmp.ne.s32.totalorder %s155, %s156
    %p168 = scmp.eq.s32.totalorder %s20, 1
    %p169 = por %p167, %p168
    %p171 = scmp.ne.s32.totalorder %s156, %s170
    %p172 = scmp.eq.s32.totalorder %s20, 0
    %p173 = por %p171, %p172
    %s175 = sadd.s32 %s174, 1
    %p178 = scmp.eq.s32.totalorder %s14, 1
    %p179 = scmp.ne.s32.totalorder %s174, %s176
    %p180 = scmp.eq.s32.totalorder %s14, 0
    %p181 = por %p179, %p180
    %p182 = scmp.ne.s32.totalorder %s174, %s176
    %p183 = scmp.eq.s32.totalorder %s19, 1
    %p184 = por %p182, %p183
    %p185 = scmp.ne.s32.totalorder %s176, %s177
    %p186 = scmp.eq.s32.totalorder %s19, 0
    %p187 = por %p185, %p186
    %p188 = scmp.ne.s32.totalorder %s176, %s177
    %p189 = scmp.eq.s32.totalorder %s20, 1
    %p190 = por %p188, %p189
    %p192 = scmp.ne.s32.totalorder %s177, %s191
    %p193 = scmp.eq.s32.totalorder %s20, 0
    %p194 = por %p192, %p193
    %s195 = ssub.s32 %s14, %s21
    %p196 = scmp.eq.s32.totalorder %s195, 0
    %s198 = sadd.s32 %s197, 1
    %s199 = scalar_select %p196, %s197, %s198
    %p202 = pneg %p196
    %p203 = scmp.eq.s32.totalorder %s14, 1
    %p204 = por %p202, %p203
    %p205 = scmp.ne.s32.totalorder %s197, %s200
    %p206 = scmp.eq.s32.totalorder %s14, 0
    %p207 = por %p205, %p206
    %p208 = scmp.ne.s32.totalorder %s197, %s200
    %p209 = scmp.eq.s32.totalorder %s19, 1
    %p210 = por %p208, %p209
    %p211 = scmp.ne.s32.totalorder %s200, %s201
    %p212 = scmp.eq.s32.totalorder %s19, 0
    %p213 = por %p211, %p212
    %p214 = scmp.ne.s32.totalorder %s200, %s201
    %p215 = scmp.eq.s32.totalorder %s20, 1
    %p216 = por %p214, %p215
    %p218 = scmp.ne.s32.totalorder %s201, %s217
    %p219 = scmp.eq.s32.totalorder %s20, 0
    %p220 = por %p218, %p219
    %p221 = scmp.le.s32.totalorder 1, %s14
    %p222 = scmp.lt.s32.totalorder %s14, 3
    %p223 = pnand %p221, %p222
    %p224 = pneg %p223
    // Predicated region
    $region9: #{tms_net_forward.1} parent=5 // pred_check
      _
    $region10: #{tms_net_forward.1} parent=5 // pred_check_branch
      %226 = sbr.rel (%p223) target = $region12
    $region11: #{tms_net_forward.1} parent=5 // pred_region
      %s227 = ssub.s32 %s14, 1
      // Predicated region
      $region13: #{tms_net_forward.1} parent=11 // pred_check
        %p228 = pneg %p61
      $region14: #{tms_net_forward.1} parent=11 // pred_check_branch
        %230 = sbr.rel (%p228) target = $region16
      $region15: #{tms_net_forward.1} parent=11 // pred_region
        _
      $region16: #{tms_net_forward.1} parent=11 // pred_fallthru
        _
      // Predicated region
      $region17: #{tms_net_forward.1} parent=11 // pred_check
        %p231 = pneg %p82
      $region18: #{tms_net_forward.1} parent=11 // pred_check_branch
        %233 = sbr.rel (%p231) target = $region20
      $region19: #{tms_net_forward.1} parent=11 // pred_region
        _
      $region20: #{tms_net_forward.1} parent=11 // pred_fallthru
        _
      // Predicated region
      $region21: #{tms_net_forward.1} parent=11 // pred_check
        %p234 = pneg %p103
      $region22: #{tms_net_forward.1} parent=11 // pred_check_branch
        %236 = sbr.rel (%p234) target = $region24
      $region23: #{tms_net_forward.1} parent=11 // pred_region
        _
      $region24: #{tms_net_forward.1} parent=11 // pred_fallthru
        _
      // Predicated region
      $region25: #{tms_net_forward.1} parent=11 // pred_check
        %p237 = pneg %p124
      $region26: #{tms_net_forward.1} parent=11 // pred_check_branch
        %239 = sbr.rel (%p237) target = $region28
      $region27: #{tms_net_forward.1} parent=11 // pred_region
        _
      $region28: #{tms_net_forward.1} parent=11 // pred_fallthru
        _
      // Predicated region
      $region29: #{tms_net_forward.1} parent=11 // pred_check
        %p240 = pneg %p145
      $region30: #{tms_net_forward.1} parent=11 // pred_check_branch
        %242 = sbr.rel (%p240) target = $region32
      $region31: #{tms_net_forward.1} parent=11 // pred_region
        _
      $region32: #{tms_net_forward.1} parent=11 // pred_fallthru
        _
      // Predicated region
      $region33: #{tms_net_forward.1} parent=11 // pred_check
        %p243 = pneg %p166
      $region34: #{tms_net_forward.1} parent=11 // pred_check_branch
        %245 = sbr.rel (%p243) target = $region36
      $region35: #{tms_net_forward.1} parent=11 // pred_region
        _
      $region36: #{tms_net_forward.1} parent=11 // pred_fallthru
        _
      // Predicated region
      $region37: #{tms_net_forward.1} parent=11 // pred_check
        %p246 = pneg %p187
      $region38: #{tms_net_forward.1} parent=11 // pred_check_branch
        %248 = sbr.rel (%p246) target = $region40
      $region39: #{tms_net_forward.1} parent=11 // pred_region
        _
      $region40: #{tms_net_forward.1} parent=11 // pred_fallthru
        _
    $region12: #{tms_net_forward.1} parent=5 // pred_fallthru
      _
    %p249 = scmp.lt.s32.totalorder %s14, 2
    // Predicated region
    $region41: #{tms_net_forward.1} parent=5 // pred_check
      %p250 = pneg %p249
    $region42: #{tms_net_forward.1} parent=5 // pred_check_branch
      %252 = sbr.rel (%p250) target = $region44
    $region43: #{tms_net_forward.1} parent=5 // pred_region
      // Predicated region
      $region45: #{tms_net_forward.1} parent=43 // pred_check
        %p253 = pneg %p34
      $region46: #{tms_net_forward.1} parent=43 // pred_check_branch
        %255 = sbr.rel (%p253) target = $region48
      $region47: #{tms_net_forward.1} parent=43 // pred_region
        %p256 = scmp.lt.s32.totalorder %s14, 1
        %s257 = scalar_select %p256, %s14, 1
        %s258 = smul.addr %s257, 11
        %s259 = scalar_lea.vmem %s0, %s258
      $region48: #{tms_net_forward.1} parent=43 // pred_fallthru
        _
    $region44: #{tms_net_forward.1} parent=5 // pred_fallthru
      _
    %p260 = scmp.le.s32.totalorder 1, %s14
    %p261 = scmp.lt.s32.totalorder %s14, 3
    %p262 = pnand %p260, %p261
    %p263 = pneg %p262
    // Predicated region
    $region49: #{tms_net_forward.1} parent=5 // pred_check
      _
    $region50: #{tms_net_forward.1} parent=5 // pred_check_branch
      %265 = sbr.rel (%p262) target = $region52
    $region51: #{tms_net_forward.1} parent=5 // pred_region
      %s266 = ssub.s32 %s14, 1
      %p267 = scmp.lt.s32.totalorder %s19, 1
      %s268 = scalar_select %p267, %s19, 1
      %s269 = smul.addr %s268, 11
      %s270 = scalar_lea.vmem %s0, %s269
      %p271 = pneg %p40
      %p272 = pneg %p37
      %p273 = pneg %p61
      %p274 = pneg %p58
      %p275 = pneg %p82
      %p276 = pneg %p79
      %p277 = pneg %p103
      %p278 = pneg %p100
      %p279 = pneg %p124
      %p280 = pneg %p121
      %p281 = pneg %p145
      %p282 = pneg %p142
      %p283 = pneg %p166
      %p284 = pneg %p163
      %p285 = pneg %p187
      %p286 = pneg %p184
      %p287 = pneg %p213
      %p288 = pneg %p210
      %p289 = scmp.lt.s32.totalorder %s19, 1
      %s290 = scalar_select %p289, %s19, 1
      %s291 = smul.addr %s290, 8
      %s292 = smul.addr %s291, 2
      %s293 = scalar_lea.vmem %s8, %s292
      %p294 = scmp.lt.s32.totalorder %s19, 1
      %s295 = scalar_select %p294, %s19, 1
      %s296 = smul.addr %s295, 11
      %s297 = scalar_lea.vmem %s0, %s296
      %p298 = scmp.lt.s32.totalorder %s19, 1
      %s299 = scalar_select %p298, %s19, 1
      %s300 = smul.addr %s299, 8
      %s301 = smul.addr %s300, 2
      %s302 = scalar_lea.vmem %s8, %s301
      %v305 = vld [vmem:[%s297] sm:$0xff]
      %307 = vst [vmem:[#allocation1] ss:$4 sm:$0xff] %v305
      %v308 = vld [vmem:[#allocation1] sm:$0xff]
      %v309 = vld [vmem:[#allocation1 + $0x8] sm:$0xff]
      %v310 = vld [vmem:[#allocation1 + $0x10] sm:$0xff]
      %v311 = vld [vmem:[#allocation1 + $0x18] sm:$0xff]
      %316 = vst [vmem:[#allocation5] sm:$0x11] %v308
      %317 = vst [vmem:[#allocation5 + $0x8] sm:$0x11] %v309
      %318 = vst [vmem:[#allocation5 + $0x10] sm:$0x11] %v310
      %319 = vst [vmem:[#allocation5 + $0x18] sm:$0x11] %v311
      %v320 = vld [vmem:[%s297] sm:$0xff]
      %v321 = vld [vmem:[%s297 + $0x8] sm:$0x1]
      %s323 = scalar_lea.vmem [#allocation1], 1
      %324 = vst [vmem:[%s323] ss:$4 sm:$0xff] %v320
      %s326 = scalar_lea.vmem [#allocation1], 33
      %327 = vst [vmem:[%s326] ss:$4 sm:$0xff] %v321
      %v328 = vld [vmem:[#allocation1] sm:$0xff]
      %v330 = vld [vmem:[#allocation1 + $0x8] sm:$0xff]
      %v332 = vld [vmem:[#allocation1 + $0x10] sm:$0xff]
      %v334 = vld [vmem:[#allocation1 + $0x18] sm:$0xff]
      %v336 = vld [vmem:[#allocation1 + $0x20] sm:$0xff]
      %338 = vrot.lane.b32.xlu0 %v328, 127
      %v339 = vpop.permute.xlu0 %338
      %340 = vrot.lane.b32.xlu0 %v330, 127
      %v341 = vpop.permute.xlu0 %340
      %342 = vrot.lane.b32.xlu0 %v332, 127
      %v343 = vpop.permute.xlu0 %342
      %344 = vrot.lane.b32.xlu0 %v334, 127
      %v345 = vpop.permute.xlu0 %344
      %346 = vrot.lane.b32.xlu0 %v336, 127
      %v347 = vpop.permute.xlu0 %346
      %v348 = vrot.slane %v339, 4
      %v349 = vrot.slane %v341, 4
      %v350 = vrot.slane %v343, 4
      %v351 = vrot.slane %v345, 4
      %v352 = vrot.slane %v347, 4
      %vm353 = vcmask 1043456
      %v354 = vsel %vm353, %v348, %v349
      %vm355 = vcmask 1039360
      %v356 = vsel %vm355, %v339, %v354
      %v357 = vsel %vm353, %v349, %v350
      %v358 = vsel %vm355, %v341, %v357
      %v359 = vsel %vm353, %v350, %v351
      %v360 = vsel %vm355, %v343, %v359
      %v361 = vsel %vm353, %v351, %v352
      %v362 = vsel %vm355, %v345, %v361
      %367 = vst [vmem:[#allocation5] sm:$0x22] %v356
      %368 = vst [vmem:[#allocation5 + $0x8] sm:$0x22] %v358
      %369 = vst [vmem:[#allocation5 + $0x10] sm:$0x22] %v360
      %370 = vst [vmem:[#allocation5 + $0x18] sm:$0x22] %v362
      %v371 = vld [vmem:[%s297] sm:$0xff]
      %v372 = vld [vmem:[%s297 + $0x8] sm:$0x1]
      %s374 = scalar_lea.vmem [#allocation1], 2
      %375 = vst [vmem:[%s374] ss:$4 sm:$0xff] %v371
      %s377 = scalar_lea.vmem [#allocation1], 34
      %378 = vst [vmem:[%s377] ss:$4 sm:$0xff] %v372
      %v379 = vld [vmem:[#allocation1] sm:$0xff]
      %v381 = vld [vmem:[#allocation1 + $0x8] sm:$0xff]
      %v383 = vld [vmem:[#allocation1 + $0x10] sm:$0xff]
      %v385 = vld [vmem:[#allocation1 + $0x18] sm:$0xff]
      %v387 = vld [vmem:[#allocation1 + $0x20] sm:$0xff]
      %389 = vrot.lane.b32.xlu0 %v379, 126
      %v390 = vpop.permute.xlu0 %389
      %391 = vrot.lane.b32.xlu0 %v381, 126
      %v392 = vpop.permute.xlu0 %391
      %393 = vrot.lane.b32.xlu0 %v383, 126
      %v394 = vpop.permute.xlu0 %393
      %395 = vrot.lane.b32.xlu0 %v385, 126
      %v396 = vpop.permute.xlu0 %395
      %397 = vrot.lane.b32.xlu0 %v387, 126
      %v398 = vpop.permute.xlu0 %397
      %v399 = vrot.slane %v390, 4
      %v400 = vrot.slane %v392, 4
      %v401 = vrot.slane %v394, 4
      %v402 = vrot.slane %v396, 4
      %v403 = vrot.slane %v398, 4
      %v404 = vsel %vm353, %v399, %v400
      %vm405 = vcmask 1031168
      %v406 = vsel %vm405, %v390, %v404
      %v407 = vsel %vm353, %v400, %v401
      %v408 = vsel %vm405, %v392, %v407
      %v409 = vsel %vm353, %v401, %v402
      %v410 = vsel %vm405, %v394, %v409
      %v411 = vsel %vm353, %v402, %v403
      %v412 = vsel %vm405, %v396, %v411
      %417 = vst [vmem:[#allocation5] sm:$0x44] %v406
      %418 = vst [vmem:[#allocation5 + $0x8] sm:$0x44] %v408
      %419 = vst [vmem:[#allocation5 + $0x10] sm:$0x44] %v410
      %420 = vst [vmem:[#allocation5 + $0x18] sm:$0x44] %v412
      %v421 = vld [vmem:[%s297] sm:$0xff]
      %v422 = vld [vmem:[%s297 + $0x8] sm:$0x1]
      %s424 = scalar_lea.vmem [#allocation1], 3
      %425 = vst [vmem:[%s424] ss:$4 sm:$0xff] %v421
      %s427 = scalar_lea.vmem [#allocation1], 35
      %428 = vst [vmem:[%s427] ss:$4 sm:$0xff] %v422
      %v429 = vld [vmem:[#allocation1] sm:$0xff]
      %v431 = vld [vmem:[#allocation1 + $0x8] sm:$0xff]
      %v433 = vld [vmem:[#allocation1 + $0x10] sm:$0xff]
      %v435 = vld [vmem:[#allocation1 + $0x18] sm:$0xff]
      %v437 = vld [vmem:[#allocation1 + $0x20] sm:$0xff]
      %439 = vrot.lane.b32.xlu0 %v429, 118
      %v440 = vpop.permute.xlu0 %439
      %441 = vrot.lane.b32.xlu0 %v431, 118
      %v442 = vpop.permute.xlu0 %441
      %443 = vrot.lane.b32.xlu0 %v433, 118
      %v444 = vpop.permute.xlu0 %443
      %445 = vrot.lane.b32.xlu0 %v435, 118
      %v446 = vpop.permute.xlu0 %445
      %447 = vrot.lane.b32.xlu0 %v437, 118
      %v448 = vpop.permute.xlu0 %447
      %v449 = vrot.slane %v440, 4
      %v450 = vrot.slane %v442, 4
      %v451 = vrot.slane %v444, 4
      %v452 = vrot.slane %v446, 4
      %v453 = vrot.slane %v448, 4
      %v454 = vsel %vm353, %v449, %v450
      %vm455 = vcmask 965632
      %v456 = vsel %vm455, %v440, %v454
      %v457 = vsel %vm353, %v450, %v451
      %v458 = vsel %vm455, %v442, %v457
      %v459 = vsel %vm353, %v451, %v452
      %v460 = vsel %vm455, %v444, %v459
      %v461 = vsel %vm353, %v452, %v453
      %v462 = vsel %vm455, %v446, %v461
      %467 = vst [vmem:[#allocation5] sm:$0x88] %v456
      %468 = vst [vmem:[#allocation5 + $0x8] sm:$0x88] %v458
      %469 = vst [vmem:[#allocation5 + $0x10] sm:$0x88] %v460
      %470 = vst [vmem:[#allocation5 + $0x18] sm:$0x88] %v462
      %v471 = vld [vmem:[%s297] sm:$0xff]
      %v472 = vld [vmem:[%s297 + $0x8] sm:$0x1]
      %474 = vst [vmem:[#allocation1] ss:$4 sm:$0xff] %v471
      %s476 = scalar_lea.vmem [#allocation1], 32
      %477 = vst [vmem:[%s476] ss:$4 sm:$0xff] %v472
      %v478 = vld [vmem:[#allocation1] sm:$0xff]
      %v480 = vld [vmem:[#allocation1 + $0x8] sm:$0xff]
      %v482 = vld [vmem:[#allocation1 + $0x10] sm:$0xff]
      %v484 = vld [vmem:[#allocation1 + $0x18] sm:$0xff]
      %v486 = vld [vmem:[#allocation1 + $0x20] sm:$0xff]
      %488 = vrot.lane.b32.xlu0 %v478, 117
      %v489 = vpop.permute.xlu0 %488
      %490 = vrot.lane.b32.xlu0 %v480, 117
      %v491 = vpop.permute.xlu0 %490
      %492 = vrot.lane.b32.xlu0 %v482, 117
      %v493 = vpop.permute.xlu0 %492
      %494 = vrot.lane.b32.xlu0 %v484, 117
      %v495 = vpop.permute.xlu0 %494
      %496 = vrot.lane.b32.xlu0 %v486, 117
      %v497 = vpop.permute.xlu0 %496
      %v498 = vrot.slane %v489, 4
      %v499 = vrot.slane %v491, 4
      %v500 = vrot.slane %v493, 4
      %v501 = vrot.slane %v495, 4
      %v502 = vrot.slane %v497, 4
      %v503 = vsel %vm353, %v498, %v499
      %vm504 = vcmask 957440
      %v505 = vsel %vm504, %v489, %v503
      %v506 = vsel %vm353, %v499, %v500
      %v507 = vsel %vm504, %v491, %v506
      %v508 = vsel %vm353, %v500, %v501
      %v509 = vsel %vm504, %v493, %v508
      %v510 = vsel %vm353, %v501, %v502
      %v511 = vsel %vm504, %v495, %v510
      %516 = vst [vmem:[#allocation5 + $0x20] sm:$0x11] %v505
      %517 = vst [vmem:[#allocation5 + $0x28] sm:$0x11] %v507
      %518 = vst [vmem:[#allocation5 + $0x30] sm:$0x11] %v509
      %519 = vst [vmem:[#allocation5 + $0x38] sm:$0x11] %v511
      %v520 = vld [vmem:[%s297] sm:$0xff]
      %v521 = vld [vmem:[%s297 + $0x8] sm:$0x1]
      %s523 = scalar_lea.vmem [#allocation1], 1
      %524 = vst [vmem:[%s523] ss:$4 sm:$0xff] %v520
      %s526 = scalar_lea.vmem [#allocation1], 33
      %527 = vst [vmem:[%s526] ss:$4 sm:$0xff] %v521
      %v528 = vld [vmem:[#allocation1] sm:$0xff]
      %v530 = vld [vmem:[#allocation1 + $0x8] sm:$0xff]
      %v532 = vld [vmem:[#allocation1 + $0x10] sm:$0xff]
      %v534 = vld [vmem:[#allocation1 + $0x18] sm:$0xff]
      %v536 = vld [vmem:[#allocation1 + $0x20] sm:$0xff]
      %538 = vrot.lane.b32.xlu0 %v528, 116
      %v539 = vpop.permute.xlu0 %538
      %540 = vrot.lane.b32.xlu0 %v530, 116
      %v541 = vpop.permute.xlu0 %540
      %542 = vrot.lane.b32.xlu0 %v532, 116
      %v543 = vpop.permute.xlu0 %542
      %544 = vrot.lane.b32.xlu0 %v534, 116
      %v545 = vpop.permute.xlu0 %544
      %546 = vrot.lane.b32.xlu0 %v536, 116
      %v547 = vpop.permute.xlu0 %546
      %v548 = vrot.slane %v539, 4
      %v549 = vrot.slane %v541, 4
      %v550 = vrot.slane %v543, 4
      %v551 = vrot.slane %v545, 4
      %v552 = vrot.slane %v547, 4
      %v553 = vsel %vm353, %v548, %v549
      %vm554 = vcmask 949248
      %v555 = vsel %vm554, %v539, %v553
      %v556 = vsel %vm353, %v549, %v550
      %v557 = vsel %vm554, %v541, %v556
      %v558 = vsel %vm353, %v550, %v551
      %v559 = vsel %vm554, %v543, %v558
      %v560 = vsel %vm353, %v551, %v552
      %v561 = vsel %vm554, %v545, %v560
      %566 = vst [vmem:[#allocation5 + $0x20] sm:$0x22] %v555
      %567 = vst [vmem:[#allocation5 + $0x28] sm:$0x22] %v557
      %568 = vst [vmem:[#allocation5 + $0x30] sm:$0x22] %v559
      %569 = vst [vmem:[#allocation5 + $0x38] sm:$0x22] %v561
      %v570 = vld [vmem:[%s297] sm:$0xff]
      %v571 = vld [vmem:[%s297 + $0x8] sm:$0x1]
      %s573 = scalar_lea.vmem [#allocation1], 2
      %574 = vst [vmem:[%s573] ss:$4 sm:$0xff] %v570
      %s576 = scalar_lea.vmem [#allocation1], 34
      %577 = vst [vmem:[%s576] ss:$4 sm:$0xff] %v571
      %v578 = vld [vmem:[#allocation1] sm:$0xff]
      %v580 = vld [vmem:[#allocation1 + $0x8] sm:$0xff]
      %v582 = vld [vmem:[#allocation1 + $0x10] sm:$0xff]
      %v584 = vld [vmem:[#allocation1 + $0x18] sm:$0xff]
      %v586 = vld [vmem:[#allocation1 + $0x20] sm:$0xff]
      %588 = vrot.lane.b32.xlu0 %v578, 108
      %v589 = vpop.permute.xlu0 %588
      %590 = vrot.lane.b32.xlu0 %v580, 108
      %v591 = vpop.permute.xlu0 %590
      %592 = vrot.lane.b32.xlu0 %v582, 108
      %v593 = vpop.permute.xlu0 %592
      %594 = vrot.lane.b32.xlu0 %v584, 108
      %v595 = vpop.permute.xlu0 %594
      %596 = vrot.lane.b32.xlu0 %v586, 108
      %v597 = vpop.permute.xlu0 %596
      %v598 = vrot.slane %v589, 4
      %v599 = vrot.slane %v591, 4
      %v600 = vrot.slane %v593, 4
      %v601 = vrot.slane %v595, 4
      %v602 = vrot.slane %v597, 4
      %v603 = vsel %vm353, %v598, %v599
      %vm604 = vcmask 883712
      %v605 = vsel %vm604, %v589, %v603
      %v606 = vsel %vm353, %v599, %v600
      %v607 = vsel %vm604, %v591, %v606
      %v608 = vsel %vm353, %v600, %v601
      %v609 = vsel %vm604, %v593, %v608
      %v610 = vsel %vm353, %v601, %v602
      %v611 = vsel %vm604, %v595, %v610
      %616 = vst [vmem:[#allocation5 + $0x20] sm:$0x44] %v605
      %617 = vst [vmem:[#allocation5 + $0x28] sm:$0x44] %v607
      %618 = vst [vmem:[#allocation5 + $0x30] sm:$0x44] %v609
      %619 = vst [vmem:[#allocation5 + $0x38] sm:$0x44] %v611
      %v620 = vld [vmem:[%s297] sm:$0xff]
      %v621 = vld [vmem:[%s297 + $0x8] sm:$0x1]
      %s623 = scalar_lea.vmem [#allocation1], 3
      %624 = vst [vmem:[%s623] ss:$4 sm:$0xff] %v620
      %s626 = scalar_lea.vmem [#allocation1], 35
      %627 = vst [vmem:[%s626] ss:$4 sm:$0xff] %v621
      %v628 = vld [vmem:[#allocation1] sm:$0xff]
      %v630 = vld [vmem:[#allocation1 + $0x8] sm:$0xff]
      %v632 = vld [vmem:[#allocation1 + $0x10] sm:$0xff]
      %v634 = vld [vmem:[#allocation1 + $0x18] sm:$0xff]
      %v636 = vld [vmem:[#allocation1 + $0x20] sm:$0xff]
      %638 = vrot.lane.b32.xlu0 %v628, 107
      %v639 = vpop.permute.xlu0 %638
      %640 = vrot.lane.b32.xlu0 %v630, 107
      %v641 = vpop.permute.xlu0 %640
      %642 = vrot.lane.b32.xlu0 %v632, 107
      %v643 = vpop.permute.xlu0 %642
      %644 = vrot.lane.b32.xlu0 %v634, 107
      %v645 = vpop.permute.xlu0 %644
      %646 = vrot.lane.b32.xlu0 %v636, 107
      %v647 = vpop.permute.xlu0 %646
      %v648 = vrot.slane %v639, 4
      %v649 = vrot.slane %v641, 4
      %v650 = vrot.slane %v643, 4
      %v651 = vrot.slane %v645, 4
      %v652 = vrot.slane %v647, 4
      %v653 = vsel %vm353, %v648, %v649
      %vm654 = vcmask 875520
      %v655 = vsel %vm654, %v639, %v653
      %v656 = vsel %vm353, %v649, %v650
      %v657 = vsel %vm654, %v641, %v656
      %v658 = vsel %vm353, %v650, %v651
      %v659 = vsel %vm654, %v643, %v658
      %v660 = vsel %vm353, %v651, %v652
      %v661 = vsel %vm654, %v645, %v660
      %666 = vst [vmem:[#allocation5 + $0x20] sm:$0x88] %v655
      %667 = vst [vmem:[#allocation5 + $0x28] sm:$0x88] %v657
      %668 = vst [vmem:[#allocation5 + $0x30] sm:$0x88] %v659
      %669 = vst [vmem:[#allocation5 + $0x38] sm:$0x88] %v661
      %v670 = vld [vmem:[%s297] sm:$0xff]
      %v671 = vld [vmem:[%s297 + $0x8] sm:$0x1]
      %673 = vst [vmem:[#allocation1] ss:$4 sm:$0xff] %v670
      %s675 = scalar_lea.vmem [#allocation1], 32
      %676 = vst [vmem:[%s675] ss:$4 sm:$0xff] %v671
      %v677 = vld [vmem:[#allocation1] sm:$0xff]
      %v679 = vld [vmem:[#allocation1 + $0x8] sm:$0xff]
      %v681 = vld [vmem:[#allocation1 + $0x10] sm:$0xff]
      %v683 = vld [vmem:[#allocation1 + $0x18] sm:$0xff]
      %v685 = vld [vmem:[#allocation1 + $0x20] sm:$0xff]
      %687 = vrot.lane.b32.xlu0 %v677, 106
      %v688 = vpop.permute.xlu0 %687
      %689 = vrot.lane.b32.xlu0 %v679, 106
      %v690 = vpop.permute.xlu0 %689
      %691 = vrot.lane.b32.xlu0 %v681, 106
      %v692 = vpop.permute.xlu0 %691
      %693 = vrot.lane.b32.xlu0 %v683, 106
      %v694 = vpop.permute.xlu0 %693
      %695 = vrot.lane.b32.xlu0 %v685, 106
      %v696 = vpop.permute.xlu0 %695
      %v697 = vrot.slane %v688, 4
      %v698 = vrot.slane %v690, 4
      %v699 = vrot.slane %v692, 4
      %v700 = vrot.slane %v694, 4
      %v701 = vrot.slane %v696, 4
      %v702 = vsel %vm353, %v697, %v698
      %vm703 = vcmask 867328
      %v704 = vsel %vm703, %v688, %v702
      %v705 = vsel %vm353, %v698, %v699
      %v706 = vsel %vm703, %v690, %v705
      %v707 = vsel %vm353, %v699, %v700
      %v708 = vsel %vm703, %v692, %v707
      %v709 = vsel %vm353, %v700, %v701
      %v710 = vsel %vm703, %v694, %v709
      %715 = vst [vmem:[#allocation5 + $0x40] sm:$0x11] %v704
      %716 = vst [vmem:[#allocation5 + $0x48] sm:$0x11] %v706
      %717 = vst [vmem:[#allocation5 + $0x50] sm:$0x11] %v708
      %718 = vst [vmem:[#allocation5 + $0x58] sm:$0x11] %v710
      %v719 = vld [vmem:[%s297 + $0x1] sm:$0xff]
      %s721 = scalar_lea.vmem [#allocation1], 1
      %722 = vst [vmem:[%s721] ss:$4 sm:$0xff] %v719
      %v723 = vld [vmem:[#allocation1] sm:$0xff]
      %v724 = vld [vmem:[#allocation1 + $0x8] sm:$0xff]
      %v725 = vld [vmem:[#allocation1 + $0x10] sm:$0xff]
      %v726 = vld [vmem:[#allocation1 + $0x18] sm:$0xff]
      %731 = vst [vmem:[#allocation5 + $0x40] sm:$0x22] %v723
      %732 = vst [vmem:[#allocation5 + $0x48] sm:$0x22] %v724
      %733 = vst [vmem:[#allocation5 + $0x50] sm:$0x22] %v725
      %734 = vst [vmem:[#allocation5 + $0x58] sm:$0x22] %v726
      %v735 = vld [vmem:[%s297 + $0x1] sm:$0xff]
      %v736 = vld [vmem:[%s297 + $0x9] sm:$0x1]
      %s738 = scalar_lea.vmem [#allocation1], 2
      %739 = vst [vmem:[%s738] ss:$4 sm:$0xff] %v735
      %s741 = scalar_lea.vmem [#allocation1], 34
      %742 = vst [vmem:[%s741] ss:$4 sm:$0xff] %v736
      %v743 = vld [vmem:[#allocation1] sm:$0xff]
      %v745 = vld [vmem:[#allocation1 + $0x8] sm:$0xff]
      %v747 = vld [vmem:[#allocation1 + $0x10] sm:$0xff]
      %v749 = vld [vmem:[#allocation1 + $0x18] sm:$0xff]
      %v751 = vld [vmem:[#allocation1 + $0x20] sm:$0xff]
      %753 = vrot.lane.b32.xlu0 %v743, 127
      %v754 = vpop.permute.xlu0 %753
      %755 = vrot.lane.b32.xlu0 %v745, 127
      %v756 = vpop.permute.xlu0 %755
      %757 = vrot.lane.b32.xlu0 %v747, 127
      %v758 = vpop.permute.xlu0 %757
      %759 = vrot.lane.b32.xlu0 %v749, 127
      %v760 = vpop.permute.xlu0 %759
      %761 = vrot.lane.b32.xlu0 %v751, 127
      %v762 = vpop.permute.xlu0 %761
      %v763 = vrot.slane %v754, 4
      %v764 = vrot.slane %v756, 4
      %v765 = vrot.slane %v758, 4
      %v766 = vrot.slane %v760, 4
      %v767 = vrot.slane %v762, 4
      %v768 = vsel %vm353, %v763, %v764
      %v769 = vsel %vm355, %v754, %v768
      %v770 = vsel %vm353, %v764, %v765
      %v771 = vsel %vm355, %v756, %v770
      %v772 = vsel %vm353, %v765, %v766
      %v773 = vsel %vm355, %v758, %v772
      %v774 = vsel %vm353, %v766, %v767
      %v775 = vsel %vm355, %v760, %v774
      %780 = vst [vmem:[#allocation5 + $0x40] sm:$0x44] %v769
      %781 = vst [vmem:[#allocation5 + $0x48] sm:$0x44] %v771
      %782 = vst [vmem:[#allocation5 + $0x50] sm:$0x44] %v773
      %783 = vst [vmem:[#allocation5 + $0x58] sm:$0x44] %v775
      %v784 = vld [vmem:[%s297 + $0x1] sm:$0xff]
      %v785 = vld [vmem:[%s297 + $0x9] sm:$0x1]
      %s787 = scalar_lea.vmem [#allocation1], 3
      %788 = vst [vmem:[%s787] ss:$4 sm:$0xff] %v784
      %s790 = scalar_lea.vmem [#allocation1], 35
      %791 = vst [vmem:[%s790] ss:$4 sm:$0xff] %v785
      %v792 = vld [vmem:[#allocation1] sm:$0xff]
      %v794 = vld [vmem:[#allocation1 + $0x8] sm:$0xff]
      %v796 = vld [vmem:[#allocation1 + $0x10] sm:$0xff]
      %v798 = vld [vmem:[#allocation1 + $0x18] sm:$0xff]
      %v800 = vld [vmem:[#allocation1 + $0x20] sm:$0xff]
      %802 = vrot.lane.b32.xlu0 %v792, 126
      %v803 = vpop.permute.xlu0 %802
      %804 = vrot.lane.b32.xlu0 %v794, 126
      %v805 = vpop.permute.xlu0 %804
      %806 = vrot.lane.b32.xlu0 %v796, 126
      %v807 = vpop.permute.xlu0 %806
      %808 = vrot.lane.b32.xlu0 %v798, 126
      %v809 = vpop.permute.xlu0 %808
      %810 = vrot.lane.b32.xlu0 %v800, 126
      %v811 = vpop.permute.xlu0 %810
      %v812 = vrot.slane %v803, 4
      %v813 = vrot.slane %v805, 4
      %v814 = vrot.slane %v807, 4
      %v815 = vrot.slane %v809, 4
      %v816 = vrot.slane %v811, 4
      %v817 = vsel %vm353, %v812, %v813
      %v818 = vsel %vm405, %v803, %v817
      %v819 = vsel %vm353, %v813, %v814
      %v820 = vsel %vm405, %v805, %v819
      %v821 = vsel %vm353, %v814, %v815
      %v822 = vsel %vm405, %v807, %v821
      %v823 = vsel %vm353, %v815, %v816
      %v824 = vsel %vm405, %v809, %v823
      %829 = vst [vmem:[#allocation5 + $0x40] sm:$0x88] %v818
      %830 = vst [vmem:[#allocation5 + $0x48] sm:$0x88] %v820
      %831 = vst [vmem:[#allocation5 + $0x50] sm:$0x88] %v822
      %832 = vst [vmem:[#allocation5 + $0x58] sm:$0x88] %v824
      %v833 = vld [vmem:[%s297 + $0x1] sm:$0xff]
      %v834 = vld [vmem:[%s297 + $0x9] sm:$0x1]
      %836 = vst [vmem:[#allocation1] ss:$4 sm:$0xff] %v833
      %s838 = scalar_lea.vmem [#allocation1], 32
      %839 = vst [vmem:[%s838] ss:$4 sm:$0xff] %v834
      %v840 = vld [vmem:[#allocation1] sm:$0xff]
      %v842 = vld [vmem:[#allocation1 + $0x8] sm:$0xff]
      %v844 = vld [vmem:[#allocation1 + $0x10] sm:$0xff]
      %v846 = vld [vmem:[#allocation1 + $0x18] sm:$0xff]
      %v848 = vld [vmem:[#allocation1 + $0x20] sm:$0xff]
      %850 = vrot.lane.b32.xlu0 %v840, 118
      %v851 = vpop.permute.xlu0 %850
      %852 = vrot.lane.b32.xlu0 %v842, 118
      %v853 = vpop.permute.xlu0 %852
      %854 = vrot.lane.b32.xlu0 %v844, 118
      %v855 = vpop.permute.xlu0 %854
      %856 = vrot.lane.b32.xlu0 %v846, 118
      %v857 = vpop.permute.xlu0 %856
      %858 = vrot.lane.b32.xlu0 %v848, 118
      %v859 = vpop.permute.xlu0 %858
      %v860 = vrot.slane %v851, 4
      %v861 = vrot.slane %v853, 4
      %v862 = vrot.slane %v855, 4
      %v863 = vrot.slane %v857, 4
      %v864 = vrot.slane %v859, 4
      %v865 = vsel %vm353, %v860, %v861
      %v866 = vsel %vm455, %v851, %v865
      %v867 = vsel %vm353, %v861, %v862
      %v868 = vsel %vm455, %v853, %v867
      %v869 = vsel %vm353, %v862, %v863
      %v870 = vsel %vm455, %v855, %v869
      %v871 = vsel %vm353, %v863, %v864
      %v872 = vsel %vm455, %v857, %v871
      %877 = vst [vmem:[#allocation5 + $0x60] sm:$0x11] %v866
      %878 = vst [vmem:[#allocation5 + $0x68] sm:$0x11] %v868
      %879 = vst [vmem:[#allocation5 + $0x70] sm:$0x11] %v870
      %880 = vst [vmem:[#allocation5 + $0x78] sm:$0x11] %v872
      %v881 = vld [vmem:[%s297 + $0x1] sm:$0xff]
      %v882 = vld [vmem:[%s297 + $0x9] sm:$0x1]
      %s884 = scalar_lea.vmem [#allocation1], 1
      %885 = vst [vmem:[%s884] ss:$4 sm:$0xff] %v881
      %s887 = scalar_lea.vmem [#allocation1], 33
      %888 = vst [vmem:[%s887] ss:$4 sm:$0xff] %v882
      %v889 = vld [vmem:[#allocation1] sm:$0xff]
      %v891 = vld [vmem:[#allocation1 + $0x8] sm:$0xff]
      %v893 = vld [vmem:[#allocation1 + $0x10] sm:$0xff]
      %v895 = vld [vmem:[#allocation1 + $0x18] sm:$0xff]
      %v897 = vld [vmem:[#allocation1 + $0x20] sm:$0xff]
      %899 = vrot.lane.b32.xlu0 %v889, 117
      %v900 = vpop.permute.xlu0 %899
      %901 = vrot.lane.b32.xlu0 %v891, 117
      %v902 = vpop.permute.xlu0 %901
      %903 = vrot.lane.b32.xlu0 %v893, 117
      %v904 = vpop.permute.xlu0 %903
      %905 = vrot.lane.b32.xlu0 %v895, 117
      %v906 = vpop.permute.xlu0 %905
      %907 = vrot.lane.b32.xlu0 %v897, 117
      %v908 = vpop.permute.xlu0 %907
      %v909 = vrot.slane %v900, 4
      %v910 = vrot.slane %v902, 4
      %v911 = vrot.slane %v904, 4
      %v912 = vrot.slane %v906, 4
      %v913 = vrot.slane %v908, 4
      %v914 = vsel %vm353, %v909, %v910
      %v915 = vsel %vm504, %v900, %v914
      %v916 = vsel %vm353, %v910, %v911
      %v917 = vsel %vm504, %v902, %v916
      %v918 = vsel %vm353, %v911, %v912
      %v919 = vsel %vm504, %v904, %v918
      %v920 = vsel %vm353, %v912, %v913
      %v921 = vsel %vm504, %v906, %v920
      %926 = vst [vmem:[#allocation5 + $0x60] sm:$0x22] %v915
      %927 = vst [vmem:[#allocation5 + $0x68] sm:$0x22] %v917
      %928 = vst [vmem:[#allocation5 + $0x70] sm:$0x22] %v919
      %929 = vst [vmem:[#allocation5 + $0x78] sm:$0x22] %v921
      %v930 = vld [vmem:[%s297 + $0x1] sm:$0xff]
      %v931 = vld [vmem:[%s297 + $0x9] sm:$0x1]
      %s933 = scalar_lea.vmem [#allocation1], 2
      %934 = vst [vmem:[%s933] ss:$4 sm:$0xff] %v930
      %s936 = scalar_lea.vmem [#allocation1], 34
      %937 = vst [vmem:[%s936] ss:$4 sm:$0xff] %v931
      %v938 = vld [vmem:[#allocation1] sm:$0xff]
      %v940 = vld [vmem:[#allocation1 + $0x8] sm:$0xff]
      %v942 = vld [vmem:[#allocation1 + $0x10] sm:$0xff]
      %v944 = vld [vmem:[#allocation1 + $0x18] sm:$0xff]
      %v946 = vld [vmem:[#allocation1 + $0x20] sm:$0xff]
      %948 = vrot.lane.b32.xlu0 %v938, 116
      %v949 = vpop.permute.xlu0 %948
      %950 = vrot.lane.b32.xlu0 %v940, 116
      %v951 = vpop.permute.xlu0 %950
      %952 = vrot.lane.b32.xlu0 %v942, 116
      %v953 = vpop.permute.xlu0 %952
      %954 = vrot.lane.b32.xlu0 %v944, 116
      %v955 = vpop.permute.xlu0 %954
      %956 = vrot.lane.b32.xlu0 %v946, 116
      %v957 = vpop.permute.xlu0 %956
      %v958 = vrot.slane %v949, 4
      %v959 = vrot.slane %v951, 4
      %v960 = vrot.slane %v953, 4
      %v961 = vrot.slane %v955, 4
      %v962 = vrot.slane %v957, 4
      %v963 = vsel %vm353, %v958, %v959
      %v964 = vsel %vm554, %v949, %v963
      %v965 = vsel %vm353, %v959, %v960
      %v966 = vsel %vm554, %v951, %v965
      %v967 = vsel %vm353, %v960, %v961
      %v968 = vsel %vm554, %v953, %v967
      %v969 = vsel %vm353, %v961, %v962
      %v970 = vsel %vm554, %v955, %v969
      %975 = vst [vmem:[#allocation5 + $0x60] sm:$0x44] %v964
      %976 = vst [vmem:[#allocation5 + $0x68] sm:$0x44] %v966
      %977 = vst [vmem:[#allocation5 + $0x70] sm:$0x44] %v968
      %978 = vst [vmem:[#allocation5 + $0x78] sm:$0x44] %v970
      %v979 = vld [vmem:[%s297 + $0x1] sm:$0xff]
      %v980 = vld [vmem:[%s297 + $0x9] sm:$0x1]
      %s982 = scalar_lea.vmem [#allocation1], 3
      %983 = vst [vmem:[%s982] ss:$4 sm:$0xff] %v979
      %s985 = scalar_lea.vmem [#allocation1], 35
      %986 = vst [vmem:[%s985] ss:$4 sm:$0xff] %v980
      %v987 = vld [vmem:[#allocation1] sm:$0xff]
      %v989 = vld [vmem:[#allocation1 + $0x8] sm:$0xff]
      %v991 = vld [vmem:[#allocation1 + $0x10] sm:$0xff]
      %v993 = vld [vmem:[#allocation1 + $0x18] sm:$0xff]
      %v995 = vld [vmem:[#allocation1 + $0x20] sm:$0xff]
      %997 = vrot.lane.b32.xlu0 %v987, 108
      %v998 = vpop.permute.xlu0 %997
      %999 = vrot.lane.b32.xlu0 %v989, 108
      %v1000 = vpop.permute.xlu0 %999
      %1001 = vrot.lane.b32.xlu0 %v991, 108
      %v1002 = vpop.permute.xlu0 %1001
      %1003 = vrot.lane.b32.xlu0 %v993, 108
      %v1004 = vpop.permute.xlu0 %1003
      %1005 = vrot.lane.b32.xlu0 %v995, 108
      %v1006 = vpop.permute.xlu0 %1005
      %v1007 = vrot.slane %v998, 4
      %v1008 = vrot.slane %v1000, 4
      %v1009 = vrot.slane %v1002, 4
      %v1010 = vrot.slane %v1004, 4
      %v1011 = vrot.slane %v1006, 4
      %v1012 = vsel %vm353, %v1007, %v1008
      %v1013 = vsel %vm604, %v998, %v1012
      %v1014 = vsel %vm353, %v1008, %v1009
      %v1015 = vsel %vm604, %v1000, %v1014
      %v1016 = vsel %vm353, %v1009, %v1010
      %v1017 = vsel %vm604, %v1002, %v1016
      %v1018 = vsel %vm353, %v1010, %v1011
      %v1019 = vsel %vm604, %v1004, %v1018
      %1024 = vst [vmem:[#allocation5 + $0x60] sm:$0x88] %v1013
      %1025 = vst [vmem:[#allocation5 + $0x68] sm:$0x88] %v1015
      %1026 = vst [vmem:[#allocation5 + $0x70] sm:$0x88] %v1017
      %1027 = vst [vmem:[#allocation5 + $0x78] sm:$0x88] %v1019
      %v1028 = vld [vmem:[%s297 + $0x1] sm:$0xff]
      %v1029 = vld [vmem:[%s297 + $0x9] sm:$0x1]
      %1031 = vst [vmem:[#allocation1] ss:$4 sm:$0xff] %v1028
      %s1033 = scalar_lea.vmem [#allocation1], 32
      %1034 = vst [vmem:[%s1033] ss:$4 sm:$0xff] %v1029
      %v1035 = vld [vmem:[#allocation1] sm:$0xff]
      %v1037 = vld [vmem:[#allocation1 + $0x8] sm:$0xff]
      %v1039 = vld [vmem:[#allocation1 + $0x10] sm:$0xff]
      %v1041 = vld [vmem:[#allocation1 + $0x18] sm:$0xff]
      %v1043 = vld [vmem:[#allocation1 + $0x20] sm:$0xff]
      %1045 = vrot.lane.b32.xlu0 %v1035, 107
      %v1046 = vpop.permute.xlu0 %1045
      %1047 = vrot.lane.b32.xlu0 %v1037, 107
      %v1048 = vpop.permute.xlu0 %1047
      %1049 = vrot.lane.b32.xlu0 %v1039, 107
      %v1050 = vpop.permute.xlu0 %1049
      %1051 = vrot.lane.b32.xlu0 %v1041, 107
      %v1052 = vpop.permute.xlu0 %1051
      %1053 = vrot.lane.b32.xlu0 %v1043, 107
      %v1054 = vpop.permute.xlu0 %1053
      %v1055 = vrot.slane %v1046, 4
      %v1056 = vrot.slane %v1048, 4
      %v1057 = vrot.slane %v1050, 4
      %v1058 = vrot.slane %v1052, 4
      %v1059 = vrot.slane %v1054, 4
      %v1060 = vsel %vm353, %v1055, %v1056
      %v1061 = vsel %vm654, %v1046, %v1060
      %v1062 = vsel %vm353, %v1056, %v1057
      %v1063 = vsel %vm654, %v1048, %v1062
      %v1064 = vsel %vm353, %v1057, %v1058
      %v1065 = vsel %vm654, %v1050, %v1064
      %v1066 = vsel %vm353, %v1058, %v1059
      %v1067 = vsel %vm654, %v1052, %v1066
      %1072 = vst [vmem:[#allocation5 + $0x80] sm:$0x11] %v1061
      %1073 = vst [vmem:[#allocation5 + $0x88] sm:$0x11] %v1063
      %1074 = vst [vmem:[#allocation5 + $0x90] sm:$0x11] %v1065
      %1075 = vst [vmem:[#allocation5 + $0x98] sm:$0x11] %v1067
      %v1076 = vld [vmem:[%s297 + $0x1] sm:$0xff]
      %v1077 = vld [vmem:[%s297 + $0x9] sm:$0x1]
      %s1079 = scalar_lea.vmem [#allocation1], 1
      %1080 = vst [vmem:[%s1079] ss:$4 sm:$0xff] %v1076
      %s1082 = scalar_lea.vmem [#allocation1], 33
      %1083 = vst [vmem:[%s1082] ss:$4 sm:$0xff] %v1077
      %v1084 = vld [vmem:[#allocation1] sm:$0xff]
      %v1086 = vld [vmem:[#allocation1 + $0x8] sm:$0xff]
      %v1088 = vld [vmem:[#allocation1 + $0x10] sm:$0xff]
      %v1090 = vld [vmem:[#allocation1 + $0x18] sm:$0xff]
      %v1092 = vld [vmem:[#allocation1 + $0x20] sm:$0xff]
      %1094 = vrot.lane.b32.xlu0 %v1084, 106
      %v1095 = vpop.permute.xlu0 %1094
      %1096 = vrot.lane.b32.xlu0 %v1086, 106
      %v1097 = vpop.permute.xlu0 %1096
      %1098 = vrot.lane.b32.xlu0 %v1088, 106
      %v1099 = vpop.permute.xlu0 %1098
      %1100 = vrot.lane.b32.xlu0 %v1090, 106
      %v1101 = vpop.permute.xlu0 %1100
      %1102 = vrot.lane.b32.xlu0 %v1092, 106
      %v1103 = vpop.permute.xlu0 %1102
      %v1104 = vrot.slane %v1095, 4
      %v1105 = vrot.slane %v1097, 4
      %v1106 = vrot.slane %v1099, 4
      %v1107 = vrot.slane %v1101, 4
      %v1108 = vrot.slane %v1103, 4
      %v1109 = vsel %vm353, %v1104, %v1105
      %v1110 = vsel %vm703, %v1095, %v1109
      %v1111 = vsel %vm353, %v1105, %v1106
      %v1112 = vsel %vm703, %v1097, %v1111
      %v1113 = vsel %vm353, %v1106, %v1107
      %v1114 = vsel %vm703, %v1099, %v1113
      %v1115 = vsel %vm353, %v1107, %v1108
      %v1116 = vsel %vm703, %v1101, %v1115
      %1121 = vst [vmem:[#allocation5 + $0x80] sm:$0x22] %v1110
      %1122 = vst [vmem:[#allocation5 + $0x88] sm:$0x22] %v1112
      %1123 = vst [vmem:[#allocation5 + $0x90] sm:$0x22] %v1114
      %1124 = vst [vmem:[#allocation5 + $0x98] sm:$0x22] %v1116
      %v1125 = vld [vmem:[%s297 + $0x2] sm:$0xff]
      %s1127 = scalar_lea.vmem [#allocation1], 2
      %1128 = vst [vmem:[%s1127] ss:$4 sm:$0xff] %v1125
      %v1129 = vld [vmem:[#allocation1] sm:$0xff]
      %v1130 = vld [vmem:[#allocation1 + $0x8] sm:$0xff]
      %v1131 = vld [vmem:[#allocation1 + $0x10] sm:$0xff]
      %v1132 = vld [vmem:[#allocation1 + $0x18] sm:$0xff]
      %1137 = vst [vmem:[#allocation5 + $0x80] sm:$0x44] %v1129
      %1138 = vst [vmem:[#allocation5 + $0x88] sm:$0x44] %v1130
      %1139 = vst [vmem:[#allocation5 + $0x90] sm:$0x44] %v1131
      %1140 = vst [vmem:[#allocation5 + $0x98] sm:$0x44] %v1132
      %v1141 = vld [vmem:[%s297 + $0x2] sm:$0xff]
      %v1142 = vld [vmem:[%s297 + $0xa] sm:$0x1]
      %s1144 = scalar_lea.vmem [#allocation1], 3
      %1145 = vst [vmem:[%s1144] ss:$4 sm:$0xff] %v1141
      %s1147 = scalar_lea.vmem [#allocation1], 35
      %1148 = vst [vmem:[%s1147] ss:$4 sm:$0xff] %v1142
      %v1149 = vld [vmem:[#allocation1] sm:$0xff]
      %v1151 = vld [vmem:[#allocation1 + $0x8] sm:$0xff]
      %v1153 = vld [vmem:[#allocation1 + $0x10] sm:$0xff]
      %v1155 = vld [vmem:[#allocation1 + $0x18] sm:$0xff]
      %v1157 = vld [vmem:[#allocation1 + $0x20] sm:$0xff]
      %1159 = vrot.lane.b32.xlu0 %v1149, 127
      %v1160 = vpop.permute.xlu0 %1159
      %1161 = vrot.lane.b32.xlu0 %v1151, 127
      %v1162 = vpop.permute.xlu0 %1161
      %1163 = vrot.lane.b32.xlu0 %v1153, 127
      %v1164 = vpop.permute.xlu0 %1163
      %1165 = vrot.lane.b32.xlu0 %v1155, 127
      %v1166 = vpop.permute.xlu0 %1165
      %1167 = vrot.lane.b32.xlu0 %v1157, 127
      %v1168 = vpop.permute.xlu0 %1167
      %v1169 = vrot.slane %v1160, 4
      %v1170 = vrot.slane %v1162, 4
      %v1171 = vrot.slane %v1164, 4
      %v1172 = vrot.slane %v1166, 4
      %v1173 = vrot.slane %v1168, 4
      %v1174 = vsel %vm353, %v1169, %v1170
      %v1175 = vsel %vm355, %v1160, %v1174
      %v1176 = vsel %vm353, %v1170, %v1171
      %v1177 = vsel %vm355, %v1162, %v1176
      %v1178 = vsel %vm353, %v1171, %v1172
      %v1179 = vsel %vm355, %v1164, %v1178
      %v1180 = vsel %vm353, %v1172, %v1173
      %v1181 = vsel %vm355, %v1166, %v1180
      %1186 = vst [vmem:[#allocation5 + $0x80] sm:$0x88] %v1175
      %1187 = vst [vmem:[#allocation5 + $0x88] sm:$0x88] %v1177
      %1188 = vst [vmem:[#allocation5 + $0x90] sm:$0x88] %v1179
      %1189 = vst [vmem:[#allocation5 + $0x98] sm:$0x88] %v1181
      %v1190 = vld [vmem:[%s297 + $0x2] sm:$0xff]
      %v1191 = vld [vmem:[%s297 + $0xa] sm:$0x1]
      %1193 = vst [vmem:[#allocation1] ss:$4 sm:$0xff] %v1190
      %s1195 = scalar_lea.vmem [#allocation1], 32
      %1196 = vst [vmem:[%s1195] ss:$4 sm:$0xff] %v1191
      %v1197 = vld [vmem:[#allocation1] sm:$0xff]
      %v1199 = vld [vmem:[#allocation1 + $0x8] sm:$0xff]
      %v1201 = vld [vmem:[#allocation1 + $0x10] sm:$0xff]
      %v1203 = vld [vmem:[#allocation1 + $0x18] sm:$0xff]
      %v1205 = vld [vmem:[#allocation1 + $0x20] sm:$0xff]
      %1207 = vrot.lane.b32.xlu0 %v1197, 126
      %v1208 = vpop.permute.xlu0 %1207
      %1209 = vrot.lane.b32.xlu0 %v1199, 126
      %v1210 = vpop.permute.xlu0 %1209
      %1211 = vrot.lane.b32.xlu0 %v1201, 126
      %v1212 = vpop.permute.xlu0 %1211
      %1213 = vrot.lane.b32.xlu0 %v1203, 126
      %v1214 = vpop.permute.xlu0 %1213
      %1215 = vrot.lane.b32.xlu0 %v1205, 126
      %v1216 = vpop.permute.xlu0 %1215
      %v1217 = vrot.slane %v1208, 4
      %v1218 = vrot.slane %v1210, 4
      %v1219 = vrot.slane %v1212, 4
      %v1220 = vrot.slane %v1214, 4
      %v1221 = vrot.slane %v1216, 4
      %v1222 = vsel %vm353, %v1217, %v1218
      %v1223 = vsel %vm405, %v1208, %v1222
      %v1224 = vsel %vm353, %v1218, %v1219
      %v1225 = vsel %vm405, %v1210, %v1224
      %v1226 = vsel %vm353, %v1219, %v1220
      %v1227 = vsel %vm405, %v1212, %v1226
      %v1228 = vsel %vm353, %v1220, %v1221
      %v1229 = vsel %vm405, %v1214, %v1228
      %1234 = vst [vmem:[#allocation5 + $0xa0] sm:$0x11] %v1223
      %1235 = vst [vmem:[#allocation5 + $0xa8] sm:$0x11] %v1225
      %1236 = vst [vmem:[#allocation5 + $0xb0] sm:$0x11] %v1227
      %1237 = vst [vmem:[#allocation5 + $0xb8] sm:$0x11] %v1229
      %v1238 = vld [vmem:[%s297 + $0x2] sm:$0xff]
      %v1239 = vld [vmem:[%s297 + $0xa] sm:$0x1]
      %s1241 = scalar_lea.vmem [#allocation1], 1
      %1242 = vst [vmem:[%s1241] ss:$4 sm:$0xff] %v1238
      %s1244 = scalar_lea.vmem [#allocation1], 33
      %1245 = vst [vmem:[%s1244] ss:$4 sm:$0xff] %v1239
      %v1246 = vld [vmem:[#allocation1] sm:$0xff]
      %v1248 = vld [vmem:[#allocation1 + $0x8] sm:$0xff]
      %v1250 = vld [vmem:[#allocation1 + $0x10] sm:$0xff]
      %v1252 = vld [vmem:[#allocation1 + $0x18] sm:$0xff]
      %v1254 = vld [vmem:[#allocation1 + $0x20] sm:$0xff]
      %1256 = vrot.lane.b32.xlu0 %v1246, 118
      %v1257 = vpop.permute.xlu0 %1256
      %1258 = vrot.lane.b32.xlu0 %v1248, 118
      %v1259 = vpop.permute.xlu0 %1258
      %1260 = vrot.lane.b32.xlu0 %v1250, 118
      %v1261 = vpop.permute.xlu0 %1260
      %1262 = vrot.lane.b32.xlu0 %v1252, 118
      %v1263 = vpop.permute.xlu0 %1262
      %1264 = vrot.lane.b32.xlu0 %v1254, 118
      %v1265 = vpop.permute.xlu0 %1264
      %v1266 = vrot.slane %v1257, 4
      %v1267 = vrot.slane %v1259, 4
      %v1268 = vrot.slane %v1261, 4
      %v1269 = vrot.slane %v1263, 4
      %v1270 = vrot.slane %v1265, 4
      %v1271 = vsel %vm353, %v1266, %v1267
      %v1272 = vsel %vm455, %v1257, %v1271
      %v1273 = vsel %vm353, %v1267, %v1268
      %v1274 = vsel %vm455, %v1259, %v1273
      %v1275 = vsel %vm353, %v1268, %v1269
      %v1276 = vsel %vm455, %v1261, %v1275
      %v1277 = vsel %vm353, %v1269, %v1270
      %v1278 = vsel %vm455, %v1263, %v1277
      %1283 = vst [vmem:[#allocation5 + $0xa0] sm:$0x22] %v1272
      %1284 = vst [vmem:[#allocation5 + $0xa8] sm:$0x22] %v1274
      %1285 = vst [vmem:[#allocation5 + $0xb0] sm:$0x22] %v1276
      %1286 = vst [vmem:[#allocation5 + $0xb8] sm:$0x22] %v1278
      %v1287 = vld [vmem:[%s297 + $0x2] sm:$0xff]
      %v1288 = vld [vmem:[%s297 + $0xa] sm:$0x1]
      %s1290 = scalar_lea.vmem [#allocation1], 2
      %1291 = vst [vmem:[%s1290] ss:$4 sm:$0xff] %v1287
      %s1293 = scalar_lea.vmem [#allocation1], 34
      %1294 = vst [vmem:[%s1293] ss:$4 sm:$0xff] %v1288
      %v1295 = vld [vmem:[#allocation1] sm:$0xff]
      %v1297 = vld [vmem:[#allocation1 + $0x8] sm:$0xff]
      %v1299 = vld [vmem:[#allocation1 + $0x10] sm:$0xff]
      %v1301 = vld [vmem:[#allocation1 + $0x18] sm:$0xff]
      %v1303 = vld [vmem:[#allocation1 + $0x20] sm:$0xff]
      %1305 = vrot.lane.b32.xlu0 %v1295, 117
      %v1306 = vpop.permute.xlu0 %1305
      %1307 = vrot.lane.b32.xlu0 %v1297, 117
      %v1308 = vpop.permute.xlu0 %1307
      %1309 = vrot.lane.b32.xlu0 %v1299, 117
      %v1310 = vpop.permute.xlu0 %1309
      %1311 = vrot.lane.b32.xlu0 %v1301, 117
      %v1312 = vpop.permute.xlu0 %1311
      %1313 = vrot.lane.b32.xlu0 %v1303, 117
      %v1314 = vpop.permute.xlu0 %1313
      %v1315 = vrot.slane %v1306, 4
      %v1316 = vrot.slane %v1308, 4
      %v1317 = vrot.slane %v1310, 4
      %v1318 = vrot.slane %v1312, 4
      %v1319 = vrot.slane %v1314, 4
      %v1320 = vsel %vm353, %v1315, %v1316
      %v1321 = vsel %vm504, %v1306, %v1320
      %v1322 = vsel %vm353, %v1316, %v1317
      %v1323 = vsel %vm504, %v1308, %v1322
      %v1324 = vsel %vm353, %v1317, %v1318
      %v1325 = vsel %vm504, %v1310, %v1324
      %v1326 = vsel %vm353, %v1318, %v1319
      %v1327 = vsel %vm504, %v1312, %v1326
      %1332 = vst [vmem:[#allocation5 + $0xa0] sm:$0x44] %v1321
      %1333 = vst [vmem:[#allocation5 + $0xa8] sm:$0x44] %v1323
      %1334 = vst [vmem:[#allocation5 + $0xb0] sm:$0x44] %v1325
      %1335 = vst [vmem:[#allocation5 + $0xb8] sm:$0x44] %v1327
      %v1336 = vld [vmem:[%s297 + $0x2] sm:$0xff]
      %v1337 = vld [vmem:[%s297 + $0xa] sm:$0x1]
      %s1339 = scalar_lea.vmem [#allocation1], 3
      %1340 = vst [vmem:[%s1339] ss:$4 sm:$0xff] %v1336
      %s1342 = scalar_lea.vmem [#allocation1], 35
      %1343 = vst [vmem:[%s1342] ss:$4 sm:$0xff] %v1337
      %v1344 = vld [vmem:[#allocation1] sm:$0xff]
      %v1346 = vld [vmem:[#allocation1 + $0x8] sm:$0xff]
      %v1348 = vld [vmem:[#allocation1 + $0x10] sm:$0xff]
      %v1350 = vld [vmem:[#allocation1 + $0x18] sm:$0xff]
      %v1352 = vld [vmem:[#allocation1 + $0x20] sm:$0xff]
      %1354 = vrot.lane.b32.xlu0 %v1344, 116
      %v1355 = vpop.permute.xlu0 %1354
      %1356 = vrot.lane.b32.xlu0 %v1346, 116
      %v1357 = vpop.permute.xlu0 %1356
      %1358 = vrot.lane.b32.xlu0 %v1348, 116
      %v1359 = vpop.permute.xlu0 %1358
      %1360 = vrot.lane.b32.xlu0 %v1350, 116
      %v1361 = vpop.permute.xlu0 %1360
      %1362 = vrot.lane.b32.xlu0 %v1352, 116
      %v1363 = vpop.permute.xlu0 %1362
      %v1364 = vrot.slane %v1355, 4
      %v1365 = vrot.slane %v1357, 4
      %v1366 = vrot.slane %v1359, 4
      %v1367 = vrot.slane %v1361, 4
      %v1368 = vrot.slane %v1363, 4
      %v1369 = vsel %vm353, %v1364, %v1365
      %v1370 = vsel %vm554, %v1355, %v1369
      %v1371 = vsel %vm353, %v1365, %v1366
      %v1372 = vsel %vm554, %v1357, %v1371
      %v1373 = vsel %vm353, %v1366, %v1367
      %v1374 = vsel %vm554, %v1359, %v1373
      %v1375 = vsel %vm353, %v1367, %v1368
      %v1376 = vsel %vm554, %v1361, %v1375
      %1381 = vst [vmem:[#allocation5 + $0xa0] sm:$0x88] %v1370
      %1382 = vst [vmem:[#allocation5 + $0xa8] sm:$0x88] %v1372
      %1383 = vst [vmem:[#allocation5 + $0xb0] sm:$0x88] %v1374
      %1384 = vst [vmem:[#allocation5 + $0xb8] sm:$0x88] %v1376
      %v1385 = vld [vmem:[%s297 + $0x2] sm:$0xff]
      %v1386 = vld [vmem:[%s297 + $0xa] sm:$0x1]
      %1388 = vst [vmem:[#allocation1] ss:$4 sm:$0xff] %v1385
      %s1390 = scalar_lea.vmem [#allocation1], 32
      %1391 = vst [vmem:[%s1390] ss:$4 sm:$0xff] %v1386
      %v1392 = vld [vmem:[#allocation1] sm:$0xff]
      %v1394 = vld [vmem:[#allocation1 + $0x8] sm:$0xff]
      %v1396 = vld [vmem:[#allocation1 + $0x10] sm:$0xff]
      %v1398 = vld [vmem:[#allocation1 + $0x18] sm:$0xff]
      %v1400 = vld [vmem:[#allocation1 + $0x20] sm:$0xff]
      %1402 = vrot.lane.b32.xlu0 %v1392, 108
      %v1403 = vpop.permute.xlu0 %1402
      %1404 = vrot.lane.b32.xlu0 %v1394, 108
      %v1405 = vpop.permute.xlu0 %1404
      %1406 = vrot.lane.b32.xlu0 %v1396, 108
      %v1407 = vpop.permute.xlu0 %1406
      %1408 = vrot.lane.b32.xlu0 %v1398, 108
      %v1409 = vpop.permute.xlu0 %1408
      %1410 = vrot.lane.b32.xlu0 %v1400, 108
      %v1411 = vpop.permute.xlu0 %1410
      %v1412 = vrot.slane %v1403, 4
      %v1413 = vrot.slane %v1405, 4
      %v1414 = vrot.slane %v1407, 4
      %v1415 = vrot.slane %v1409, 4
      %v1416 = vrot.slane %v1411, 4
      %v1417 = vsel %vm353, %v1412, %v1413
      %v1418 = vsel %vm604, %v1403, %v1417
      %v1419 = vsel %vm353, %v1413, %v1414
      %v1420 = vsel %vm604, %v1405, %v1419
      %v1421 = vsel %vm353, %v1414, %v1415
      %v1422 = vsel %vm604, %v1407, %v1421
      %v1423 = vsel %vm353, %v1415, %v1416
      %v1424 = vsel %vm604, %v1409, %v1423
      %1429 = vst [vmem:[#allocation5 + $0xc0] sm:$0x11] %v1418
      %1430 = vst [vmem:[#allocation5 + $0xc8] sm:$0x11] %v1420
      %1431 = vst [vmem:[#allocation5 + $0xd0] sm:$0x11] %v1422
      %1432 = vst [vmem:[#allocation5 + $0xd8] sm:$0x11] %v1424
      %v1433 = vld [vmem:[%s297 + $0x2] sm:$0xff]
      %v1434 = vld [vmem:[%s297 + $0xa] sm:$0x1]
      %s1436 = scalar_lea.vmem [#allocation1], 1
      %1437 = vst [vmem:[%s1436] ss:$4 sm:$0xff] %v1433
      %s1439 = scalar_lea.vmem [#allocation1], 33
      %1440 = vst [vmem:[%s1439] ss:$4 sm:$0xff] %v1434
      %v1441 = vld [vmem:[#allocation1] sm:$0xff]
      %v1443 = vld [vmem:[#allocation1 + $0x8] sm:$0xff]
      %v1445 = vld [vmem:[#allocation1 + $0x10] sm:$0xff]
      %v1447 = vld [vmem:[#allocation1 + $0x18] sm:$0xff]
      %v1449 = vld [vmem:[#allocation1 + $0x20] sm:$0xff]
      %1451 = vrot.lane.b32.xlu0 %v1441, 107
      %v1452 = vpop.permute.xlu0 %1451
      %1453 = vrot.lane.b32.xlu0 %v1443, 107
      %v1454 = vpop.permute.xlu0 %1453
      %1455 = vrot.lane.b32.xlu0 %v1445, 107
      %v1456 = vpop.permute.xlu0 %1455
      %1457 = vrot.lane.b32.xlu0 %v1447, 107
      %v1458 = vpop.permute.xlu0 %1457
      %1459 = vrot.lane.b32.xlu0 %v1449, 107
      %v1460 = vpop.permute.xlu0 %1459
      %v1461 = vrot.slane %v1452, 4
      %v1462 = vrot.slane %v1454, 4
      %v1463 = vrot.slane %v1456, 4
      %v1464 = vrot.slane %v1458, 4
      %v1465 = vrot.slane %v1460, 4
      %v1466 = vsel %vm353, %v1461, %v1462
      %v1467 = vsel %vm654, %v1452, %v1466
      %v1468 = vsel %vm353, %v1462, %v1463
      %v1469 = vsel %vm654, %v1454, %v1468
      %v1470 = vsel %vm353, %v1463, %v1464
      %v1471 = vsel %vm654, %v1456, %v1470
      %v1472 = vsel %vm353, %v1464, %v1465
      %v1473 = vsel %vm654, %v1458, %v1472
      %1478 = vst [vmem:[#allocation5 + $0xc0] sm:$0x22] %v1467
      %1479 = vst [vmem:[#allocation5 + $0xc8] sm:$0x22] %v1469
      %1480 = vst [vmem:[#allocation5 + $0xd0] sm:$0x22] %v1471
      %1481 = vst [vmem:[#allocation5 + $0xd8] sm:$0x22] %v1473
      %v1482 = vld [vmem:[%s297 + $0x2] sm:$0xff]
      %v1483 = vld [vmem:[%s297 + $0xa] sm:$0x1]
      %s1485 = scalar_lea.vmem [#allocation1], 2
      %1486 = vst [vmem:[%s1485] ss:$4 sm:$0xff] %v1482
      %s1488 = scalar_lea.vmem [#allocation1], 34
      %1489 = vst [vmem:[%s1488] ss:$4 sm:$0xff] %v1483
      %v1490 = vld [vmem:[#allocation1] sm:$0xff]
      %v1492 = vld [vmem:[#allocation1 + $0x8] sm:$0xff]
      %v1494 = vld [vmem:[#allocation1 + $0x10] sm:$0xff]
      %v1496 = vld [vmem:[#allocation1 + $0x18] sm:$0xff]
      %v1498 = vld [vmem:[#allocation1 + $0x20] sm:$0xff]
      %1500 = vrot.lane.b32.xlu0 %v1490, 106
      %v1501 = vpop.permute.xlu0 %1500
      %1502 = vrot.lane.b32.xlu0 %v1492, 106
      %v1503 = vpop.permute.xlu0 %1502
      %1504 = vrot.lane.b32.xlu0 %v1494, 106
      %v1505 = vpop.permute.xlu0 %1504
      %1506 = vrot.lane.b32.xlu0 %v1496, 106
      %v1507 = vpop.permute.xlu0 %1506
      %1508 = vrot.lane.b32.xlu0 %v1498, 106
      %v1509 = vpop.permute.xlu0 %1508
      %v1510 = vrot.slane %v1501, 4
      %v1511 = vrot.slane %v1503, 4
      %v1512 = vrot.slane %v1505, 4
      %v1513 = vrot.slane %v1507, 4
      %v1514 = vrot.slane %v1509, 4
      %v1515 = vsel %vm353, %v1510, %v1511
      %v1516 = vsel %vm703, %v1501, %v1515
      %v1517 = vsel %vm353, %v1511, %v1512
      %v1518 = vsel %vm703, %v1503, %v1517
      %v1519 = vsel %vm353, %v1512, %v1513
      %v1520 = vsel %vm703, %v1505, %v1519
      %v1521 = vsel %vm353, %v1513, %v1514
      %v1522 = vsel %vm703, %v1507, %v1521
      %1527 = vst [vmem:[#allocation5 + $0xc0] sm:$0x44] %v1516
      %1528 = vst [vmem:[#allocation5 + $0xc8] sm:$0x44] %v1518
      %1529 = vst [vmem:[#allocation5 + $0xd0] sm:$0x44] %v1520
      %1530 = vst [vmem:[#allocation5 + $0xd8] sm:$0x44] %v1522
      %vm1531 = vcmask 1043459
      %vm1532 = vsmask.f32 3328
      %vm1533 = vmand %vm1531, %vm1532
      %vm1534 = vcmask 1047559
      %vm1535 = vsmask.f32 7424
      %vm1536 = vmand %vm1534, %vm1535
      %vm1537 = vmor %vm1536, %vm1533
      %v1538 = vld [vmem:[#allocation5 + $0xc0] sm:$0x88]
      %v1539 = vsel %vm1537, 1065369472, %v1538
      %1540 = vst [vmem:[#allocation5 + $0xc0] sm:$0x88] %v1539
      %v1541 = vld [vmem:[#allocation5 + $0xc8] sm:$0x88]
      %v1542 = vsel %vm1537, 1065369472, %v1541
      %1543 = vst [vmem:[#allocation5 + $0xc8] sm:$0x88] %v1542
      %v1544 = vld [vmem:[#allocation5 + $0xd0] sm:$0x88]
      %v1545 = vsel %vm1537, 1065369472, %v1544
      %1546 = vst [vmem:[#allocation5 + $0xd0] sm:$0x88] %v1545
      %v1547 = vld [vmem:[#allocation5 + $0xd8] sm:$0x88]
      %v1548 = vsel %vm1537, 1065369472, %v1547
      %1549 = vst [vmem:[#allocation5 + $0xd8] sm:$0x88] %v1548
      %v1550 = vld [vmem:[%s1] sm:$0xf]
      %v1551 = vld [vmem:[#allocation5] sm:$0xff]
      %v1552 = vld [vmem:[#allocation5 + $0x8] sm:$0xff]
      %v1553 = vld [vmem:[#allocation5 + $0x10] sm:$0xff]
      %v1554 = vld [vmem:[#allocation5 + $0x18] sm:$0xff]
      %v1555 = vld [vmem:[#allocation5 + $0x20] sm:$0xff]
      %v1556 = vld [vmem:[#allocation5 + $0x28] sm:$0xff]
      %v1557 = vld [vmem:[#allocation5 + $0x30] sm:$0xff]
      %v1558 = vld [vmem:[#allocation5 + $0x38] sm:$0xff]
      %v1559 = vld [vmem:[#allocation5 + $0x40] sm:$0xff]
      %v1560 = vld [vmem:[#allocation5 + $0x48] sm:$0xff]
      %v1561 = vld [vmem:[#allocation5 + $0x50] sm:$0xff]
      %v1562 = vld [vmem:[#allocation5 + $0x58] sm:$0xff]
      %v1563 = vld [vmem:[#allocation5 + $0x60] sm:$0xff]
      %v1564 = vld [vmem:[#allocation5 + $0x68] sm:$0xff]
      %v1565 = vld [vmem:[#allocation5 + $0x70] sm:$0xff]
      %v1566 = vld [vmem:[#allocation5 + $0x78] sm:$0xff]
      %v1567 = vld [vmem:[#allocation5 + $0x80] sm:$0xff]
      %v1568 = vld [vmem:[#allocation5 + $0x88] sm:$0xff]
      %v1569 = vld [vmem:[#allocation5 + $0x90] sm:$0xff]
      %v1570 = vld [vmem:[#allocation5 + $0x98] sm:$0xff]
      %v1571 = vld [vmem:[#allocation5 + $0xa0] sm:$0xff]
      %v1572 = vld [vmem:[#allocation5 + $0xa8] sm:$0xff]
      %v1573 = vld [vmem:[#allocation5 + $0xb0] sm:$0xff]
      %v1574 = vld [vmem:[#allocation5 + $0xb8] sm:$0xff]
      %v1575 = vld [vmem:[#allocation5 + $0xc0] sm:$0xff]
      %v1576 = vld [vmem:[#allocation5 + $0xc8] sm:$0xff]
      %v1577 = vld [vmem:[#allocation5 + $0xd0] sm:$0xff]
      %v1578 = vld [vmem:[#allocation5 + $0xd8] sm:$0xff]
      %v1607 = vunpack.c.l.b16 %v1551
      %v1608 = vunpack.c.h.b16 %v1551
      %v1609 = vunpack.c.l.b16 %v1552
      %v1610 = vunpack.c.h.b16 %v1552
      %v1611 = vunpack.c.l.b16 %v1553
      %v1612 = vunpack.c.h.b16 %v1553
      %v1613 = vunpack.c.l.b16 %v1554
      %v1614 = vunpack.c.h.b16 %v1554
      %v1615 = vunpack.c.l.b16 %v1555
      %v1616 = vunpack.c.h.b16 %v1555
      %v1617 = vunpack.c.l.b16 %v1556
      %v1618 = vunpack.c.h.b16 %v1556
      %v1619 = vunpack.c.l.b16 %v1557
      %v1620 = vunpack.c.h.b16 %v1557
      %v1621 = vunpack.c.l.b16 %v1558
      %v1622 = vunpack.c.h.b16 %v1558
      %v1623 = vunpack.c.l.b16 %v1559
      %v1624 = vunpack.c.h.b16 %v1559
      %v1625 = vunpack.c.l.b16 %v1560
      %v1626 = vunpack.c.h.b16 %v1560
      %v1627 = vunpack.c.l.b16 %v1561
      %v1628 = vunpack.c.h.b16 %v1561
      %v1629 = vunpack.c.l.b16 %v1562
      %v1630 = vunpack.c.h.b16 %v1562
      %v1631 = vunpack.c.l.b16 %v1563
      %v1632 = vunpack.c.h.b16 %v1563
      %v1633 = vunpack.c.l.b16 %v1564
      %v1634 = vunpack.c.h.b16 %v1564
      %v1635 = vunpack.c.l.b16 %v1565
      %v1636 = vunpack.c.h.b16 %v1565
      %v1637 = vunpack.c.l.b16 %v1566
      %v1638 = vunpack.c.h.b16 %v1566
      %v1639 = vunpack.c.l.b16 %v1567
      %v1640 = vunpack.c.h.b16 %v1567
      %v1641 = vunpack.c.l.b16 %v1568
      %v1642 = vunpack.c.h.b16 %v1568
      %v1643 = vunpack.c.l.b16 %v1569
      %v1644 = vunpack.c.h.b16 %v1569
      %v1645 = vunpack.c.l.b16 %v1570
      %v1646 = vunpack.c.h.b16 %v1570
      %v1647 = vunpack.c.l.b16 %v1571
      %v1648 = vunpack.c.h.b16 %v1571
      %v1649 = vunpack.c.l.b16 %v1572
      %v1650 = vunpack.c.h.b16 %v1572
      %v1651 = vunpack.c.l.b16 %v1573
      %v1652 = vunpack.c.h.b16 %v1573
      %v1653 = vunpack.c.l.b16 %v1574
      %v1654 = vunpack.c.h.b16 %v1574
      %v1655 = vunpack.c.l.b16 %v1575
      %v1656 = vunpack.c.h.b16 %v1575
      %v1657 = vunpack.c.l.b16 %v1576
      %v1658 = vunpack.c.h.b16 %v1576
      %v1659 = vunpack.c.l.b16 %v1577
      %v1660 = vunpack.c.h.b16 %v1577
      %v1661 = vunpack.c.l.b16 %v1578
      %v1662 = vunpack.c.h.b16 %v1578
      %v1663 = vpack.c.b16 %v1615, %v1607
      %v1664 = vpack.c.b16 %v1616, %v1608
      %v1665 = vpack.c.b16 %v1617, %v1609
      %v1666 = vpack.c.b16 %v1618, %v1610
      %v1667 = vpack.c.b16 %v1619, %v1611
      %v1668 = vpack.c.b16 %v1620, %v1612
      %v1669 = vpack.c.b16 %v1621, %v1613
      %v1670 = vpack.c.b16 %v1622, %v1614
      %v1671 = vpack.c.b16 %v1631, %v1623
      %v1672 = vpack.c.b16 %v1632, %v1624
      %v1673 = vpack.c.b16 %v1633, %v1625
      %v1674 = vpack.c.b16 %v1634, %v1626
      %v1675 = vpack.c.b16 %v1635, %v1627
      %v1676 = vpack.c.b16 %v1636, %v1628
      %v1677 = vpack.c.b16 %v1637, %v1629
      %v1678 = vpack.c.b16 %v1638, %v1630
      %v1679 = vpack.c.b16 %v1647, %v1639
      %v1680 = vpack.c.b16 %v1648, %v1640
      %v1681 = vpack.c.b16 %v1649, %v1641
      %v1682 = vpack.c.b16 %v1650, %v1642
      %v1683 = vpack.c.b16 %v1651, %v1643
      %v1684 = vpack.c.b16 %v1652, %v1644
      %v1685 = vpack.c.b16 %v1653, %v1645
      %v1686 = vpack.c.b16 %v1654, %v1646
      %v1687 = vpack.c.b16 %v1655, %v1655
      %v1688 = vpack.c.b16 %v1656, %v1656
      %v1689 = vpack.c.b16 %v1657, %v1657
      %v1690 = vpack.c.b16 %v1658, %v1658
      %v1691 = vpack.c.b16 %v1659, %v1659
      %v1692 = vpack.c.b16 %v1660, %v1660
      %v1693 = vpack.c.b16 %v1661, %v1661
      %v1694 = vpack.c.b16 %v1662, %v1662
      %vm1719 = vcmask 449536
      %v1721 = vsel %vm1719, %v1550, 0
      %vm1723 = vcmask 1042432
      %vm1724 = vcmask 1043456
      %v1725 = vsel %vm1723, 4294967295, 65535
      %v1726 = vsel %vm1724, %v1725, 0
      %v1728 = vand.u32 %v1687, %v1726
      %v1731 = vand.u32 %v1688, %v1726
      %v1734 = vand.u32 %v1689, %v1726
      %v1737 = vand.u32 %v1690, %v1726
      %v1740 = vand.u32 %v1691, %v1726
      %v1743 = vand.u32 %v1692, %v1726
      %v1746 = vand.u32 %v1693, %v1726
      %v1749 = vand.u32 %v1694, %v1726
      %1751 = vmatpush.bf16.msra.mxu0 0
      %1752 = vmatpush.bf16.msra.mxu0 0
      %1753 = vmatpush.bf16.msra.mxu0 0
      %1754 = vmatpush.bf16.msra.mxu0 0
      %1755 = vmatpush.bf16.msra.mxu0 %v1728
      %1756 = vmatpush.bf16.msra.mxu0 %v1679
      %1757 = vmatpush.bf16.msra.mxu0 %v1671
      %1758 = vmatpush.bf16.msra.mxu0 %v1663
      %1759 = vmatmul.bf16.gmra.mxu0 %v1721
      %v1760 = vpop.f32.mrf.mxu0
      %v1761 = vadd.f32 0.0, %v1760
      %v1762 = vpop.f32.mrf.mxu0
      %1763 = vdwg.mxu0
      %1764 = vmatpush.bf16.msra.mxu0 0
      %1765 = vmatpush.bf16.msra.mxu0 0
      %1766 = vmatpush.bf16.msra.mxu0 0
      %1767 = vmatpush.bf16.msra.mxu0 0
      %1768 = vmatpush.bf16.msra.mxu0 %v1731
      %1769 = vmatpush.bf16.msra.mxu0 %v1680
      %1770 = vmatpush.bf16.msra.mxu0 %v1672
      %1771 = vmatpush.bf16.msra.mxu0 %v1664
      %1772 = vmatmul.bf16.gmra.mxu0 %v1721
      %v1773 = vpop.f32.mrf.mxu0
      %v1774 = vadd.f32 0.0, %v1773
      %v1775 = vpop.f32.mrf.mxu0
      %1776 = vdwg.mxu0
      %1777 = vmatpush.bf16.msra.mxu0 0
      %1778 = vmatpush.bf16.msra.mxu0 0
      %1779 = vmatpush.bf16.msra.mxu0 0
      %1780 = vmatpush.bf16.msra.mxu0 0
      %1781 = vmatpush.bf16.msra.mxu0 %v1734
      %1782 = vmatpush.bf16.msra.mxu0 %v1681
      %1783 = vmatpush.bf16.msra.mxu0 %v1673
      %1784 = vmatpush.bf16.msra.mxu0 %v1665
      %1785 = vmatmul.bf16.gmra.mxu0 %v1721
      %v1786 = vpop.f32.mrf.mxu0
      %v1787 = vadd.f32 0.0, %v1786
      %v1788 = vpop.f32.mrf.mxu0
      %1789 = vdwg.mxu0
      %1790 = vmatpush.bf16.msra.mxu0 0
      %1791 = vmatpush.bf16.msra.mxu0 0
      %1792 = vmatpush.bf16.msra.mxu0 0
      %1793 = vmatpush.bf16.msra.mxu0 0
      %1794 = vmatpush.bf16.msra.mxu0 %v1737
      %1795 = vmatpush.bf16.msra.mxu0 %v1682
      %1796 = vmatpush.bf16.msra.mxu0 %v1674
      %1797 = vmatpush.bf16.msra.mxu0 %v1666
      %1798 = vmatmul.bf16.gmra.mxu0 %v1721
      %v1799 = vpop.f32.mrf.mxu0
      %v1800 = vadd.f32 0.0, %v1799
      %v1801 = vpop.f32.mrf.mxu0
      %1802 = vdwg.mxu0
      %1803 = vmatpush.bf16.msra.mxu0 0
      %1804 = vmatpush.bf16.msra.mxu0 0
      %1805 = vmatpush.bf16.msra.mxu0 0
      %1806 = vmatpush.bf16.msra.mxu0 0
      %1807 = vmatpush.bf16.msra.mxu0 %v1740
      %1808 = vmatpush.bf16.msra.mxu0 %v1683
      %1809 = vmatpush.bf16.msra.mxu0 %v1675
      %1810 = vmatpush.bf16.msra.mxu0 %v1667
      %1811 = vmatmul.bf16.gmra.mxu0 %v1721
      %v1812 = vpop.f32.mrf.mxu0
      %v1813 = vadd.f32 0.0, %v1812
      %v1814 = vpop.f32.mrf.mxu0
      %1815 = vdwg.mxu0
      %1816 = vmatpush.bf16.msra.mxu0 0
      %1817 = vmatpush.bf16.msra.mxu0 0
      %1818 = vmatpush.bf16.msra.mxu0 0
      %1819 = vmatpush.bf16.msra.mxu0 0
      %1820 = vmatpush.bf16.msra.mxu0 %v1743
      %1821 = vmatpush.bf16.msra.mxu0 %v1684
      %1822 = vmatpush.bf16.msra.mxu0 %v1676
      %1823 = vmatpush.bf16.msra.mxu0 %v1668
      %1824 = vmatmul.bf16.gmra.mxu0 %v1721
      %v1825 = vpop.f32.mrf.mxu0
      %v1826 = vadd.f32 0.0, %v1825
      %v1827 = vpop.f32.mrf.mxu0
      %1828 = vdwg.mxu0
      %1829 = vmatpush.bf16.msra.mxu0 0
      %1830 = vmatpush.bf16.msra.mxu0 0
      %1831 = vmatpush.bf16.msra.mxu0 0
      %1832 = vmatpush.bf16.msra.mxu0 0
      %1833 = vmatpush.bf16.msra.mxu0 %v1746
      %1834 = vmatpush.bf16.msra.mxu0 %v1685
      %1835 = vmatpush.bf16.msra.mxu0 %v1677
      %1836 = vmatpush.bf16.msra.mxu0 %v1669
      %1837 = vmatmul.bf16.gmra.mxu0 %v1721
      %v1838 = vpop.f32.mrf.mxu0
      %v1839 = vadd.f32 0.0, %v1838
      %v1840 = vpop.f32.mrf.mxu0
      %1841 = vdwg.mxu0
      %1842 = vmatpush.bf16.msra.mxu0 0
      %1843 = vmatpush.bf16.msra.mxu0 0
      %1844 = vmatpush.bf16.msra.mxu0 0
      %1845 = vmatpush.bf16.msra.mxu0 0
      %1846 = vmatpush.bf16.msra.mxu0 %v1749
      %1847 = vmatpush.bf16.msra.mxu0 %v1686
      %1848 = vmatpush.bf16.msra.mxu0 %v1678
      %1849 = vmatpush.bf16.msra.mxu0 %v1670
      %1850 = vmatmul.bf16.gmra.mxu0 %v1721
      %v1851 = vpop.f32.mrf.mxu0
      %v1852 = vadd.f32 0.0, %v1851
      %v1853 = vpop.f32.mrf.mxu0
      %1854 = vdwg.mxu0
      %v1855 = vmax.f32 %v1761, 0.0
      %v1856 = vmax.f32 %v1774, 0.0
      %v1857 = vmax.f32 %v1787, 0.0
      %v1858 = vmax.f32 %v1800, 0.0
      %v1859 = vmax.f32 %v1813, 0.0
      %v1860 = vmax.f32 %v1826, 0.0
      %v1861 = vmax.f32 %v1839, 0.0
      %v1862 = vmax.f32 %v1852, 0.0
      %1863 = vst [vmem:[#allocation2] sm:$0xff] 0
      %1864 = vst [vmem:[#allocation2 + $0x8] sm:$0xff] 0
      %1865 = vst [vmem:[#allocation2 + $0x10] sm:$0xff] 0
      %1866 = vst [vmem:[#allocation2 + $0x18] sm:$0xff] 0
      %1867 = vst [vmem:[#allocation2 + $0x20] sm:$0xff] 0
      %1868 = vst [vmem:[#allocation2 + $0x28] sm:$0xf] 0
      %v1869 = vld [vmem:[%s5] sm:$0xff]
      %v1871 = vperm.slane %v1869, 0
      %v1872 = vperm.slane %v1869, 1
      %v1873 = vperm.slane %v1869, 2
      %v1874 = vperm.slane %v1869, 3
      %v1875 = vperm.slane %v1869, 4
      %v1876 = vperm.slane %v1869, 5
      %v1877 = vperm.slane %v1869, 6
      %v1878 = vperm.slane %v1869, 7
      %v1887 = vmul.f32 %v1855, %v1871
      %v1888 = vmul.f32 %v1856, %v1872
      %v1889 = vmul.f32 %v1857, %v1873
      %v1890 = vmul.f32 %v1858, %v1874
      %v1891 = vmul.f32 %v1859, %v1875
      %v1892 = vmul.f32 %v1860, %v1876
      %v1893 = vmul.f32 %v1861, %v1877
      %v1894 = vmul.f32 %v1862, %v1878
      %v1895 = vpack.c.bf16 %v1888, %v1887
      %v1896 = vpack.c.bf16 %v1890, %v1889
      %v1897 = vpack.c.bf16 %v1892, %v1891
      %v1898 = vpack.c.bf16 %v1894, %v1893
      %1903 = vrot.lane.b32.xlu0 %v1895, 11
      %v1904 = vpop.permute.xlu0 %1903
      %1905 = vrot.lane.b32.xlu0 %v1896, 11
      %v1906 = vpop.permute.xlu0 %1905
      %1907 = vrot.lane.b32.xlu0 %v1897, 11
      %v1908 = vpop.permute.xlu0 %1907
      %1909 = vrot.lane.b32.xlu0 %v1898, 11
      %v1910 = vpop.permute.xlu0 %1909
      %v1911 = vrot.slane %v1904, 4
      %v1912 = vrot.slane %v1906, 4
      %v1913 = vrot.slane %v1908, 4
      %v1914 = vrot.slane %v1910, 4
      %vm1915 = vcmask 89088
      %v1916 = vsel %vm1915, %v1911, %v1904
      %v1917 = vsel %vm353, %v1911, %v1912
      %v1918 = vsel %vm1915, %v1917, %v1906
      %v1919 = vsel %vm353, %v1912, %v1913
      %v1920 = vsel %vm1915, %v1919, %v1908
      %v1921 = vsel %vm353, %v1913, %v1914
      %v1922 = vsel %vm1915, %v1921, %v1910
      %vm1928 = vcmask 1043544
      %vm1929 = vcmask 1047556
      %vm1930 = vmor %vm1929, %vm1928
      %1931 = vst.msk [vmem:[#allocation2 + $0x4] sm:$0xff] %vm1930, %v1916
      %1932 = vst [vmem:[#allocation2 + $0xc] sm:$0xff] %v1918
      %1933 = vst [vmem:[#allocation2 + $0x14] sm:$0xff] %v1920
      %1934 = vst [vmem:[#allocation2 + $0x1c] sm:$0xff] %v1922
      %vm1935 = vcmask 84992
      %1936 = vst.msk [vmem:[#allocation2 + $0x24] sm:$0xf] %vm1935, %v1914
      %v1937 = vld [vmem:[#allocation2 + $0x4] sm:$0xff]
      %v1938 = vld [vmem:[#allocation2 + $0xc] sm:$0xff]
      %v1939 = vld [vmem:[#allocation2 + $0x14] sm:$0xff]
      %v1940 = vld [vmem:[#allocation2 + $0x1c] sm:$0xff]
      %v1941 = vld [vmem:[#allocation2 + $0x24] sm:$0xf]
      %v1942 = vunpack.c.l.bf16 %v1937
      %v1943 = vunpack.c.h.bf16 %v1937
      %v1944 = vunpack.c.l.bf16 %v1938
      %v1945 = vunpack.c.h.bf16 %v1938
      %v1946 = vunpack.c.l.bf16 %v1939
      %v1947 = vunpack.c.h.bf16 %v1939
      %v1948 = vunpack.c.l.bf16 %v1940
      %v1949 = vunpack.c.h.bf16 %v1940
      %v1950 = vunpack.c.l.bf16 %v1941
      %1960 = vrot.lane.b32.xlu0 %v1942, 127
      %v1961 = vpop.permute.xlu0 %1960
      %1962 = vrot.lane.b32.xlu0 %v1943, 127
      %v1963 = vpop.permute.xlu0 %1962
      %1964 = vrot.lane.b32.xlu0 %v1944, 127
      %v1965 = vpop.permute.xlu0 %1964
      %1966 = vrot.lane.b32.xlu0 %v1945, 127
      %v1967 = vpop.permute.xlu0 %1966
      %1968 = vrot.lane.b32.xlu0 %v1946, 127
      %v1969 = vpop.permute.xlu0 %1968
      %1970 = vrot.lane.b32.xlu0 %v1947, 127
      %v1971 = vpop.permute.xlu0 %1970
      %1972 = vrot.lane.b32.xlu0 %v1948, 127
      %v1973 = vpop.permute.xlu0 %1972
      %1974 = vrot.lane.b32.xlu0 %v1949, 127
      %v1975 = vpop.permute.xlu0 %1974
      %1976 = vrot.lane.b32.xlu0 %v1950, 127
      %v1977 = vpop.permute.xlu0 %1976
      %vm1978 = vcmask 1039360
      %v1979 = vsel %vm1978, %v1961, %v1963
      %v1980 = vsel %vm1978, %v1963, %v1965
      %v1981 = vsel %vm1978, %v1965, %v1967
      %v1982 = vsel %vm1978, %v1967, %v1969
      %v1983 = vsel %vm1978, %v1969, %v1971
      %v1984 = vsel %vm1978, %v1971, %v1973
      %v1985 = vsel %vm1978, %v1973, %v1975
      %v1986 = vsel %vm1978, %v1975, %v1977
      %v1995 = vmax.f32 %v1942, %v1979
      %v1996 = vmax.f32 %v1943, %v1980
      %v1997 = vmax.f32 %v1944, %v1981
      %v1998 = vmax.f32 %v1945, %v1982
      %v1999 = vmax.f32 %v1946, %v1983
      %v2000 = vmax.f32 %v1947, %v1984
      %v2001 = vmax.f32 %v1948, %v1985
      %v2002 = vmax.f32 %v1949, %v1986
      %v2003 = vpack.c.bf16 %v1996, %v1995
      %v2004 = vpack.c.bf16 %v1998, %v1997
      %v2005 = vpack.c.bf16 %v2000, %v1999
      %v2006 = vpack.c.bf16 %v2002, %v2001
      %v2007 = vunpack.c.l.bf16 %v2003
      %v2008 = vunpack.c.h.bf16 %v2003
      %v2009 = vunpack.c.l.bf16 %v2004
      %v2010 = vunpack.c.h.bf16 %v2004
      %v2011 = vunpack.c.l.bf16 %v2005
      %v2012 = vunpack.c.h.bf16 %v2005
      %v2013 = vunpack.c.l.bf16 %v2006
      %v2014 = vunpack.c.h.bf16 %v2006
      %2015 = vrot.lane.b32.xlu0 %v1942, 118
      %v2016 = vpop.permute.xlu0 %2015
      %2017 = vrot.lane.b32.xlu0 %v1943, 118
      %v2018 = vpop.permute.xlu0 %2017
      %2019 = vrot.lane.b32.xlu0 %v1944, 118
      %v2020 = vpop.permute.xlu0 %2019
      %2021 = vrot.lane.b32.xlu0 %v1945, 118
      %v2022 = vpop.permute.xlu0 %2021
      %2023 = vrot.lane.b32.xlu0 %v1946, 118
      %v2024 = vpop.permute.xlu0 %2023
      %2025 = vrot.lane.b32.xlu0 %v1947, 118
      %v2026 = vpop.permute.xlu0 %2025
      %2027 = vrot.lane.b32.xlu0 %v1948, 118
      %v2028 = vpop.permute.xlu0 %2027
      %2029 = vrot.lane.b32.xlu0 %v1949, 118
      %v2030 = vpop.permute.xlu0 %2029
      %2031 = vrot.lane.b32.xlu0 %v1950, 118
      %v2032 = vpop.permute.xlu0 %2031
      %vm2033 = vcmask 965632
      %v2034 = vsel %vm2033, %v2016, %v2018
      %v2035 = vsel %vm2033, %v2018, %v2020
      %v2036 = vsel %vm2033, %v2020, %v2022
      %v2037 = vsel %vm2033, %v2022, %v2024
      %v2038 = vsel %vm2033, %v2024, %v2026
      %v2039 = vsel %vm2033, %v2026, %v2028
      %v2040 = vsel %vm2033, %v2028, %v2030
      %v2041 = vsel %vm2033, %v2030, %v2032
      %v2050 = vmax.f32 %v2007, %v2034
      %v2051 = vmax.f32 %v2008, %v2035
      %v2052 = vmax.f32 %v2009, %v2036
      %v2053 = vmax.f32 %v2010, %v2037
      %v2054 = vmax.f32 %v2011, %v2038
      %v2055 = vmax.f32 %v2012, %v2039
      %v2056 = vmax.f32 %v2013, %v2040
      %v2057 = vmax.f32 %v2014, %v2041
      %v2058 = vpack.c.bf16 %v2051, %v2050
      %v2059 = vpack.c.bf16 %v2053, %v2052
      %v2060 = vpack.c.bf16 %v2055, %v2054
      %v2061 = vpack.c.bf16 %v2057, %v2056
      %v2062 = vunpack.c.l.bf16 %v2058
      %v2063 = vunpack.c.h.bf16 %v2058
      %v2064 = vunpack.c.l.bf16 %v2059
      %v2065 = vunpack.c.h.bf16 %v2059
      %v2066 = vunpack.c.l.bf16 %v2060
      %v2067 = vunpack.c.h.bf16 %v2060
      %v2068 = vunpack.c.l.bf16 %v2061
      %v2069 = vunpack.c.h.bf16 %v2061
      %2070 = vrot.lane.b32.xlu0 %v1942, 117
      %v2071 = vpop.permute.xlu0 %2070
      %2072 = vrot.lane.b32.xlu0 %v1943, 117
      %v2073 = vpop.permute.xlu0 %2072
      %2074 = vrot.lane.b32.xlu0 %v1944, 117
      %v2075 = vpop.permute.xlu0 %2074
      %2076 = vrot.lane.b32.xlu0 %v1945, 117
      %v2077 = vpop.permute.xlu0 %2076
      %2078 = vrot.lane.b32.xlu0 %v1946, 117
      %v2079 = vpop.permute.xlu0 %2078
      %2080 = vrot.lane.b32.xlu0 %v1947, 117
      %v2081 = vpop.permute.xlu0 %2080
      %2082 = vrot.lane.b32.xlu0 %v1948, 117
      %v2083 = vpop.permute.xlu0 %2082
      %2084 = vrot.lane.b32.xlu0 %v1949, 117
      %v2085 = vpop.permute.xlu0 %2084
      %2086 = vrot.lane.b32.xlu0 %v1950, 117
      %v2087 = vpop.permute.xlu0 %2086
      %vm2088 = vcmask 957440
      %v2089 = vsel %vm2088, %v2071, %v2073
      %v2090 = vsel %vm2088, %v2073, %v2075
      %v2091 = vsel %vm2088, %v2075, %v2077
      %v2092 = vsel %vm2088, %v2077, %v2079
      %v2093 = vsel %vm2088, %v2079, %v2081
      %v2094 = vsel %vm2088, %v2081, %v2083
      %v2095 = vsel %vm2088, %v2083, %v2085
      %v2096 = vsel %vm2088, %v2085, %v2087
      %v2105 = vmax.f32 %v2062, %v2089
      %v2106 = vmax.f32 %v2063, %v2090
      %v2107 = vmax.f32 %v2064, %v2091
      %v2108 = vmax.f32 %v2065, %v2092
      %v2109 = vmax.f32 %v2066, %v2093
      %v2110 = vmax.f32 %v2067, %v2094
      %v2111 = vmax.f32 %v2068, %v2095
      %v2112 = vmax.f32 %v2069, %v2096
      %v2113 = vpack.c.bf16 %v2106, %v2105
      %v2114 = vpack.c.bf16 %v2108, %v2107
      %v2115 = vpack.c.bf16 %v2110, %v2109
      %v2116 = vpack.c.bf16 %v2112, %v2111
      %v2117 = vld [vmem:[#allocation2 + $0x8] sm:$0xff]
      %v2118 = vld [vmem:[#allocation2 + $0x10] sm:$0xff]
      %v2119 = vld [vmem:[#allocation2 + $0x18] sm:$0xff]
      %v2120 = vld [vmem:[#allocation2 + $0x20] sm:$0xff]
      %v2121 = vunpack.c.l.bf16 %v2113
      %v2122 = vunpack.c.h.bf16 %v2113
      %v2123 = vunpack.c.l.bf16 %v2114
      %v2124 = vunpack.c.h.bf16 %v2114
      %v2125 = vunpack.c.l.bf16 %v2115
      %v2126 = vunpack.c.h.bf16 %v2115
      %v2127 = vunpack.c.l.bf16 %v2116
      %v2128 = vunpack.c.h.bf16 %v2116
      %v2129 = vunpack.c.l.bf16 %v2117
      %v2130 = vunpack.c.h.bf16 %v2117
      %v2131 = vunpack.c.l.bf16 %v2118
      %v2132 = vunpack.c.h.bf16 %v2118
      %v2133 = vunpack.c.l.bf16 %v2119
      %v2134 = vunpack.c.h.bf16 %v2119
      %v2135 = vunpack.c.l.bf16 %v2120
      %v2136 = vunpack.c.h.bf16 %v2120
      %v2137 = vmax.f32 %v2121, %v2129
      %v2138 = vmax.f32 %v2122, %v2130
      %v2139 = vmax.f32 %v2123, %v2131
      %v2140 = vmax.f32 %v2124, %v2132
      %v2141 = vmax.f32 %v2125, %v2133
      %v2142 = vmax.f32 %v2126, %v2134
      %v2143 = vmax.f32 %v2127, %v2135
      %v2144 = vmax.f32 %v2128, %v2136
      %v2145 = vpack.c.bf16 %v2138, %v2137
      %v2146 = vpack.c.bf16 %v2140, %v2139
      %v2147 = vpack.c.bf16 %v2142, %v2141
      %v2148 = vpack.c.bf16 %v2144, %v2143
      %v2149 = vld [vmem:[#allocation2 + $0x28] sm:$0xf]
      %v2150 = vunpack.c.l.bf16 %v2145
      %v2151 = vunpack.c.h.bf16 %v2145
      %v2152 = vunpack.c.l.bf16 %v2146
      %v2153 = vunpack.c.h.bf16 %v2146
      %v2154 = vunpack.c.l.bf16 %v2147
      %v2155 = vunpack.c.h.bf16 %v2147
      %v2156 = vunpack.c.l.bf16 %v2148
      %v2157 = vunpack.c.h.bf16 %v2148
      %v2158 = vunpack.c.l.bf16 %v2149
      %2168 = vrot.lane.b32.xlu0 %v2129, 127
      %v2169 = vpop.permute.xlu0 %2168
      %2170 = vrot.lane.b32.xlu0 %v2130, 127
      %v2171 = vpop.permute.xlu0 %2170
      %2172 = vrot.lane.b32.xlu0 %v2131, 127
      %v2173 = vpop.permute.xlu0 %2172
      %2174 = vrot.lane.b32.xlu0 %v2132, 127
      %v2175 = vpop.permute.xlu0 %2174
      %2176 = vrot.lane.b32.xlu0 %v2133, 127
      %v2177 = vpop.permute.xlu0 %2176
      %2178 = vrot.lane.b32.xlu0 %v2134, 127
      %v2179 = vpop.permute.xlu0 %2178
      %2180 = vrot.lane.b32.xlu0 %v2135, 127
      %v2181 = vpop.permute.xlu0 %2180
      %2182 = vrot.lane.b32.xlu0 %v2136, 127
      %v2183 = vpop.permute.xlu0 %2182
      %2184 = vrot.lane.b32.xlu0 %v2158, 127
      %v2185 = vpop.permute.xlu0 %2184
      %v2186 = vsel %vm1978, %v2169, %v2171
      %v2187 = vsel %vm1978, %v2171, %v2173
      %v2188 = vsel %vm1978, %v2173, %v2175
      %v2189 = vsel %vm1978, %v2175, %v2177
      %v2190 = vsel %vm1978, %v2177, %v2179
      %v2191 = vsel %vm1978, %v2179, %v2181
      %v2192 = vsel %vm1978, %v2181, %v2183
      %v2193 = vsel %vm1978, %v2183, %v2185
      %v2202 = vmax.f32 %v2150, %v2186
      %v2203 = vmax.f32 %v2151, %v2187
      %v2204 = vmax.f32 %v2152, %v2188
      %v2205 = vmax.f32 %v2153, %v2189
      %v2206 = vmax.f32 %v2154, %v2190
      %v2207 = vmax.f32 %v2155, %v2191
      %v2208 = vmax.f32 %v2156, %v2192
      %v2209 = vmax.f32 %v2157, %v2193
      %v2210 = vpack.c.bf16 %v2203, %v2202
      %v2211 = vpack.c.bf16 %v2205, %v2204
      %v2212 = vpack.c.bf16 %v2207, %v2206
      %v2213 = vpack.c.bf16 %v2209, %v2208
      %v2214 = vunpack.c.l.bf16 %v2210
      %v2215 = vunpack.c.h.bf16 %v2210
      %v2216 = vunpack.c.l.bf16 %v2211
      %v2217 = vunpack.c.h.bf16 %v2211
      %v2218 = vunpack.c.l.bf16 %v2212
      %v2219 = vunpack.c.h.bf16 %v2212
      %v2220 = vunpack.c.l.bf16 %v2213
      %v2221 = vunpack.c.h.bf16 %v2213
      %2222 = vrot.lane.b32.xlu0 %v2129, 118
      %v2223 = vpop.permute.xlu0 %2222
      %2224 = vrot.lane.b32.xlu0 %v2130, 118
      %v2225 = vpop.permute.xlu0 %2224
      %2226 = vrot.lane.b32.xlu0 %v2131, 118
      %v2227 = vpop.permute.xlu0 %2226
      %2228 = vrot.lane.b32.xlu0 %v2132, 118
      %v2229 = vpop.permute.xlu0 %2228
      %2230 = vrot.lane.b32.xlu0 %v2133, 118
      %v2231 = vpop.permute.xlu0 %2230
      %2232 = vrot.lane.b32.xlu0 %v2134, 118
      %v2233 = vpop.permute.xlu0 %2232
      %2234 = vrot.lane.b32.xlu0 %v2135, 118
      %v2235 = vpop.permute.xlu0 %2234
      %2236 = vrot.lane.b32.xlu0 %v2136, 118
      %v2237 = vpop.permute.xlu0 %2236
      %2238 = vrot.lane.b32.xlu0 %v2158, 118
      %v2239 = vpop.permute.xlu0 %2238
      %v2240 = vsel %vm2033, %v2223, %v2225
      %v2241 = vsel %vm2033, %v2225, %v2227
      %v2242 = vsel %vm2033, %v2227, %v2229
      %v2243 = vsel %vm2033, %v2229, %v2231
      %v2244 = vsel %vm2033, %v2231, %v2233
      %v2245 = vsel %vm2033, %v2233, %v2235
      %v2246 = vsel %vm2033, %v2235, %v2237
      %v2247 = vsel %vm2033, %v2237, %v2239
      %v2256 = vmax.f32 %v2214, %v2240
      %v2257 = vmax.f32 %v2215, %v2241
      %v2258 = vmax.f32 %v2216, %v2242
      %v2259 = vmax.f32 %v2217, %v2243
      %v2260 = vmax.f32 %v2218, %v2244
      %v2261 = vmax.f32 %v2219, %v2245
      %v2262 = vmax.f32 %v2220, %v2246
      %v2263 = vmax.f32 %v2221, %v2247
      %v2264 = vpack.c.bf16 %v2257, %v2256
      %v2265 = vpack.c.bf16 %v2259, %v2258
      %v2266 = vpack.c.bf16 %v2261, %v2260
      %v2267 = vpack.c.bf16 %v2263, %v2262
      %v2268 = vunpack.c.l.bf16 %v2264
      %v2269 = vunpack.c.h.bf16 %v2264
      %v2270 = vunpack.c.l.bf16 %v2265
      %v2271 = vunpack.c.h.bf16 %v2265
      %v2272 = vunpack.c.l.bf16 %v2266
      %v2273 = vunpack.c.h.bf16 %v2266
      %v2274 = vunpack.c.l.bf16 %v2267
      %v2275 = vunpack.c.h.bf16 %v2267
      %2276 = vrot.lane.b32.xlu0 %v2129, 117
      %v2277 = vpop.permute.xlu0 %2276
      %2278 = vrot.lane.b32.xlu0 %v2130, 117
      %v2279 = vpop.permute.xlu0 %2278
      %2280 = vrot.lane.b32.xlu0 %v2131, 117
      %v2281 = vpop.permute.xlu0 %2280
      %2282 = vrot.lane.b32.xlu0 %v2132, 117
      %v2283 = vpop.permute.xlu0 %2282
      %2284 = vrot.lane.b32.xlu0 %v2133, 117
      %v2285 = vpop.permute.xlu0 %2284
      %2286 = vrot.lane.b32.xlu0 %v2134, 117
      %v2287 = vpop.permute.xlu0 %2286
      %2288 = vrot.lane.b32.xlu0 %v2135, 117
      %v2289 = vpop.permute.xlu0 %2288
      %2290 = vrot.lane.b32.xlu0 %v2136, 117
      %v2291 = vpop.permute.xlu0 %2290
      %2292 = vrot.lane.b32.xlu0 %v2158, 117
      %v2293 = vpop.permute.xlu0 %2292
      %v2294 = vsel %vm2088, %v2277, %v2279
      %v2295 = vsel %vm2088, %v2279, %v2281
      %v2296 = vsel %vm2088, %v2281, %v2283
      %v2297 = vsel %vm2088, %v2283, %v2285
      %v2298 = vsel %vm2088, %v2285, %v2287
      %v2299 = vsel %vm2088, %v2287, %v2289
      %v2300 = vsel %vm2088, %v2289, %v2291
      %v2301 = vsel %vm2088, %v2291, %v2293
      %v2310 = vmax.f32 %v2268, %v2294
      %v2311 = vmax.f32 %v2269, %v2295
      %v2312 = vmax.f32 %v2270, %v2296
      %v2313 = vmax.f32 %v2271, %v2297
      %v2314 = vmax.f32 %v2272, %v2298
      %v2315 = vmax.f32 %v2273, %v2299
      %v2316 = vmax.f32 %v2274, %v2300
      %v2317 = vmax.f32 %v2275, %v2301
      %v2318 = vpack.c.bf16 %v2311, %v2310
      %v2319 = vpack.c.bf16 %v2313, %v2312
      %v2320 = vpack.c.bf16 %v2315, %v2314
      %v2321 = vpack.c.bf16 %v2317, %v2316
      %2322 = vst [vmem:[#allocation3] sm:$0xff] 0
      %2323 = vst [vmem:[#allocation3 + $0x8] sm:$0xff] 0
      %2324 = vst [vmem:[#allocation3 + $0x10] sm:$0xff] 0
      %2325 = vst [vmem:[#allocation3 + $0x18] sm:$0xf] 0
      %v2326 = vld [vmem:[%s6] sm:$0xf]
      %v2327 = vld [vmem:[%s6 + $0x4] sm:$0xf]
      %v2328 = vld [vmem:[%s6 + $0x8] sm:$0xf]
      %v2329 = vld [vmem:[%s6 + $0xc] sm:$0xf]
      %v2330 = vld [vmem:[%s6 + $0x10] sm:$0xf]
      %v2331 = vld [vmem:[%s6 + $0x14] sm:$0xf]
      %v2332 = vld [vmem:[%s6 + $0x18] sm:$0xf]
      %v2333 = vld [vmem:[%s6 + $0x1c] sm:$0xf]
      %v2334 = vld [vmem:[%s6 + $0x20] sm:$0xf]
      %v2335 = vld [vmem:[%s6 + $0x24] sm:$0xf]
      %v2336 = vld [vmem:[%s6 + $0x28] sm:$0xf]
      %v2337 = vld [vmem:[%s6 + $0x2c] sm:$0xf]
      %v2338 = vld [vmem:[%s6 + $0x30] sm:$0xf]
      %v2339 = vld [vmem:[%s6 + $0x34] sm:$0xf]
      %v2340 = vld [vmem:[%s6 + $0x38] sm:$0xf]
      %v2341 = vld [vmem:[%s6 + $0x3c] sm:$0xf]
      %v2343 = vunpack.c.l.b16 %v2318
      %v2344 = vunpack.c.h.b16 %v2318
      %v2345 = vpack.c.b16 %v2343, %v2343
      %v2346 = vpack.c.b16 %v2344, %v2344
      %2347 = vrot.lane.b32.xlu0 %v2345, 117
      %v2348 = vpop.permute.xlu0 %2347
      %2349 = vrot.lane.b32.xlu0 %v2346, 117
      %v2350 = vpop.permute.xlu0 %2349
      %v2351 = vsel %vm504, %v2348, %v2350
      %v2369 = vunpack.c.l.b16 %v2326
      %v2370 = vunpack.c.l.b16 %v2327
      %v2371 = vunpack.c.l.b16 %v2328
      %v2372 = vunpack.c.l.b16 %v2329
      %v2373 = vunpack.c.l.b16 %v2330
      %v2374 = vunpack.c.l.b16 %v2331
      %v2375 = vunpack.c.l.b16 %v2332
      %v2376 = vunpack.c.l.b16 %v2333
      %v2377 = vunpack.c.l.b16 %v2334
      %v2378 = vunpack.c.l.b16 %v2335
      %v2379 = vunpack.c.l.b16 %v2336
      %v2380 = vunpack.c.l.b16 %v2337
      %v2381 = vunpack.c.l.b16 %v2338
      %v2382 = vunpack.c.l.b16 %v2339
      %v2383 = vunpack.c.l.b16 %v2340
      %v2384 = vunpack.c.l.b16 %v2341
      %v2385 = vpack.c.b16 %v2370, %v2369
      %v2386 = vpack.c.b16 %v2372, %v2371
      %v2387 = vpack.c.b16 %v2374, %v2373
      %v2388 = vpack.c.b16 %v2376, %v2375
      %v2389 = vpack.c.b16 %v2378, %v2377
      %v2390 = vpack.c.b16 %v2380, %v2379
      %v2391 = vpack.c.b16 %v2382, %v2381
      %v2392 = vpack.c.b16 %v2384, %v2383
      %2401 = vmatpush.bf16.msra.mxu0 %v2392
      %2402 = vmatpush.bf16.msra.mxu0 %v2391
      %2403 = vmatpush.bf16.msra.mxu0 %v2390
      %2404 = vmatpush.bf16.msra.mxu0 %v2389
      %2405 = vmatpush.bf16.msra.mxu0 %v2388
      %2406 = vmatpush.bf16.msra.mxu0 %v2387
      %2407 = vmatpush.bf16.msra.mxu0 %v2386
      %2408 = vmatpush.bf16.msra.mxu0 %v2385
      %2409 = vmatmul.bf16.gmra.mxu0 %v2351
      %v2410 = vpop.f32.mrf.mxu0
      %v2411 = vadd.f32 0.0, %v2410
      %v2412 = vpop.f32.mrf.mxu0
      %2413 = vdwg.mxu0
      %v2414 = vpack.c.bf16 %v2411, %v2411
      %2415 = vst [vmem:[#allocation3 + $0x4] sm:$0xf] %v2414
      %v2416 = vld [vmem:[%s6] sm:$0xf]
      %v2417 = vld [vmem:[%s6 + $0x4] sm:$0xf]
      %v2418 = vld [vmem:[%s6 + $0x8] sm:$0xf]
      %v2419 = vld [vmem:[%s6 + $0xc] sm:$0xf]
      %v2420 = vld [vmem:[%s6 + $0x10] sm:$0xf]
      %v2421 = vld [vmem:[%s6 + $0x14] sm:$0xf]
      %v2422 = vld [vmem:[%s6 + $0x18] sm:$0xf]
      %v2423 = vld [vmem:[%s6 + $0x1c] sm:$0xf]
      %v2424 = vld [vmem:[%s6 + $0x20] sm:$0xf]
      %v2425 = vld [vmem:[%s6 + $0x24] sm:$0xf]
      %v2426 = vld [vmem:[%s6 + $0x28] sm:$0xf]
      %v2427 = vld [vmem:[%s6 + $0x2c] sm:$0xf]
      %v2428 = vld [vmem:[%s6 + $0x30] sm:$0xf]
      %v2429 = vld [vmem:[%s6 + $0x34] sm:$0xf]
      %v2430 = vld [vmem:[%s6 + $0x38] sm:$0xf]
      %v2431 = vld [vmem:[%s6 + $0x3c] sm:$0xf]
      %v2433 = vunpack.c.l.b16 %v2319
      %v2434 = vunpack.c.h.b16 %v2319
      %v2435 = vpack.c.b16 %v2433, %v2433
      %v2436 = vpack.c.b16 %v2434, %v2434
      %2437 = vrot.lane.b32.xlu0 %v2435, 117
      %v2438 = vpop.permute.xlu0 %2437
      %2439 = vrot.lane.b32.xlu0 %v2436, 117
      %v2440 = vpop.permute.xlu0 %2439
      %v2441 = vsel %vm504, %v2438, %v2440
      %v2459 = vunpack.c.l.b16 %v2416
      %v2460 = vunpack.c.l.b16 %v2417
      %v2461 = vunpack.c.l.b16 %v2418
      %v2462 = vunpack.c.l.b16 %v2419
      %v2463 = vunpack.c.l.b16 %v2420
      %v2464 = vunpack.c.l.b16 %v2421
      %v2465 = vunpack.c.l.b16 %v2422
      %v2466 = vunpack.c.l.b16 %v2423
      %v2467 = vunpack.c.l.b16 %v2424
      %v2468 = vunpack.c.l.b16 %v2425
      %v2469 = vunpack.c.l.b16 %v2426
      %v2470 = vunpack.c.l.b16 %v2427
      %v2471 = vunpack.c.l.b16 %v2428
      %v2472 = vunpack.c.l.b16 %v2429
      %v2473 = vunpack.c.l.b16 %v2430
      %v2474 = vunpack.c.l.b16 %v2431
      %v2475 = vpack.c.b16 %v2460, %v2459
      %v2476 = vpack.c.b16 %v2462, %v2461
      %v2477 = vpack.c.b16 %v2464, %v2463
      %v2478 = vpack.c.b16 %v2466, %v2465
      %v2479 = vpack.c.b16 %v2468, %v2467
      %v2480 = vpack.c.b16 %v2470, %v2469
      %v2481 = vpack.c.b16 %v2472, %v2471
      %v2482 = vpack.c.b16 %v2474, %v2473
      %2491 = vmatpush.bf16.msra.mxu0 %v2482
      %2492 = vmatpush.bf16.msra.mxu0 %v2481
      %2493 = vmatpush.bf16.msra.mxu0 %v2480
      %2494 = vmatpush.bf16.msra.mxu0 %v2479
      %2495 = vmatpush.bf16.msra.mxu0 %v2478
      %2496 = vmatpush.bf16.msra.mxu0 %v2477
      %2497 = vmatpush.bf16.msra.mxu0 %v2476
      %2498 = vmatpush.bf16.msra.mxu0 %v2475
      %2499 = vmatmul.bf16.gmra.mxu0 %v2441
      %v2500 = vpop.f32.mrf.mxu0
      %v2501 = vadd.f32 0.0, %v2500
      %v2502 = vpop.f32.mrf.mxu0
      %2503 = vdwg.mxu0
      %v2504 = vpack.c.bf16 %v2501, %v2501
      %2505 = vst [vmem:[#allocation3 + $0x8] sm:$0xf] %v2504
      %v2506 = vld [vmem:[%s6] sm:$0xf]
      %v2507 = vld [vmem:[%s6 + $0x4] sm:$0xf]
      %v2508 = vld [vmem:[%s6 + $0x8] sm:$0xf]
      %v2509 = vld [vmem:[%s6 + $0xc] sm:$0xf]
      %v2510 = vld [vmem:[%s6 + $0x10] sm:$0xf]
      %v2511 = vld [vmem:[%s6 + $0x14] sm:$0xf]
      %v2512 = vld [vmem:[%s6 + $0x18] sm:$0xf]
      %v2513 = vld [vmem:[%s6 + $0x1c] sm:$0xf]
      %v2514 = vld [vmem:[%s6 + $0x20] sm:$0xf]
      %v2515 = vld [vmem:[%s6 + $0x24] sm:$0xf]
      %v2516 = vld [vmem:[%s6 + $0x28] sm:$0xf]
      %v2517 = vld [vmem:[%s6 + $0x2c] sm:$0xf]
      %v2518 = vld [vmem:[%s6 + $0x30] sm:$0xf]
      %v2519 = vld [vmem:[%s6 + $0x34] sm:$0xf]
      %v2520 = vld [vmem:[%s6 + $0x38] sm:$0xf]
      %v2521 = vld [vmem:[%s6 + $0x3c] sm:$0xf]
      %v2523 = vunpack.c.l.b16 %v2320
      %v2524 = vunpack.c.h.b16 %v2320
      %v2525 = vpack.c.b16 %v2523, %v2523
      %v2526 = vpack.c.b16 %v2524, %v2524
      %2527 = vrot.lane.b32.xlu0 %v2525, 117
      %v2528 = vpop.permute.xlu0 %2527
      %2529 = vrot.lane.b32.xlu0 %v2526, 117
      %v2530 = vpop.permute.xlu0 %2529
      %v2531 = vsel %vm504, %v2528, %v2530
      %v2549 = vunpack.c.l.b16 %v2506
      %v2550 = vunpack.c.l.b16 %v2507
      %v2551 = vunpack.c.l.b16 %v2508
      %v2552 = vunpack.c.l.b16 %v2509
      %v2553 = vunpack.c.l.b16 %v2510
      %v2554 = vunpack.c.l.b16 %v2511
      %v2555 = vunpack.c.l.b16 %v2512
      %v2556 = vunpack.c.l.b16 %v2513
      %v2557 = vunpack.c.l.b16 %v2514
      %v2558 = vunpack.c.l.b16 %v2515
      %v2559 = vunpack.c.l.b16 %v2516
      %v2560 = vunpack.c.l.b16 %v2517
      %v2561 = vunpack.c.l.b16 %v2518
      %v2562 = vunpack.c.l.b16 %v2519
      %v2563 = vunpack.c.l.b16 %v2520
      %v2564 = vunpack.c.l.b16 %v2521
      %v2565 = vpack.c.b16 %v2550, %v2549
      %v2566 = vpack.c.b16 %v2552, %v2551
      %v2567 = vpack.c.b16 %v2554, %v2553
      %v2568 = vpack.c.b16 %v2556, %v2555
      %v2569 = vpack.c.b16 %v2558, %v2557
      %v2570 = vpack.c.b16 %v2560, %v2559
      %v2571 = vpack.c.b16 %v2562, %v2561
      %v2572 = vpack.c.b16 %v2564, %v2563
      %2581 = vmatpush.bf16.msra.mxu0 %v2572
      %2582 = vmatpush.bf16.msra.mxu0 %v2571
      %2583 = vmatpush.bf16.msra.mxu0 %v2570
      %2584 = vmatpush.bf16.msra.mxu0 %v2569
      %2585 = vmatpush.bf16.msra.mxu0 %v2568
      %2586 = vmatpush.bf16.msra.mxu0 %v2567
      %2587 = vmatpush.bf16.msra.mxu0 %v2566
      %2588 = vmatpush.bf16.msra.mxu0 %v2565
      %2589 = vmatmul.bf16.gmra.mxu0 %v2531
      %v2590 = vpop.f32.mrf.mxu0
      %v2591 = vadd.f32 0.0, %v2590
      %v2592 = vpop.f32.mrf.mxu0
      %2593 = vdwg.mxu0
      %v2594 = vpack.c.bf16 %v2591, %v2591
      %2595 = vst [vmem:[#allocation3 + $0xc] sm:$0xf] %v2594
      %v2596 = vld [vmem:[%s6] sm:$0xf]
      %v2597 = vld [vmem:[%s6 + $0x4] sm:$0xf]
      %v2598 = vld [vmem:[%s6 + $0x8] sm:$0xf]
      %v2599 = vld [vmem:[%s6 + $0xc] sm:$0xf]
      %v2600 = vld [vmem:[%s6 + $0x10] sm:$0xf]
      %v2601 = vld [vmem:[%s6 + $0x14] sm:$0xf]
      %v2602 = vld [vmem:[%s6 + $0x18] sm:$0xf]
      %v2603 = vld [vmem:[%s6 + $0x1c] sm:$0xf]
      %v2604 = vld [vmem:[%s6 + $0x20] sm:$0xf]
      %v2605 = vld [vmem:[%s6 + $0x24] sm:$0xf]
      %v2606 = vld [vmem:[%s6 + $0x28] sm:$0xf]
      %v2607 = vld [vmem:[%s6 + $0x2c] sm:$0xf]
      %v2608 = vld [vmem:[%s6 + $0x30] sm:$0xf]
      %v2609 = vld [vmem:[%s6 + $0x34] sm:$0xf]
      %v2610 = vld [vmem:[%s6 + $0x38] sm:$0xf]
      %v2611 = vld [vmem:[%s6 + $0x3c] sm:$0xf]
      %v2613 = vunpack.c.l.b16 %v2321
      %v2614 = vunpack.c.h.b16 %v2321
      %v2615 = vpack.c.b16 %v2613, %v2613
      %v2616 = vpack.c.b16 %v2614, %v2614
      %2617 = vrot.lane.b32.xlu0 %v2615, 117
      %v2618 = vpop.permute.xlu0 %2617
      %2619 = vrot.lane.b32.xlu0 %v2616, 117
      %v2620 = vpop.permute.xlu0 %2619
      %v2621 = vsel %vm504, %v2618, %v2620
      %v2639 = vunpack.c.l.b16 %v2596
      %v2640 = vunpack.c.l.b16 %v2597
      %v2641 = vunpack.c.l.b16 %v2598
      %v2642 = vunpack.c.l.b16 %v2599
      %v2643 = vunpack.c.l.b16 %v2600
      %v2644 = vunpack.c.l.b16 %v2601
      %v2645 = vunpack.c.l.b16 %v2602
      %v2646 = vunpack.c.l.b16 %v2603
      %v2647 = vunpack.c.l.b16 %v2604
      %v2648 = vunpack.c.l.b16 %v2605
      %v2649 = vunpack.c.l.b16 %v2606
      %v2650 = vunpack.c.l.b16 %v2607
      %v2651 = vunpack.c.l.b16 %v2608
      %v2652 = vunpack.c.l.b16 %v2609
      %v2653 = vunpack.c.l.b16 %v2610
      %v2654 = vunpack.c.l.b16 %v2611
      %v2655 = vpack.c.b16 %v2640, %v2639
      %v2656 = vpack.c.b16 %v2642, %v2641
      %v2657 = vpack.c.b16 %v2644, %v2643
      %v2658 = vpack.c.b16 %v2646, %v2645
      %v2659 = vpack.c.b16 %v2648, %v2647
      %v2660 = vpack.c.b16 %v2650, %v2649
      %v2661 = vpack.c.b16 %v2652, %v2651
      %v2662 = vpack.c.b16 %v2654, %v2653
      %2671 = vmatpush.bf16.msra.mxu0 %v2662
      %2672 = vmatpush.bf16.msra.mxu0 %v2661
      %2673 = vmatpush.bf16.msra.mxu0 %v2660
      %2674 = vmatpush.bf16.msra.mxu0 %v2659
      %2675 = vmatpush.bf16.msra.mxu0 %v2658
      %2676 = vmatpush.bf16.msra.mxu0 %v2657
      %2677 = vmatpush.bf16.msra.mxu0 %v2656
      %2678 = vmatpush.bf16.msra.mxu0 %v2655
      %2679 = vmatmul.bf16.gmra.mxu0 %v2621
      %v2680 = vpop.f32.mrf.mxu0
      %v2681 = vadd.f32 0.0, %v2680
      %v2682 = vpop.f32.mrf.mxu0
      %2683 = vdwg.mxu0
      %v2684 = vpack.c.bf16 %v2681, %v2681
      %2685 = vst [vmem:[#allocation3 + $0x10] sm:$0xf] %v2684
      %v2686 = vld [vmem:[#allocation3] sm:$0xff]
      %v2687 = vld [vmem:[#allocation3 + $0x8] sm:$0xff]
      %2688 = vst [vmem:[#allocation6] sm:$0xff] %v2686
      %2689 = vst [vmem:[#allocation6 + $0x8] sm:$0xff] %v2687
      %v2690 = vld [vmem:[#allocation3] sm:$0xff]
      %v2691 = vld [vmem:[#allocation3 + $0x8] sm:$0xff]
      %v2692 = vld [vmem:[#allocation3 + $0x10] sm:$0xf]
      %2696 = vrot.lane.b32.xlu0 %v2690, 127
      %v2697 = vpop.permute.xlu0 %2696
      %2698 = vrot.lane.b32.xlu0 %v2691, 127
      %v2699 = vpop.permute.xlu0 %2698
      %2700 = vrot.lane.b32.xlu0 %v2692, 127
      %v2701 = vpop.permute.xlu0 %2700
      %v2702 = vrot.slane %v2697, 4
      %v2703 = vrot.slane %v2699, 4
      %v2704 = vrot.slane %v2701, 4
      %v2705 = vsel %vm353, %v2702, %v2703
      %v2706 = vsel %vm355, %v2697, %v2705
      %v2707 = vsel %vm353, %v2703, %v2704
      %v2708 = vsel %vm355, %v2699, %v2707
      %2711 = vst [vmem:[#allocation6 + $0x10] sm:$0xff] %v2706
      %2712 = vst [vmem:[#allocation6 + $0x18] sm:$0xff] %v2708
      %v2713 = vld [vmem:[#allocation3] sm:$0xff]
      %v2714 = vld [vmem:[#allocation3 + $0x8] sm:$0xff]
      %v2715 = vld [vmem:[#allocation3 + $0x10] sm:$0xf]
      %2719 = vrot.lane.b32.xlu0 %v2713, 126
      %v2720 = vpop.permute.xlu0 %2719
      %2721 = vrot.lane.b32.xlu0 %v2714, 126
      %v2722 = vpop.permute.xlu0 %2721
      %2723 = vrot.lane.b32.xlu0 %v2715, 126
      %v2724 = vpop.permute.xlu0 %2723
      %v2725 = vrot.slane %v2720, 4
      %v2726 = vrot.slane %v2722, 4
      %v2727 = vrot.slane %v2724, 4
      %v2728 = vsel %vm353, %v2725, %v2726
      %v2729 = vsel %vm405, %v2720, %v2728
      %v2730 = vsel %vm353, %v2726, %v2727
      %v2731 = vsel %vm405, %v2722, %v2730
      %2734 = vst [vmem:[#allocation6 + $0x20] sm:$0xff] %v2729
      %2735 = vst [vmem:[#allocation6 + $0x28] sm:$0xff] %v2731
      %v2736 = vld [vmem:[#allocation3] sm:$0xff]
      %v2737 = vld [vmem:[#allocation3 + $0x8] sm:$0xff]
      %v2738 = vld [vmem:[#allocation3 + $0x10] sm:$0xf]
      %2742 = vrot.lane.b32.xlu0 %v2736, 122
      %v2743 = vpop.permute.xlu0 %2742
      %2744 = vrot.lane.b32.xlu0 %v2737, 122
      %v2745 = vpop.permute.xlu0 %2744
      %2746 = vrot.lane.b32.xlu0 %v2738, 122
      %v2747 = vpop.permute.xlu0 %2746
      %v2748 = vrot.slane %v2743, 4
      %v2749 = vrot.slane %v2745, 4
      %v2750 = vrot.slane %v2747, 4
      %v2751 = vsel %vm353, %v2748, %v2749
      %vm2752 = vcmask 998400
      %v2753 = vsel %vm2752, %v2743, %v2751
      %v2754 = vsel %vm353, %v2749, %v2750
      %v2755 = vsel %vm2752, %v2745, %v2754
      %2758 = vst [vmem:[#allocation6 + $0x30] sm:$0xff] %v2753
      %2759 = vst [vmem:[#allocation6 + $0x38] sm:$0xff] %v2755
      %v2760 = vld [vmem:[#allocation3] sm:$0xff]
      %v2761 = vld [vmem:[#allocation3 + $0x8] sm:$0xff]
      %v2762 = vld [vmem:[#allocation3 + $0x10] sm:$0xf]
      %2766 = vrot.lane.b32.xlu0 %v2760, 121
      %v2767 = vpop.permute.xlu0 %2766
      %2768 = vrot.lane.b32.xlu0 %v2761, 121
      %v2769 = vpop.permute.xlu0 %2768
      %2770 = vrot.lane.b32.xlu0 %v2762, 121
      %v2771 = vpop.permute.xlu0 %2770
      %v2772 = vrot.slane %v2767, 4
      %v2773 = vrot.slane %v2769, 4
      %v2774 = vrot.slane %v2771, 4
      %v2775 = vsel %vm353, %v2772, %v2773
      %vm2776 = vcmask 990208
      %v2777 = vsel %vm2776, %v2767, %v2775
      %v2778 = vsel %vm353, %v2773, %v2774
      %v2779 = vsel %vm2776, %v2769, %v2778
      %2782 = vst [vmem:[#allocation6 + $0x40] sm:$0xff] %v2777
      %2783 = vst [vmem:[#allocation6 + $0x48] sm:$0xff] %v2779
      %v2784 = vld [vmem:[#allocation3] sm:$0xff]
      %v2785 = vld [vmem:[#allocation3 + $0x8] sm:$0xff]
      %v2786 = vld [vmem:[#allocation3 + $0x10] sm:$0xf]
      %2790 = vrot.lane.b32.xlu0 %v2784, 120
      %v2791 = vpop.permute.xlu0 %2790
      %2792 = vrot.lane.b32.xlu0 %v2785, 120
      %v2793 = vpop.permute.xlu0 %2792
      %2794 = vrot.lane.b32.xlu0 %v2786, 120
      %v2795 = vpop.permute.xlu0 %2794
      %v2796 = vrot.slane %v2791, 4
      %v2797 = vrot.slane %v2793, 4
      %v2798 = vrot.slane %v2795, 4
      %v2799 = vsel %vm353, %v2796, %v2797
      %vm2800 = vcmask 982016
      %v2801 = vsel %vm2800, %v2791, %v2799
      %v2802 = vsel %vm353, %v2797, %v2798
      %v2803 = vsel %vm2800, %v2793, %v2802
      %2806 = vst [vmem:[#allocation6 + $0x50] sm:$0xff] %v2801
      %2807 = vst [vmem:[#allocation6 + $0x58] sm:$0xff] %v2803
      %v2808 = vld [vmem:[#allocation3] sm:$0xff]
      %v2809 = vld [vmem:[#allocation3 + $0x8] sm:$0xff]
      %v2810 = vld [vmem:[#allocation3 + $0x10] sm:$0xf]
      %2814 = vrot.lane.b32.xlu0 %v2808, 116
      %v2815 = vpop.permute.xlu0 %2814
      %2816 = vrot.lane.b32.xlu0 %v2809, 116
      %v2817 = vpop.permute.xlu0 %2816
      %2818 = vrot.lane.b32.xlu0 %v2810, 116
      %v2819 = vpop.permute.xlu0 %2818
      %v2820 = vrot.slane %v2815, 4
      %v2821 = vrot.slane %v2817, 4
      %v2822 = vrot.slane %v2819, 4
      %v2823 = vsel %vm353, %v2820, %v2821
      %v2824 = vsel %vm554, %v2815, %v2823
      %v2825 = vsel %vm353, %v2821, %v2822
      %v2826 = vsel %vm554, %v2817, %v2825
      %2829 = vst [vmem:[#allocation6 + $0x60] sm:$0xff] %v2824
      %2830 = vst [vmem:[#allocation6 + $0x68] sm:$0xff] %v2826
      %v2831 = vld [vmem:[#allocation3] sm:$0xff]
      %v2832 = vld [vmem:[#allocation3 + $0x8] sm:$0xff]
      %v2833 = vld [vmem:[#allocation3 + $0x10] sm:$0xf]
      %2837 = vrot.lane.b32.xlu0 %v2831, 115
      %v2838 = vpop.permute.xlu0 %2837
      %2839 = vrot.lane.b32.xlu0 %v2832, 115
      %v2840 = vpop.permute.xlu0 %2839
      %2841 = vrot.lane.b32.xlu0 %v2833, 115
      %v2842 = vpop.permute.xlu0 %2841
      %v2843 = vrot.slane %v2838, 4
      %v2844 = vrot.slane %v2840, 4
      %v2845 = vrot.slane %v2842, 4
      %v2846 = vsel %vm353, %v2843, %v2844
      %vm2847 = vcmask 941056
      %v2848 = vsel %vm2847, %v2838, %v2846
      %v2849 = vsel %vm353, %v2844, %v2845
      %v2850 = vsel %vm2847, %v2840, %v2849
      %2853 = vst [vmem:[#allocation6 + $0x70] sm:$0xff] %v2848
      %2854 = vst [vmem:[#allocation6 + $0x78] sm:$0xff] %v2850
      %v2855 = vld [vmem:[#allocation3] sm:$0xff]
      %v2856 = vld [vmem:[#allocation3 + $0x8] sm:$0xff]
      %v2857 = vld [vmem:[#allocation3 + $0x10] sm:$0xf]
      %2861 = vrot.lane.b32.xlu0 %v2855, 114
      %v2862 = vpop.permute.xlu0 %2861
      %2863 = vrot.lane.b32.xlu0 %v2856, 114
      %v2864 = vpop.permute.xlu0 %2863
      %2865 = vrot.lane.b32.xlu0 %v2857, 114
      %v2866 = vpop.permute.xlu0 %2865
      %v2867 = vrot.slane %v2862, 4
      %v2868 = vrot.slane %v2864, 4
      %v2869 = vrot.slane %v2866, 4
      %v2870 = vsel %vm353, %v2867, %v2868
      %vm2871 = vcmask 932864
      %v2872 = vsel %vm2871, %v2862, %v2870
      %v2873 = vsel %vm353, %v2868, %v2869
      %v2874 = vsel %vm2871, %v2864, %v2873
      %2877 = vst [vmem:[#allocation6 + $0x80] sm:$0xff] %v2872
      %2878 = vst [vmem:[#allocation6 + $0x88] sm:$0xff] %v2874
      %v2879 = vld [vmem:[#allocation3 + $0x4] sm:$0xff]
      %v2880 = vld [vmem:[#allocation3 + $0xc] sm:$0xff]
      %2881 = vst [vmem:[#allocation6 + $0x90] sm:$0xff] %v2879
      %2882 = vst [vmem:[#allocation6 + $0x98] sm:$0xff] %v2880
      %v2883 = vld [vmem:[#allocation3 + $0x4] sm:$0xff]
      %v2884 = vld [vmem:[#allocation3 + $0xc] sm:$0xff]
      %v2885 = vld [vmem:[#allocation3 + $0x14] sm:$0xf]
      %2889 = vrot.lane.b32.xlu0 %v2883, 127
      %v2890 = vpop.permute.xlu0 %2889
      %2891 = vrot.lane.b32.xlu0 %v2884, 127
      %v2892 = vpop.permute.xlu0 %2891
      %2893 = vrot.lane.b32.xlu0 %v2885, 127
      %v2894 = vpop.permute.xlu0 %2893
      %v2895 = vrot.slane %v2890, 4
      %v2896 = vrot.slane %v2892, 4
      %v2897 = vrot.slane %v2894, 4
      %v2898 = vsel %vm353, %v2895, %v2896
      %v2899 = vsel %vm355, %v2890, %v2898
      %v2900 = vsel %vm353, %v2896, %v2897
      %v2901 = vsel %vm355, %v2892, %v2900
      %2904 = vst [vmem:[#allocation6 + $0xa0] sm:$0xff] %v2899
      %2905 = vst [vmem:[#allocation6 + $0xa8] sm:$0xff] %v2901
      %v2906 = vld [vmem:[#allocation3 + $0x4] sm:$0xff]
      %v2907 = vld [vmem:[#allocation3 + $0xc] sm:$0xff]
      %v2908 = vld [vmem:[#allocation3 + $0x14] sm:$0xf]
      %2912 = vrot.lane.b32.xlu0 %v2906, 126
      %v2913 = vpop.permute.xlu0 %2912
      %2914 = vrot.lane.b32.xlu0 %v2907, 126
      %v2915 = vpop.permute.xlu0 %2914
      %2916 = vrot.lane.b32.xlu0 %v2908, 126
      %v2917 = vpop.permute.xlu0 %2916
      %v2918 = vrot.slane %v2913, 4
      %v2919 = vrot.slane %v2915, 4
      %v2920 = vrot.slane %v2917, 4
      %v2921 = vsel %vm353, %v2918, %v2919
      %v2922 = vsel %vm405, %v2913, %v2921
      %v2923 = vsel %vm353, %v2919, %v2920
      %v2924 = vsel %vm405, %v2915, %v2923
      %2927 = vst [vmem:[#allocation6 + $0xb0] sm:$0xff] %v2922
      %2928 = vst [vmem:[#allocation6 + $0xb8] sm:$0xff] %v2924
      %v2929 = vld [vmem:[#allocation3 + $0x4] sm:$0xff]
      %v2930 = vld [vmem:[#allocation3 + $0xc] sm:$0xff]
      %v2931 = vld [vmem:[#allocation3 + $0x14] sm:$0xf]
      %2935 = vrot.lane.b32.xlu0 %v2929, 122
      %v2936 = vpop.permute.xlu0 %2935
      %2937 = vrot.lane.b32.xlu0 %v2930, 122
      %v2938 = vpop.permute.xlu0 %2937
      %2939 = vrot.lane.b32.xlu0 %v2931, 122
      %v2940 = vpop.permute.xlu0 %2939
      %v2941 = vrot.slane %v2936, 4
      %v2942 = vrot.slane %v2938, 4
      %v2943 = vrot.slane %v2940, 4
      %v2944 = vsel %vm353, %v2941, %v2942
      %v2945 = vsel %vm2752, %v2936, %v2944
      %v2946 = vsel %vm353, %v2942, %v2943
      %v2947 = vsel %vm2752, %v2938, %v2946
      %2950 = vst [vmem:[#allocation6 + $0xc0] sm:$0xff] %v2945
      %2951 = vst [vmem:[#allocation6 + $0xc8] sm:$0xff] %v2947
      %v2952 = vld [vmem:[#allocation3 + $0x4] sm:$0xff]
      %v2953 = vld [vmem:[#allocation3 + $0xc] sm:$0xff]
      %v2954 = vld [vmem:[#allocation3 + $0x14] sm:$0xf]
      %2958 = vrot.lane.b32.xlu0 %v2952, 121
      %v2959 = vpop.permute.xlu0 %2958
      %2960 = vrot.lane.b32.xlu0 %v2953, 121
      %v2961 = vpop.permute.xlu0 %2960
      %2962 = vrot.lane.b32.xlu0 %v2954, 121
      %v2963 = vpop.permute.xlu0 %2962
      %v2964 = vrot.slane %v2959, 4
      %v2965 = vrot.slane %v2961, 4
      %v2966 = vrot.slane %v2963, 4
      %v2967 = vsel %vm353, %v2964, %v2965
      %v2968 = vsel %vm2776, %v2959, %v2967
      %v2969 = vsel %vm353, %v2965, %v2966
      %v2970 = vsel %vm2776, %v2961, %v2969
      %2973 = vst [vmem:[#allocation6 + $0xd0] sm:$0xff] %v2968
      %2974 = vst [vmem:[#allocation6 + $0xd8] sm:$0xff] %v2970
      %v2975 = vld [vmem:[#allocation3 + $0x4] sm:$0xff]
      %v2976 = vld [vmem:[#allocation3 + $0xc] sm:$0xff]
      %v2977 = vld [vmem:[#allocation3 + $0x14] sm:$0xf]
      %2981 = vrot.lane.b32.xlu0 %v2975, 120
      %v2982 = vpop.permute.xlu0 %2981
      %2983 = vrot.lane.b32.xlu0 %v2976, 120
      %v2984 = vpop.permute.xlu0 %2983
      %2985 = vrot.lane.b32.xlu0 %v2977, 120
      %v2986 = vpop.permute.xlu0 %2985
      %v2987 = vrot.slane %v2982, 4
      %v2988 = vrot.slane %v2984, 4
      %v2989 = vrot.slane %v2986, 4
      %v2990 = vsel %vm353, %v2987, %v2988
      %v2991 = vsel %vm2800, %v2982, %v2990
      %v2992 = vsel %vm353, %v2988, %v2989
      %v2993 = vsel %vm2800, %v2984, %v2992
      %2996 = vst [vmem:[#allocation6 + $0xe0] sm:$0xff] %v2991
      %2997 = vst [vmem:[#allocation6 + $0xe8] sm:$0xff] %v2993
      %v2998 = vld [vmem:[#allocation3 + $0x4] sm:$0xff]
      %v2999 = vld [vmem:[#allocation3 + $0xc] sm:$0xff]
      %v3000 = vld [vmem:[#allocation3 + $0x14] sm:$0xf]
      %3004 = vrot.lane.b32.xlu0 %v2998, 116
      %v3005 = vpop.permute.xlu0 %3004
      %3006 = vrot.lane.b32.xlu0 %v2999, 116
      %v3007 = vpop.permute.xlu0 %3006
      %3008 = vrot.lane.b32.xlu0 %v3000, 116
      %v3009 = vpop.permute.xlu0 %3008
      %v3010 = vrot.slane %v3005, 4
      %v3011 = vrot.slane %v3007, 4
      %v3012 = vrot.slane %v3009, 4
      %v3013 = vsel %vm353, %v3010, %v3011
      %v3014 = vsel %vm554, %v3005, %v3013
      %v3015 = vsel %vm353, %v3011, %v3012
      %v3016 = vsel %vm554, %v3007, %v3015
      %3019 = vst [vmem:[#allocation6 + $0xf0] sm:$0xff] %v3014
      %3020 = vst [vmem:[#allocation6 + $0xf8] sm:$0xff] %v3016
      %v3021 = vld [vmem:[#allocation3 + $0x4] sm:$0xff]
      %v3022 = vld [vmem:[#allocation3 + $0xc] sm:$0xff]
      %v3023 = vld [vmem:[#allocation3 + $0x14] sm:$0xf]
      %3027 = vrot.lane.b32.xlu0 %v3021, 115
      %v3028 = vpop.permute.xlu0 %3027
      %3029 = vrot.lane.b32.xlu0 %v3022, 115
      %v3030 = vpop.permute.xlu0 %3029
      %3031 = vrot.lane.b32.xlu0 %v3023, 115
      %v3032 = vpop.permute.xlu0 %3031
      %v3033 = vrot.slane %v3028, 4
      %v3034 = vrot.slane %v3030, 4
      %v3035 = vrot.slane %v3032, 4
      %v3036 = vsel %vm353, %v3033, %v3034
      %v3037 = vsel %vm2847, %v3028, %v3036
      %v3038 = vsel %vm353, %v3034, %v3035
      %v3039 = vsel %vm2847, %v3030, %v3038
      %3042 = vst [vmem:[#allocation6 + $0x100] sm:$0xff] %v3037
      %3043 = vst [vmem:[#allocation6 + $0x108] sm:$0xff] %v3039
      %v3044 = vld [vmem:[#allocation3 + $0x4] sm:$0xff]
      %v3045 = vld [vmem:[#allocation3 + $0xc] sm:$0xff]
      %v3046 = vld [vmem:[#allocation3 + $0x14] sm:$0xf]
      %3050 = vrot.lane.b32.xlu0 %v3044, 114
      %v3051 = vpop.permute.xlu0 %3050
      %3052 = vrot.lane.b32.xlu0 %v3045, 114
      %v3053 = vpop.permute.xlu0 %3052
      %3054 = vrot.lane.b32.xlu0 %v3046, 114
      %v3055 = vpop.permute.xlu0 %3054
      %v3056 = vrot.slane %v3051, 4
      %v3057 = vrot.slane %v3053, 4
      %v3058 = vrot.slane %v3055, 4
      %v3059 = vsel %vm353, %v3056, %v3057
      %v3060 = vsel %vm2871, %v3051, %v3059
      %v3061 = vsel %vm353, %v3057, %v3058
      %v3062 = vsel %vm2871, %v3053, %v3061
      %3065 = vst [vmem:[#allocation6 + $0x110] sm:$0xff] %v3060
      %3066 = vst [vmem:[#allocation6 + $0x118] sm:$0xff] %v3062
      %v3067 = vld [vmem:[#allocation3 + $0x8] sm:$0xff]
      %v3068 = vld [vmem:[#allocation3 + $0x10] sm:$0xff]
      %3069 = vst [vmem:[#allocation6 + $0x120] sm:$0xff] %v3067
      %3070 = vst [vmem:[#allocation6 + $0x128] sm:$0xff] %v3068
      %v3071 = vld [vmem:[#allocation3 + $0x8] sm:$0xff]
      %v3072 = vld [vmem:[#allocation3 + $0x10] sm:$0xff]
      %v3073 = vld [vmem:[#allocation3 + $0x18] sm:$0xf]
      %3077 = vrot.lane.b32.xlu0 %v3071, 127
      %v3078 = vpop.permute.xlu0 %3077
      %3079 = vrot.lane.b32.xlu0 %v3072, 127
      %v3080 = vpop.permute.xlu0 %3079
      %3081 = vrot.lane.b32.xlu0 %v3073, 127
      %v3082 = vpop.permute.xlu0 %3081
      %v3083 = vrot.slane %v3078, 4
      %v3084 = vrot.slane %v3080, 4
      %v3085 = vrot.slane %v3082, 4
      %v3086 = vsel %vm353, %v3083, %v3084
      %v3087 = vsel %vm355, %v3078, %v3086
      %v3088 = vsel %vm353, %v3084, %v3085
      %v3089 = vsel %vm355, %v3080, %v3088
      %3092 = vst [vmem:[#allocation6 + $0x130] sm:$0xff] %v3087
      %3093 = vst [vmem:[#allocation6 + $0x138] sm:$0xff] %v3089
      %v3094 = vld [vmem:[#allocation3 + $0x8] sm:$0xff]
      %v3095 = vld [vmem:[#allocation3 + $0x10] sm:$0xff]
      %v3096 = vld [vmem:[#allocation3 + $0x18] sm:$0xf]
      %3100 = vrot.lane.b32.xlu0 %v3094, 126
      %v3101 = vpop.permute.xlu0 %3100
      %3102 = vrot.lane.b32.xlu0 %v3095, 126
      %v3103 = vpop.permute.xlu0 %3102
      %3104 = vrot.lane.b32.xlu0 %v3096, 126
      %v3105 = vpop.permute.xlu0 %3104
      %v3106 = vrot.slane %v3101, 4
      %v3107 = vrot.slane %v3103, 4
      %v3108 = vrot.slane %v3105, 4
      %v3109 = vsel %vm353, %v3106, %v3107
      %v3110 = vsel %vm405, %v3101, %v3109
      %v3111 = vsel %vm353, %v3107, %v3108
      %v3112 = vsel %vm405, %v3103, %v3111
      %3115 = vst [vmem:[#allocation6 + $0x140] sm:$0xff] %v3110
      %3116 = vst [vmem:[#allocation6 + $0x148] sm:$0xff] %v3112
      %v3117 = vld [vmem:[#allocation3 + $0x8] sm:$0xff]
      %v3118 = vld [vmem:[#allocation3 + $0x10] sm:$0xff]
      %v3119 = vld [vmem:[#allocation3 + $0x18] sm:$0xf]
      %3123 = vrot.lane.b32.xlu0 %v3117, 122
      %v3124 = vpop.permute.xlu0 %3123
      %3125 = vrot.lane.b32.xlu0 %v3118, 122
      %v3126 = vpop.permute.xlu0 %3125
      %3127 = vrot.lane.b32.xlu0 %v3119, 122
      %v3128 = vpop.permute.xlu0 %3127
      %v3129 = vrot.slane %v3124, 4
      %v3130 = vrot.slane %v3126, 4
      %v3131 = vrot.slane %v3128, 4
      %v3132 = vsel %vm353, %v3129, %v3130
      %v3133 = vsel %vm2752, %v3124, %v3132
      %v3134 = vsel %vm353, %v3130, %v3131
      %v3135 = vsel %vm2752, %v3126, %v3134
      %3138 = vst [vmem:[#allocation6 + $0x150] sm:$0xff] %v3133
      %3139 = vst [vmem:[#allocation6 + $0x158] sm:$0xff] %v3135
      %v3140 = vld [vmem:[#allocation3 + $0x8] sm:$0xff]
      %v3141 = vld [vmem:[#allocation3 + $0x10] sm:$0xff]
      %v3142 = vld [vmem:[#allocation3 + $0x18] sm:$0xf]
      %3146 = vrot.lane.b32.xlu0 %v3140, 121
      %v3147 = vpop.permute.xlu0 %3146
      %3148 = vrot.lane.b32.xlu0 %v3141, 121
      %v3149 = vpop.permute.xlu0 %3148
      %3150 = vrot.lane.b32.xlu0 %v3142, 121
      %v3151 = vpop.permute.xlu0 %3150
      %v3152 = vrot.slane %v3147, 4
      %v3153 = vrot.slane %v3149, 4
      %v3154 = vrot.slane %v3151, 4
      %v3155 = vsel %vm353, %v3152, %v3153
      %v3156 = vsel %vm2776, %v3147, %v3155
      %v3157 = vsel %vm353, %v3153, %v3154
      %v3158 = vsel %vm2776, %v3149, %v3157
      %3161 = vst [vmem:[#allocation6 + $0x160] sm:$0xff] %v3156
      %3162 = vst [vmem:[#allocation6 + $0x168] sm:$0xff] %v3158
      %v3163 = vld [vmem:[#allocation3 + $0x8] sm:$0xff]
      %v3164 = vld [vmem:[#allocation3 + $0x10] sm:$0xff]
      %v3165 = vld [vmem:[#allocation3 + $0x18] sm:$0xf]
      %3169 = vrot.lane.b32.xlu0 %v3163, 120
      %v3170 = vpop.permute.xlu0 %3169
      %3171 = vrot.lane.b32.xlu0 %v3164, 120
      %v3172 = vpop.permute.xlu0 %3171
      %3173 = vrot.lane.b32.xlu0 %v3165, 120
      %v3174 = vpop.permute.xlu0 %3173
      %v3175 = vrot.slane %v3170, 4
      %v3176 = vrot.slane %v3172, 4
      %v3177 = vrot.slane %v3174, 4
      %v3178 = vsel %vm353, %v3175, %v3176
      %v3179 = vsel %vm2800, %v3170, %v3178
      %v3180 = vsel %vm353, %v3176, %v3177
      %v3181 = vsel %vm2800, %v3172, %v3180
      %3184 = vst [vmem:[#allocation6 + $0x170] sm:$0xff] %v3179
      %3185 = vst [vmem:[#allocation6 + $0x178] sm:$0xff] %v3181
      %v3186 = vld [vmem:[#allocation3 + $0x8] sm:$0xff]
      %v3187 = vld [vmem:[#allocation3 + $0x10] sm:$0xff]
      %v3188 = vld [vmem:[#allocation3 + $0x18] sm:$0xf]
      %3192 = vrot.lane.b32.xlu0 %v3186, 116
      %v3193 = vpop.permute.xlu0 %3192
      %3194 = vrot.lane.b32.xlu0 %v3187, 116
      %v3195 = vpop.permute.xlu0 %3194
      %3196 = vrot.lane.b32.xlu0 %v3188, 116
      %v3197 = vpop.permute.xlu0 %3196
      %v3198 = vrot.slane %v3193, 4
      %v3199 = vrot.slane %v3195, 4
      %v3200 = vrot.slane %v3197, 4
      %v3201 = vsel %vm353, %v3198, %v3199
      %v3202 = vsel %vm554, %v3193, %v3201
      %v3203 = vsel %vm353, %v3199, %v3200
      %v3204 = vsel %vm554, %v3195, %v3203
      %3207 = vst [vmem:[#allocation6 + $0x180] sm:$0xff] %v3202
      %3208 = vst [vmem:[#allocation6 + $0x188] sm:$0xff] %v3204
      %v3209 = vld [vmem:[#allocation3 + $0x8] sm:$0xff]
      %v3210 = vld [vmem:[#allocation3 + $0x10] sm:$0xff]
      %v3211 = vld [vmem:[#allocation3 + $0x18] sm:$0xf]
      %3215 = vrot.lane.b32.xlu0 %v3209, 115
      %v3216 = vpop.permute.xlu0 %3215
      %3217 = vrot.lane.b32.xlu0 %v3210, 115
      %v3218 = vpop.permute.xlu0 %3217
      %3219 = vrot.lane.b32.xlu0 %v3211, 115
      %v3220 = vpop.permute.xlu0 %3219
      %v3221 = vrot.slane %v3216, 4
      %v3222 = vrot.slane %v3218, 4
      %v3223 = vrot.slane %v3220, 4
      %v3224 = vsel %vm353, %v3221, %v3222
      %v3225 = vsel %vm2847, %v3216, %v3224
      %v3226 = vsel %vm353, %v3222, %v3223
      %v3227 = vsel %vm2847, %v3218, %v3226
      %3230 = vst [vmem:[#allocation6 + $0x190] sm:$0xff] %v3225
      %3231 = vst [vmem:[#allocation6 + $0x198] sm:$0xff] %v3227
      %v3232 = vld [vmem:[#allocation3 + $0x8] sm:$0xff]
      %v3233 = vld [vmem:[#allocation3 + $0x10] sm:$0xff]
      %v3234 = vld [vmem:[#allocation3 + $0x18] sm:$0xf]
      %3238 = vrot.lane.b32.xlu0 %v3232, 114
      %v3239 = vpop.permute.xlu0 %3238
      %3240 = vrot.lane.b32.xlu0 %v3233, 114
      %v3241 = vpop.permute.xlu0 %3240
      %3242 = vrot.lane.b32.xlu0 %v3234, 114
      %v3243 = vpop.permute.xlu0 %3242
      %v3244 = vrot.slane %v3239, 4
      %v3245 = vrot.slane %v3241, 4
      %v3246 = vrot.slane %v3243, 4
      %v3247 = vsel %vm353, %v3244, %v3245
      %v3248 = vsel %vm2871, %v3239, %v3247
      %v3249 = vsel %vm353, %v3245, %v3246
      %v3250 = vsel %vm2871, %v3241, %v3249
      %3253 = vst [vmem:[#allocation6 + $0x1a0] sm:$0xff] %v3248
      %3254 = vst [vmem:[#allocation6 + $0x1a8] sm:$0xff] %v3250
      %vm3255 = vcmask 1040384
      %vm3256 = vsmask.f32 256
      %vm3257 = vmand %vm3255, %vm3256
      %vm3258 = vcmask 1044484
      %vm3259 = vsmask.f32 4352
      %vm3260 = vmand %vm3258, %vm3259
      %vm3261 = vmor %vm3260, %vm3257
      %v3262 = vld [vmem:[#allocation6 + $0x1b0] sm:$0x11]
      %v3263 = vsel %vm3261, 1065369472, %v3262
      %3264 = vst [vmem:[#allocation6 + $0x1b0] sm:$0x11] %v3263
      %v3265 = vld [vmem:[#allocation6 + $0x1b8] sm:$0x11]
      %v3266 = vsel %vm3261, 1065369472, %v3265
      %3267 = vst [vmem:[#allocation6 + $0x1b8] sm:$0x11] %v3266
      %v3268 = vld [vmem:[%s2] sm:$0xff]
      %v3269 = vld [vmem:[%s2 + $0x8] sm:$0xff]
      %v3270 = vld [vmem:[#allocation6] sm:$0xff]
      %v3271 = vld [vmem:[#allocation6 + $0x8] sm:$0xff]
      %v3272 = vld [vmem:[#allocation6 + $0x10] sm:$0xff]
      %v3273 = vld [vmem:[#allocation6 + $0x18] sm:$0xff]
      %v3274 = vld [vmem:[#allocation6 + $0x20] sm:$0xff]
      %v3275 = vld [vmem:[#allocation6 + $0x28] sm:$0xff]
      %v3276 = vld [vmem:[#allocation6 + $0x30] sm:$0xff]
      %v3277 = vld [vmem:[#allocation6 + $0x38] sm:$0xff]
      %v3278 = vld [vmem:[#allocation6 + $0x40] sm:$0xff]
      %v3279 = vld [vmem:[#allocation6 + $0x48] sm:$0xff]
      %v3280 = vld [vmem:[#allocation6 + $0x50] sm:$0xff]
      %v3281 = vld [vmem:[#allocation6 + $0x58] sm:$0xff]
      %v3282 = vld [vmem:[#allocation6 + $0x60] sm:$0xff]
      %v3283 = vld [vmem:[#allocation6 + $0x68] sm:$0xff]
      %v3284 = vld [vmem:[#allocation6 + $0x70] sm:$0xff]
      %v3285 = vld [vmem:[#allocation6 + $0x78] sm:$0xff]
      %v3286 = vld [vmem:[#allocation6 + $0x80] sm:$0xff]
      %v3287 = vld [vmem:[#allocation6 + $0x88] sm:$0xff]
      %v3288 = vld [vmem:[#allocation6 + $0x90] sm:$0xff]
      %v3289 = vld [vmem:[#allocation6 + $0x98] sm:$0xff]
      %v3290 = vld [vmem:[#allocation6 + $0xa0] sm:$0xff]
      %v3291 = vld [vmem:[#allocation6 + $0xa8] sm:$0xff]
      %v3292 = vld [vmem:[#allocation6 + $0xb0] sm:$0xff]
      %v3293 = vld [vmem:[#allocation6 + $0xb8] sm:$0xff]
      %v3294 = vld [vmem:[#allocation6 + $0xc0] sm:$0xff]
      %v3295 = vld [vmem:[#allocation6 + $0xc8] sm:$0xff]
      %v3296 = vld [vmem:[#allocation6 + $0xd0] sm:$0xff]
      %v3297 = vld [vmem:[#allocation6 + $0xd8] sm:$0xff]
      %v3298 = vld [vmem:[#allocation6 + $0xe0] sm:$0xff]
      %v3299 = vld [vmem:[#allocation6 + $0xe8] sm:$0xff]
      %v3300 = vld [vmem:[#allocation6 + $0xf0] sm:$0xff]
      %v3301 = vld [vmem:[#allocation6 + $0xf8] sm:$0xff]
      %v3302 = vld [vmem:[#allocation6 + $0x100] sm:$0xff]
      %v3303 = vld [vmem:[#allocation6 + $0x108] sm:$0xff]
      %v3304 = vld [vmem:[#allocation6 + $0x110] sm:$0xff]
      %v3305 = vld [vmem:[#allocation6 + $0x118] sm:$0xff]
      %v3306 = vld [vmem:[#allocation6 + $0x120] sm:$0xff]
      %v3307 = vld [vmem:[#allocation6 + $0x128] sm:$0xff]
      %v3308 = vld [vmem:[#allocation6 + $0x130] sm:$0xff]
      %v3309 = vld [vmem:[#allocation6 + $0x138] sm:$0xff]
      %v3310 = vld [vmem:[#allocation6 + $0x140] sm:$0xff]
      %v3311 = vld [vmem:[#allocation6 + $0x148] sm:$0xff]
      %v3312 = vld [vmem:[#allocation6 + $0x150] sm:$0xff]
      %v3313 = vld [vmem:[#allocation6 + $0x158] sm:$0xff]
      %v3314 = vld [vmem:[#allocation6 + $0x160] sm:$0xff]
      %v3315 = vld [vmem:[#allocation6 + $0x168] sm:$0xff]
      %v3316 = vld [vmem:[#allocation6 + $0x170] sm:$0xff]
      %v3317 = vld [vmem:[#allocation6 + $0x178] sm:$0xff]
      %v3318 = vld [vmem:[#allocation6 + $0x180] sm:$0xff]
      %v3319 = vld [vmem:[#allocation6 + $0x188] sm:$0xff]
      %v3320 = vld [vmem:[#allocation6 + $0x190] sm:$0xff]
      %v3321 = vld [vmem:[#allocation6 + $0x198] sm:$0xff]
      %v3322 = vld [vmem:[#allocation6 + $0x1a0] sm:$0xff]
      %v3323 = vld [vmem:[#allocation6 + $0x1a8] sm:$0xff]
      %v3324 = vld [vmem:[#allocation6 + $0x1b0] sm:$0x11]
      %v3325 = vld [vmem:[#allocation6 + $0x1b8] sm:$0x11]
      %v3328 = vunpack.c.l.b16 %v3268
      %v3329 = vunpack.c.h.b16 %v3268
      %v3330 = vunpack.c.l.b16 %v3269
      %v3331 = vunpack.c.h.b16 %v3269
      %v3332 = vpack.c.b16 %v3330, %v3328
      %v3333 = vpack.c.b16 %v3331, %v3329
      %v3391 = vunpack.c.l.b16 %v3270
      %v3392 = vunpack.c.h.b16 %v3270
      %v3393 = vunpack.c.l.b16 %v3271
      %v3394 = vunpack.c.h.b16 %v3271
      %v3395 = vunpack.c.l.b16 %v3272
      %v3396 = vunpack.c.h.b16 %v3272
      %v3397 = vunpack.c.l.b16 %v3273
      %v3398 = vunpack.c.h.b16 %v3273
      %v3399 = vunpack.c.l.b16 %v3274
      %v3400 = vunpack.c.h.b16 %v3274
      %v3401 = vunpack.c.l.b16 %v3275
      %v3402 = vunpack.c.h.b16 %v3275
      %v3403 = vunpack.c.l.b16 %v3276
      %v3404 = vunpack.c.h.b16 %v3276
      %v3405 = vunpack.c.l.b16 %v3277
      %v3406 = vunpack.c.h.b16 %v3277
      %v3407 = vunpack.c.l.b16 %v3278
      %v3408 = vunpack.c.h.b16 %v3278
      %v3409 = vunpack.c.l.b16 %v3279
      %v3410 = vunpack.c.h.b16 %v3279
      %v3411 = vunpack.c.l.b16 %v3280
      %v3412 = vunpack.c.h.b16 %v3280
      %v3413 = vunpack.c.l.b16 %v3281
      %v3414 = vunpack.c.h.b16 %v3281
      %v3415 = vunpack.c.l.b16 %v3282
      %v3416 = vunpack.c.h.b16 %v3282
      %v3417 = vunpack.c.l.b16 %v3283
      %v3418 = vunpack.c.h.b16 %v3283
      %v3419 = vunpack.c.l.b16 %v3284
      %v3420 = vunpack.c.h.b16 %v3284
      %v3421 = vunpack.c.l.b16 %v3285
      %v3422 = vunpack.c.h.b16 %v3285
      %v3423 = vunpack.c.l.b16 %v3286
      %v3424 = vunpack.c.h.b16 %v3286
      %v3425 = vunpack.c.l.b16 %v3287
      %v3426 = vunpack.c.h.b16 %v3287
      %v3427 = vunpack.c.l.b16 %v3288
      %v3428 = vunpack.c.h.b16 %v3288
      %v3429 = vunpack.c.l.b16 %v3289
      %v3430 = vunpack.c.h.b16 %v3289
      %v3431 = vunpack.c.l.b16 %v3290
      %v3432 = vunpack.c.h.b16 %v3290
      %v3433 = vunpack.c.l.b16 %v3291
      %v3434 = vunpack.c.h.b16 %v3291
      %v3435 = vunpack.c.l.b16 %v3292
      %v3436 = vunpack.c.h.b16 %v3292
      %v3437 = vunpack.c.l.b16 %v3293
      %v3438 = vunpack.c.h.b16 %v3293
      %v3439 = vunpack.c.l.b16 %v3294
      %v3440 = vunpack.c.h.b16 %v3294
      %v3441 = vunpack.c.l.b16 %v3295
      %v3442 = vunpack.c.h.b16 %v3295
      %v3443 = vunpack.c.l.b16 %v3296
      %v3444 = vunpack.c.h.b16 %v3296
      %v3445 = vunpack.c.l.b16 %v3297
      %v3446 = vunpack.c.h.b16 %v3297
      %v3447 = vunpack.c.l.b16 %v3298
      %v3448 = vunpack.c.h.b16 %v3298
      %v3449 = vunpack.c.l.b16 %v3299
      %v3450 = vunpack.c.h.b16 %v3299
      %v3451 = vunpack.c.l.b16 %v3300
      %v3452 = vunpack.c.h.b16 %v3300
      %v3453 = vunpack.c.l.b16 %v3301
      %v3454 = vunpack.c.h.b16 %v3301
      %v3455 = vunpack.c.l.b16 %v3302
      %v3456 = vunpack.c.h.b16 %v3302
      %v3457 = vunpack.c.l.b16 %v3303
      %v3458 = vunpack.c.h.b16 %v3303
      %v3459 = vunpack.c.l.b16 %v3304
      %v3460 = vunpack.c.h.b16 %v3304
      %v3461 = vunpack.c.l.b16 %v3305
      %v3462 = vunpack.c.h.b16 %v3305
      %v3463 = vunpack.c.l.b16 %v3306
      %v3464 = vunpack.c.h.b16 %v3306
      %v3465 = vunpack.c.l.b16 %v3307
      %v3466 = vunpack.c.h.b16 %v3307
      %v3467 = vunpack.c.l.b16 %v3308
      %v3468 = vunpack.c.h.b16 %v3308
      %v3469 = vunpack.c.l.b16 %v3309
      %v3470 = vunpack.c.h.b16 %v3309
      %v3471 = vunpack.c.l.b16 %v3310
      %v3472 = vunpack.c.h.b16 %v3310
      %v3473 = vunpack.c.l.b16 %v3311
      %v3474 = vunpack.c.h.b16 %v3311
      %v3475 = vunpack.c.l.b16 %v3312
      %v3476 = vunpack.c.h.b16 %v3312
      %v3477 = vunpack.c.l.b16 %v3313
      %v3478 = vunpack.c.h.b16 %v3313
      %v3479 = vunpack.c.l.b16 %v3314
      %v3480 = vunpack.c.h.b16 %v3314
      %v3481 = vunpack.c.l.b16 %v3315
      %v3482 = vunpack.c.h.b16 %v3315
      %v3483 = vunpack.c.l.b16 %v3316
      %v3484 = vunpack.c.h.b16 %v3316
      %v3485 = vunpack.c.l.b16 %v3317
      %v3486 = vunpack.c.h.b16 %v3317
      %v3487 = vunpack.c.l.b16 %v3318
      %v3488 = vunpack.c.h.b16 %v3318
      %v3489 = vunpack.c.l.b16 %v3319
      %v3490 = vunpack.c.h.b16 %v3319
      %v3491 = vunpack.c.l.b16 %v3320
      %v3492 = vunpack.c.h.b16 %v3320
      %v3493 = vunpack.c.l.b16 %v3321
      %v3494 = vunpack.c.h.b16 %v3321
      %v3495 = vunpack.c.l.b16 %v3322
      %v3496 = vunpack.c.h.b16 %v3322
      %v3497 = vunpack.c.l.b16 %v3323
      %v3498 = vunpack.c.h.b16 %v3323
      %v3499 = vunpack.c.l.b16 %v3324
      %v3500 = vunpack.c.h.b16 %v3324
      %v3501 = vunpack.c.l.b16 %v3325
      %v3502 = vunpack.c.h.b16 %v3325
      %v3503 = vpack.c.b16 %v3395, %v3391
      %v3504 = vpack.c.b16 %v3396, %v3392
      %v3505 = vpack.c.b16 %v3397, %v3393
      %v3506 = vpack.c.b16 %v3398, %v3394
      %v3507 = vpack.c.b16 %v3403, %v3399
      %v3508 = vpack.c.b16 %v3404, %v3400
      %v3509 = vpack.c.b16 %v3405, %v3401
      %v3510 = vpack.c.b16 %v3406, %v3402
      %v3511 = vpack.c.b16 %v3411, %v3407
      %v3512 = vpack.c.b16 %v3412, %v3408
      %v3513 = vpack.c.b16 %v3413, %v3409
      %v3514 = vpack.c.b16 %v3414, %v3410
      %v3515 = vpack.c.b16 %v3419, %v3415
      %v3516 = vpack.c.b16 %v3420, %v3416
      %v3517 = vpack.c.b16 %v3421, %v3417
      %v3518 = vpack.c.b16 %v3422, %v3418
      %v3519 = vpack.c.b16 %v3427, %v3423
      %v3520 = vpack.c.b16 %v3428, %v3424
      %v3521 = vpack.c.b16 %v3429, %v3425
      %v3522 = vpack.c.b16 %v3430, %v3426
      %v3523 = vpack.c.b16 %v3435, %v3431
      %v3524 = vpack.c.b16 %v3436, %v3432
      %v3525 = vpack.c.b16 %v3437, %v3433
      %v3526 = vpack.c.b16 %v3438, %v3434
      %v3527 = vpack.c.b16 %v3443, %v3439
      %v3528 = vpack.c.b16 %v3444, %v3440
      %v3529 = vpack.c.b16 %v3445, %v3441
      %v3530 = vpack.c.b16 %v3446, %v3442
      %v3531 = vpack.c.b16 %v3451, %v3447
      %v3532 = vpack.c.b16 %v3452, %v3448
      %v3533 = vpack.c.b16 %v3453, %v3449
      %v3534 = vpack.c.b16 %v3454, %v3450
      %v3535 = vpack.c.b16 %v3459, %v3455
      %v3536 = vpack.c.b16 %v3460, %v3456
      %v3537 = vpack.c.b16 %v3461, %v3457
      %v3538 = vpack.c.b16 %v3462, %v3458
      %v3539 = vpack.c.b16 %v3467, %v3463
      %v3540 = vpack.c.b16 %v3468, %v3464
      %v3541 = vpack.c.b16 %v3469, %v3465
      %v3542 = vpack.c.b16 %v3470, %v3466
      %v3543 = vpack.c.b16 %v3475, %v3471
      %v3544 = vpack.c.b16 %v3476, %v3472
      %v3545 = vpack.c.b16 %v3477, %v3473
      %v3546 = vpack.c.b16 %v3478, %v3474
      %v3547 = vpack.c.b16 %v3483, %v3479
      %v3548 = vpack.c.b16 %v3484, %v3480
      %v3549 = vpack.c.b16 %v3485, %v3481
      %v3550 = vpack.c.b16 %v3486, %v3482
      %v3551 = vpack.c.b16 %v3491, %v3487
      %v3552 = vpack.c.b16 %v3492, %v3488
      %v3553 = vpack.c.b16 %v3493, %v3489
      %v3554 = vpack.c.b16 %v3494, %v3490
      %v3555 = vpack.c.b16 %v3499, %v3495
      %v3556 = vpack.c.b16 %v3500, %v3496
      %v3557 = vpack.c.b16 %v3501, %v3497
      %v3558 = vpack.c.b16 %v3502, %v3498
      %vm3611 = vcmask 728064
      %v3613 = vsel %vm3611, %v3333, 0
      %vm3615 = vcmask 1044480
      %v3616 = vsel %vm1724, 4294967295, 65535
      %v3617 = vsel %vm3615, %v3616, 0
      %v3619 = vand.u32 %v3555, %v3617
      %v3622 = vand.u32 %v3556, %v3617
      %v3625 = vand.u32 %v3557, %v3617
      %v3628 = vand.u32 %v3558, %v3617
      %3630 = vmatpush.bf16.msra.mxu0 %v3531
      %3631 = vmatpush.bf16.msra.mxu0 %v3527
      %3632 = vmatpush.bf16.msra.mxu0 %v3523
      %3633 = vmatpush.bf16.msra.mxu0 %v3519
      %3634 = vmatpush.bf16.msra.mxu0 %v3515
      %3635 = vmatpush.bf16.msra.mxu0 %v3511
      %3636 = vmatpush.bf16.msra.mxu0 %v3507
      %3637 = vmatpush.bf16.msra.mxu0 %v3503
      %3638 = vmatmul.bf16.gmra.mxu0 %v3332
      %v3639 = vpop.f32.mrf.mxu0
      %v3640 = vadd.f32 0.0, %v3639
      %v3641 = vpop.f32.mrf.mxu0
      %v3642 = vadd.f32 0.0, %v3641
      %3643 = vdwg.mxu0
      %3644 = vmatpush.bf16.msra.mxu0 0
      %3645 = vmatpush.bf16.msra.mxu0 0
      %3646 = vmatpush.bf16.msra.mxu0 %v3619
      %3647 = vmatpush.bf16.msra.mxu0 %v3551
      %3648 = vmatpush.bf16.msra.mxu0 %v3547
      %3649 = vmatpush.bf16.msra.mxu0 %v3543
      %3650 = vmatpush.bf16.msra.mxu0 %v3539
      %3651 = vmatpush.bf16.msra.mxu0 %v3535
      %3652 = vmatmul.bf16.gmra.mxu0 %v3613
      %v3653 = vpop.f32.mrf.mxu0
      %v3654 = vadd.f32 %v3640, %v3653
      %v3655 = vpop.f32.mrf.mxu0
      %v3656 = vadd.f32 %v3642, %v3655
      %3657 = vdwg.mxu0
      %3658 = vmatpush.bf16.msra.mxu0 %v3532
      %3659 = vmatpush.bf16.msra.mxu0 %v3528
      %3660 = vmatpush.bf16.msra.mxu0 %v3524
      %3661 = vmatpush.bf16.msra.mxu0 %v3520
      %3662 = vmatpush.bf16.msra.mxu0 %v3516
      %3663 = vmatpush.bf16.msra.mxu0 %v3512
      %3664 = vmatpush.bf16.msra.mxu0 %v3508
      %3665 = vmatpush.bf16.msra.mxu0 %v3504
      %3666 = vmatmul.bf16.gmra.mxu0 %v3332
      %v3667 = vpop.f32.mrf.mxu0
      %v3668 = vadd.f32 0.0, %v3667
      %v3669 = vpop.f32.mrf.mxu0
      %v3670 = vadd.f32 0.0, %v3669
      %3671 = vdwg.mxu0
      %3672 = vmatpush.bf16.msra.mxu0 0
      %3673 = vmatpush.bf16.msra.mxu0 0
      %3674 = vmatpush.bf16.msra.mxu0 %v3622
      %3675 = vmatpush.bf16.msra.mxu0 %v3552
      %3676 = vmatpush.bf16.msra.mxu0 %v3548
      %3677 = vmatpush.bf16.msra.mxu0 %v3544
      %3678 = vmatpush.bf16.msra.mxu0 %v3540
      %3679 = vmatpush.bf16.msra.mxu0 %v3536
      %3680 = vmatmul.bf16.gmra.mxu0 %v3613
      %v3681 = vpop.f32.mrf.mxu0
      %v3682 = vadd.f32 %v3668, %v3681
      %v3683 = vpop.f32.mrf.mxu0
      %v3684 = vadd.f32 %v3670, %v3683
      %3685 = vdwg.mxu0
      %3686 = vmatpush.bf16.msra.mxu0 %v3533
      %3687 = vmatpush.bf16.msra.mxu0 %v3529
      %3688 = vmatpush.bf16.msra.mxu0 %v3525
      %3689 = vmatpush.bf16.msra.mxu0 %v3521
      %3690 = vmatpush.bf16.msra.mxu0 %v3517
      %3691 = vmatpush.bf16.msra.mxu0 %v3513
      %3692 = vmatpush.bf16.msra.mxu0 %v3509
      %3693 = vmatpush.bf16.msra.mxu0 %v3505
      %3694 = vmatmul.bf16.gmra.mxu0 %v3332
      %v3695 = vpop.f32.mrf.mxu0
      %v3696 = vadd.f32 0.0, %v3695
      %v3697 = vpop.f32.mrf.mxu0
      %v3698 = vadd.f32 0.0, %v3697
      %3699 = vdwg.mxu0
      %3700 = vmatpush.bf16.msra.mxu0 0
      %3701 = vmatpush.bf16.msra.mxu0 0
      %3702 = vmatpush.bf16.msra.mxu0 %v3625
      %3703 = vmatpush.bf16.msra.mxu0 %v3553
      %3704 = vmatpush.bf16.msra.mxu0 %v3549
      %3705 = vmatpush.bf16.msra.mxu0 %v3545
      %3706 = vmatpush.bf16.msra.mxu0 %v3541
      %3707 = vmatpush.bf16.msra.mxu0 %v3537
      %3708 = vmatmul.bf16.gmra.mxu0 %v3613
      %v3709 = vpop.f32.mrf.mxu0
      %v3710 = vadd.f32 %v3696, %v3709
      %v3711 = vpop.f32.mrf.mxu0
      %v3712 = vadd.f32 %v3698, %v3711
      %3713 = vdwg.mxu0
      %3714 = vmatpush.bf16.msra.mxu0 %v3534
      %3715 = vmatpush.bf16.msra.mxu0 %v3530
      %3716 = vmatpush.bf16.msra.mxu0 %v3526
      %3717 = vmatpush.bf16.msra.mxu0 %v3522
      %3718 = vmatpush.bf16.msra.mxu0 %v3518
      %3719 = vmatpush.bf16.msra.mxu0 %v3514
      %3720 = vmatpush.bf16.msra.mxu0 %v3510
      %3721 = vmatpush.bf16.msra.mxu0 %v3506
      %3722 = vmatmul.bf16.gmra.mxu0 %v3332
      %v3723 = vpop.f32.mrf.mxu0
      %v3724 = vadd.f32 0.0, %v3723
      %v3725 = vpop.f32.mrf.mxu0
      %v3726 = vadd.f32 0.0, %v3725
      %3727 = vdwg.mxu0
      %3728 = vmatpush.bf16.msra.mxu0 0
      %3729 = vmatpush.bf16.msra.mxu0 0
      %3730 = vmatpush.bf16.msra.mxu0 %v3628
      %3731 = vmatpush.bf16.msra.mxu0 %v3554
      %3732 = vmatpush.bf16.msra.mxu0 %v3550
      %3733 = vmatpush.bf16.msra.mxu0 %v3546
      %3734 = vmatpush.bf16.msra.mxu0 %v3542
      %3735 = vmatpush.bf16.msra.mxu0 %v3538
      %3736 = vmatmul.bf16.gmra.mxu0 %v3613
      %v3737 = vpop.f32.mrf.mxu0
      %v3738 = vadd.f32 %v3724, %v3737
      %v3739 = vpop.f32.mrf.mxu0
      %v3740 = vadd.f32 %v3726, %v3739
      %3741 = vdwg.mxu0
      %v3742 = vmax.f32 %v3654, 0.0
      %v3743 = vmax.f32 %v3682, 0.0
      %v3744 = vmax.f32 %v3710, 0.0
      %v3745 = vmax.f32 %v3738, 0.0
      %v3746 = vmax.f32 %v3656, 0.0
      %v3747 = vmax.f32 %v3684, 0.0
      %v3748 = vmax.f32 %v3712, 0.0
      %v3749 = vmax.f32 %v3740, 0.0
      %v3750 = vpack.c.bf16 %v3743, %v3742
      %v3751 = vpack.c.bf16 %v3745, %v3744
      %v3752 = vpack.c.bf16 %v3747, %v3746
      %v3753 = vpack.c.bf16 %v3749, %v3748
      %3754 = vst [vmem:[#allocation4] sm:$0xff] 0
      %3755 = vst [vmem:[#allocation4 + $0x8] sm:$0xff] 0
      %3756 = vst [vmem:[#allocation4 + $0x10] sm:$0xff] 0
      %3757 = vst [vmem:[#allocation4 + $0x18] sm:$0xff] 0
      %3758 = vst [vmem:[#allocation4 + $0x20] sm:$0xff] 0
      %3759 = vst [vmem:[#allocation4 + $0x28] sm:$0xf] 0
      %3760 = vst [vmem:[#allocation4 + $0x2c] sm:$0xff] 0
      %3761 = vst [vmem:[#allocation4 + $0x34] sm:$0xff] 0
      %3762 = vst [vmem:[#allocation4 + $0x3c] sm:$0xff] 0
      %3763 = vst [vmem:[#allocation4 + $0x44] sm:$0xff] 0
      %3764 = vst [vmem:[#allocation4 + $0x4c] sm:$0xff] 0
      %3765 = vst [vmem:[#allocation4 + $0x54] sm:$0xf] 0
      %v3766 = vld [vmem:[%s7] sm:$0xf]
      %v3767 = vld [vmem:[%s7 + $0x4] sm:$0xf]
      %v3768 = vld [vmem:[%s7 + $0x8] sm:$0xf]
      %v3769 = vld [vmem:[%s7 + $0xc] sm:$0xf]
      %v3770 = vld [vmem:[%s7 + $0x10] sm:$0xf]
      %v3771 = vld [vmem:[%s7 + $0x14] sm:$0xf]
      %v3772 = vld [vmem:[%s7 + $0x18] sm:$0xf]
      %v3773 = vld [vmem:[%s7 + $0x1c] sm:$0xf]
      %v3774 = vld [vmem:[%s7 + $0x20] sm:$0xf]
      %v3775 = vld [vmem:[%s7 + $0x24] sm:$0xf]
      %v3776 = vld [vmem:[%s7 + $0x28] sm:$0xf]
      %v3777 = vld [vmem:[%s7 + $0x2c] sm:$0xf]
      %v3778 = vld [vmem:[%s7 + $0x30] sm:$0xf]
      %v3779 = vld [vmem:[%s7 + $0x34] sm:$0xf]
      %v3780 = vld [vmem:[%s7 + $0x38] sm:$0xf]
      %v3781 = vld [vmem:[%s7 + $0x3c] sm:$0xf]
      %v3784 = vunpack.c.l.b16 %v3750
      %v3785 = vunpack.c.l.b16 %v3752
      %v3786 = vpack.c.b16 %v3785, %v3784
      %v3804 = vunpack.c.l.b16 %v3766
      %v3805 = vunpack.c.l.b16 %v3767
      %v3806 = vunpack.c.l.b16 %v3768
      %v3807 = vunpack.c.l.b16 %v3769
      %v3808 = vunpack.c.l.b16 %v3770
      %v3809 = vunpack.c.l.b16 %v3771
      %v3810 = vunpack.c.l.b16 %v3772
      %v3811 = vunpack.c.l.b16 %v3773
      %v3812 = vunpack.c.l.b16 %v3774
      %v3813 = vunpack.c.l.b16 %v3775
      %v3814 = vunpack.c.l.b16 %v3776
      %v3815 = vunpack.c.l.b16 %v3777
      %v3816 = vunpack.c.l.b16 %v3778
      %v3817 = vunpack.c.l.b16 %v3779
      %v3818 = vunpack.c.l.b16 %v3780
      %v3819 = vunpack.c.l.b16 %v3781
      %v3820 = vpack.c.b16 %v3805, %v3804
      %v3821 = vpack.c.b16 %v3807, %v3806
      %v3822 = vpack.c.b16 %v3809, %v3808
      %v3823 = vpack.c.b16 %v3811, %v3810
      %v3824 = vpack.c.b16 %v3813, %v3812
      %v3825 = vpack.c.b16 %v3815, %v3814
      %v3826 = vpack.c.b16 %v3817, %v3816
      %v3827 = vpack.c.b16 %v3819, %v3818
      %3836 = vmatpush.bf16.msra.mxu0 %v3827
      %3837 = vmatpush.bf16.msra.mxu0 %v3826
      %3838 = vmatpush.bf16.msra.mxu0 %v3825
      %3839 = vmatpush.bf16.msra.mxu0 %v3824
      %3840 = vmatpush.bf16.msra.mxu0 %v3823
      %3841 = vmatpush.bf16.msra.mxu0 %v3822
      %3842 = vmatpush.bf16.msra.mxu0 %v3821
      %3843 = vmatpush.bf16.msra.mxu0 %v3820
      %3844 = vmatmul.bf16.gmra.mxu0 %v3786
      %v3845 = vpop.f32.mrf.mxu0
      %v3846 = vadd.f32 0.0, %v3845
      %v3847 = vpop.f32.mrf.mxu0
      %v3848 = vadd.f32 0.0, %v3847
      %3849 = vdwg.mxu0
      %v3850 = vpack.c.bf16 %v3846, %v3846
      %v3851 = vpack.c.bf16 %v3848, %v3848
      %3852 = vst [vmem:[#allocation4 + $0x4] sm:$0xf] %v3850
      %3853 = vst [vmem:[#allocation4 + $0x30] sm:$0xf] %v3851
      %3854 = vst [vmem:[#allocation4 + $0x8] sm:$0xf] %v3850
      %3855 = vst [vmem:[#allocation4 + $0x34] sm:$0xf] %v3851
      %v3856 = vld [vmem:[%s7] sm:$0xf]
      %v3857 = vld [vmem:[%s7 + $0x4] sm:$0xf]
      %v3858 = vld [vmem:[%s7 + $0x8] sm:$0xf]
      %v3859 = vld [vmem:[%s7 + $0xc] sm:$0xf]
      %v3860 = vld [vmem:[%s7 + $0x10] sm:$0xf]
      %v3861 = vld [vmem:[%s7 + $0x14] sm:$0xf]
      %v3862 = vld [vmem:[%s7 + $0x18] sm:$0xf]
      %v3863 = vld [vmem:[%s7 + $0x1c] sm:$0xf]
      %v3864 = vld [vmem:[%s7 + $0x20] sm:$0xf]
      %v3865 = vld [vmem:[%s7 + $0x24] sm:$0xf]
      %v3866 = vld [vmem:[%s7 + $0x28] sm:$0xf]
      %v3867 = vld [vmem:[%s7 + $0x2c] sm:$0xf]
      %v3868 = vld [vmem:[%s7 + $0x30] sm:$0xf]
      %v3869 = vld [vmem:[%s7 + $0x34] sm:$0xf]
      %v3870 = vld [vmem:[%s7 + $0x38] sm:$0xf]
      %v3871 = vld [vmem:[%s7 + $0x3c] sm:$0xf]
      %v3872 = vunpack.c.h.b16 %v3750
      %v3873 = vunpack.c.h.b16 %v3752
      %v3874 = vpack.c.b16 %v3873, %v3872
      %v3892 = vunpack.c.l.b16 %v3856
      %v3893 = vunpack.c.l.b16 %v3857
      %v3894 = vunpack.c.l.b16 %v3858
      %v3895 = vunpack.c.l.b16 %v3859
      %v3896 = vunpack.c.l.b16 %v3860
      %v3897 = vunpack.c.l.b16 %v3861
      %v3898 = vunpack.c.l.b16 %v3862
      %v3899 = vunpack.c.l.b16 %v3863
      %v3900 = vunpack.c.l.b16 %v3864
      %v3901 = vunpack.c.l.b16 %v3865
      %v3902 = vunpack.c.l.b16 %v3866
      %v3903 = vunpack.c.l.b16 %v3867
      %v3904 = vunpack.c.l.b16 %v3868
      %v3905 = vunpack.c.l.b16 %v3869
      %v3906 = vunpack.c.l.b16 %v3870
      %v3907 = vunpack.c.l.b16 %v3871
      %v3908 = vpack.c.b16 %v3893, %v3892
      %v3909 = vpack.c.b16 %v3895, %v3894
      %v3910 = vpack.c.b16 %v3897, %v3896
      %v3911 = vpack.c.b16 %v3899, %v3898
      %v3912 = vpack.c.b16 %v3901, %v3900
      %v3913 = vpack.c.b16 %v3903, %v3902
      %v3914 = vpack.c.b16 %v3905, %v3904
      %v3915 = vpack.c.b16 %v3907, %v3906
      %3924 = vmatpush.bf16.msra.mxu0 %v3915
      %3925 = vmatpush.bf16.msra.mxu0 %v3914
      %3926 = vmatpush.bf16.msra.mxu0 %v3913
      %3927 = vmatpush.bf16.msra.mxu0 %v3912
      %3928 = vmatpush.bf16.msra.mxu0 %v3911
      %3929 = vmatpush.bf16.msra.mxu0 %v3910
      %3930 = vmatpush.bf16.msra.mxu0 %v3909
      %3931 = vmatpush.bf16.msra.mxu0 %v3908
      %3932 = vmatmul.bf16.gmra.mxu0 %v3874
      %v3933 = vpop.f32.mrf.mxu0
      %v3934 = vadd.f32 0.0, %v3933
      %v3935 = vpop.f32.mrf.mxu0
      %v3936 = vadd.f32 0.0, %v3935
      %3937 = vdwg.mxu0
      %v3938 = vpack.c.bf16 %v3934, %v3934
      %v3939 = vpack.c.bf16 %v3936, %v3936
      %3940 = vst [vmem:[#allocation4 + $0xc] sm:$0xf] %v3938
      %3941 = vst [vmem:[#allocation4 + $0x38] sm:$0xf] %v3939
      %3942 = vst [vmem:[#allocation4 + $0x10] sm:$0xf] %v3938
      %3943 = vst [vmem:[#allocation4 + $0x3c] sm:$0xf] %v3939
      %v3944 = vld [vmem:[%s7] sm:$0xf]
      %v3945 = vld [vmem:[%s7 + $0x4] sm:$0xf]
      %v3946 = vld [vmem:[%s7 + $0x8] sm:$0xf]
      %v3947 = vld [vmem:[%s7 + $0xc] sm:$0xf]
      %v3948 = vld [vmem:[%s7 + $0x10] sm:$0xf]
      %v3949 = vld [vmem:[%s7 + $0x14] sm:$0xf]
      %v3950 = vld [vmem:[%s7 + $0x18] sm:$0xf]
      %v3951 = vld [vmem:[%s7 + $0x1c] sm:$0xf]
      %v3952 = vld [vmem:[%s7 + $0x20] sm:$0xf]
      %v3953 = vld [vmem:[%s7 + $0x24] sm:$0xf]
      %v3954 = vld [vmem:[%s7 + $0x28] sm:$0xf]
      %v3955 = vld [vmem:[%s7 + $0x2c] sm:$0xf]
      %v3956 = vld [vmem:[%s7 + $0x30] sm:$0xf]
      %v3957 = vld [vmem:[%s7 + $0x34] sm:$0xf]
      %v3958 = vld [vmem:[%s7 + $0x38] sm:$0xf]
      %v3959 = vld [vmem:[%s7 + $0x3c] sm:$0xf]
      %v3962 = vunpack.c.l.b16 %v3751
      %v3963 = vunpack.c.l.b16 %v3753
      %v3964 = vpack.c.b16 %v3963, %v3962
      %v3982 = vunpack.c.l.b16 %v3944
      %v3983 = vunpack.c.l.b16 %v3945
      %v3984 = vunpack.c.l.b16 %v3946
      %v3985 = vunpack.c.l.b16 %v3947
      %v3986 = vunpack.c.l.b16 %v3948
      %v3987 = vunpack.c.l.b16 %v3949
      %v3988 = vunpack.c.l.b16 %v3950
      %v3989 = vunpack.c.l.b16 %v3951
      %v3990 = vunpack.c.l.b16 %v3952
      %v3991 = vunpack.c.l.b16 %v3953
      %v3992 = vunpack.c.l.b16 %v3954
      %v3993 = vunpack.c.l.b16 %v3955
      %v3994 = vunpack.c.l.b16 %v3956
      %v3995 = vunpack.c.l.b16 %v3957
      %v3996 = vunpack.c.l.b16 %v3958
      %v3997 = vunpack.c.l.b16 %v3959
      %v3998 = vpack.c.b16 %v3983, %v3982
      %v3999 = vpack.c.b16 %v3985, %v3984
      %v4000 = vpack.c.b16 %v3987, %v3986
      %v4001 = vpack.c.b16 %v3989, %v3988
      %v4002 = vpack.c.b16 %v3991, %v3990
      %v4003 = vpack.c.b16 %v3993, %v3992
      %v4004 = vpack.c.b16 %v3995, %v3994
      %v4005 = vpack.c.b16 %v3997, %v3996
      %4014 = vmatpush.bf16.msra.mxu0 %v4005
      %4015 = vmatpush.bf16.msra.mxu0 %v4004
      %4016 = vmatpush.bf16.msra.mxu0 %v4003
      %4017 = vmatpush.bf16.msra.mxu0 %v4002
      %4018 = vmatpush.bf16.msra.mxu0 %v4001
      %4019 = vmatpush.bf16.msra.mxu0 %v4000
      %4020 = vmatpush.bf16.msra.mxu0 %v3999
      %4021 = vmatpush.bf16.msra.mxu0 %v3998
      %4022 = vmatmul.bf16.gmra.mxu0 %v3964
      %v4023 = vpop.f32.mrf.mxu0
      %v4024 = vadd.f32 0.0, %v4023
      %v4025 = vpop.f32.mrf.mxu0
      %v4026 = vadd.f32 0.0, %v4025
      %4027 = vdwg.mxu0
      %v4028 = vpack.c.bf16 %v4024, %v4024
      %v4029 = vpack.c.bf16 %v4026, %v4026
      %4030 = vst [vmem:[#allocation4 + $0x14] sm:$0xf] %v4028
      %4031 = vst [vmem:[#allocation4 + $0x40] sm:$0xf] %v4029
      %4032 = vst [vmem:[#allocation4 + $0x18] sm:$0xf] %v4028
      %4033 = vst [vmem:[#allocation4 + $0x44] sm:$0xf] %v4029
      %v4034 = vld [vmem:[%s7] sm:$0xf]
      %v4035 = vld [vmem:[%s7 + $0x4] sm:$0xf]
      %v4036 = vld [vmem:[%s7 + $0x8] sm:$0xf]
      %v4037 = vld [vmem:[%s7 + $0xc] sm:$0xf]
      %v4038 = vld [vmem:[%s7 + $0x10] sm:$0xf]
      %v4039 = vld [vmem:[%s7 + $0x14] sm:$0xf]
      %v4040 = vld [vmem:[%s7 + $0x18] sm:$0xf]
      %v4041 = vld [vmem:[%s7 + $0x1c] sm:$0xf]
      %v4042 = vld [vmem:[%s7 + $0x20] sm:$0xf]
      %v4043 = vld [vmem:[%s7 + $0x24] sm:$0xf]
      %v4044 = vld [vmem:[%s7 + $0x28] sm:$0xf]
      %v4045 = vld [vmem:[%s7 + $0x2c] sm:$0xf]
      %v4046 = vld [vmem:[%s7 + $0x30] sm:$0xf]
      %v4047 = vld [vmem:[%s7 + $0x34] sm:$0xf]
      %v4048 = vld [vmem:[%s7 + $0x38] sm:$0xf]
      %v4049 = vld [vmem:[%s7 + $0x3c] sm:$0xf]
      %v4050 = vunpack.c.h.b16 %v3751
      %v4051 = vunpack.c.h.b16 %v3753
      %v4052 = vpack.c.b16 %v4051, %v4050
      %v4070 = vunpack.c.l.b16 %v4034
      %v4071 = vunpack.c.l.b16 %v4035
      %v4072 = vunpack.c.l.b16 %v4036
      %v4073 = vunpack.c.l.b16 %v4037
      %v4074 = vunpack.c.l.b16 %v4038
      %v4075 = vunpack.c.l.b16 %v4039
      %v4076 = vunpack.c.l.b16 %v4040
      %v4077 = vunpack.c.l.b16 %v4041
      %v4078 = vunpack.c.l.b16 %v4042
      %v4079 = vunpack.c.l.b16 %v4043
      %v4080 = vunpack.c.l.b16 %v4044
      %v4081 = vunpack.c.l.b16 %v4045
      %v4082 = vunpack.c.l.b16 %v4046
      %v4083 = vunpack.c.l.b16 %v4047
      %v4084 = vunpack.c.l.b16 %v4048
      %v4085 = vunpack.c.l.b16 %v4049
      %v4086 = vpack.c.b16 %v4071, %v4070
      %v4087 = vpack.c.b16 %v4073, %v4072
      %v4088 = vpack.c.b16 %v4075, %v4074
      %v4089 = vpack.c.b16 %v4077, %v4076
      %v4090 = vpack.c.b16 %v4079, %v4078
      %v4091 = vpack.c.b16 %v4081, %v4080
      %v4092 = vpack.c.b16 %v4083, %v4082
      %v4093 = vpack.c.b16 %v4085, %v4084
      %4102 = vmatpush.bf16.msra.mxu0 %v4093
      %4103 = vmatpush.bf16.msra.mxu0 %v4092
      %4104 = vmatpush.bf16.msra.mxu0 %v4091
      %4105 = vmatpush.bf16.msra.mxu0 %v4090
      %4106 = vmatpush.bf16.msra.mxu0 %v4089
      %4107 = vmatpush.bf16.msra.mxu0 %v4088
      %4108 = vmatpush.bf16.msra.mxu0 %v4087
      %4109 = vmatpush.bf16.msra.mxu0 %v4086
      %4110 = vmatmul.bf16.gmra.mxu0 %v4052
      %v4111 = vpop.f32.mrf.mxu0
      %v4112 = vadd.f32 0.0, %v4111
      %v4113 = vpop.f32.mrf.mxu0
      %v4114 = vadd.f32 0.0, %v4113
      %4115 = vdwg.mxu0
      %v4116 = vpack.c.bf16 %v4112, %v4112
      %v4117 = vpack.c.bf16 %v4114, %v4114
      %4118 = vst [vmem:[#allocation4 + $0x1c] sm:$0xf] %v4116
      %4119 = vst [vmem:[#allocation4 + $0x48] sm:$0xf] %v4117
      %4120 = vst [vmem:[#allocation4 + $0x20] sm:$0xf] %v4116
      %4121 = vst [vmem:[#allocation4 + $0x4c] sm:$0xf] %v4117
      %v4122 = vld [vmem:[#allocation4] sm:$0xff]
      %v4123 = vld [vmem:[#allocation4 + $0x8] sm:$0xff]
      %v4124 = vld [vmem:[#allocation4 + $0x10] sm:$0xff]
      %v4125 = vld [vmem:[#allocation4 + $0x18] sm:$0xff]
      %v4126 = vld [vmem:[#allocation4 + $0x2c] sm:$0xff]
      %v4127 = vld [vmem:[#allocation4 + $0x34] sm:$0xff]
      %v4128 = vld [vmem:[#allocation4 + $0x3c] sm:$0xff]
      %v4129 = vld [vmem:[#allocation4 + $0x44] sm:$0xff]
      %4130 = vst [vmem:[#allocation7] sm:$0xff] %v4122
      %4131 = vst [vmem:[#allocation7 + $0x8] sm:$0xff] %v4123
      %4132 = vst [vmem:[#allocation7 + $0x10] sm:$0xff] %v4124
      %4133 = vst [vmem:[#allocation7 + $0x18] sm:$0xff] %v4125
      %4134 = vst [vmem:[#allocation7 + $0x20] sm:$0xff] %v4126
      %4135 = vst [vmem:[#allocation7 + $0x28] sm:$0xff] %v4127
      %4136 = vst [vmem:[#allocation7 + $0x30] sm:$0xff] %v4128
      %4137 = vst [vmem:[#allocation7 + $0x38] sm:$0xff] %v4129
      %v4138 = vld [vmem:[#allocation2] sm:$0xff]
      %v4139 = vld [vmem:[#allocation2 + $0x8] sm:$0xff]
      %v4140 = vld [vmem:[#allocation2 + $0x10] sm:$0xff]
      %v4141 = vld [vmem:[#allocation2 + $0x18] sm:$0xff]
      %4142 = vst [vmem:[#allocation7 + $0x6c0] sm:$0xff] %v4138
      %4143 = vst [vmem:[#allocation7 + $0x6c8] sm:$0xff] %v4139
      %4144 = vst [vmem:[#allocation7 + $0x6d0] sm:$0xff] %v4140
      %4145 = vst [vmem:[#allocation7 + $0x6d8] sm:$0xff] %v4141
      %v4146 = vld [vmem:[#allocation4] sm:$0xff]
      %v4147 = vld [vmem:[#allocation4 + $0x8] sm:$0xff]
      %v4148 = vld [vmem:[#allocation4 + $0x10] sm:$0xff]
      %v4149 = vld [vmem:[#allocation4 + $0x18] sm:$0xff]
      %v4150 = vld [vmem:[#allocation4 + $0x20] sm:$0xf]
      %v4151 = vld [vmem:[#allocation4 + $0x2c] sm:$0xff]
      %v4152 = vld [vmem:[#allocation4 + $0x34] sm:$0xff]
      %v4153 = vld [vmem:[#allocation4 + $0x3c] sm:$0xff]
      %v4154 = vld [vmem:[#allocation4 + $0x44] sm:$0xff]
      %v4155 = vld [vmem:[#allocation4 + $0x4c] sm:$0xf]
      %4166 = vrot.lane.b32.xlu0 %v4146, 127
      %v4167 = vpop.permute.xlu0 %4166
      %4168 = vrot.lane.b32.xlu0 %v4147, 127
      %v4169 = vpop.permute.xlu0 %4168
      %4170 = vrot.lane.b32.xlu0 %v4148, 127
      %v4171 = vpop.permute.xlu0 %4170
      %4172 = vrot.lane.b32.xlu0 %v4149, 127
      %v4173 = vpop.permute.xlu0 %4172
      %4174 = vrot.lane.b32.xlu0 %v4150, 127
      %v4175 = vpop.permute.xlu0 %4174
      %4176 = vrot.lane.b32.xlu0 %v4151, 127
      %v4177 = vpop.permute.xlu0 %4176
      %4178 = vrot.lane.b32.xlu0 %v4152, 127
      %v4179 = vpop.permute.xlu0 %4178
      %4180 = vrot.lane.b32.xlu0 %v4153, 127
      %v4181 = vpop.permute.xlu0 %4180
      %4182 = vrot.lane.b32.xlu0 %v4154, 127
      %v4183 = vpop.permute.xlu0 %4182
      %4184 = vrot.lane.b32.xlu0 %v4155, 127
      %v4185 = vpop.permute.xlu0 %4184
      %v4186 = vrot.slane %v4167, 4
      %v4187 = vrot.slane %v4169, 4
      %v4188 = vrot.slane %v4171, 4
      %v4189 = vrot.slane %v4173, 4
      %v4190 = vrot.slane %v4175, 4
      %v4191 = vrot.slane %v4177, 4
      %v4192 = vrot.slane %v4179, 4
      %v4193 = vrot.slane %v4181, 4
      %v4194 = vrot.slane %v4183, 4
      %v4195 = vrot.slane %v4185, 4
      %v4196 = vsel %vm353, %v4186, %v4187
      %v4197 = vsel %vm355, %v4167, %v4196
      %v4198 = vsel %vm353, %v4187, %v4188
      %v4199 = vsel %vm355, %v4169, %v4198
      %v4200 = vsel %vm353, %v4188, %v4189
      %v4201 = vsel %vm355, %v4171, %v4200
      %v4202 = vsel %vm353, %v4189, %v4190
      %v4203 = vsel %vm355, %v4173, %v4202
      %v4204 = vsel %vm353, %v4191, %v4192
      %v4205 = vsel %vm355, %v4177, %v4204
      %v4206 = vsel %vm353, %v4192, %v4193
      %v4207 = vsel %vm355, %v4179, %v4206
      %v4208 = vsel %vm353, %v4193, %v4194
      %v4209 = vsel %vm355, %v4181, %v4208
      %v4210 = vsel %vm353, %v4194, %v4195
      %v4211 = vsel %vm355, %v4183, %v4210
      %4220 = vst [vmem:[#allocation7 + $0x40] sm:$0xff] %v4197
      %4221 = vst [vmem:[#allocation7 + $0x48] sm:$0xff] %v4199
      %4222 = vst [vmem:[#allocation7 + $0x50] sm:$0xff] %v4201
      %4223 = vst [vmem:[#allocation7 + $0x58] sm:$0xff] %v4203
      %4224 = vst [vmem:[#allocation7 + $0x60] sm:$0xff] %v4205
      %4225 = vst [vmem:[#allocation7 + $0x68] sm:$0xff] %v4207
      %4226 = vst [vmem:[#allocation7 + $0x70] sm:$0xff] %v4209
      %4227 = vst [vmem:[#allocation7 + $0x78] sm:$0xff] %v4211
      %v4228 = vld [vmem:[#allocation2] sm:$0xff]
      %v4229 = vld [vmem:[#allocation2 + $0x8] sm:$0xff]
      %v4230 = vld [vmem:[#allocation2 + $0x10] sm:$0xff]
      %v4231 = vld [vmem:[#allocation2 + $0x18] sm:$0xff]
      %v4232 = vld [vmem:[#allocation2 + $0x20] sm:$0xf]
      %4238 = vrot.lane.b32.xlu0 %v4228, 127
      %v4239 = vpop.permute.xlu0 %4238
      %4240 = vrot.lane.b32.xlu0 %v4229, 127
      %v4241 = vpop.permute.xlu0 %4240
      %4242 = vrot.lane.b32.xlu0 %v4230, 127
      %v4243 = vpop.permute.xlu0 %4242
      %4244 = vrot.lane.b32.xlu0 %v4231, 127
      %v4245 = vpop.permute.xlu0 %4244
      %4246 = vrot.lane.b32.xlu0 %v4232, 127
      %v4247 = vpop.permute.xlu0 %4246
      %v4248 = vrot.slane %v4239, 4
      %v4249 = vrot.slane %v4241, 4
      %v4250 = vrot.slane %v4243, 4
      %v4251 = vrot.slane %v4245, 4
      %v4252 = vrot.slane %v4247, 4
      %v4253 = vsel %vm353, %v4248, %v4249
      %v4254 = vsel %vm355, %v4239, %v4253
      %v4255 = vsel %vm353, %v4249, %v4250
      %v4256 = vsel %vm355, %v4241, %v4255
      %v4257 = vsel %vm353, %v4250, %v4251
      %v4258 = vsel %vm355, %v4243, %v4257
      %v4259 = vsel %vm353, %v4251, %v4252
      %v4260 = vsel %vm355, %v4245, %v4259
      %4265 = vst [vmem:[#allocation7 + $0x6e0] sm:$0xff] %v4254
      %4266 = vst [vmem:[#allocation7 + $0x6e8] sm:$0xff] %v4256
      %4267 = vst [vmem:[#allocation7 + $0x6f0] sm:$0xff] %v4258
      %4268 = vst [vmem:[#allocation7 + $0x6f8] sm:$0xff] %v4260
      %v4269 = vld [vmem:[#allocation4] sm:$0xff]
      %v4270 = vld [vmem:[#allocation4 + $0x8] sm:$0xff]
      %v4271 = vld [vmem:[#allocation4 + $0x10] sm:$0xff]
      %v4272 = vld [vmem:[#allocation4 + $0x18] sm:$0xff]
      %v4273 = vld [vmem:[#allocation4 + $0x20] sm:$0xf]
      %v4274 = vld [vmem:[#allocation4 + $0x2c] sm:$0xff]
      %v4275 = vld [vmem:[#allocation4 + $0x34] sm:$0xff]
      %v4276 = vld [vmem:[#allocation4 + $0x3c] sm:$0xff]
      %v4277 = vld [vmem:[#allocation4 + $0x44] sm:$0xff]
      %v4278 = vld [vmem:[#allocation4 + $0x4c] sm:$0xf]
      %4289 = vrot.lane.b32.xlu0 %v4269, 126
      %v4290 = vpop.permute.xlu0 %4289
      %4291 = vrot.lane.b32.xlu0 %v4270, 126
      %v4292 = vpop.permute.xlu0 %4291
      %4293 = vrot.lane.b32.xlu0 %v4271, 126
      %v4294 = vpop.permute.xlu0 %4293
      %4295 = vrot.lane.b32.xlu0 %v4272, 126
      %v4296 = vpop.permute.xlu0 %4295
      %4297 = vrot.lane.b32.xlu0 %v4273, 126
      %v4298 = vpop.permute.xlu0 %4297
      %4299 = vrot.lane.b32.xlu0 %v4274, 126
      %v4300 = vpop.permute.xlu0 %4299
      %4301 = vrot.lane.b32.xlu0 %v4275, 126
      %v4302 = vpop.permute.xlu0 %4301
      %4303 = vrot.lane.b32.xlu0 %v4276, 126
      %v4304 = vpop.permute.xlu0 %4303
      %4305 = vrot.lane.b32.xlu0 %v4277, 126
      %v4306 = vpop.permute.xlu0 %4305
      %4307 = vrot.lane.b32.xlu0 %v4278, 126
      %v4308 = vpop.permute.xlu0 %4307
      %v4309 = vrot.slane %v4290, 4
      %v4310 = vrot.slane %v4292, 4
      %v4311 = vrot.slane %v4294, 4
      %v4312 = vrot.slane %v4296, 4
      %v4313 = vrot.slane %v4298, 4
      %v4314 = vrot.slane %v4300, 4
      %v4315 = vrot.slane %v4302, 4
      %v4316 = vrot.slane %v4304, 4
      %v4317 = vrot.slane %v4306, 4
      %v4318 = vrot.slane %v4308, 4
      %v4319 = vsel %vm353, %v4309, %v4310
      %v4320 = vsel %vm405, %v4290, %v4319
      %v4321 = vsel %vm353, %v4310, %v4311
      %v4322 = vsel %vm405, %v4292, %v4321
      %v4323 = vsel %vm353, %v4311, %v4312
      %v4324 = vsel %vm405, %v4294, %v4323
      %v4325 = vsel %vm353, %v4312, %v4313
      %v4326 = vsel %vm405, %v4296, %v4325
      %v4327 = vsel %vm353, %v4314, %v4315
      %v4328 = vsel %vm405, %v4300, %v4327
      %v4329 = vsel %vm353, %v4315, %v4316
      %v4330 = vsel %vm405, %v4302, %v4329
      %v4331 = vsel %vm353, %v4316, %v4317
      %v4332 = vsel %vm405, %v4304, %v4331
      %v4333 = vsel %vm353, %v4317, %v4318
      %v4334 = vsel %vm405, %v4306, %v4333
      %4343 = vst [vmem:[#allocation7 + $0x80] sm:$0xff] %v4320
      %4344 = vst [vmem:[#allocation7 + $0x88] sm:$0xff] %v4322
      %4345 = vst [vmem:[#allocation7 + $0x90] sm:$0xff] %v4324
      %4346 = vst [vmem:[#allocation7 + $0x98] sm:$0xff] %v4326
      %4347 = vst [vmem:[#allocation7 + $0xa0] sm:$0xff] %v4328
      %4348 = vst [vmem:[#allocation7 + $0xa8] sm:$0xff] %v4330
      %4349 = vst [vmem:[#allocation7 + $0xb0] sm:$0xff] %v4332
      %4350 = vst [vmem:[#allocation7 + $0xb8] sm:$0xff] %v4334
      %v4351 = vld [vmem:[#allocation2] sm:$0xff]
      %v4352 = vld [vmem:[#allocation2 + $0x8] sm:$0xff]
      %v4353 = vld [vmem:[#allocation2 + $0x10] sm:$0xff]
      %v4354 = vld [vmem:[#allocation2 + $0x18] sm:$0xff]
      %v4355 = vld [vmem:[#allocation2 + $0x20] sm:$0xf]
      %4361 = vrot.lane.b32.xlu0 %v4351, 126
      %v4362 = vpop.permute.xlu0 %4361
      %4363 = vrot.lane.b32.xlu0 %v4352, 126
      %v4364 = vpop.permute.xlu0 %4363
      %4365 = vrot.lane.b32.xlu0 %v4353, 126
      %v4366 = vpop.permute.xlu0 %4365
      %4367 = vrot.lane.b32.xlu0 %v4354, 126
      %v4368 = vpop.permute.xlu0 %4367
      %4369 = vrot.lane.b32.xlu0 %v4355, 126
      %v4370 = vpop.permute.xlu0 %4369
      %v4371 = vrot.slane %v4362, 4
      %v4372 = vrot.slane %v4364, 4
      %v4373 = vrot.slane %v4366, 4
      %v4374 = vrot.slane %v4368, 4
      %v4375 = vrot.slane %v4370, 4
      %v4376 = vsel %vm353, %v4371, %v4372
      %v4377 = vsel %vm405, %v4362, %v4376
      %v4378 = vsel %vm353, %v4372, %v4373
      %v4379 = vsel %vm405, %v4364, %v4378
      %v4380 = vsel %vm353, %v4373, %v4374
      %v4381 = vsel %vm405, %v4366, %v4380
      %v4382 = vsel %vm353, %v4374, %v4375
      %v4383 = vsel %vm405, %v4368, %v4382
      %4388 = vst [vmem:[#allocation7 + $0x700] sm:$0xff] %v4377
      %4389 = vst [vmem:[#allocation7 + $0x708] sm:$0xff] %v4379
      %4390 = vst [vmem:[#allocation7 + $0x710] sm:$0xff] %v4381
      %4391 = vst [vmem:[#allocation7 + $0x718] sm:$0xff] %v4383
      %v4392 = vld [vmem:[#allocation4] sm:$0xff]
      %v4393 = vld [vmem:[#allocation4 + $0x8] sm:$0xff]
      %v4394 = vld [vmem:[#allocation4 + $0x10] sm:$0xff]
      %v4395 = vld [vmem:[#allocation4 + $0x18] sm:$0xff]
      %v4396 = vld [vmem:[#allocation4 + $0x20] sm:$0xf]
      %v4397 = vld [vmem:[#allocation4 + $0x2c] sm:$0xff]
      %v4398 = vld [vmem:[#allocation4 + $0x34] sm:$0xff]
      %v4399 = vld [vmem:[#allocation4 + $0x3c] sm:$0xff]
      %v4400 = vld [vmem:[#allocation4 + $0x44] sm:$0xff]
      %v4401 = vld [vmem:[#allocation4 + $0x4c] sm:$0xf]
      %4412 = vrot.lane.b32.xlu0 %v4392, 118
      %v4413 = vpop.permute.xlu0 %4412
      %4414 = vrot.lane.b32.xlu0 %v4393, 118
      %v4415 = vpop.permute.xlu0 %4414
      %4416 = vrot.lane.b32.xlu0 %v4394, 118
      %v4417 = vpop.permute.xlu0 %4416
      %4418 = vrot.lane.b32.xlu0 %v4395, 118
      %v4419 = vpop.permute.xlu0 %4418
      %4420 = vrot.lane.b32.xlu0 %v4396, 118
      %v4421 = vpop.permute.xlu0 %4420
      %4422 = vrot.lane.b32.xlu0 %v4397, 118
      %v4423 = vpop.permute.xlu0 %4422
      %4424 = vrot.lane.b32.xlu0 %v4398, 118
      %v4425 = vpop.permute.xlu0 %4424
      %4426 = vrot.lane.b32.xlu0 %v4399, 118
      %v4427 = vpop.permute.xlu0 %4426
      %4428 = vrot.lane.b32.xlu0 %v4400, 118
      %v4429 = vpop.permute.xlu0 %4428
      %4430 = vrot.lane.b32.xlu0 %v4401, 118
      %v4431 = vpop.permute.xlu0 %4430
      %v4432 = vrot.slane %v4413, 4
      %v4433 = vrot.slane %v4415, 4
      %v4434 = vrot.slane %v4417, 4
      %v4435 = vrot.slane %v4419, 4
      %v4436 = vrot.slane %v4421, 4
      %v4437 = vrot.slane %v4423, 4
      %v4438 = vrot.slane %v4425, 4
      %v4439 = vrot.slane %v4427, 4
      %v4440 = vrot.slane %v4429, 4
      %v4441 = vrot.slane %v4431, 4
      %v4442 = vsel %vm353, %v4432, %v4433
      %v4443 = vsel %vm455, %v4413, %v4442
      %v4444 = vsel %vm353, %v4433, %v4434
      %v4445 = vsel %vm455, %v4415, %v4444
      %v4446 = vsel %vm353, %v4434, %v4435
      %v4447 = vsel %vm455, %v4417, %v4446
      %v4448 = vsel %vm353, %v4435, %v4436
      %v4449 = vsel %vm455, %v4419, %v4448
      %v4450 = vsel %vm353, %v4437, %v4438
      %v4451 = vsel %vm455, %v4423, %v4450
      %v4452 = vsel %vm353, %v4438, %v4439
      %v4453 = vsel %vm455, %v4425, %v4452
      %v4454 = vsel %vm353, %v4439, %v4440
      %v4455 = vsel %vm455, %v4427, %v4454
      %v4456 = vsel %vm353, %v4440, %v4441
      %v4457 = vsel %vm455, %v4429, %v4456
      %4466 = vst [vmem:[#allocation7 + $0xc0] sm:$0xff] %v4443
      %4467 = vst [vmem:[#allocation7 + $0xc8] sm:$0xff] %v4445
      %4468 = vst [vmem:[#allocation7 + $0xd0] sm:$0xff] %v4447
      %4469 = vst [vmem:[#allocation7 + $0xd8] sm:$0xff] %v4449
      %4470 = vst [vmem:[#allocation7 + $0xe0] sm:$0xff] %v4451
      %4471 = vst [vmem:[#allocation7 + $0xe8] sm:$0xff] %v4453
      %4472 = vst [vmem:[#allocation7 + $0xf0] sm:$0xff] %v4455
      %4473 = vst [vmem:[#allocation7 + $0xf8] sm:$0xff] %v4457
      %v4474 = vld [vmem:[#allocation2] sm:$0xff]
      %v4475 = vld [vmem:[#allocation2 + $0x8] sm:$0xff]
      %v4476 = vld [vmem:[#allocation2 + $0x10] sm:$0xff]
      %v4477 = vld [vmem:[#allocation2 + $0x18] sm:$0xff]
      %v4478 = vld [vmem:[#allocation2 + $0x20] sm:$0xf]
      %4484 = vrot.lane.b32.xlu0 %v4474, 118
      %v4485 = vpop.permute.xlu0 %4484
      %4486 = vrot.lane.b32.xlu0 %v4475, 118
      %v4487 = vpop.permute.xlu0 %4486
      %4488 = vrot.lane.b32.xlu0 %v4476, 118
      %v4489 = vpop.permute.xlu0 %4488
      %4490 = vrot.lane.b32.xlu0 %v4477, 118
      %v4491 = vpop.permute.xlu0 %4490
      %4492 = vrot.lane.b32.xlu0 %v4478, 118
      %v4493 = vpop.permute.xlu0 %4492
      %v4494 = vrot.slane %v4485, 4
      %v4495 = vrot.slane %v4487, 4
      %v4496 = vrot.slane %v4489, 4
      %v4497 = vrot.slane %v4491, 4
      %v4498 = vrot.slane %v4493, 4
      %v4499 = vsel %vm353, %v4494, %v4495
      %v4500 = vsel %vm455, %v4485, %v4499
      %v4501 = vsel %vm353, %v4495, %v4496
      %v4502 = vsel %vm455, %v4487, %v4501
      %v4503 = vsel %vm353, %v4496, %v4497
      %v4504 = vsel %vm455, %v4489, %v4503
      %v4505 = vsel %vm353, %v4497, %v4498
      %v4506 = vsel %vm455, %v4491, %v4505
      %4511 = vst [vmem:[#allocation7 + $0x720] sm:$0xff] %v4500
      %4512 = vst [vmem:[#allocation7 + $0x728] sm:$0xff] %v4502
      %4513 = vst [vmem:[#allocation7 + $0x730] sm:$0xff] %v4504
      %4514 = vst [vmem:[#allocation7 + $0x738] sm:$0xff] %v4506
      %v4515 = vld [vmem:[#allocation4] sm:$0xff]
      %v4516 = vld [vmem:[#allocation4 + $0x8] sm:$0xff]
      %v4517 = vld [vmem:[#allocation4 + $0x10] sm:$0xff]
      %v4518 = vld [vmem:[#allocation4 + $0x18] sm:$0xff]
      %v4519 = vld [vmem:[#allocation4 + $0x20] sm:$0xf]
      %v4520 = vld [vmem:[#allocation4 + $0x2c] sm:$0xff]
      %v4521 = vld [vmem:[#allocation4 + $0x34] sm:$0xff]
      %v4522 = vld [vmem:[#allocation4 + $0x3c] sm:$0xff]
      %v4523 = vld [vmem:[#allocation4 + $0x44] sm:$0xff]
      %v4524 = vld [vmem:[#allocation4 + $0x4c] sm:$0xf]
      %4535 = vrot.lane.b32.xlu0 %v4515, 117
      %v4536 = vpop.permute.xlu0 %4535
      %4537 = vrot.lane.b32.xlu0 %v4516, 117
      %v4538 = vpop.permute.xlu0 %4537
      %4539 = vrot.lane.b32.xlu0 %v4517, 117
      %v4540 = vpop.permute.xlu0 %4539
      %4541 = vrot.lane.b32.xlu0 %v4518, 117
      %v4542 = vpop.permute.xlu0 %4541
      %4543 = vrot.lane.b32.xlu0 %v4519, 117
      %v4544 = vpop.permute.xlu0 %4543
      %4545 = vrot.lane.b32.xlu0 %v4520, 117
      %v4546 = vpop.permute.xlu0 %4545
      %4547 = vrot.lane.b32.xlu0 %v4521, 117
      %v4548 = vpop.permute.xlu0 %4547
      %4549 = vrot.lane.b32.xlu0 %v4522, 117
      %v4550 = vpop.permute.xlu0 %4549
      %4551 = vrot.lane.b32.xlu0 %v4523, 117
      %v4552 = vpop.permute.xlu0 %4551
      %4553 = vrot.lane.b32.xlu0 %v4524, 117
      %v4554 = vpop.permute.xlu0 %4553
      %v4555 = vrot.slane %v4536, 4
      %v4556 = vrot.slane %v4538, 4
      %v4557 = vrot.slane %v4540, 4
      %v4558 = vrot.slane %v4542, 4
      %v4559 = vrot.slane %v4544, 4
      %v4560 = vrot.slane %v4546, 4
      %v4561 = vrot.slane %v4548, 4
      %v4562 = vrot.slane %v4550, 4
      %v4563 = vrot.slane %v4552, 4
      %v4564 = vrot.slane %v4554, 4
      %v4565 = vsel %vm353, %v4555, %v4556
      %v4566 = vsel %vm504, %v4536, %v4565
      %v4567 = vsel %vm353, %v4556, %v4557
      %v4568 = vsel %vm504, %v4538, %v4567
      %v4569 = vsel %vm353, %v4557, %v4558
      %v4570 = vsel %vm504, %v4540, %v4569
      %v4571 = vsel %vm353, %v4558, %v4559
      %v4572 = vsel %vm504, %v4542, %v4571
      %v4573 = vsel %vm353, %v4560, %v4561
      %v4574 = vsel %vm504, %v4546, %v4573
      %v4575 = vsel %vm353, %v4561, %v4562
      %v4576 = vsel %vm504, %v4548, %v4575
      %v4577 = vsel %vm353, %v4562, %v4563
      %v4578 = vsel %vm504, %v4550, %v4577
      %v4579 = vsel %vm353, %v4563, %v4564
      %v4580 = vsel %vm504, %v4552, %v4579
      %4589 = vst [vmem:[#allocation7 + $0x100] sm:$0xff] %v4566
      %4590 = vst [vmem:[#allocation7 + $0x108] sm:$0xff] %v4568
      %4591 = vst [vmem:[#allocation7 + $0x110] sm:$0xff] %v4570
      %4592 = vst [vmem:[#allocation7 + $0x118] sm:$0xff] %v4572
      %4593 = vst [vmem:[#allocation7 + $0x120] sm:$0xff] %v4574
      %4594 = vst [vmem:[#allocation7 + $0x128] sm:$0xff] %v4576
      %4595 = vst [vmem:[#allocation7 + $0x130] sm:$0xff] %v4578
      %4596 = vst [vmem:[#allocation7 + $0x138] sm:$0xff] %v4580
      %v4597 = vld [vmem:[#allocation2] sm:$0xff]
      %v4598 = vld [vmem:[#allocation2 + $0x8] sm:$0xff]
      %v4599 = vld [vmem:[#allocation2 + $0x10] sm:$0xff]
      %v4600 = vld [vmem:[#allocation2 + $0x18] sm:$0xff]
      %v4601 = vld [vmem:[#allocation2 + $0x20] sm:$0xf]
      %4607 = vrot.lane.b32.xlu0 %v4597, 117
      %v4608 = vpop.permute.xlu0 %4607
      %4609 = vrot.lane.b32.xlu0 %v4598, 117
      %v4610 = vpop.permute.xlu0 %4609
      %4611 = vrot.lane.b32.xlu0 %v4599, 117
      %v4612 = vpop.permute.xlu0 %4611
      %4613 = vrot.lane.b32.xlu0 %v4600, 117
      %v4614 = vpop.permute.xlu0 %4613
      %4615 = vrot.lane.b32.xlu0 %v4601, 117
      %v4616 = vpop.permute.xlu0 %4615
      %v4617 = vrot.slane %v4608, 4
      %v4618 = vrot.slane %v4610, 4
      %v4619 = vrot.slane %v4612, 4
      %v4620 = vrot.slane %v4614, 4
      %v4621 = vrot.slane %v4616, 4
      %v4622 = vsel %vm353, %v4617, %v4618
      %v4623 = vsel %vm504, %v4608, %v4622
      %v4624 = vsel %vm353, %v4618, %v4619
      %v4625 = vsel %vm504, %v4610, %v4624
      %v4626 = vsel %vm353, %v4619, %v4620
      %v4627 = vsel %vm504, %v4612, %v4626
      %v4628 = vsel %vm353, %v4620, %v4621
      %v4629 = vsel %vm504, %v4614, %v4628
      %4634 = vst [vmem:[#allocation7 + $0x740] sm:$0xff] %v4623
      %4635 = vst [vmem:[#allocation7 + $0x748] sm:$0xff] %v4625
      %4636 = vst [vmem:[#allocation7 + $0x750] sm:$0xff] %v4627
      %4637 = vst [vmem:[#allocation7 + $0x758] sm:$0xff] %v4629
      %v4638 = vld [vmem:[#allocation4] sm:$0xff]
      %v4639 = vld [vmem:[#allocation4 + $0x8] sm:$0xff]
      %v4640 = vld [vmem:[#allocation4 + $0x10] sm:$0xff]
      %v4641 = vld [vmem:[#allocation4 + $0x18] sm:$0xff]
      %v4642 = vld [vmem:[#allocation4 + $0x20] sm:$0xf]
      %v4643 = vld [vmem:[#allocation4 + $0x2c] sm:$0xff]
      %v4644 = vld [vmem:[#allocation4 + $0x34] sm:$0xff]
      %v4645 = vld [vmem:[#allocation4 + $0x3c] sm:$0xff]
      %v4646 = vld [vmem:[#allocation4 + $0x44] sm:$0xff]
      %v4647 = vld [vmem:[#allocation4 + $0x4c] sm:$0xf]
      %4658 = vrot.lane.b32.xlu0 %v4638, 116
      %v4659 = vpop.permute.xlu0 %4658
      %4660 = vrot.lane.b32.xlu0 %v4639, 116
      %v4661 = vpop.permute.xlu0 %4660
      %4662 = vrot.lane.b32.xlu0 %v4640, 116
      %v4663 = vpop.permute.xlu0 %4662
      %4664 = vrot.lane.b32.xlu0 %v4641, 116
      %v4665 = vpop.permute.xlu0 %4664
      %4666 = vrot.lane.b32.xlu0 %v4642, 116
      %v4667 = vpop.permute.xlu0 %4666
      %4668 = vrot.lane.b32.xlu0 %v4643, 116
      %v4669 = vpop.permute.xlu0 %4668
      %4670 = vrot.lane.b32.xlu0 %v4644, 116
      %v4671 = vpop.permute.xlu0 %4670
      %4672 = vrot.lane.b32.xlu0 %v4645, 116
      %v4673 = vpop.permute.xlu0 %4672
      %4674 = vrot.lane.b32.xlu0 %v4646, 116
      %v4675 = vpop.permute.xlu0 %4674
      %4676 = vrot.lane.b32.xlu0 %v4647, 116
      %v4677 = vpop.permute.xlu0 %4676
      %v4678 = vrot.slane %v4659, 4
      %v4679 = vrot.slane %v4661, 4
      %v4680 = vrot.slane %v4663, 4
      %v4681 = vrot.slane %v4665, 4
      %v4682 = vrot.slane %v4667, 4
      %v4683 = vrot.slane %v4669, 4
      %v4684 = vrot.slane %v4671, 4
      %v4685 = vrot.slane %v4673, 4
      %v4686 = vrot.slane %v4675, 4
      %v4687 = vrot.slane %v4677, 4
      %v4688 = vsel %vm353, %v4678, %v4679
      %v4689 = vsel %vm554, %v4659, %v4688
      %v4690 = vsel %vm353, %v4679, %v4680
      %v4691 = vsel %vm554, %v4661, %v4690
      %v4692 = vsel %vm353, %v4680, %v4681
      %v4693 = vsel %vm554, %v4663, %v4692
      %v4694 = vsel %vm353, %v4681, %v4682
      %v4695 = vsel %vm554, %v4665, %v4694
      %v4696 = vsel %vm353, %v4683, %v4684
      %v4697 = vsel %vm554, %v4669, %v4696
      %v4698 = vsel %vm353, %v4684, %v4685
      %v4699 = vsel %vm554, %v4671, %v4698
      %v4700 = vsel %vm353, %v4685, %v4686
      %v4701 = vsel %vm554, %v4673, %v4700
      %v4702 = vsel %vm353, %v4686, %v4687
      %v4703 = vsel %vm554, %v4675, %v4702
      %4712 = vst [vmem:[#allocation7 + $0x140] sm:$0xff] %v4689
      %4713 = vst [vmem:[#allocation7 + $0x148] sm:$0xff] %v4691
      %4714 = vst [vmem:[#allocation7 + $0x150] sm:$0xff] %v4693
      %4715 = vst [vmem:[#allocation7 + $0x158] sm:$0xff] %v4695
      %4716 = vst [vmem:[#allocation7 + $0x160] sm:$0xff] %v4697
      %4717 = vst [vmem:[#allocation7 + $0x168] sm:$0xff] %v4699
      %4718 = vst [vmem:[#allocation7 + $0x170] sm:$0xff] %v4701
      %4719 = vst [vmem:[#allocation7 + $0x178] sm:$0xff] %v4703
      %v4720 = vld [vmem:[#allocation2] sm:$0xff]
      %v4721 = vld [vmem:[#allocation2 + $0x8] sm:$0xff]
      %v4722 = vld [vmem:[#allocation2 + $0x10] sm:$0xff]
      %v4723 = vld [vmem:[#allocation2 + $0x18] sm:$0xff]
      %v4724 = vld [vmem:[#allocation2 + $0x20] sm:$0xf]
      %4730 = vrot.lane.b32.xlu0 %v4720, 116
      %v4731 = vpop.permute.xlu0 %4730
      %4732 = vrot.lane.b32.xlu0 %v4721, 116
      %v4733 = vpop.permute.xlu0 %4732
      %4734 = vrot.lane.b32.xlu0 %v4722, 116
      %v4735 = vpop.permute.xlu0 %4734
      %4736 = vrot.lane.b32.xlu0 %v4723, 116
      %v4737 = vpop.permute.xlu0 %4736
      %4738 = vrot.lane.b32.xlu0 %v4724, 116
      %v4739 = vpop.permute.xlu0 %4738
      %v4740 = vrot.slane %v4731, 4
      %v4741 = vrot.slane %v4733, 4
      %v4742 = vrot.slane %v4735, 4
      %v4743 = vrot.slane %v4737, 4
      %v4744 = vrot.slane %v4739, 4
      %v4745 = vsel %vm353, %v4740, %v4741
      %v4746 = vsel %vm554, %v4731, %v4745
      %v4747 = vsel %vm353, %v4741, %v4742
      %v4748 = vsel %vm554, %v4733, %v4747
      %v4749 = vsel %vm353, %v4742, %v4743
      %v4750 = vsel %vm554, %v4735, %v4749
      %v4751 = vsel %vm353, %v4743, %v4744
      %v4752 = vsel %vm554, %v4737, %v4751
      %4757 = vst [vmem:[#allocation7 + $0x760] sm:$0xff] %v4746
      %4758 = vst [vmem:[#allocation7 + $0x768] sm:$0xff] %v4748
      %4759 = vst [vmem:[#allocation7 + $0x770] sm:$0xff] %v4750
      %4760 = vst [vmem:[#allocation7 + $0x778] sm:$0xff] %v4752
      %v4761 = vld [vmem:[#allocation4] sm:$0xff]
      %v4762 = vld [vmem:[#allocation4 + $0x8] sm:$0xff]
      %v4763 = vld [vmem:[#allocation4 + $0x10] sm:$0xff]
      %v4764 = vld [vmem:[#allocation4 + $0x18] sm:$0xff]
      %v4765 = vld [vmem:[#allocation4 + $0x20] sm:$0xf]
      %v4766 = vld [vmem:[#allocation4 + $0x2c] sm:$0xff]
      %v4767 = vld [vmem:[#allocation4 + $0x34] sm:$0xff]
      %v4768 = vld [vmem:[#allocation4 + $0x3c] sm:$0xff]
      %v4769 = vld [vmem:[#allocation4 + $0x44] sm:$0xff]
      %v4770 = vld [vmem:[#allocation4 + $0x4c] sm:$0xf]
      %4781 = vrot.lane.b32.xlu0 %v4761, 108
      %v4782 = vpop.permute.xlu0 %4781
      %4783 = vrot.lane.b32.xlu0 %v4762, 108
      %v4784 = vpop.permute.xlu0 %4783
      %4785 = vrot.lane.b32.xlu0 %v4763, 108
      %v4786 = vpop.permute.xlu0 %4785
      %4787 = vrot.lane.b32.xlu0 %v4764, 108
      %v4788 = vpop.permute.xlu0 %4787
      %4789 = vrot.lane.b32.xlu0 %v4765, 108
      %v4790 = vpop.permute.xlu0 %4789
      %4791 = vrot.lane.b32.xlu0 %v4766, 108
      %v4792 = vpop.permute.xlu0 %4791
      %4793 = vrot.lane.b32.xlu0 %v4767, 108
      %v4794 = vpop.permute.xlu0 %4793
      %4795 = vrot.lane.b32.xlu0 %v4768, 108
      %v4796 = vpop.permute.xlu0 %4795
      %4797 = vrot.lane.b32.xlu0 %v4769, 108
      %v4798 = vpop.permute.xlu0 %4797
      %4799 = vrot.lane.b32.xlu0 %v4770, 108
      %v4800 = vpop.permute.xlu0 %4799
      %v4801 = vrot.slane %v4782, 4
      %v4802 = vrot.slane %v4784, 4
      %v4803 = vrot.slane %v4786, 4
      %v4804 = vrot.slane %v4788, 4
      %v4805 = vrot.slane %v4790, 4
      %v4806 = vrot.slane %v4792, 4
      %v4807 = vrot.slane %v4794, 4
      %v4808 = vrot.slane %v4796, 4
      %v4809 = vrot.slane %v4798, 4
      %v4810 = vrot.slane %v4800, 4
      %v4811 = vsel %vm353, %v4801, %v4802
      %v4812 = vsel %vm604, %v4782, %v4811
      %v4813 = vsel %vm353, %v4802, %v4803
      %v4814 = vsel %vm604, %v4784, %v4813
      %v4815 = vsel %vm353, %v4803, %v4804
      %v4816 = vsel %vm604, %v4786, %v4815
      %v4817 = vsel %vm353, %v4804, %v4805
      %v4818 = vsel %vm604, %v4788, %v4817
      %v4819 = vsel %vm353, %v4806, %v4807
      %v4820 = vsel %vm604, %v4792, %v4819
      %v4821 = vsel %vm353, %v4807, %v4808
      %v4822 = vsel %vm604, %v4794, %v4821
      %v4823 = vsel %vm353, %v4808, %v4809
      %v4824 = vsel %vm604, %v4796, %v4823
      %v4825 = vsel %vm353, %v4809, %v4810
      %v4826 = vsel %vm604, %v4798, %v4825
      %4835 = vst [vmem:[#allocation7 + $0x180] sm:$0xff] %v4812
      %4836 = vst [vmem:[#allocation7 + $0x188] sm:$0xff] %v4814
      %4837 = vst [vmem:[#allocation7 + $0x190] sm:$0xff] %v4816
      %4838 = vst [vmem:[#allocation7 + $0x198] sm:$0xff] %v4818
      %4839 = vst [vmem:[#allocation7 + $0x1a0] sm:$0xff] %v4820
      %4840 = vst [vmem:[#allocation7 + $0x1a8] sm:$0xff] %v4822
      %4841 = vst [vmem:[#allocation7 + $0x1b0] sm:$0xff] %v4824
      %4842 = vst [vmem:[#allocation7 + $0x1b8] sm:$0xff] %v4826
      %v4843 = vld [vmem:[#allocation2] sm:$0xff]
      %v4844 = vld [vmem:[#allocation2 + $0x8] sm:$0xff]
      %v4845 = vld [vmem:[#allocation2 + $0x10] sm:$0xff]
      %v4846 = vld [vmem:[#allocation2 + $0x18] sm:$0xff]
      %v4847 = vld [vmem:[#allocation2 + $0x20] sm:$0xf]
      %4853 = vrot.lane.b32.xlu0 %v4843, 108
      %v4854 = vpop.permute.xlu0 %4853
      %4855 = vrot.lane.b32.xlu0 %v4844, 108
      %v4856 = vpop.permute.xlu0 %4855
      %4857 = vrot.lane.b32.xlu0 %v4845, 108
      %v4858 = vpop.permute.xlu0 %4857
      %4859 = vrot.lane.b32.xlu0 %v4846, 108
      %v4860 = vpop.permute.xlu0 %4859
      %4861 = vrot.lane.b32.xlu0 %v4847, 108
      %v4862 = vpop.permute.xlu0 %4861
      %v4863 = vrot.slane %v4854, 4
      %v4864 = vrot.slane %v4856, 4
      %v4865 = vrot.slane %v4858, 4
      %v4866 = vrot.slane %v4860, 4
      %v4867 = vrot.slane %v4862, 4
      %v4868 = vsel %vm353, %v4863, %v4864
      %v4869 = vsel %vm604, %v4854, %v4868
      %v4870 = vsel %vm353, %v4864, %v4865
      %v4871 = vsel %vm604, %v4856, %v4870
      %v4872 = vsel %vm353, %v4865, %v4866
      %v4873 = vsel %vm604, %v4858, %v4872
      %v4874 = vsel %vm353, %v4866, %v4867
      %v4875 = vsel %vm604, %v4860, %v4874
      %4880 = vst [vmem:[#allocation7 + $0x780] sm:$0xff] %v4869
      %4881 = vst [vmem:[#allocation7 + $0x788] sm:$0xff] %v4871
      %4882 = vst [vmem:[#allocation7 + $0x790] sm:$0xff] %v4873
      %4883 = vst [vmem:[#allocation7 + $0x798] sm:$0xff] %v4875
      %v4884 = vld [vmem:[#allocation4] sm:$0xff]
      %v4885 = vld [vmem:[#allocation4 + $0x8] sm:$0xff]
      %v4886 = vld [vmem:[#allocation4 + $0x10] sm:$0xff]
      %v4887 = vld [vmem:[#allocation4 + $0x18] sm:$0xff]
      %v4888 = vld [vmem:[#allocation4 + $0x20] sm:$0xf]
      %v4889 = vld [vmem:[#allocation4 + $0x2c] sm:$0xff]
      %v4890 = vld [vmem:[#allocation4 + $0x34] sm:$0xff]
      %v4891 = vld [vmem:[#allocation4 + $0x3c] sm:$0xff]
      %v4892 = vld [vmem:[#allocation4 + $0x44] sm:$0xff]
      %v4893 = vld [vmem:[#allocation4 + $0x4c] sm:$0xf]
      %4904 = vrot.lane.b32.xlu0 %v4884, 107
      %v4905 = vpop.permute.xlu0 %4904
      %4906 = vrot.lane.b32.xlu0 %v4885, 107
      %v4907 = vpop.permute.xlu0 %4906
      %4908 = vrot.lane.b32.xlu0 %v4886, 107
      %v4909 = vpop.permute.xlu0 %4908
      %4910 = vrot.lane.b32.xlu0 %v4887, 107
      %v4911 = vpop.permute.xlu0 %4910
      %4912 = vrot.lane.b32.xlu0 %v4888, 107
      %v4913 = vpop.permute.xlu0 %4912
      %4914 = vrot.lane.b32.xlu0 %v4889, 107
      %v4915 = vpop.permute.xlu0 %4914
      %4916 = vrot.lane.b32.xlu0 %v4890, 107
      %v4917 = vpop.permute.xlu0 %4916
      %4918 = vrot.lane.b32.xlu0 %v4891, 107
      %v4919 = vpop.permute.xlu0 %4918
      %4920 = vrot.lane.b32.xlu0 %v4892, 107
      %v4921 = vpop.permute.xlu0 %4920
      %4922 = vrot.lane.b32.xlu0 %v4893, 107
      %v4923 = vpop.permute.xlu0 %4922
      %v4924 = vrot.slane %v4905, 4
      %v4925 = vrot.slane %v4907, 4
      %v4926 = vrot.slane %v4909, 4
      %v4927 = vrot.slane %v4911, 4
      %v4928 = vrot.slane %v4913, 4
      %v4929 = vrot.slane %v4915, 4
      %v4930 = vrot.slane %v4917, 4
      %v4931 = vrot.slane %v4919, 4
      %v4932 = vrot.slane %v4921, 4
      %v4933 = vrot.slane %v4923, 4
      %v4934 = vsel %vm353, %v4924, %v4925
      %v4935 = vsel %vm654, %v4905, %v4934
      %v4936 = vsel %vm353, %v4925, %v4926
      %v4937 = vsel %vm654, %v4907, %v4936
      %v4938 = vsel %vm353, %v4926, %v4927
      %v4939 = vsel %vm654, %v4909, %v4938
      %v4940 = vsel %vm353, %v4927, %v4928
      %v4941 = vsel %vm654, %v4911, %v4940
      %v4942 = vsel %vm353, %v4929, %v4930
      %v4943 = vsel %vm654, %v4915, %v4942
      %v4944 = vsel %vm353, %v4930, %v4931
      %v4945 = vsel %vm654, %v4917, %v4944
      %v4946 = vsel %vm353, %v4931, %v4932
      %v4947 = vsel %vm654, %v4919, %v4946
      %v4948 = vsel %vm353, %v4932, %v4933
      %v4949 = vsel %vm654, %v4921, %v4948
      %4958 = vst [vmem:[#allocation7 + $0x1c0] sm:$0xff] %v4935
      %4959 = vst [vmem:[#allocation7 + $0x1c8] sm:$0xff] %v4937
      %4960 = vst [vmem:[#allocation7 + $0x1d0] sm:$0xff] %v4939
      %4961 = vst [vmem:[#allocation7 + $0x1d8] sm:$0xff] %v4941
      %4962 = vst [vmem:[#allocation7 + $0x1e0] sm:$0xff] %v4943
      %4963 = vst [vmem:[#allocation7 + $0x1e8] sm:$0xff] %v4945
      %4964 = vst [vmem:[#allocation7 + $0x1f0] sm:$0xff] %v4947
      %4965 = vst [vmem:[#allocation7 + $0x1f8] sm:$0xff] %v4949
      %v4966 = vld [vmem:[#allocation2] sm:$0xff]
      %v4967 = vld [vmem:[#allocation2 + $0x8] sm:$0xff]
      %v4968 = vld [vmem:[#allocation2 + $0x10] sm:$0xff]
      %v4969 = vld [vmem:[#allocation2 + $0x18] sm:$0xff]
      %v4970 = vld [vmem:[#allocation2 + $0x20] sm:$0xf]
      %4976 = vrot.lane.b32.xlu0 %v4966, 107
      %v4977 = vpop.permute.xlu0 %4976
      %4978 = vrot.lane.b32.xlu0 %v4967, 107
      %v4979 = vpop.permute.xlu0 %4978
      %4980 = vrot.lane.b32.xlu0 %v4968, 107
      %v4981 = vpop.permute.xlu0 %4980
      %4982 = vrot.lane.b32.xlu0 %v4969, 107
      %v4983 = vpop.permute.xlu0 %4982
      %4984 = vrot.lane.b32.xlu0 %v4970, 107
      %v4985 = vpop.permute.xlu0 %4984
      %v4986 = vrot.slane %v4977, 4
      %v4987 = vrot.slane %v4979, 4
      %v4988 = vrot.slane %v4981, 4
      %v4989 = vrot.slane %v4983, 4
      %v4990 = vrot.slane %v4985, 4
      %v4991 = vsel %vm353, %v4986, %v4987
      %v4992 = vsel %vm654, %v4977, %v4991
      %v4993 = vsel %vm353, %v4987, %v4988
      %v4994 = vsel %vm654, %v4979, %v4993
      %v4995 = vsel %vm353, %v4988, %v4989
      %v4996 = vsel %vm654, %v4981, %v4995
      %v4997 = vsel %vm353, %v4989, %v4990
      %v4998 = vsel %vm654, %v4983, %v4997
      %5003 = vst [vmem:[#allocation7 + $0x7a0] sm:$0xff] %v4992
      %5004 = vst [vmem:[#allocation7 + $0x7a8] sm:$0xff] %v4994
      %5005 = vst [vmem:[#allocation7 + $0x7b0] sm:$0xff] %v4996
      %5006 = vst [vmem:[#allocation7 + $0x7b8] sm:$0xff] %v4998
      %v5007 = vld [vmem:[#allocation4] sm:$0xff]
      %v5008 = vld [vmem:[#allocation4 + $0x8] sm:$0xff]
      %v5009 = vld [vmem:[#allocation4 + $0x10] sm:$0xff]
      %v5010 = vld [vmem:[#allocation4 + $0x18] sm:$0xff]
      %v5011 = vld [vmem:[#allocation4 + $0x20] sm:$0xf]
      %v5012 = vld [vmem:[#allocation4 + $0x2c] sm:$0xff]
      %v5013 = vld [vmem:[#allocation4 + $0x34] sm:$0xff]
      %v5014 = vld [vmem:[#allocation4 + $0x3c] sm:$0xff]
      %v5015 = vld [vmem:[#allocation4 + $0x44] sm:$0xff]
      %v5016 = vld [vmem:[#allocation4 + $0x4c] sm:$0xf]
      %5027 = vrot.lane.b32.xlu0 %v5007, 106
      %v5028 = vpop.permute.xlu0 %5027
      %5029 = vrot.lane.b32.xlu0 %v5008, 106
      %v5030 = vpop.permute.xlu0 %5029
      %5031 = vrot.lane.b32.xlu0 %v5009, 106
      %v5032 = vpop.permute.xlu0 %5031
      %5033 = vrot.lane.b32.xlu0 %v5010, 106
      %v5034 = vpop.permute.xlu0 %5033
      %5035 = vrot.lane.b32.xlu0 %v5011, 106
      %v5036 = vpop.permute.xlu0 %5035
      %5037 = vrot.lane.b32.xlu0 %v5012, 106
      %v5038 = vpop.permute.xlu0 %5037
      %5039 = vrot.lane.b32.xlu0 %v5013, 106
      %v5040 = vpop.permute.xlu0 %5039
      %5041 = vrot.lane.b32.xlu0 %v5014, 106
      %v5042 = vpop.permute.xlu0 %5041
      %5043 = vrot.lane.b32.xlu0 %v5015, 106
      %v5044 = vpop.permute.xlu0 %5043
      %5045 = vrot.lane.b32.xlu0 %v5016, 106
      %v5046 = vpop.permute.xlu0 %5045
      %v5047 = vrot.slane %v5028, 4
      %v5048 = vrot.slane %v5030, 4
      %v5049 = vrot.slane %v5032, 4
      %v5050 = vrot.slane %v5034, 4
      %v5051 = vrot.slane %v5036, 4
      %v5052 = vrot.slane %v5038, 4
      %v5053 = vrot.slane %v5040, 4
      %v5054 = vrot.slane %v5042, 4
      %v5055 = vrot.slane %v5044, 4
      %v5056 = vrot.slane %v5046, 4
      %v5057 = vsel %vm353, %v5047, %v5048
      %v5058 = vsel %vm703, %v5028, %v5057
      %v5059 = vsel %vm353, %v5048, %v5049
      %v5060 = vsel %vm703, %v5030, %v5059
      %v5061 = vsel %vm353, %v5049, %v5050
      %v5062 = vsel %vm703, %v5032, %v5061
      %v5063 = vsel %vm353, %v5050, %v5051
      %v5064 = vsel %vm703, %v5034, %v5063
      %v5065 = vsel %vm353, %v5052, %v5053
      %v5066 = vsel %vm703, %v5038, %v5065
      %v5067 = vsel %vm353, %v5053, %v5054
      %v5068 = vsel %vm703, %v5040, %v5067
      %v5069 = vsel %vm353, %v5054, %v5055
      %v5070 = vsel %vm703, %v5042, %v5069
      %v5071 = vsel %vm353, %v5055, %v5056
      %v5072 = vsel %vm703, %v5044, %v5071
      %5081 = vst [vmem:[#allocation7 + $0x200] sm:$0xff] %v5058
      %5082 = vst [vmem:[#allocation7 + $0x208] sm:$0xff] %v5060
      %5083 = vst [vmem:[#allocation7 + $0x210] sm:$0xff] %v5062
      %5084 = vst [vmem:[#allocation7 + $0x218] sm:$0xff] %v5064
      %5085 = vst [vmem:[#allocation7 + $0x220] sm:$0xff] %v5066
      %5086 = vst [vmem:[#allocation7 + $0x228] sm:$0xff] %v5068
      %5087 = vst [vmem:[#allocation7 + $0x230] sm:$0xff] %v5070
      %5088 = vst [vmem:[#allocation7 + $0x238] sm:$0xff] %v5072
      %v5089 = vld [vmem:[#allocation2] sm:$0xff]
      %v5090 = vld [vmem:[#allocation2 + $0x8] sm:$0xff]
      %v5091 = vld [vmem:[#allocation2 + $0x10] sm:$0xff]
      %v5092 = vld [vmem:[#allocation2 + $0x18] sm:$0xff]
      %v5093 = vld [vmem:[#allocation2 + $0x20] sm:$0xf]
      %5099 = vrot.lane.b32.xlu0 %v5089, 106
      %v5100 = vpop.permute.xlu0 %5099
      %5101 = vrot.lane.b32.xlu0 %v5090, 106
      %v5102 = vpop.permute.xlu0 %5101
      %5103 = vrot.lane.b32.xlu0 %v5091, 106
      %v5104 = vpop.permute.xlu0 %5103
      %5105 = vrot.lane.b32.xlu0 %v5092, 106
      %v5106 = vpop.permute.xlu0 %5105
      %5107 = vrot.lane.b32.xlu0 %v5093, 106
      %v5108 = vpop.permute.xlu0 %5107
      %v5109 = vrot.slane %v5100, 4
      %v5110 = vrot.slane %v5102, 4
      %v5111 = vrot.slane %v5104, 4
      %v5112 = vrot.slane %v5106, 4
      %v5113 = vrot.slane %v5108, 4
      %v5114 = vsel %vm353, %v5109, %v5110
      %v5115 = vsel %vm703, %v5100, %v5114
      %v5116 = vsel %vm353, %v5110, %v5111
      %v5117 = vsel %vm703, %v5102, %v5116
      %v5118 = vsel %vm353, %v5111, %v5112
      %v5119 = vsel %vm703, %v5104, %v5118
      %v5120 = vsel %vm353, %v5112, %v5113
      %v5121 = vsel %vm703, %v5106, %v5120
      %5126 = vst [vmem:[#allocation7 + $0x7c0] sm:$0xff] %v5115
      %5127 = vst [vmem:[#allocation7 + $0x7c8] sm:$0xff] %v5117
      %5128 = vst [vmem:[#allocation7 + $0x7d0] sm:$0xff] %v5119
      %5129 = vst [vmem:[#allocation7 + $0x7d8] sm:$0xff] %v5121
      %v5130 = vld [vmem:[#allocation4 + $0x4] sm:$0xff]
      %v5131 = vld [vmem:[#allocation4 + $0xc] sm:$0xff]
      %v5132 = vld [vmem:[#allocation4 + $0x14] sm:$0xff]
      %v5133 = vld [vmem:[#allocation4 + $0x1c] sm:$0xff]
      %v5134 = vld [vmem:[#allocation4 + $0x30] sm:$0xff]
      %v5135 = vld [vmem:[#allocation4 + $0x38] sm:$0xff]
      %v5136 = vld [vmem:[#allocation4 + $0x40] sm:$0xff]
      %v5137 = vld [vmem:[#allocation4 + $0x48] sm:$0xff]
      %5138 = vst [vmem:[#allocation7 + $0x240] sm:$0xff] %v5130
      %5139 = vst [vmem:[#allocation7 + $0x248] sm:$0xff] %v5131
      %5140 = vst [vmem:[#allocation7 + $0x250] sm:$0xff] %v5132
      %5141 = vst [vmem:[#allocation7 + $0x258] sm:$0xff] %v5133
      %5142 = vst [vmem:[#allocation7 + $0x260] sm:$0xff] %v5134
      %5143 = vst [vmem:[#allocation7 + $0x268] sm:$0xff] %v5135
      %5144 = vst [vmem:[#allocation7 + $0x270] sm:$0xff] %v5136
      %5145 = vst [vmem:[#allocation7 + $0x278] sm:$0xff] %v5137
      %v5146 = vld [vmem:[#allocation2 + $0x4] sm:$0xff]
      %v5147 = vld [vmem:[#allocation2 + $0xc] sm:$0xff]
      %v5148 = vld [vmem:[#allocation2 + $0x14] sm:$0xff]
      %v5149 = vld [vmem:[#allocation2 + $0x1c] sm:$0xff]
      %5150 = vst [vmem:[#allocation7 + $0x7e0] sm:$0xff] %v5146
      %5151 = vst [vmem:[#allocation7 + $0x7e8] sm:$0xff] %v5147
      %5152 = vst [vmem:[#allocation7 + $0x7f0] sm:$0xff] %v5148
      %5153 = vst [vmem:[#allocation7 + $0x7f8] sm:$0xff] %v5149
      %v5154 = vld [vmem:[#allocation4 + $0x4] sm:$0xff]
      %v5155 = vld [vmem:[#allocation4 + $0xc] sm:$0xff]
      %v5156 = vld [vmem:[#allocation4 + $0x14] sm:$0xff]
      %v5157 = vld [vmem:[#allocation4 + $0x1c] sm:$0xff]
      %v5158 = vld [vmem:[#allocation4 + $0x24] sm:$0xf]
      %v5159 = vld [vmem:[#allocation4 + $0x30] sm:$0xff]
      %v5160 = vld [vmem:[#allocation4 + $0x38] sm:$0xff]
      %v5161 = vld [vmem:[#allocation4 + $0x40] sm:$0xff]
      %v5162 = vld [vmem:[#allocation4 + $0x48] sm:$0xff]
      %v5163 = vld [vmem:[#allocation4 + $0x50] sm:$0xf]
      %5174 = vrot.lane.b32.xlu0 %v5154, 127
      %v5175 = vpop.permute.xlu0 %5174
      %5176 = vrot.lane.b32.xlu0 %v5155, 127
      %v5177 = vpop.permute.xlu0 %5176
      %5178 = vrot.lane.b32.xlu0 %v5156, 127
      %v5179 = vpop.permute.xlu0 %5178
      %5180 = vrot.lane.b32.xlu0 %v5157, 127
      %v5181 = vpop.permute.xlu0 %5180
      %5182 = vrot.lane.b32.xlu0 %v5158, 127
      %v5183 = vpop.permute.xlu0 %5182
      %5184 = vrot.lane.b32.xlu0 %v5159, 127
      %v5185 = vpop.permute.xlu0 %5184
      %5186 = vrot.lane.b32.xlu0 %v5160, 127
      %v5187 = vpop.permute.xlu0 %5186
      %5188 = vrot.lane.b32.xlu0 %v5161, 127
      %v5189 = vpop.permute.xlu0 %5188
      %5190 = vrot.lane.b32.xlu0 %v5162, 127
      %v5191 = vpop.permute.xlu0 %5190
      %5192 = vrot.lane.b32.xlu0 %v5163, 127
      %v5193 = vpop.permute.xlu0 %5192
      %v5194 = vrot.slane %v5175, 4
      %v5195 = vrot.slane %v5177, 4
      %v5196 = vrot.slane %v5179, 4
      %v5197 = vrot.slane %v5181, 4
      %v5198 = vrot.slane %v5183, 4
      %v5199 = vrot.slane %v5185, 4
      %v5200 = vrot.slane %v5187, 4
      %v5201 = vrot.slane %v5189, 4
      %v5202 = vrot.slane %v5191, 4
      %v5203 = vrot.slane %v5193, 4
      %v5204 = vsel %vm353, %v5194, %v5195
      %v5205 = vsel %vm355, %v5175, %v5204
      %v5206 = vsel %vm353, %v5195, %v5196
      %v5207 = vsel %vm355, %v5177, %v5206
      %v5208 = vsel %vm353, %v5196, %v5197
      %v5209 = vsel %vm355, %v5179, %v5208
      %v5210 = vsel %vm353, %v5197, %v5198
      %v5211 = vsel %vm355, %v5181, %v5210
      %v5212 = vsel %vm353, %v5199, %v5200
      %v5213 = vsel %vm355, %v5185, %v5212
      %v5214 = vsel %vm353, %v5200, %v5201
      %v5215 = vsel %vm355, %v5187, %v5214
      %v5216 = vsel %vm353, %v5201, %v5202
      %v5217 = vsel %vm355, %v5189, %v5216
      %v5218 = vsel %vm353, %v5202, %v5203
      %v5219 = vsel %vm355, %v5191, %v5218
      %5228 = vst [vmem:[#allocation7 + $0x280] sm:$0xff] %v5205
      %5229 = vst [vmem:[#allocation7 + $0x288] sm:$0xff] %v5207
      %5230 = vst [vmem:[#allocation7 + $0x290] sm:$0xff] %v5209
      %5231 = vst [vmem:[#allocation7 + $0x298] sm:$0xff] %v5211
      %5232 = vst [vmem:[#allocation7 + $0x2a0] sm:$0xff] %v5213
      %5233 = vst [vmem:[#allocation7 + $0x2a8] sm:$0xff] %v5215
      %5234 = vst [vmem:[#allocation7 + $0x2b0] sm:$0xff] %v5217
      %5235 = vst [vmem:[#allocation7 + $0x2b8] sm:$0xff] %v5219
      %v5236 = vld [vmem:[#allocation2 + $0x4] sm:$0xff]
      %v5237 = vld [vmem:[#allocation2 + $0xc] sm:$0xff]
      %v5238 = vld [vmem:[#allocation2 + $0x14] sm:$0xff]
      %v5239 = vld [vmem:[#allocation2 + $0x1c] sm:$0xff]
      %v5240 = vld [vmem:[#allocation2 + $0x24] sm:$0xf]
      %5246 = vrot.lane.b32.xlu0 %v5236, 127
      %v5247 = vpop.permute.xlu0 %5246
      %5248 = vrot.lane.b32.xlu0 %v5237, 127
      %v5249 = vpop.permute.xlu0 %5248
      %5250 = vrot.lane.b32.xlu0 %v5238, 127
      %v5251 = vpop.permute.xlu0 %5250
      %5252 = vrot.lane.b32.xlu0 %v5239, 127
      %v5253 = vpop.permute.xlu0 %5252
      %5254 = vrot.lane.b32.xlu0 %v5240, 127
      %v5255 = vpop.permute.xlu0 %5254
      %v5256 = vrot.slane %v5247, 4
      %v5257 = vrot.slane %v5249, 4
      %v5258 = vrot.slane %v5251, 4
      %v5259 = vrot.slane %v5253, 4
      %v5260 = vrot.slane %v5255, 4
      %v5261 = vsel %vm353, %v5256, %v5257
      %v5262 = vsel %vm355, %v5247, %v5261
      %v5263 = vsel %vm353, %v5257, %v5258
      %v5264 = vsel %vm355, %v5249, %v5263
      %v5265 = vsel %vm353, %v5258, %v5259
      %v5266 = vsel %vm355, %v5251, %v5265
      %v5267 = vsel %vm353, %v5259, %v5260
      %v5268 = vsel %vm355, %v5253, %v5267
      %5273 = vst [vmem:[#allocation7 + $0x800] sm:$0xff] %v5262
      %5274 = vst [vmem:[#allocation7 + $0x808] sm:$0xff] %v5264
      %5275 = vst [vmem:[#allocation7 + $0x810] sm:$0xff] %v5266
      %5276 = vst [vmem:[#allocation7 + $0x818] sm:$0xff] %v5268
      %v5277 = vld [vmem:[#allocation4 + $0x4] sm:$0xff]
      %v5278 = vld [vmem:[#allocation4 + $0xc] sm:$0xff]
      %v5279 = vld [vmem:[#allocation4 + $0x14] sm:$0xff]
      %v5280 = vld [vmem:[#allocation4 + $0x1c] sm:$0xff]
      %v5281 = vld [vmem:[#allocation4 + $0x24] sm:$0xf]
      %v5282 = vld [vmem:[#allocation4 + $0x30] sm:$0xff]
      %v5283 = vld [vmem:[#allocation4 + $0x38] sm:$0xff]
      %v5284 = vld [vmem:[#allocation4 + $0x40] sm:$0xff]
      %v5285 = vld [vmem:[#allocation4 + $0x48] sm:$0xff]
      %v5286 = vld [vmem:[#allocation4 + $0x50] sm:$0xf]
      %5297 = vrot.lane.b32.xlu0 %v5277, 126
      %v5298 = vpop.permute.xlu0 %5297
      %5299 = vrot.lane.b32.xlu0 %v5278, 126
      %v5300 = vpop.permute.xlu0 %5299
      %5301 = vrot.lane.b32.xlu0 %v5279, 126
      %v5302 = vpop.permute.xlu0 %5301
      %5303 = vrot.lane.b32.xlu0 %v5280, 126
      %v5304 = vpop.permute.xlu0 %5303
      %5305 = vrot.lane.b32.xlu0 %v5281, 126
      %v5306 = vpop.permute.xlu0 %5305
      %5307 = vrot.lane.b32.xlu0 %v5282, 126
      %v5308 = vpop.permute.xlu0 %5307
      %5309 = vrot.lane.b32.xlu0 %v5283, 126
      %v5310 = vpop.permute.xlu0 %5309
      %5311 = vrot.lane.b32.xlu0 %v5284, 126
      %v5312 = vpop.permute.xlu0 %5311
      %5313 = vrot.lane.b32.xlu0 %v5285, 126
      %v5314 = vpop.permute.xlu0 %5313
      %5315 = vrot.lane.b32.xlu0 %v5286, 126
      %v5316 = vpop.permute.xlu0 %5315
      %v5317 = vrot.slane %v5298, 4
      %v5318 = vrot.slane %v5300, 4
      %v5319 = vrot.slane %v5302, 4
      %v5320 = vrot.slane %v5304, 4
      %v5321 = vrot.slane %v5306, 4
      %v5322 = vrot.slane %v5308, 4
      %v5323 = vrot.slane %v5310, 4
      %v5324 = vrot.slane %v5312, 4
      %v5325 = vrot.slane %v5314, 4
      %v5326 = vrot.slane %v5316, 4
      %v5327 = vsel %vm353, %v5317, %v5318
      %v5328 = vsel %vm405, %v5298, %v5327
      %v5329 = vsel %vm353, %v5318, %v5319
      %v5330 = vsel %vm405, %v5300, %v5329
      %v5331 = vsel %vm353, %v5319, %v5320
      %v5332 = vsel %vm405, %v5302, %v5331
      %v5333 = vsel %vm353, %v5320, %v5321
      %v5334 = vsel %vm405, %v5304, %v5333
      %v5335 = vsel %vm353, %v5322, %v5323
      %v5336 = vsel %vm405, %v5308, %v5335
      %v5337 = vsel %vm353, %v5323, %v5324
      %v5338 = vsel %vm405, %v5310, %v5337
      %v5339 = vsel %vm353, %v5324, %v5325
      %v5340 = vsel %vm405, %v5312, %v5339
      %v5341 = vsel %vm353, %v5325, %v5326
      %v5342 = vsel %vm405, %v5314, %v5341
      %5351 = vst [vmem:[#allocation7 + $0x2c0] sm:$0xff] %v5328
      %5352 = vst [vmem:[#allocation7 + $0x2c8] sm:$0xff] %v5330
      %5353 = vst [vmem:[#allocation7 + $0x2d0] sm:$0xff] %v5332
      %5354 = vst [vmem:[#allocation7 + $0x2d8] sm:$0xff] %v5334
      %5355 = vst [vmem:[#allocation7 + $0x2e0] sm:$0xff] %v5336
      %5356 = vst [vmem:[#allocation7 + $0x2e8] sm:$0xff] %v5338
      %5357 = vst [vmem:[#allocation7 + $0x2f0] sm:$0xff] %v5340
      %5358 = vst [vmem:[#allocation7 + $0x2f8] sm:$0xff] %v5342
      %v5359 = vld [vmem:[#allocation2 + $0x4] sm:$0xff]
      %v5360 = vld [vmem:[#allocation2 + $0xc] sm:$0xff]
      %v5361 = vld [vmem:[#allocation2 + $0x14] sm:$0xff]
      %v5362 = vld [vmem:[#allocation2 + $0x1c] sm:$0xff]
      %v5363 = vld [vmem:[#allocation2 + $0x24] sm:$0xf]
      %5369 = vrot.lane.b32.xlu0 %v5359, 126
      %v5370 = vpop.permute.xlu0 %5369
      %5371 = vrot.lane.b32.xlu0 %v5360, 126
      %v5372 = vpop.permute.xlu0 %5371
      %5373 = vrot.lane.b32.xlu0 %v5361, 126
      %v5374 = vpop.permute.xlu0 %5373
      %5375 = vrot.lane.b32.xlu0 %v5362, 126
      %v5376 = vpop.permute.xlu0 %5375
      %5377 = vrot.lane.b32.xlu0 %v5363, 126
      %v5378 = vpop.permute.xlu0 %5377
      %v5379 = vrot.slane %v5370, 4
      %v5380 = vrot.slane %v5372, 4
      %v5381 = vrot.slane %v5374, 4
      %v5382 = vrot.slane %v5376, 4
      %v5383 = vrot.slane %v5378, 4
      %v5384 = vsel %vm353, %v5379, %v5380
      %v5385 = vsel %vm405, %v5370, %v5384
      %v5386 = vsel %vm353, %v5380, %v5381
      %v5387 = vsel %vm405, %v5372, %v5386
      %v5388 = vsel %vm353, %v5381, %v5382
      %v5389 = vsel %vm405, %v5374, %v5388
      %v5390 = vsel %vm353, %v5382, %v5383
      %v5391 = vsel %vm405, %v5376, %v5390
      %5396 = vst [vmem:[#allocation7 + $0x820] sm:$0xff] %v5385
      %5397 = vst [vmem:[#allocation7 + $0x828] sm:$0xff] %v5387
      %5398 = vst [vmem:[#allocation7 + $0x830] sm:$0xff] %v5389
      %5399 = vst [vmem:[#allocation7 + $0x838] sm:$0xff] %v5391
      %v5400 = vld [vmem:[#allocation4 + $0x4] sm:$0xff]
      %v5401 = vld [vmem:[#allocation4 + $0xc] sm:$0xff]
      %v5402 = vld [vmem:[#allocation4 + $0x14] sm:$0xff]
      %v5403 = vld [vmem:[#allocation4 + $0x1c] sm:$0xff]
      %v5404 = vld [vmem:[#allocation4 + $0x24] sm:$0xf]
      %v5405 = vld [vmem:[#allocation4 + $0x30] sm:$0xff]
      %v5406 = vld [vmem:[#allocation4 + $0x38] sm:$0xff]
      %v5407 = vld [vmem:[#allocation4 + $0x40] sm:$0xff]
      %v5408 = vld [vmem:[#allocation4 + $0x48] sm:$0xff]
      %v5409 = vld [vmem:[#allocation4 + $0x50] sm:$0xf]
      %5420 = vrot.lane.b32.xlu0 %v5400, 118
      %v5421 = vpop.permute.xlu0 %5420
      %5422 = vrot.lane.b32.xlu0 %v5401, 118
      %v5423 = vpop.permute.xlu0 %5422
      %5424 = vrot.lane.b32.xlu0 %v5402, 118
      %v5425 = vpop.permute.xlu0 %5424
      %5426 = vrot.lane.b32.xlu0 %v5403, 118
      %v5427 = vpop.permute.xlu0 %5426
      %5428 = vrot.lane.b32.xlu0 %v5404, 118
      %v5429 = vpop.permute.xlu0 %5428
      %5430 = vrot.lane.b32.xlu0 %v5405, 118
      %v5431 = vpop.permute.xlu0 %5430
      %5432 = vrot.lane.b32.xlu0 %v5406, 118
      %v5433 = vpop.permute.xlu0 %5432
      %5434 = vrot.lane.b32.xlu0 %v5407, 118
      %v5435 = vpop.permute.xlu0 %5434
      %5436 = vrot.lane.b32.xlu0 %v5408, 118
      %v5437 = vpop.permute.xlu0 %5436
      %5438 = vrot.lane.b32.xlu0 %v5409, 118
      %v5439 = vpop.permute.xlu0 %5438
      %v5440 = vrot.slane %v5421, 4
      %v5441 = vrot.slane %v5423, 4
      %v5442 = vrot.slane %v5425, 4
      %v5443 = vrot.slane %v5427, 4
      %v5444 = vrot.slane %v5429, 4
      %v5445 = vrot.slane %v5431, 4
      %v5446 = vrot.slane %v5433, 4
      %v5447 = vrot.slane %v5435, 4
      %v5448 = vrot.slane %v5437, 4
      %v5449 = vrot.slane %v5439, 4
      %v5450 = vsel %vm353, %v5440, %v5441
      %v5451 = vsel %vm455, %v5421, %v5450
      %v5452 = vsel %vm353, %v5441, %v5442
      %v5453 = vsel %vm455, %v5423, %v5452
      %v5454 = vsel %vm353, %v5442, %v5443
      %v5455 = vsel %vm455, %v5425, %v5454
      %v5456 = vsel %vm353, %v5443, %v5444
      %v5457 = vsel %vm455, %v5427, %v5456
      %v5458 = vsel %vm353, %v5445, %v5446
      %v5459 = vsel %vm455, %v5431, %v5458
      %v5460 = vsel %vm353, %v5446, %v5447
      %v5461 = vsel %vm455, %v5433, %v5460
      %v5462 = vsel %vm353, %v5447, %v5448
      %v5463 = vsel %vm455, %v5435, %v5462
      %v5464 = vsel %vm353, %v5448, %v5449
      %v5465 = vsel %vm455, %v5437, %v5464
      %5474 = vst [vmem:[#allocation7 + $0x300] sm:$0xff] %v5451
      %5475 = vst [vmem:[#allocation7 + $0x308] sm:$0xff] %v5453
      %5476 = vst [vmem:[#allocation7 + $0x310] sm:$0xff] %v5455
      %5477 = vst [vmem:[#allocation7 + $0x318] sm:$0xff] %v5457
      %5478 = vst [vmem:[#allocation7 + $0x320] sm:$0xff] %v5459
      %5479 = vst [vmem:[#allocation7 + $0x328] sm:$0xff] %v5461
      %5480 = vst [vmem:[#allocation7 + $0x330] sm:$0xff] %v5463
      %5481 = vst [vmem:[#allocation7 + $0x338] sm:$0xff] %v5465
      %v5482 = vld [vmem:[#allocation2 + $0x4] sm:$0xff]
      %v5483 = vld [vmem:[#allocation2 + $0xc] sm:$0xff]
      %v5484 = vld [vmem:[#allocation2 + $0x14] sm:$0xff]
      %v5485 = vld [vmem:[#allocation2 + $0x1c] sm:$0xff]
      %v5486 = vld [vmem:[#allocation2 + $0x24] sm:$0xf]
      %5492 = vrot.lane.b32.xlu0 %v5482, 118
      %v5493 = vpop.permute.xlu0 %5492
      %5494 = vrot.lane.b32.xlu0 %v5483, 118
      %v5495 = vpop.permute.xlu0 %5494
      %5496 = vrot.lane.b32.xlu0 %v5484, 118
      %v5497 = vpop.permute.xlu0 %5496
      %5498 = vrot.lane.b32.xlu0 %v5485, 118
      %v5499 = vpop.permute.xlu0 %5498
      %5500 = vrot.lane.b32.xlu0 %v5486, 118
      %v5501 = vpop.permute.xlu0 %5500
      %v5502 = vrot.slane %v5493, 4
      %v5503 = vrot.slane %v5495, 4
      %v5504 = vrot.slane %v5497, 4
      %v5505 = vrot.slane %v5499, 4
      %v5506 = vrot.slane %v5501, 4
      %v5507 = vsel %vm353, %v5502, %v5503
      %v5508 = vsel %vm455, %v5493, %v5507
      %v5509 = vsel %vm353, %v5503, %v5504
      %v5510 = vsel %vm455, %v5495, %v5509
      %v5511 = vsel %vm353, %v5504, %v5505
      %v5512 = vsel %vm455, %v5497, %v5511
      %v5513 = vsel %vm353, %v5505, %v5506
      %v5514 = vsel %vm455, %v5499, %v5513
      %5519 = vst [vmem:[#allocation7 + $0x840] sm:$0xff] %v5508
      %5520 = vst [vmem:[#allocation7 + $0x848] sm:$0xff] %v5510
      %5521 = vst [vmem:[#allocation7 + $0x850] sm:$0xff] %v5512
      %5522 = vst [vmem:[#allocation7 + $0x858] sm:$0xff] %v5514
      %v5523 = vld [vmem:[#allocation4 + $0x4] sm:$0xff]
      %v5524 = vld [vmem:[#allocation4 + $0xc] sm:$0xff]
      %v5525 = vld [vmem:[#allocation4 + $0x14] sm:$0xff]
      %v5526 = vld [vmem:[#allocation4 + $0x1c] sm:$0xff]
      %v5527 = vld [vmem:[#allocation4 + $0x24] sm:$0xf]
      %v5528 = vld [vmem:[#allocation4 + $0x30] sm:$0xff]
      %v5529 = vld [vmem:[#allocation4 + $0x38] sm:$0xff]
      %v5530 = vld [vmem:[#allocation4 + $0x40] sm:$0xff]
      %v5531 = vld [vmem:[#allocation4 + $0x48] sm:$0xff]
      %v5532 = vld [vmem:[#allocation4 + $0x50] sm:$0xf]
      %5543 = vrot.lane.b32.xlu0 %v5523, 117
      %v5544 = vpop.permute.xlu0 %5543
      %5545 = vrot.lane.b32.xlu0 %v5524, 117
      %v5546 = vpop.permute.xlu0 %5545
      %5547 = vrot.lane.b32.xlu0 %v5525, 117
      %v5548 = vpop.permute.xlu0 %5547
      %5549 = vrot.lane.b32.xlu0 %v5526, 117
      %v5550 = vpop.permute.xlu0 %5549
      %5551 = vrot.lane.b32.xlu0 %v5527, 117
      %v5552 = vpop.permute.xlu0 %5551
      %5553 = vrot.lane.b32.xlu0 %v5528, 117
      %v5554 = vpop.permute.xlu0 %5553
      %5555 = vrot.lane.b32.xlu0 %v5529, 117
      %v5556 = vpop.permute.xlu0 %5555
      %5557 = vrot.lane.b32.xlu0 %v5530, 117
      %v5558 = vpop.permute.xlu0 %5557
      %5559 = vrot.lane.b32.xlu0 %v5531, 117
      %v5560 = vpop.permute.xlu0 %5559
      %5561 = vrot.lane.b32.xlu0 %v5532, 117
      %v5562 = vpop.permute.xlu0 %5561
      %v5563 = vrot.slane %v5544, 4
      %v5564 = vrot.slane %v5546, 4
      %v5565 = vrot.slane %v5548, 4
      %v5566 = vrot.slane %v5550, 4
      %v5567 = vrot.slane %v5552, 4
      %v5568 = vrot.slane %v5554, 4
      %v5569 = vrot.slane %v5556, 4
      %v5570 = vrot.slane %v5558, 4
      %v5571 = vrot.slane %v5560, 4
      %v5572 = vrot.slane %v5562, 4
      %v5573 = vsel %vm353, %v5563, %v5564
      %v5574 = vsel %vm504, %v5544, %v5573
      %v5575 = vsel %vm353, %v5564, %v5565
      %v5576 = vsel %vm504, %v5546, %v5575
      %v5577 = vsel %vm353, %v5565, %v5566
      %v5578 = vsel %vm504, %v5548, %v5577
      %v5579 = vsel %vm353, %v5566, %v5567
      %v5580 = vsel %vm504, %v5550, %v5579
      %v5581 = vsel %vm353, %v5568, %v5569
      %v5582 = vsel %vm504, %v5554, %v5581
      %v5583 = vsel %vm353, %v5569, %v5570
      %v5584 = vsel %vm504, %v5556, %v5583
      %v5585 = vsel %vm353, %v5570, %v5571
      %v5586 = vsel %vm504, %v5558, %v5585
      %v5587 = vsel %vm353, %v5571, %v5572
      %v5588 = vsel %vm504, %v5560, %v5587
      %5597 = vst [vmem:[#allocation7 + $0x340] sm:$0xff] %v5574
      %5598 = vst [vmem:[#allocation7 + $0x348] sm:$0xff] %v5576
      %5599 = vst [vmem:[#allocation7 + $0x350] sm:$0xff] %v5578
      %5600 = vst [vmem:[#allocation7 + $0x358] sm:$0xff] %v5580
      %5601 = vst [vmem:[#allocation7 + $0x360] sm:$0xff] %v5582
      %5602 = vst [vmem:[#allocation7 + $0x368] sm:$0xff] %v5584
      %5603 = vst [vmem:[#allocation7 + $0x370] sm:$0xff] %v5586
      %5604 = vst [vmem:[#allocation7 + $0x378] sm:$0xff] %v5588
      %v5605 = vld [vmem:[#allocation2 + $0x4] sm:$0xff]
      %v5606 = vld [vmem:[#allocation2 + $0xc] sm:$0xff]
      %v5607 = vld [vmem:[#allocation2 + $0x14] sm:$0xff]
      %v5608 = vld [vmem:[#allocation2 + $0x1c] sm:$0xff]
      %v5609 = vld [vmem:[#allocation2 + $0x24] sm:$0xf]
      %5615 = vrot.lane.b32.xlu0 %v5605, 117
      %v5616 = vpop.permute.xlu0 %5615
      %5617 = vrot.lane.b32.xlu0 %v5606, 117
      %v5618 = vpop.permute.xlu0 %5617
      %5619 = vrot.lane.b32.xlu0 %v5607, 117
      %v5620 = vpop.permute.xlu0 %5619
      %5621 = vrot.lane.b32.xlu0 %v5608, 117
      %v5622 = vpop.permute.xlu0 %5621
      %5623 = vrot.lane.b32.xlu0 %v5609, 117
      %v5624 = vpop.permute.xlu0 %5623
      %v5625 = vrot.slane %v5616, 4
      %v5626 = vrot.slane %v5618, 4
      %v5627 = vrot.slane %v5620, 4
      %v5628 = vrot.slane %v5622, 4
      %v5629 = vrot.slane %v5624, 4
      %v5630 = vsel %vm353, %v5625, %v5626
      %v5631 = vsel %vm504, %v5616, %v5630
      %v5632 = vsel %vm353, %v5626, %v5627
      %v5633 = vsel %vm504, %v5618, %v5632
      %v5634 = vsel %vm353, %v5627, %v5628
      %v5635 = vsel %vm504, %v5620, %v5634
      %v5636 = vsel %vm353, %v5628, %v5629
      %v5637 = vsel %vm504, %v5622, %v5636
      %5642 = vst [vmem:[#allocation7 + $0x860] sm:$0xff] %v5631
      %5643 = vst [vmem:[#allocation7 + $0x868] sm:$0xff] %v5633
      %5644 = vst [vmem:[#allocation7 + $0x870] sm:$0xff] %v5635
      %5645 = vst [vmem:[#allocation7 + $0x878] sm:$0xff] %v5637
      %v5646 = vld [vmem:[#allocation4 + $0x4] sm:$0xff]
      %v5647 = vld [vmem:[#allocation4 + $0xc] sm:$0xff]
      %v5648 = vld [vmem:[#allocation4 + $0x14] sm:$0xff]
      %v5649 = vld [vmem:[#allocation4 + $0x1c] sm:$0xff]
      %v5650 = vld [vmem:[#allocation4 + $0x24] sm:$0xf]
      %v5651 = vld [vmem:[#allocation4 + $0x30] sm:$0xff]
      %v5652 = vld [vmem:[#allocation4 + $0x38] sm:$0xff]
      %v5653 = vld [vmem:[#allocation4 + $0x40] sm:$0xff]
      %v5654 = vld [vmem:[#allocation4 + $0x48] sm:$0xff]
      %v5655 = vld [vmem:[#allocation4 + $0x50] sm:$0xf]
      %5666 = vrot.lane.b32.xlu0 %v5646, 116
      %v5667 = vpop.permute.xlu0 %5666
      %5668 = vrot.lane.b32.xlu0 %v5647, 116
      %v5669 = vpop.permute.xlu0 %5668
      %5670 = vrot.lane.b32.xlu0 %v5648, 116
      %v5671 = vpop.permute.xlu0 %5670
      %5672 = vrot.lane.b32.xlu0 %v5649, 116
      %v5673 = vpop.permute.xlu0 %5672
      %5674 = vrot.lane.b32.xlu0 %v5650, 116
      %v5675 = vpop.permute.xlu0 %5674
      %5676 = vrot.lane.b32.xlu0 %v5651, 116
      %v5677 = vpop.permute.xlu0 %5676
      %5678 = vrot.lane.b32.xlu0 %v5652, 116
      %v5679 = vpop.permute.xlu0 %5678
      %5680 = vrot.lane.b32.xlu0 %v5653, 116
      %v5681 = vpop.permute.xlu0 %5680
      %5682 = vrot.lane.b32.xlu0 %v5654, 116
      %v5683 = vpop.permute.xlu0 %5682
      %5684 = vrot.lane.b32.xlu0 %v5655, 116
      %v5685 = vpop.permute.xlu0 %5684
      %v5686 = vrot.slane %v5667, 4
      %v5687 = vrot.slane %v5669, 4
      %v5688 = vrot.slane %v5671, 4
      %v5689 = vrot.slane %v5673, 4
      %v5690 = vrot.slane %v5675, 4
      %v5691 = vrot.slane %v5677, 4
      %v5692 = vrot.slane %v5679, 4
      %v5693 = vrot.slane %v5681, 4
      %v5694 = vrot.slane %v5683, 4
      %v5695 = vrot.slane %v5685, 4
      %v5696 = vsel %vm353, %v5686, %v5687
      %v5697 = vsel %vm554, %v5667, %v5696
      %v5698 = vsel %vm353, %v5687, %v5688
      %v5699 = vsel %vm554, %v5669, %v5698
      %v5700 = vsel %vm353, %v5688, %v5689
      %v5701 = vsel %vm554, %v5671, %v5700
      %v5702 = vsel %vm353, %v5689, %v5690
      %v5703 = vsel %vm554, %v5673, %v5702
      %v5704 = vsel %vm353, %v5691, %v5692
      %v5705 = vsel %vm554, %v5677, %v5704
      %v5706 = vsel %vm353, %v5692, %v5693
      %v5707 = vsel %vm554, %v5679, %v5706
      %v5708 = vsel %vm353, %v5693, %v5694
      %v5709 = vsel %vm554, %v5681, %v5708
      %v5710 = vsel %vm353, %v5694, %v5695
      %v5711 = vsel %vm554, %v5683, %v5710
      %5720 = vst [vmem:[#allocation7 + $0x380] sm:$0xff] %v5697
      %5721 = vst [vmem:[#allocation7 + $0x388] sm:$0xff] %v5699
      %5722 = vst [vmem:[#allocation7 + $0x390] sm:$0xff] %v5701
      %5723 = vst [vmem:[#allocation7 + $0x398] sm:$0xff] %v5703
      %5724 = vst [vmem:[#allocation7 + $0x3a0] sm:$0xff] %v5705
      %5725 = vst [vmem:[#allocation7 + $0x3a8] sm:$0xff] %v5707
      %5726 = vst [vmem:[#allocation7 + $0x3b0] sm:$0xff] %v5709
      %5727 = vst [vmem:[#allocation7 + $0x3b8] sm:$0xff] %v5711
      %v5728 = vld [vmem:[#allocation2 + $0x4] sm:$0xff]
      %v5729 = vld [vmem:[#allocation2 + $0xc] sm:$0xff]
      %v5730 = vld [vmem:[#allocation2 + $0x14] sm:$0xff]
      %v5731 = vld [vmem:[#allocation2 + $0x1c] sm:$0xff]
      %v5732 = vld [vmem:[#allocation2 + $0x24] sm:$0xf]
      %5738 = vrot.lane.b32.xlu0 %v5728, 116
      %v5739 = vpop.permute.xlu0 %5738
      %5740 = vrot.lane.b32.xlu0 %v5729, 116
      %v5741 = vpop.permute.xlu0 %5740
      %5742 = vrot.lane.b32.xlu0 %v5730, 116
      %v5743 = vpop.permute.xlu0 %5742
      %5744 = vrot.lane.b32.xlu0 %v5731, 116
      %v5745 = vpop.permute.xlu0 %5744
      %5746 = vrot.lane.b32.xlu0 %v5732, 116
      %v5747 = vpop.permute.xlu0 %5746
      %v5748 = vrot.slane %v5739, 4
      %v5749 = vrot.slane %v5741, 4
      %v5750 = vrot.slane %v5743, 4
      %v5751 = vrot.slane %v5745, 4
      %v5752 = vrot.slane %v5747, 4
      %v5753 = vsel %vm353, %v5748, %v5749
      %v5754 = vsel %vm554, %v5739, %v5753
      %v5755 = vsel %vm353, %v5749, %v5750
      %v5756 = vsel %vm554, %v5741, %v5755
      %v5757 = vsel %vm353, %v5750, %v5751
      %v5758 = vsel %vm554, %v5743, %v5757
      %v5759 = vsel %vm353, %v5751, %v5752
      %v5760 = vsel %vm554, %v5745, %v5759
      %5765 = vst [vmem:[#allocation7 + $0x880] sm:$0xff] %v5754
      %5766 = vst [vmem:[#allocation7 + $0x888] sm:$0xff] %v5756
      %5767 = vst [vmem:[#allocation7 + $0x890] sm:$0xff] %v5758
      %5768 = vst [vmem:[#allocation7 + $0x898] sm:$0xff] %v5760
      %v5769 = vld [vmem:[#allocation4 + $0x4] sm:$0xff]
      %v5770 = vld [vmem:[#allocation4 + $0xc] sm:$0xff]
      %v5771 = vld [vmem:[#allocation4 + $0x14] sm:$0xff]
      %v5772 = vld [vmem:[#allocation4 + $0x1c] sm:$0xff]
      %v5773 = vld [vmem:[#allocation4 + $0x24] sm:$0xf]
      %v5774 = vld [vmem:[#allocation4 + $0x30] sm:$0xff]
      %v5775 = vld [vmem:[#allocation4 + $0x38] sm:$0xff]
      %v5776 = vld [vmem:[#allocation4 + $0x40] sm:$0xff]
      %v5777 = vld [vmem:[#allocation4 + $0x48] sm:$0xff]
      %v5778 = vld [vmem:[#allocation4 + $0x50] sm:$0xf]
      %5789 = vrot.lane.b32.xlu0 %v5769, 108
      %v5790 = vpop.permute.xlu0 %5789
      %5791 = vrot.lane.b32.xlu0 %v5770, 108
      %v5792 = vpop.permute.xlu0 %5791
      %5793 = vrot.lane.b32.xlu0 %v5771, 108
      %v5794 = vpop.permute.xlu0 %5793
      %5795 = vrot.lane.b32.xlu0 %v5772, 108
      %v5796 = vpop.permute.xlu0 %5795
      %5797 = vrot.lane.b32.xlu0 %v5773, 108
      %v5798 = vpop.permute.xlu0 %5797
      %5799 = vrot.lane.b32.xlu0 %v5774, 108
      %v5800 = vpop.permute.xlu0 %5799
      %5801 = vrot.lane.b32.xlu0 %v5775, 108
      %v5802 = vpop.permute.xlu0 %5801
      %5803 = vrot.lane.b32.xlu0 %v5776, 108
      %v5804 = vpop.permute.xlu0 %5803
      %5805 = vrot.lane.b32.xlu0 %v5777, 108
      %v5806 = vpop.permute.xlu0 %5805
      %5807 = vrot.lane.b32.xlu0 %v5778, 108
      %v5808 = vpop.permute.xlu0 %5807
      %v5809 = vrot.slane %v5790, 4
      %v5810 = vrot.slane %v5792, 4
      %v5811 = vrot.slane %v5794, 4
      %v5812 = vrot.slane %v5796, 4
      %v5813 = vrot.slane %v5798, 4
      %v5814 = vrot.slane %v5800, 4
      %v5815 = vrot.slane %v5802, 4
      %v5816 = vrot.slane %v5804, 4
      %v5817 = vrot.slane %v5806, 4
      %v5818 = vrot.slane %v5808, 4
      %v5819 = vsel %vm353, %v5809, %v5810
      %v5820 = vsel %vm604, %v5790, %v5819
      %v5821 = vsel %vm353, %v5810, %v5811
      %v5822 = vsel %vm604, %v5792, %v5821
      %v5823 = vsel %vm353, %v5811, %v5812
      %v5824 = vsel %vm604, %v5794, %v5823
      %v5825 = vsel %vm353, %v5812, %v5813
      %v5826 = vsel %vm604, %v5796, %v5825
      %v5827 = vsel %vm353, %v5814, %v5815
      %v5828 = vsel %vm604, %v5800, %v5827
      %v5829 = vsel %vm353, %v5815, %v5816
      %v5830 = vsel %vm604, %v5802, %v5829
      %v5831 = vsel %vm353, %v5816, %v5817
      %v5832 = vsel %vm604, %v5804, %v5831
      %v5833 = vsel %vm353, %v5817, %v5818
      %v5834 = vsel %vm604, %v5806, %v5833
      %5843 = vst [vmem:[#allocation7 + $0x3c0] sm:$0xff] %v5820
      %5844 = vst [vmem:[#allocation7 + $0x3c8] sm:$0xff] %v5822
      %5845 = vst [vmem:[#allocation7 + $0x3d0] sm:$0xff] %v5824
      %5846 = vst [vmem:[#allocation7 + $0x3d8] sm:$0xff] %v5826
      %5847 = vst [vmem:[#allocation7 + $0x3e0] sm:$0xff] %v5828
      %5848 = vst [vmem:[#allocation7 + $0x3e8] sm:$0xff] %v5830
      %5849 = vst [vmem:[#allocation7 + $0x3f0] sm:$0xff] %v5832
      %5850 = vst [vmem:[#allocation7 + $0x3f8] sm:$0xff] %v5834
      %v5851 = vld [vmem:[#allocation2 + $0x4] sm:$0xff]
      %v5852 = vld [vmem:[#allocation2 + $0xc] sm:$0xff]
      %v5853 = vld [vmem:[#allocation2 + $0x14] sm:$0xff]
      %v5854 = vld [vmem:[#allocation2 + $0x1c] sm:$0xff]
      %v5855 = vld [vmem:[#allocation2 + $0x24] sm:$0xf]
      %5861 = vrot.lane.b32.xlu0 %v5851, 108
      %v5862 = vpop.permute.xlu0 %5861
      %5863 = vrot.lane.b32.xlu0 %v5852, 108
      %v5864 = vpop.permute.xlu0 %5863
      %5865 = vrot.lane.b32.xlu0 %v5853, 108
      %v5866 = vpop.permute.xlu0 %5865
      %5867 = vrot.lane.b32.xlu0 %v5854, 108
      %v5868 = vpop.permute.xlu0 %5867
      %5869 = vrot.lane.b32.xlu0 %v5855, 108
      %v5870 = vpop.permute.xlu0 %5869
      %v5871 = vrot.slane %v5862, 4
      %v5872 = vrot.slane %v5864, 4
      %v5873 = vrot.slane %v5866, 4
      %v5874 = vrot.slane %v5868, 4
      %v5875 = vrot.slane %v5870, 4
      %v5876 = vsel %vm353, %v5871, %v5872
      %v5877 = vsel %vm604, %v5862, %v5876
      %v5878 = vsel %vm353, %v5872, %v5873
      %v5879 = vsel %vm604, %v5864, %v5878
      %v5880 = vsel %vm353, %v5873, %v5874
      %v5881 = vsel %vm604, %v5866, %v5880
      %v5882 = vsel %vm353, %v5874, %v5875
      %v5883 = vsel %vm604, %v5868, %v5882
      %5888 = vst [vmem:[#allocation7 + $0x8a0] sm:$0xff] %v5877
      %5889 = vst [vmem:[#allocation7 + $0x8a8] sm:$0xff] %v5879
      %5890 = vst [vmem:[#allocation7 + $0x8b0] sm:$0xff] %v5881
      %5891 = vst [vmem:[#allocation7 + $0x8b8] sm:$0xff] %v5883
      %v5892 = vld [vmem:[#allocation4 + $0x4] sm:$0xff]
      %v5893 = vld [vmem:[#allocation4 + $0xc] sm:$0xff]
      %v5894 = vld [vmem:[#allocation4 + $0x14] sm:$0xff]
      %v5895 = vld [vmem:[#allocation4 + $0x1c] sm:$0xff]
      %v5896 = vld [vmem:[#allocation4 + $0x24] sm:$0xf]
      %v5897 = vld [vmem:[#allocation4 + $0x30] sm:$0xff]
      %v5898 = vld [vmem:[#allocation4 + $0x38] sm:$0xff]
      %v5899 = vld [vmem:[#allocation4 + $0x40] sm:$0xff]
      %v5900 = vld [vmem:[#allocation4 + $0x48] sm:$0xff]
      %v5901 = vld [vmem:[#allocation4 + $0x50] sm:$0xf]
      %5912 = vrot.lane.b32.xlu0 %v5892, 107
      %v5913 = vpop.permute.xlu0 %5912
      %5914 = vrot.lane.b32.xlu0 %v5893, 107
      %v5915 = vpop.permute.xlu0 %5914
      %5916 = vrot.lane.b32.xlu0 %v5894, 107
      %v5917 = vpop.permute.xlu0 %5916
      %5918 = vrot.lane.b32.xlu0 %v5895, 107
      %v5919 = vpop.permute.xlu0 %5918
      %5920 = vrot.lane.b32.xlu0 %v5896, 107
      %v5921 = vpop.permute.xlu0 %5920
      %5922 = vrot.lane.b32.xlu0 %v5897, 107
      %v5923 = vpop.permute.xlu0 %5922
      %5924 = vrot.lane.b32.xlu0 %v5898, 107
      %v5925 = vpop.permute.xlu0 %5924
      %5926 = vrot.lane.b32.xlu0 %v5899, 107
      %v5927 = vpop.permute.xlu0 %5926
      %5928 = vrot.lane.b32.xlu0 %v5900, 107
      %v5929 = vpop.permute.xlu0 %5928
      %5930 = vrot.lane.b32.xlu0 %v5901, 107
      %v5931 = vpop.permute.xlu0 %5930
      %v5932 = vrot.slane %v5913, 4
      %v5933 = vrot.slane %v5915, 4
      %v5934 = vrot.slane %v5917, 4
      %v5935 = vrot.slane %v5919, 4
      %v5936 = vrot.slane %v5921, 4
      %v5937 = vrot.slane %v5923, 4
      %v5938 = vrot.slane %v5925, 4
      %v5939 = vrot.slane %v5927, 4
      %v5940 = vrot.slane %v5929, 4
      %v5941 = vrot.slane %v5931, 4
      %v5942 = vsel %vm353, %v5932, %v5933
      %v5943 = vsel %vm654, %v5913, %v5942
      %v5944 = vsel %vm353, %v5933, %v5934
      %v5945 = vsel %vm654, %v5915, %v5944
      %v5946 = vsel %vm353, %v5934, %v5935
      %v5947 = vsel %vm654, %v5917, %v5946
      %v5948 = vsel %vm353, %v5935, %v5936
      %v5949 = vsel %vm654, %v5919, %v5948
      %v5950 = vsel %vm353, %v5937, %v5938
      %v5951 = vsel %vm654, %v5923, %v5950
      %v5952 = vsel %vm353, %v5938, %v5939
      %v5953 = vsel %vm654, %v5925, %v5952
      %v5954 = vsel %vm353, %v5939, %v5940
      %v5955 = vsel %vm654, %v5927, %v5954
      %v5956 = vsel %vm353, %v5940, %v5941
      %v5957 = vsel %vm654, %v5929, %v5956
      %5966 = vst [vmem:[#allocation7 + $0x400] sm:$0xff] %v5943
      %5967 = vst [vmem:[#allocation7 + $0x408] sm:$0xff] %v5945
      %5968 = vst [vmem:[#allocation7 + $0x410] sm:$0xff] %v5947
      %5969 = vst [vmem:[#allocation7 + $0x418] sm:$0xff] %v5949
      %5970 = vst [vmem:[#allocation7 + $0x420] sm:$0xff] %v5951
      %5971 = vst [vmem:[#allocation7 + $0x428] sm:$0xff] %v5953
      %5972 = vst [vmem:[#allocation7 + $0x430] sm:$0xff] %v5955
      %5973 = vst [vmem:[#allocation7 + $0x438] sm:$0xff] %v5957
      %v5974 = vld [vmem:[#allocation2 + $0x4] sm:$0xff]
      %v5975 = vld [vmem:[#allocation2 + $0xc] sm:$0xff]
      %v5976 = vld [vmem:[#allocation2 + $0x14] sm:$0xff]
      %v5977 = vld [vmem:[#allocation2 + $0x1c] sm:$0xff]
      %v5978 = vld [vmem:[#allocation2 + $0x24] sm:$0xf]
      %5984 = vrot.lane.b32.xlu0 %v5974, 107
      %v5985 = vpop.permute.xlu0 %5984
      %5986 = vrot.lane.b32.xlu0 %v5975, 107
      %v5987 = vpop.permute.xlu0 %5986
      %5988 = vrot.lane.b32.xlu0 %v5976, 107
      %v5989 = vpop.permute.xlu0 %5988
      %5990 = vrot.lane.b32.xlu0 %v5977, 107
      %v5991 = vpop.permute.xlu0 %5990
      %5992 = vrot.lane.b32.xlu0 %v5978, 107
      %v5993 = vpop.permute.xlu0 %5992
      %v5994 = vrot.slane %v5985, 4
      %v5995 = vrot.slane %v5987, 4
      %v5996 = vrot.slane %v5989, 4
      %v5997 = vrot.slane %v5991, 4
      %v5998 = vrot.slane %v5993, 4
      %v5999 = vsel %vm353, %v5994, %v5995
      %v6000 = vsel %vm654, %v5985, %v5999
      %v6001 = vsel %vm353, %v5995, %v5996
      %v6002 = vsel %vm654, %v5987, %v6001
      %v6003 = vsel %vm353, %v5996, %v5997
      %v6004 = vsel %vm654, %v5989, %v6003
      %v6005 = vsel %vm353, %v5997, %v5998
      %v6006 = vsel %vm654, %v5991, %v6005
      %6011 = vst [vmem:[#allocation7 + $0x8c0] sm:$0xff] %v6000
      %6012 = vst [vmem:[#allocation7 + $0x8c8] sm:$0xff] %v6002
      %6013 = vst [vmem:[#allocation7 + $0x8d0] sm:$0xff] %v6004
      %6014 = vst [vmem:[#allocation7 + $0x8d8] sm:$0xff] %v6006
      %v6015 = vld [vmem:[#allocation4 + $0x4] sm:$0xff]
      %v6016 = vld [vmem:[#allocation4 + $0xc] sm:$0xff]
      %v6017 = vld [vmem:[#allocation4 + $0x14] sm:$0xff]
      %v6018 = vld [vmem:[#allocation4 + $0x1c] sm:$0xff]
      %v6019 = vld [vmem:[#allocation4 + $0x24] sm:$0xf]
      %v6020 = vld [vmem:[#allocation4 + $0x30] sm:$0xff]
      %v6021 = vld [vmem:[#allocation4 + $0x38] sm:$0xff]
      %v6022 = vld [vmem:[#allocation4 + $0x40] sm:$0xff]
      %v6023 = vld [vmem:[#allocation4 + $0x48] sm:$0xff]
      %v6024 = vld [vmem:[#allocation4 + $0x50] sm:$0xf]
      %6035 = vrot.lane.b32.xlu0 %v6015, 106
      %v6036 = vpop.permute.xlu0 %6035
      %6037 = vrot.lane.b32.xlu0 %v6016, 106
      %v6038 = vpop.permute.xlu0 %6037
      %6039 = vrot.lane.b32.xlu0 %v6017, 106
      %v6040 = vpop.permute.xlu0 %6039
      %6041 = vrot.lane.b32.xlu0 %v6018, 106
      %v6042 = vpop.permute.xlu0 %6041
      %6043 = vrot.lane.b32.xlu0 %v6019, 106
      %v6044 = vpop.permute.xlu0 %6043
      %6045 = vrot.lane.b32.xlu0 %v6020, 106
      %v6046 = vpop.permute.xlu0 %6045
      %6047 = vrot.lane.b32.xlu0 %v6021, 106
      %v6048 = vpop.permute.xlu0 %6047
      %6049 = vrot.lane.b32.xlu0 %v6022, 106
      %v6050 = vpop.permute.xlu0 %6049
      %6051 = vrot.lane.b32.xlu0 %v6023, 106
      %v6052 = vpop.permute.xlu0 %6051
      %6053 = vrot.lane.b32.xlu0 %v6024, 106
      %v6054 = vpop.permute.xlu0 %6053
      %v6055 = vrot.slane %v6036, 4
      %v6056 = vrot.slane %v6038, 4
      %v6057 = vrot.slane %v6040, 4
      %v6058 = vrot.slane %v6042, 4
      %v6059 = vrot.slane %v6044, 4
      %v6060 = vrot.slane %v6046, 4
      %v6061 = vrot.slane %v6048, 4
      %v6062 = vrot.slane %v6050, 4
      %v6063 = vrot.slane %v6052, 4
      %v6064 = vrot.slane %v6054, 4
      %v6065 = vsel %vm353, %v6055, %v6056
      %v6066 = vsel %vm703, %v6036, %v6065
      %v6067 = vsel %vm353, %v6056, %v6057
      %v6068 = vsel %vm703, %v6038, %v6067
      %v6069 = vsel %vm353, %v6057, %v6058
      %v6070 = vsel %vm703, %v6040, %v6069
      %v6071 = vsel %vm353, %v6058, %v6059
      %v6072 = vsel %vm703, %v6042, %v6071
      %v6073 = vsel %vm353, %v6060, %v6061
      %v6074 = vsel %vm703, %v6046, %v6073
      %v6075 = vsel %vm353, %v6061, %v6062
      %v6076 = vsel %vm703, %v6048, %v6075
      %v6077 = vsel %vm353, %v6062, %v6063
      %v6078 = vsel %vm703, %v6050, %v6077
      %v6079 = vsel %vm353, %v6063, %v6064
      %v6080 = vsel %vm703, %v6052, %v6079
      %6089 = vst [vmem:[#allocation7 + $0x440] sm:$0xff] %v6066
      %6090 = vst [vmem:[#allocation7 + $0x448] sm:$0xff] %v6068
      %6091 = vst [vmem:[#allocation7 + $0x450] sm:$0xff] %v6070
      %6092 = vst [vmem:[#allocation7 + $0x458] sm:$0xff] %v6072
      %6093 = vst [vmem:[#allocation7 + $0x460] sm:$0xff] %v6074
      %6094 = vst [vmem:[#allocation7 + $0x468] sm:$0xff] %v6076
      %6095 = vst [vmem:[#allocation7 + $0x470] sm:$0xff] %v6078
      %6096 = vst [vmem:[#allocation7 + $0x478] sm:$0xff] %v6080
      %v6097 = vld [vmem:[#allocation2 + $0x4] sm:$0xff]
      %v6098 = vld [vmem:[#allocation2 + $0xc] sm:$0xff]
      %v6099 = vld [vmem:[#allocation2 + $0x14] sm:$0xff]
      %v6100 = vld [vmem:[#allocation2 + $0x1c] sm:$0xff]
      %v6101 = vld [vmem:[#allocation2 + $0x24] sm:$0xf]
      %6107 = vrot.lane.b32.xlu0 %v6097, 106
      %v6108 = vpop.permute.xlu0 %6107
      %6109 = vrot.lane.b32.xlu0 %v6098, 106
      %v6110 = vpop.permute.xlu0 %6109
      %6111 = vrot.lane.b32.xlu0 %v6099, 106
      %v6112 = vpop.permute.xlu0 %6111
      %6113 = vrot.lane.b32.xlu0 %v6100, 106
      %v6114 = vpop.permute.xlu0 %6113
      %6115 = vrot.lane.b32.xlu0 %v6101, 106
      %v6116 = vpop.permute.xlu0 %6115
      %v6117 = vrot.slane %v6108, 4
      %v6118 = vrot.slane %v6110, 4
      %v6119 = vrot.slane %v6112, 4
      %v6120 = vrot.slane %v6114, 4
      %v6121 = vrot.slane %v6116, 4
      %v6122 = vsel %vm353, %v6117, %v6118
      %v6123 = vsel %vm703, %v6108, %v6122
      %v6124 = vsel %vm353, %v6118, %v6119
      %v6125 = vsel %vm703, %v6110, %v6124
      %v6126 = vsel %vm353, %v6119, %v6120
      %v6127 = vsel %vm703, %v6112, %v6126
      %v6128 = vsel %vm353, %v6120, %v6121
      %v6129 = vsel %vm703, %v6114, %v6128
      %6134 = vst [vmem:[#allocation7 + $0x8e0] sm:$0xff] %v6123
      %6135 = vst [vmem:[#allocation7 + $0x8e8] sm:$0xff] %v6125
      %6136 = vst [vmem:[#allocation7 + $0x8f0] sm:$0xff] %v6127
      %6137 = vst [vmem:[#allocation7 + $0x8f8] sm:$0xff] %v6129
      %v6138 = vld [vmem:[#allocation4 + $0x8] sm:$0xff]
      %v6139 = vld [vmem:[#allocation4 + $0x10] sm:$0xff]
      %v6140 = vld [vmem:[#allocation4 + $0x18] sm:$0xff]
      %v6141 = vld [vmem:[#allocation4 + $0x20] sm:$0xff]
      %v6142 = vld [vmem:[#allocation4 + $0x34] sm:$0xff]
      %v6143 = vld [vmem:[#allocation4 + $0x3c] sm:$0xff]
      %v6144 = vld [vmem:[#allocation4 + $0x44] sm:$0xff]
      %v6145 = vld [vmem:[#allocation4 + $0x4c] sm:$0xff]
      %6146 = vst [vmem:[#allocation7 + $0x480] sm:$0xff] %v6138
      %6147 = vst [vmem:[#allocation7 + $0x488] sm:$0xff] %v6139
      %6148 = vst [vmem:[#allocation7 + $0x490] sm:$0xff] %v6140
      %6149 = vst [vmem:[#allocation7 + $0x498] sm:$0xff] %v6141
      %6150 = vst [vmem:[#allocation7 + $0x4a0] sm:$0xff] %v6142
      %6151 = vst [vmem:[#allocation7 + $0x4a8] sm:$0xff] %v6143
      %6152 = vst [vmem:[#allocation7 + $0x4b0] sm:$0xff] %v6144
      %6153 = vst [vmem:[#allocation7 + $0x4b8] sm:$0xff] %v6145
      %v6154 = vld [vmem:[#allocation2 + $0x8] sm:$0xff]
      %v6155 = vld [vmem:[#allocation2 + $0x10] sm:$0xff]
      %v6156 = vld [vmem:[#allocation2 + $0x18] sm:$0xff]
      %v6157 = vld [vmem:[#allocation2 + $0x20] sm:$0xff]
      %6158 = vst [vmem:[#allocation7 + $0x900] sm:$0xff] %v6154
      %6159 = vst [vmem:[#allocation7 + $0x908] sm:$0xff] %v6155
      %6160 = vst [vmem:[#allocation7 + $0x910] sm:$0xff] %v6156
      %6161 = vst [vmem:[#allocation7 + $0x918] sm:$0xff] %v6157
      %v6162 = vld [vmem:[#allocation4 + $0x8] sm:$0xff]
      %v6163 = vld [vmem:[#allocation4 + $0x10] sm:$0xff]
      %v6164 = vld [vmem:[#allocation4 + $0x18] sm:$0xff]
      %v6165 = vld [vmem:[#allocation4 + $0x20] sm:$0xff]
      %v6166 = vld [vmem:[#allocation4 + $0x28] sm:$0xf]
      %v6167 = vld [vmem:[#allocation4 + $0x34] sm:$0xff]
      %v6168 = vld [vmem:[#allocation4 + $0x3c] sm:$0xff]
      %v6169 = vld [vmem:[#allocation4 + $0x44] sm:$0xff]
      %v6170 = vld [vmem:[#allocation4 + $0x4c] sm:$0xff]
      %v6171 = vld [vmem:[#allocation4 + $0x54] sm:$0xf]
      %6182 = vrot.lane.b32.xlu0 %v6162, 127
      %v6183 = vpop.permute.xlu0 %6182
      %6184 = vrot.lane.b32.xlu0 %v6163, 127
      %v6185 = vpop.permute.xlu0 %6184
      %6186 = vrot.lane.b32.xlu0 %v6164, 127
      %v6187 = vpop.permute.xlu0 %6186
      %6188 = vrot.lane.b32.xlu0 %v6165, 127
      %v6189 = vpop.permute.xlu0 %6188
      %6190 = vrot.lane.b32.xlu0 %v6166, 127
      %v6191 = vpop.permute.xlu0 %6190
      %6192 = vrot.lane.b32.xlu0 %v6167, 127
      %v6193 = vpop.permute.xlu0 %6192
      %6194 = vrot.lane.b32.xlu0 %v6168, 127
      %v6195 = vpop.permute.xlu0 %6194
      %6196 = vrot.lane.b32.xlu0 %v6169, 127
      %v6197 = vpop.permute.xlu0 %6196
      %6198 = vrot.lane.b32.xlu0 %v6170, 127
      %v6199 = vpop.permute.xlu0 %6198
      %6200 = vrot.lane.b32.xlu0 %v6171, 127
      %v6201 = vpop.permute.xlu0 %6200
      %v6202 = vrot.slane %v6183, 4
      %v6203 = vrot.slane %v6185, 4
      %v6204 = vrot.slane %v6187, 4
      %v6205 = vrot.slane %v6189, 4
      %v6206 = vrot.slane %v6191, 4
      %v6207 = vrot.slane %v6193, 4
      %v6208 = vrot.slane %v6195, 4
      %v6209 = vrot.slane %v6197, 4
      %v6210 = vrot.slane %v6199, 4
      %v6211 = vrot.slane %v6201, 4
      %v6212 = vsel %vm353, %v6202, %v6203
      %v6213 = vsel %vm355, %v6183, %v6212
      %v6214 = vsel %vm353, %v6203, %v6204
      %v6215 = vsel %vm355, %v6185, %v6214
      %v6216 = vsel %vm353, %v6204, %v6205
      %v6217 = vsel %vm355, %v6187, %v6216
      %v6218 = vsel %vm353, %v6205, %v6206
      %v6219 = vsel %vm355, %v6189, %v6218
      %v6220 = vsel %vm353, %v6207, %v6208
      %v6221 = vsel %vm355, %v6193, %v6220
      %v6222 = vsel %vm353, %v6208, %v6209
      %v6223 = vsel %vm355, %v6195, %v6222
      %v6224 = vsel %vm353, %v6209, %v6210
      %v6225 = vsel %vm355, %v6197, %v6224
      %v6226 = vsel %vm353, %v6210, %v6211
      %v6227 = vsel %vm355, %v6199, %v6226
      %6236 = vst [vmem:[#allocation7 + $0x4c0] sm:$0xff] %v6213
      %6237 = vst [vmem:[#allocation7 + $0x4c8] sm:$0xff] %v6215
      %6238 = vst [vmem:[#allocation7 + $0x4d0] sm:$0xff] %v6217
      %6239 = vst [vmem:[#allocation7 + $0x4d8] sm:$0xff] %v6219
      %6240 = vst [vmem:[#allocation7 + $0x4e0] sm:$0xff] %v6221
      %6241 = vst [vmem:[#allocation7 + $0x4e8] sm:$0xff] %v6223
      %6242 = vst [vmem:[#allocation7 + $0x4f0] sm:$0xff] %v6225
      %6243 = vst [vmem:[#allocation7 + $0x4f8] sm:$0xff] %v6227
      %v6244 = vld [vmem:[#allocation2 + $0x8] sm:$0xff]
      %v6245 = vld [vmem:[#allocation2 + $0x10] sm:$0xff]
      %v6246 = vld [vmem:[#allocation2 + $0x18] sm:$0xff]
      %v6247 = vld [vmem:[#allocation2 + $0x20] sm:$0xff]
      %v6248 = vld [vmem:[#allocation2 + $0x28] sm:$0xf]
      %6254 = vrot.lane.b32.xlu0 %v6244, 127
      %v6255 = vpop.permute.xlu0 %6254
      %6256 = vrot.lane.b32.xlu0 %v6245, 127
      %v6257 = vpop.permute.xlu0 %6256
      %6258 = vrot.lane.b32.xlu0 %v6246, 127
      %v6259 = vpop.permute.xlu0 %6258
      %6260 = vrot.lane.b32.xlu0 %v6247, 127
      %v6261 = vpop.permute.xlu0 %6260
      %6262 = vrot.lane.b32.xlu0 %v6248, 127
      %v6263 = vpop.permute.xlu0 %6262
      %v6264 = vrot.slane %v6255, 4
      %v6265 = vrot.slane %v6257, 4
      %v6266 = vrot.slane %v6259, 4
      %v6267 = vrot.slane %v6261, 4
      %v6268 = vrot.slane %v6263, 4
      %v6269 = vsel %vm353, %v6264, %v6265
      %v6270 = vsel %vm355, %v6255, %v6269
      %v6271 = vsel %vm353, %v6265, %v6266
      %v6272 = vsel %vm355, %v6257, %v6271
      %v6273 = vsel %vm353, %v6266, %v6267
      %v6274 = vsel %vm355, %v6259, %v6273
      %v6275 = vsel %vm353, %v6267, %v6268
      %v6276 = vsel %vm355, %v6261, %v6275
      %6281 = vst [vmem:[#allocation7 + $0x920] sm:$0xff] %v6270
      %6282 = vst [vmem:[#allocation7 + $0x928] sm:$0xff] %v6272
      %6283 = vst [vmem:[#allocation7 + $0x930] sm:$0xff] %v6274
      %6284 = vst [vmem:[#allocation7 + $0x938] sm:$0xff] %v6276
      %v6285 = vld [vmem:[#allocation4 + $0x8] sm:$0xff]
      %v6286 = vld [vmem:[#allocation4 + $0x10] sm:$0xff]
      %v6287 = vld [vmem:[#allocation4 + $0x18] sm:$0xff]
      %v6288 = vld [vmem:[#allocation4 + $0x20] sm:$0xff]
      %v6289 = vld [vmem:[#allocation4 + $0x28] sm:$0xf]
      %v6290 = vld [vmem:[#allocation4 + $0x34] sm:$0xff]
      %v6291 = vld [vmem:[#allocation4 + $0x3c] sm:$0xff]
      %v6292 = vld [vmem:[#allocation4 + $0x44] sm:$0xff]
      %v6293 = vld [vmem:[#allocation4 + $0x4c] sm:$0xff]
      %v6294 = vld [vmem:[#allocation4 + $0x54] sm:$0xf]
      %6305 = vrot.lane.b32.xlu0 %v6285, 126
      %v6306 = vpop.permute.xlu0 %6305
      %6307 = vrot.lane.b32.xlu0 %v6286, 126
      %v6308 = vpop.permute.xlu0 %6307
      %6309 = vrot.lane.b32.xlu0 %v6287, 126
      %v6310 = vpop.permute.xlu0 %6309
      %6311 = vrot.lane.b32.xlu0 %v6288, 126
      %v6312 = vpop.permute.xlu0 %6311
      %6313 = vrot.lane.b32.xlu0 %v6289, 126
      %v6314 = vpop.permute.xlu0 %6313
      %6315 = vrot.lane.b32.xlu0 %v6290, 126
      %v6316 = vpop.permute.xlu0 %6315
      %6317 = vrot.lane.b32.xlu0 %v6291, 126
      %v6318 = vpop.permute.xlu0 %6317
      %6319 = vrot.lane.b32.xlu0 %v6292, 126
      %v6320 = vpop.permute.xlu0 %6319
      %6321 = vrot.lane.b32.xlu0 %v6293, 126
      %v6322 = vpop.permute.xlu0 %6321
      %6323 = vrot.lane.b32.xlu0 %v6294, 126
      %v6324 = vpop.permute.xlu0 %6323
      %v6325 = vrot.slane %v6306, 4
      %v6326 = vrot.slane %v6308, 4
      %v6327 = vrot.slane %v6310, 4
      %v6328 = vrot.slane %v6312, 4
      %v6329 = vrot.slane %v6314, 4
      %v6330 = vrot.slane %v6316, 4
      %v6331 = vrot.slane %v6318, 4
      %v6332 = vrot.slane %v6320, 4
      %v6333 = vrot.slane %v6322, 4
      %v6334 = vrot.slane %v6324, 4
      %v6335 = vsel %vm353, %v6325, %v6326
      %v6336 = vsel %vm405, %v6306, %v6335
      %v6337 = vsel %vm353, %v6326, %v6327
      %v6338 = vsel %vm405, %v6308, %v6337
      %v6339 = vsel %vm353, %v6327, %v6328
      %v6340 = vsel %vm405, %v6310, %v6339
      %v6341 = vsel %vm353, %v6328, %v6329
      %v6342 = vsel %vm405, %v6312, %v6341
      %v6343 = vsel %vm353, %v6330, %v6331
      %v6344 = vsel %vm405, %v6316, %v6343
      %v6345 = vsel %vm353, %v6331, %v6332
      %v6346 = vsel %vm405, %v6318, %v6345
      %v6347 = vsel %vm353, %v6332, %v6333
      %v6348 = vsel %vm405, %v6320, %v6347
      %v6349 = vsel %vm353, %v6333, %v6334
      %v6350 = vsel %vm405, %v6322, %v6349
      %6359 = vst [vmem:[#allocation7 + $0x500] sm:$0xff] %v6336
      %6360 = vst [vmem:[#allocation7 + $0x508] sm:$0xff] %v6338
      %6361 = vst [vmem:[#allocation7 + $0x510] sm:$0xff] %v6340
      %6362 = vst [vmem:[#allocation7 + $0x518] sm:$0xff] %v6342
      %6363 = vst [vmem:[#allocation7 + $0x520] sm:$0xff] %v6344
      %6364 = vst [vmem:[#allocation7 + $0x528] sm:$0xff] %v6346
      %6365 = vst [vmem:[#allocation7 + $0x530] sm:$0xff] %v6348
      %6366 = vst [vmem:[#allocation7 + $0x538] sm:$0xff] %v6350
      %v6367 = vld [vmem:[#allocation2 + $0x8] sm:$0xff]
      %v6368 = vld [vmem:[#allocation2 + $0x10] sm:$0xff]
      %v6369 = vld [vmem:[#allocation2 + $0x18] sm:$0xff]
      %v6370 = vld [vmem:[#allocation2 + $0x20] sm:$0xff]
      %v6371 = vld [vmem:[#allocation2 + $0x28] sm:$0xf]
      %6377 = vrot.lane.b32.xlu0 %v6367, 126
      %v6378 = vpop.permute.xlu0 %6377
      %6379 = vrot.lane.b32.xlu0 %v6368, 126
      %v6380 = vpop.permute.xlu0 %6379
      %6381 = vrot.lane.b32.xlu0 %v6369, 126
      %v6382 = vpop.permute.xlu0 %6381
      %6383 = vrot.lane.b32.xlu0 %v6370, 126
      %v6384 = vpop.permute.xlu0 %6383
      %6385 = vrot.lane.b32.xlu0 %v6371, 126
      %v6386 = vpop.permute.xlu0 %6385
      %v6387 = vrot.slane %v6378, 4
      %v6388 = vrot.slane %v6380, 4
      %v6389 = vrot.slane %v6382, 4
      %v6390 = vrot.slane %v6384, 4
      %v6391 = vrot.slane %v6386, 4
      %v6392 = vsel %vm353, %v6387, %v6388
      %v6393 = vsel %vm405, %v6378, %v6392
      %v6394 = vsel %vm353, %v6388, %v6389
      %v6395 = vsel %vm405, %v6380, %v6394
      %v6396 = vsel %vm353, %v6389, %v6390
      %v6397 = vsel %vm405, %v6382, %v6396
      %v6398 = vsel %vm353, %v6390, %v6391
      %v6399 = vsel %vm405, %v6384, %v6398
      %6404 = vst [vmem:[#allocation7 + $0x940] sm:$0xff] %v6393
      %6405 = vst [vmem:[#allocation7 + $0x948] sm:$0xff] %v6395
      %6406 = vst [vmem:[#allocation7 + $0x950] sm:$0xff] %v6397
      %6407 = vst [vmem:[#allocation7 + $0x958] sm:$0xff] %v6399
      %v6408 = vld [vmem:[#allocation4 + $0x8] sm:$0xff]
      %v6409 = vld [vmem:[#allocation4 + $0x10] sm:$0xff]
      %v6410 = vld [vmem:[#allocation4 + $0x18] sm:$0xff]
      %v6411 = vld [vmem:[#allocation4 + $0x20] sm:$0xff]
      %v6412 = vld [vmem:[#allocation4 + $0x28] sm:$0xf]
      %v6413 = vld [vmem:[#allocation4 + $0x34] sm:$0xff]
      %v6414 = vld [vmem:[#allocation4 + $0x3c] sm:$0xff]
      %v6415 = vld [vmem:[#allocation4 + $0x44] sm:$0xff]
      %v6416 = vld [vmem:[#allocation4 + $0x4c] sm:$0xff]
      %v6417 = vld [vmem:[#allocation4 + $0x54] sm:$0xf]
      %6428 = vrot.lane.b32.xlu0 %v6408, 118
      %v6429 = vpop.permute.xlu0 %6428
      %6430 = vrot.lane.b32.xlu0 %v6409, 118
      %v6431 = vpop.permute.xlu0 %6430
      %6432 = vrot.lane.b32.xlu0 %v6410, 118
      %v6433 = vpop.permute.xlu0 %6432
      %6434 = vrot.lane.b32.xlu0 %v6411, 118
      %v6435 = vpop.permute.xlu0 %6434
      %6436 = vrot.lane.b32.xlu0 %v6412, 118
      %v6437 = vpop.permute.xlu0 %6436
      %6438 = vrot.lane.b32.xlu0 %v6413, 118
      %v6439 = vpop.permute.xlu0 %6438
      %6440 = vrot.lane.b32.xlu0 %v6414, 118
      %v6441 = vpop.permute.xlu0 %6440
      %6442 = vrot.lane.b32.xlu0 %v6415, 118
      %v6443 = vpop.permute.xlu0 %6442
      %6444 = vrot.lane.b32.xlu0 %v6416, 118
      %v6445 = vpop.permute.xlu0 %6444
      %6446 = vrot.lane.b32.xlu0 %v6417, 118
      %v6447 = vpop.permute.xlu0 %6446
      %v6448 = vrot.slane %v6429, 4
      %v6449 = vrot.slane %v6431, 4
      %v6450 = vrot.slane %v6433, 4
      %v6451 = vrot.slane %v6435, 4
      %v6452 = vrot.slane %v6437, 4
      %v6453 = vrot.slane %v6439, 4
      %v6454 = vrot.slane %v6441, 4
      %v6455 = vrot.slane %v6443, 4
      %v6456 = vrot.slane %v6445, 4
      %v6457 = vrot.slane %v6447, 4
      %v6458 = vsel %vm353, %v6448, %v6449
      %v6459 = vsel %vm455, %v6429, %v6458
      %v6460 = vsel %vm353, %v6449, %v6450
      %v6461 = vsel %vm455, %v6431, %v6460
      %v6462 = vsel %vm353, %v6450, %v6451
      %v6463 = vsel %vm455, %v6433, %v6462
      %v6464 = vsel %vm353, %v6451, %v6452
      %v6465 = vsel %vm455, %v6435, %v6464
      %v6466 = vsel %vm353, %v6453, %v6454
      %v6467 = vsel %vm455, %v6439, %v6466
      %v6468 = vsel %vm353, %v6454, %v6455
      %v6469 = vsel %vm455, %v6441, %v6468
      %v6470 = vsel %vm353, %v6455, %v6456
      %v6471 = vsel %vm455, %v6443, %v6470
      %v6472 = vsel %vm353, %v6456, %v6457
      %v6473 = vsel %vm455, %v6445, %v6472
      %6482 = vst [vmem:[#allocation7 + $0x540] sm:$0xff] %v6459
      %6483 = vst [vmem:[#allocation7 + $0x548] sm:$0xff] %v6461
      %6484 = vst [vmem:[#allocation7 + $0x550] sm:$0xff] %v6463
      %6485 = vst [vmem:[#allocation7 + $0x558] sm:$0xff] %v6465
      %6486 = vst [vmem:[#allocation7 + $0x560] sm:$0xff] %v6467
      %6487 = vst [vmem:[#allocation7 + $0x568] sm:$0xff] %v6469
      %6488 = vst [vmem:[#allocation7 + $0x570] sm:$0xff] %v6471
      %6489 = vst [vmem:[#allocation7 + $0x578] sm:$0xff] %v6473
      %v6490 = vld [vmem:[#allocation2 + $0x8] sm:$0xff]
      %v6491 = vld [vmem:[#allocation2 + $0x10] sm:$0xff]
      %v6492 = vld [vmem:[#allocation2 + $0x18] sm:$0xff]
      %v6493 = vld [vmem:[#allocation2 + $0x20] sm:$0xff]
      %v6494 = vld [vmem:[#allocation2 + $0x28] sm:$0xf]
      %6500 = vrot.lane.b32.xlu0 %v6490, 118
      %v6501 = vpop.permute.xlu0 %6500
      %6502 = vrot.lane.b32.xlu0 %v6491, 118
      %v6503 = vpop.permute.xlu0 %6502
      %6504 = vrot.lane.b32.xlu0 %v6492, 118
      %v6505 = vpop.permute.xlu0 %6504
      %6506 = vrot.lane.b32.xlu0 %v6493, 118
      %v6507 = vpop.permute.xlu0 %6506
      %6508 = vrot.lane.b32.xlu0 %v6494, 118
      %v6509 = vpop.permute.xlu0 %6508
      %v6510 = vrot.slane %v6501, 4
      %v6511 = vrot.slane %v6503, 4
      %v6512 = vrot.slane %v6505, 4
      %v6513 = vrot.slane %v6507, 4
      %v6514 = vrot.slane %v6509, 4
      %v6515 = vsel %vm353, %v6510, %v6511
      %v6516 = vsel %vm455, %v6501, %v6515
      %v6517 = vsel %vm353, %v6511, %v6512
      %v6518 = vsel %vm455, %v6503, %v6517
      %v6519 = vsel %vm353, %v6512, %v6513
      %v6520 = vsel %vm455, %v6505, %v6519
      %v6521 = vsel %vm353, %v6513, %v6514
      %v6522 = vsel %vm455, %v6507, %v6521
      %6527 = vst [vmem:[#allocation7 + $0x960] sm:$0xff] %v6516
      %6528 = vst [vmem:[#allocation7 + $0x968] sm:$0xff] %v6518
      %6529 = vst [vmem:[#allocation7 + $0x970] sm:$0xff] %v6520
      %6530 = vst [vmem:[#allocation7 + $0x978] sm:$0xff] %v6522
      %v6531 = vld [vmem:[#allocation4 + $0x8] sm:$0xff]
      %v6532 = vld [vmem:[#allocation4 + $0x10] sm:$0xff]
      %v6533 = vld [vmem:[#allocation4 + $0x18] sm:$0xff]
      %v6534 = vld [vmem:[#allocation4 + $0x20] sm:$0xff]
      %v6535 = vld [vmem:[#allocation4 + $0x28] sm:$0xf]
      %v6536 = vld [vmem:[#allocation4 + $0x34] sm:$0xff]
      %v6537 = vld [vmem:[#allocation4 + $0x3c] sm:$0xff]
      %v6538 = vld [vmem:[#allocation4 + $0x44] sm:$0xff]
      %v6539 = vld [vmem:[#allocation4 + $0x4c] sm:$0xff]
      %v6540 = vld [vmem:[#allocation4 + $0x54] sm:$0xf]
      %6551 = vrot.lane.b32.xlu0 %v6531, 117
      %v6552 = vpop.permute.xlu0 %6551
      %6553 = vrot.lane.b32.xlu0 %v6532, 117
      %v6554 = vpop.permute.xlu0 %6553
      %6555 = vrot.lane.b32.xlu0 %v6533, 117
      %v6556 = vpop.permute.xlu0 %6555
      %6557 = vrot.lane.b32.xlu0 %v6534, 117
      %v6558 = vpop.permute.xlu0 %6557
      %6559 = vrot.lane.b32.xlu0 %v6535, 117
      %v6560 = vpop.permute.xlu0 %6559
      %6561 = vrot.lane.b32.xlu0 %v6536, 117
      %v6562 = vpop.permute.xlu0 %6561
      %6563 = vrot.lane.b32.xlu0 %v6537, 117
      %v6564 = vpop.permute.xlu0 %6563
      %6565 = vrot.lane.b32.xlu0 %v6538, 117
      %v6566 = vpop.permute.xlu0 %6565
      %6567 = vrot.lane.b32.xlu0 %v6539, 117
      %v6568 = vpop.permute.xlu0 %6567
      %6569 = vrot.lane.b32.xlu0 %v6540, 117
      %v6570 = vpop.permute.xlu0 %6569
      %v6571 = vrot.slane %v6552, 4
      %v6572 = vrot.slane %v6554, 4
      %v6573 = vrot.slane %v6556, 4
      %v6574 = vrot.slane %v6558, 4
      %v6575 = vrot.slane %v6560, 4
      %v6576 = vrot.slane %v6562, 4
      %v6577 = vrot.slane %v6564, 4
      %v6578 = vrot.slane %v6566, 4
      %v6579 = vrot.slane %v6568, 4
      %v6580 = vrot.slane %v6570, 4
      %v6581 = vsel %vm353, %v6571, %v6572
      %v6582 = vsel %vm504, %v6552, %v6581
      %v6583 = vsel %vm353, %v6572, %v6573
      %v6584 = vsel %vm504, %v6554, %v6583
      %v6585 = vsel %vm353, %v6573, %v6574
      %v6586 = vsel %vm504, %v6556, %v6585
      %v6587 = vsel %vm353, %v6574, %v6575
      %v6588 = vsel %vm504, %v6558, %v6587
      %v6589 = vsel %vm353, %v6576, %v6577
      %v6590 = vsel %vm504, %v6562, %v6589
      %v6591 = vsel %vm353, %v6577, %v6578
      %v6592 = vsel %vm504, %v6564, %v6591
      %v6593 = vsel %vm353, %v6578, %v6579
      %v6594 = vsel %vm504, %v6566, %v6593
      %v6595 = vsel %vm353, %v6579, %v6580
      %v6596 = vsel %vm504, %v6568, %v6595
      %6605 = vst [vmem:[#allocation7 + $0x580] sm:$0xff] %v6582
      %6606 = vst [vmem:[#allocation7 + $0x588] sm:$0xff] %v6584
      %6607 = vst [vmem:[#allocation7 + $0x590] sm:$0xff] %v6586
      %6608 = vst [vmem:[#allocation7 + $0x598] sm:$0xff] %v6588
      %6609 = vst [vmem:[#allocation7 + $0x5a0] sm:$0xff] %v6590
      %6610 = vst [vmem:[#allocation7 + $0x5a8] sm:$0xff] %v6592
      %6611 = vst [vmem:[#allocation7 + $0x5b0] sm:$0xff] %v6594
      %6612 = vst [vmem:[#allocation7 + $0x5b8] sm:$0xff] %v6596
      %v6613 = vld [vmem:[#allocation2 + $0x8] sm:$0xff]
      %v6614 = vld [vmem:[#allocation2 + $0x10] sm:$0xff]
      %v6615 = vld [vmem:[#allocation2 + $0x18] sm:$0xff]
      %v6616 = vld [vmem:[#allocation2 + $0x20] sm:$0xff]
      %v6617 = vld [vmem:[#allocation2 + $0x28] sm:$0xf]
      %6623 = vrot.lane.b32.xlu0 %v6613, 117
      %v6624 = vpop.permute.xlu0 %6623
      %6625 = vrot.lane.b32.xlu0 %v6614, 117
      %v6626 = vpop.permute.xlu0 %6625
      %6627 = vrot.lane.b32.xlu0 %v6615, 117
      %v6628 = vpop.permute.xlu0 %6627
      %6629 = vrot.lane.b32.xlu0 %v6616, 117
      %v6630 = vpop.permute.xlu0 %6629
      %6631 = vrot.lane.b32.xlu0 %v6617, 117
      %v6632 = vpop.permute.xlu0 %6631
      %v6633 = vrot.slane %v6624, 4
      %v6634 = vrot.slane %v6626, 4
      %v6635 = vrot.slane %v6628, 4
      %v6636 = vrot.slane %v6630, 4
      %v6637 = vrot.slane %v6632, 4
      %v6638 = vsel %vm353, %v6633, %v6634
      %v6639 = vsel %vm504, %v6624, %v6638
      %v6640 = vsel %vm353, %v6634, %v6635
      %v6641 = vsel %vm504, %v6626, %v6640
      %v6642 = vsel %vm353, %v6635, %v6636
      %v6643 = vsel %vm504, %v6628, %v6642
      %v6644 = vsel %vm353, %v6636, %v6637
      %v6645 = vsel %vm504, %v6630, %v6644
      %6650 = vst [vmem:[#allocation7 + $0x980] sm:$0xff] %v6639
      %6651 = vst [vmem:[#allocation7 + $0x988] sm:$0xff] %v6641
      %6652 = vst [vmem:[#allocation7 + $0x990] sm:$0xff] %v6643
      %6653 = vst [vmem:[#allocation7 + $0x998] sm:$0xff] %v6645
      %v6654 = vld [vmem:[#allocation4 + $0x8] sm:$0xff]
      %v6655 = vld [vmem:[#allocation4 + $0x10] sm:$0xff]
      %v6656 = vld [vmem:[#allocation4 + $0x18] sm:$0xff]
      %v6657 = vld [vmem:[#allocation4 + $0x20] sm:$0xff]
      %v6658 = vld [vmem:[#allocation4 + $0x28] sm:$0xf]
      %v6659 = vld [vmem:[#allocation4 + $0x34] sm:$0xff]
      %v6660 = vld [vmem:[#allocation4 + $0x3c] sm:$0xff]
      %v6661 = vld [vmem:[#allocation4 + $0x44] sm:$0xff]
      %v6662 = vld [vmem:[#allocation4 + $0x4c] sm:$0xff]
      %v6663 = vld [vmem:[#allocation4 + $0x54] sm:$0xf]
      %6674 = vrot.lane.b32.xlu0 %v6654, 116
      %v6675 = vpop.permute.xlu0 %6674
      %6676 = vrot.lane.b32.xlu0 %v6655, 116
      %v6677 = vpop.permute.xlu0 %6676
      %6678 = vrot.lane.b32.xlu0 %v6656, 116
      %v6679 = vpop.permute.xlu0 %6678
      %6680 = vrot.lane.b32.xlu0 %v6657, 116
      %v6681 = vpop.permute.xlu0 %6680
      %6682 = vrot.lane.b32.xlu0 %v6658, 116
      %v6683 = vpop.permute.xlu0 %6682
      %6684 = vrot.lane.b32.xlu0 %v6659, 116
      %v6685 = vpop.permute.xlu0 %6684
      %6686 = vrot.lane.b32.xlu0 %v6660, 116
      %v6687 = vpop.permute.xlu0 %6686
      %6688 = vrot.lane.b32.xlu0 %v6661, 116
      %v6689 = vpop.permute.xlu0 %6688
      %6690 = vrot.lane.b32.xlu0 %v6662, 116
      %v6691 = vpop.permute.xlu0 %6690
      %6692 = vrot.lane.b32.xlu0 %v6663, 116
      %v6693 = vpop.permute.xlu0 %6692
      %v6694 = vrot.slane %v6675, 4
      %v6695 = vrot.slane %v6677, 4
      %v6696 = vrot.slane %v6679, 4
      %v6697 = vrot.slane %v6681, 4
      %v6698 = vrot.slane %v6683, 4
      %v6699 = vrot.slane %v6685, 4
      %v6700 = vrot.slane %v6687, 4
      %v6701 = vrot.slane %v6689, 4
      %v6702 = vrot.slane %v6691, 4
      %v6703 = vrot.slane %v6693, 4
      %v6704 = vsel %vm353, %v6694, %v6695
      %v6705 = vsel %vm554, %v6675, %v6704
      %v6706 = vsel %vm353, %v6695, %v6696
      %v6707 = vsel %vm554, %v6677, %v6706
      %v6708 = vsel %vm353, %v6696, %v6697
      %v6709 = vsel %vm554, %v6679, %v6708
      %v6710 = vsel %vm353, %v6697, %v6698
      %v6711 = vsel %vm554, %v6681, %v6710
      %v6712 = vsel %vm353, %v6699, %v6700
      %v6713 = vsel %vm554, %v6685, %v6712
      %v6714 = vsel %vm353, %v6700, %v6701
      %v6715 = vsel %vm554, %v6687, %v6714
      %v6716 = vsel %vm353, %v6701, %v6702
      %v6717 = vsel %vm554, %v6689, %v6716
      %v6718 = vsel %vm353, %v6702, %v6703
      %v6719 = vsel %vm554, %v6691, %v6718
      %6728 = vst [vmem:[#allocation7 + $0x5c0] sm:$0xff] %v6705
      %6729 = vst [vmem:[#allocation7 + $0x5c8] sm:$0xff] %v6707
      %6730 = vst [vmem:[#allocation7 + $0x5d0] sm:$0xff] %v6709
      %6731 = vst [vmem:[#allocation7 + $0x5d8] sm:$0xff] %v6711
      %6732 = vst [vmem:[#allocation7 + $0x5e0] sm:$0xff] %v6713
      %6733 = vst [vmem:[#allocation7 + $0x5e8] sm:$0xff] %v6715
      %6734 = vst [vmem:[#allocation7 + $0x5f0] sm:$0xff] %v6717
      %6735 = vst [vmem:[#allocation7 + $0x5f8] sm:$0xff] %v6719
      %v6736 = vld [vmem:[#allocation2 + $0x8] sm:$0xff]
      %v6737 = vld [vmem:[#allocation2 + $0x10] sm:$0xff]
      %v6738 = vld [vmem:[#allocation2 + $0x18] sm:$0xff]
      %v6739 = vld [vmem:[#allocation2 + $0x20] sm:$0xff]
      %v6740 = vld [vmem:[#allocation2 + $0x28] sm:$0xf]
      %6746 = vrot.lane.b32.xlu0 %v6736, 116
      %v6747 = vpop.permute.xlu0 %6746
      %6748 = vrot.lane.b32.xlu0 %v6737, 116
      %v6749 = vpop.permute.xlu0 %6748
      %6750 = vrot.lane.b32.xlu0 %v6738, 116
      %v6751 = vpop.permute.xlu0 %6750
      %6752 = vrot.lane.b32.xlu0 %v6739, 116
      %v6753 = vpop.permute.xlu0 %6752
      %6754 = vrot.lane.b32.xlu0 %v6740, 116
      %v6755 = vpop.permute.xlu0 %6754
      %v6756 = vrot.slane %v6747, 4
      %v6757 = vrot.slane %v6749, 4
      %v6758 = vrot.slane %v6751, 4
      %v6759 = vrot.slane %v6753, 4
      %v6760 = vrot.slane %v6755, 4
      %v6761 = vsel %vm353, %v6756, %v6757
      %v6762 = vsel %vm554, %v6747, %v6761
      %v6763 = vsel %vm353, %v6757, %v6758
      %v6764 = vsel %vm554, %v6749, %v6763
      %v6765 = vsel %vm353, %v6758, %v6759
      %v6766 = vsel %vm554, %v6751, %v6765
      %v6767 = vsel %vm353, %v6759, %v6760
      %v6768 = vsel %vm554, %v6753, %v6767
      %6773 = vst [vmem:[#allocation7 + $0x9a0] sm:$0xff] %v6762
      %6774 = vst [vmem:[#allocation7 + $0x9a8] sm:$0xff] %v6764
      %6775 = vst [vmem:[#allocation7 + $0x9b0] sm:$0xff] %v6766
      %6776 = vst [vmem:[#allocation7 + $0x9b8] sm:$0xff] %v6768
      %v6777 = vld [vmem:[#allocation4 + $0x8] sm:$0xff]
      %v6778 = vld [vmem:[#allocation4 + $0x10] sm:$0xff]
      %v6779 = vld [vmem:[#allocation4 + $0x18] sm:$0xff]
      %v6780 = vld [vmem:[#allocation4 + $0x20] sm:$0xff]
      %v6781 = vld [vmem:[#allocation4 + $0x28] sm:$0xf]
      %v6782 = vld [vmem:[#allocation4 + $0x34] sm:$0xff]
      %v6783 = vld [vmem:[#allocation4 + $0x3c] sm:$0xff]
      %v6784 = vld [vmem:[#allocation4 + $0x44] sm:$0xff]
      %v6785 = vld [vmem:[#allocation4 + $0x4c] sm:$0xff]
      %v6786 = vld [vmem:[#allocation4 + $0x54] sm:$0xf]
      %6797 = vrot.lane.b32.xlu0 %v6777, 108
      %v6798 = vpop.permute.xlu0 %6797
      %6799 = vrot.lane.b32.xlu0 %v6778, 108
      %v6800 = vpop.permute.xlu0 %6799
      %6801 = vrot.lane.b32.xlu0 %v6779, 108
      %v6802 = vpop.permute.xlu0 %6801
      %6803 = vrot.lane.b32.xlu0 %v6780, 108
      %v6804 = vpop.permute.xlu0 %6803
      %6805 = vrot.lane.b32.xlu0 %v6781, 108
      %v6806 = vpop.permute.xlu0 %6805
      %6807 = vrot.lane.b32.xlu0 %v6782, 108
      %v6808 = vpop.permute.xlu0 %6807
      %6809 = vrot.lane.b32.xlu0 %v6783, 108
      %v6810 = vpop.permute.xlu0 %6809
      %6811 = vrot.lane.b32.xlu0 %v6784, 108
      %v6812 = vpop.permute.xlu0 %6811
      %6813 = vrot.lane.b32.xlu0 %v6785, 108
      %v6814 = vpop.permute.xlu0 %6813
      %6815 = vrot.lane.b32.xlu0 %v6786, 108
      %v6816 = vpop.permute.xlu0 %6815
      %v6817 = vrot.slane %v6798, 4
      %v6818 = vrot.slane %v6800, 4
      %v6819 = vrot.slane %v6802, 4
      %v6820 = vrot.slane %v6804, 4
      %v6821 = vrot.slane %v6806, 4
      %v6822 = vrot.slane %v6808, 4
      %v6823 = vrot.slane %v6810, 4
      %v6824 = vrot.slane %v6812, 4
      %v6825 = vrot.slane %v6814, 4
      %v6826 = vrot.slane %v6816, 4
      %v6827 = vsel %vm353, %v6817, %v6818
      %v6828 = vsel %vm604, %v6798, %v6827
      %v6829 = vsel %vm353, %v6818, %v6819
      %v6830 = vsel %vm604, %v6800, %v6829
      %v6831 = vsel %vm353, %v6819, %v6820
      %v6832 = vsel %vm604, %v6802, %v6831
      %v6833 = vsel %vm353, %v6820, %v6821
      %v6834 = vsel %vm604, %v6804, %v6833
      %v6835 = vsel %vm353, %v6822, %v6823
      %v6836 = vsel %vm604, %v6808, %v6835
      %v6837 = vsel %vm353, %v6823, %v6824
      %v6838 = vsel %vm604, %v6810, %v6837
      %v6839 = vsel %vm353, %v6824, %v6825
      %v6840 = vsel %vm604, %v6812, %v6839
      %v6841 = vsel %vm353, %v6825, %v6826
      %v6842 = vsel %vm604, %v6814, %v6841
      %6851 = vst [vmem:[#allocation7 + $0x600] sm:$0xff] %v6828
      %6852 = vst [vmem:[#allocation7 + $0x608] sm:$0xff] %v6830
      %6853 = vst [vmem:[#allocation7 + $0x610] sm:$0xff] %v6832
      %6854 = vst [vmem:[#allocation7 + $0x618] sm:$0xff] %v6834
      %6855 = vst [vmem:[#allocation7 + $0x620] sm:$0xff] %v6836
      %6856 = vst [vmem:[#allocation7 + $0x628] sm:$0xff] %v6838
      %6857 = vst [vmem:[#allocation7 + $0x630] sm:$0xff] %v6840
      %6858 = vst [vmem:[#allocation7 + $0x638] sm:$0xff] %v6842
      %v6859 = vld [vmem:[#allocation2 + $0x8] sm:$0xff]
      %v6860 = vld [vmem:[#allocation2 + $0x10] sm:$0xff]
      %v6861 = vld [vmem:[#allocation2 + $0x18] sm:$0xff]
      %v6862 = vld [vmem:[#allocation2 + $0x20] sm:$0xff]
      %v6863 = vld [vmem:[#allocation2 + $0x28] sm:$0xf]
      %6869 = vrot.lane.b32.xlu0 %v6859, 108
      %v6870 = vpop.permute.xlu0 %6869
      %6871 = vrot.lane.b32.xlu0 %v6860, 108
      %v6872 = vpop.permute.xlu0 %6871
      %6873 = vrot.lane.b32.xlu0 %v6861, 108
      %v6874 = vpop.permute.xlu0 %6873
      %6875 = vrot.lane.b32.xlu0 %v6862, 108
      %v6876 = vpop.permute.xlu0 %6875
      %6877 = vrot.lane.b32.xlu0 %v6863, 108
      %v6878 = vpop.permute.xlu0 %6877
      %v6879 = vrot.slane %v6870, 4
      %v6880 = vrot.slane %v6872, 4
      %v6881 = vrot.slane %v6874, 4
      %v6882 = vrot.slane %v6876, 4
      %v6883 = vrot.slane %v6878, 4
      %v6884 = vsel %vm353, %v6879, %v6880
      %v6885 = vsel %vm604, %v6870, %v6884
      %v6886 = vsel %vm353, %v6880, %v6881
      %v6887 = vsel %vm604, %v6872, %v6886
      %v6888 = vsel %vm353, %v6881, %v6882
      %v6889 = vsel %vm604, %v6874, %v6888
      %v6890 = vsel %vm353, %v6882, %v6883
      %v6891 = vsel %vm604, %v6876, %v6890
      %6896 = vst [vmem:[#allocation7 + $0x9c0] sm:$0xff] %v6885
      %6897 = vst [vmem:[#allocation7 + $0x9c8] sm:$0xff] %v6887
      %6898 = vst [vmem:[#allocation7 + $0x9d0] sm:$0xff] %v6889
      %6899 = vst [vmem:[#allocation7 + $0x9d8] sm:$0xff] %v6891
      %v6900 = vld [vmem:[#allocation4 + $0x8] sm:$0xff]
      %v6901 = vld [vmem:[#allocation4 + $0x10] sm:$0xff]
      %v6902 = vld [vmem:[#allocation4 + $0x18] sm:$0xff]
      %v6903 = vld [vmem:[#allocation4 + $0x20] sm:$0xff]
      %v6904 = vld [vmem:[#allocation4 + $0x28] sm:$0xf]
      %v6905 = vld [vmem:[#allocation4 + $0x34] sm:$0xff]
      %v6906 = vld [vmem:[#allocation4 + $0x3c] sm:$0xff]
      %v6907 = vld [vmem:[#allocation4 + $0x44] sm:$0xff]
      %v6908 = vld [vmem:[#allocation4 + $0x4c] sm:$0xff]
      %v6909 = vld [vmem:[#allocation4 + $0x54] sm:$0xf]
      %6920 = vrot.lane.b32.xlu0 %v6900, 107
      %v6921 = vpop.permute.xlu0 %6920
      %6922 = vrot.lane.b32.xlu0 %v6901, 107
      %v6923 = vpop.permute.xlu0 %6922
      %6924 = vrot.lane.b32.xlu0 %v6902, 107
      %v6925 = vpop.permute.xlu0 %6924
      %6926 = vrot.lane.b32.xlu0 %v6903, 107
      %v6927 = vpop.permute.xlu0 %6926
      %6928 = vrot.lane.b32.xlu0 %v6904, 107
      %v6929 = vpop.permute.xlu0 %6928
      %6930 = vrot.lane.b32.xlu0 %v6905, 107
      %v6931 = vpop.permute.xlu0 %6930
      %6932 = vrot.lane.b32.xlu0 %v6906, 107
      %v6933 = vpop.permute.xlu0 %6932
      %6934 = vrot.lane.b32.xlu0 %v6907, 107
      %v6935 = vpop.permute.xlu0 %6934
      %6936 = vrot.lane.b32.xlu0 %v6908, 107
      %v6937 = vpop.permute.xlu0 %6936
      %6938 = vrot.lane.b32.xlu0 %v6909, 107
      %v6939 = vpop.permute.xlu0 %6938
      %v6940 = vrot.slane %v6921, 4
      %v6941 = vrot.slane %v6923, 4
      %v6942 = vrot.slane %v6925, 4
      %v6943 = vrot.slane %v6927, 4
      %v6944 = vrot.slane %v6929, 4
      %v6945 = vrot.slane %v6931, 4
      %v6946 = vrot.slane %v6933, 4
      %v6947 = vrot.slane %v6935, 4
      %v6948 = vrot.slane %v6937, 4
      %v6949 = vrot.slane %v6939, 4
      %v6950 = vsel %vm353, %v6940, %v6941
      %v6951 = vsel %vm654, %v6921, %v6950
      %v6952 = vsel %vm353, %v6941, %v6942
      %v6953 = vsel %vm654, %v6923, %v6952
      %v6954 = vsel %vm353, %v6942, %v6943
      %v6955 = vsel %vm654, %v6925, %v6954
      %v6956 = vsel %vm353, %v6943, %v6944
      %v6957 = vsel %vm654, %v6927, %v6956
      %v6958 = vsel %vm353, %v6945, %v6946
      %v6959 = vsel %vm654, %v6931, %v6958
      %v6960 = vsel %vm353, %v6946, %v6947
      %v6961 = vsel %vm654, %v6933, %v6960
      %v6962 = vsel %vm353, %v6947, %v6948
      %v6963 = vsel %vm654, %v6935, %v6962
      %v6964 = vsel %vm353, %v6948, %v6949
      %v6965 = vsel %vm654, %v6937, %v6964
      %6974 = vst [vmem:[#allocation7 + $0x640] sm:$0xff] %v6951
      %6975 = vst [vmem:[#allocation7 + $0x648] sm:$0xff] %v6953
      %6976 = vst [vmem:[#allocation7 + $0x650] sm:$0xff] %v6955
      %6977 = vst [vmem:[#allocation7 + $0x658] sm:$0xff] %v6957
      %6978 = vst [vmem:[#allocation7 + $0x660] sm:$0xff] %v6959
      %6979 = vst [vmem:[#allocation7 + $0x668] sm:$0xff] %v6961
      %6980 = vst [vmem:[#allocation7 + $0x670] sm:$0xff] %v6963
      %6981 = vst [vmem:[#allocation7 + $0x678] sm:$0xff] %v6965
      %v6982 = vld [vmem:[#allocation2 + $0x8] sm:$0xff]
      %v6983 = vld [vmem:[#allocation2 + $0x10] sm:$0xff]
      %v6984 = vld [vmem:[#allocation2 + $0x18] sm:$0xff]
      %v6985 = vld [vmem:[#allocation2 + $0x20] sm:$0xff]
      %v6986 = vld [vmem:[#allocation2 + $0x28] sm:$0xf]
      %6992 = vrot.lane.b32.xlu0 %v6982, 107
      %v6993 = vpop.permute.xlu0 %6992
      %6994 = vrot.lane.b32.xlu0 %v6983, 107
      %v6995 = vpop.permute.xlu0 %6994
      %6996 = vrot.lane.b32.xlu0 %v6984, 107
      %v6997 = vpop.permute.xlu0 %6996
      %6998 = vrot.lane.b32.xlu0 %v6985, 107
      %v6999 = vpop.permute.xlu0 %6998
      %7000 = vrot.lane.b32.xlu0 %v6986, 107
      %v7001 = vpop.permute.xlu0 %7000
      %v7002 = vrot.slane %v6993, 4
      %v7003 = vrot.slane %v6995, 4
      %v7004 = vrot.slane %v6997, 4
      %v7005 = vrot.slane %v6999, 4
      %v7006 = vrot.slane %v7001, 4
      %v7007 = vsel %vm353, %v7002, %v7003
      %v7008 = vsel %vm654, %v6993, %v7007
      %v7009 = vsel %vm353, %v7003, %v7004
      %v7010 = vsel %vm654, %v6995, %v7009
      %v7011 = vsel %vm353, %v7004, %v7005
      %v7012 = vsel %vm654, %v6997, %v7011
      %v7013 = vsel %vm353, %v7005, %v7006
      %v7014 = vsel %vm654, %v6999, %v7013
      %7019 = vst [vmem:[#allocation7 + $0x9e0] sm:$0xff] %v7008
      %7020 = vst [vmem:[#allocation7 + $0x9e8] sm:$0xff] %v7010
      %7021 = vst [vmem:[#allocation7 + $0x9f0] sm:$0xff] %v7012
      %7022 = vst [vmem:[#allocation7 + $0x9f8] sm:$0xff] %v7014
      %v7023 = vld [vmem:[#allocation4 + $0x8] sm:$0xff]
      %v7024 = vld [vmem:[#allocation4 + $0x10] sm:$0xff]
      %v7025 = vld [vmem:[#allocation4 + $0x18] sm:$0xff]
      %v7026 = vld [vmem:[#allocation4 + $0x20] sm:$0xff]
      %v7027 = vld [vmem:[#allocation4 + $0x28] sm:$0xf]
      %v7028 = vld [vmem:[#allocation4 + $0x34] sm:$0xff]
      %v7029 = vld [vmem:[#allocation4 + $0x3c] sm:$0xff]
      %v7030 = vld [vmem:[#allocation4 + $0x44] sm:$0xff]
      %v7031 = vld [vmem:[#allocation4 + $0x4c] sm:$0xff]
      %v7032 = vld [vmem:[#allocation4 + $0x54] sm:$0xf]
      %7043 = vrot.lane.b32.xlu0 %v7023, 106
      %v7044 = vpop.permute.xlu0 %7043
      %7045 = vrot.lane.b32.xlu0 %v7024, 106
      %v7046 = vpop.permute.xlu0 %7045
      %7047 = vrot.lane.b32.xlu0 %v7025, 106
      %v7048 = vpop.permute.xlu0 %7047
      %7049 = vrot.lane.b32.xlu0 %v7026, 106
      %v7050 = vpop.permute.xlu0 %7049
      %7051 = vrot.lane.b32.xlu0 %v7027, 106
      %v7052 = vpop.permute.xlu0 %7051
      %7053 = vrot.lane.b32.xlu0 %v7028, 106
      %v7054 = vpop.permute.xlu0 %7053
      %7055 = vrot.lane.b32.xlu0 %v7029, 106
      %v7056 = vpop.permute.xlu0 %7055
      %7057 = vrot.lane.b32.xlu0 %v7030, 106
      %v7058 = vpop.permute.xlu0 %7057
      %7059 = vrot.lane.b32.xlu0 %v7031, 106
      %v7060 = vpop.permute.xlu0 %7059
      %7061 = vrot.lane.b32.xlu0 %v7032, 106
      %v7062 = vpop.permute.xlu0 %7061
      %v7063 = vrot.slane %v7044, 4
      %v7064 = vrot.slane %v7046, 4
      %v7065 = vrot.slane %v7048, 4
      %v7066 = vrot.slane %v7050, 4
      %v7067 = vrot.slane %v7052, 4
      %v7068 = vrot.slane %v7054, 4
      %v7069 = vrot.slane %v7056, 4
      %v7070 = vrot.slane %v7058, 4
      %v7071 = vrot.slane %v7060, 4
      %v7072 = vrot.slane %v7062, 4
      %v7073 = vsel %vm353, %v7063, %v7064
      %v7074 = vsel %vm703, %v7044, %v7073
      %v7075 = vsel %vm353, %v7064, %v7065
      %v7076 = vsel %vm703, %v7046, %v7075
      %v7077 = vsel %vm353, %v7065, %v7066
      %v7078 = vsel %vm703, %v7048, %v7077
      %v7079 = vsel %vm353, %v7066, %v7067
      %v7080 = vsel %vm703, %v7050, %v7079
      %v7081 = vsel %vm353, %v7068, %v7069
      %v7082 = vsel %vm703, %v7054, %v7081
      %v7083 = vsel %vm353, %v7069, %v7070
      %v7084 = vsel %vm703, %v7056, %v7083
      %v7085 = vsel %vm353, %v7070, %v7071
      %v7086 = vsel %vm703, %v7058, %v7085
      %v7087 = vsel %vm353, %v7071, %v7072
      %v7088 = vsel %vm703, %v7060, %v7087
      %7097 = vst [vmem:[#allocation7 + $0x680] sm:$0xff] %v7074
      %7098 = vst [vmem:[#allocation7 + $0x688] sm:$0xff] %v7076
      %7099 = vst [vmem:[#allocation7 + $0x690] sm:$0xff] %v7078
      %7100 = vst [vmem:[#allocation7 + $0x698] sm:$0xff] %v7080
      %7101 = vst [vmem:[#allocation7 + $0x6a0] sm:$0xff] %v7082
      %7102 = vst [vmem:[#allocation7 + $0x6a8] sm:$0xff] %v7084
      %7103 = vst [vmem:[#allocation7 + $0x6b0] sm:$0xff] %v7086
      %7104 = vst [vmem:[#allocation7 + $0x6b8] sm:$0xff] %v7088
      %v7105 = vld [vmem:[#allocation2 + $0x8] sm:$0xff]
      %v7106 = vld [vmem:[#allocation2 + $0x10] sm:$0xff]
      %v7107 = vld [vmem:[#allocation2 + $0x18] sm:$0xff]
      %v7108 = vld [vmem:[#allocation2 + $0x20] sm:$0xff]
      %v7109 = vld [vmem:[#allocation2 + $0x28] sm:$0xf]
      %7115 = vrot.lane.b32.xlu0 %v7105, 106
      %v7116 = vpop.permute.xlu0 %7115
      %7117 = vrot.lane.b32.xlu0 %v7106, 106
      %v7118 = vpop.permute.xlu0 %7117
      %7119 = vrot.lane.b32.xlu0 %v7107, 106
      %v7120 = vpop.permute.xlu0 %7119
      %7121 = vrot.lane.b32.xlu0 %v7108, 106
      %v7122 = vpop.permute.xlu0 %7121
      %7123 = vrot.lane.b32.xlu0 %v7109, 106
      %v7124 = vpop.permute.xlu0 %7123
      %v7125 = vrot.slane %v7116, 4
      %v7126 = vrot.slane %v7118, 4
      %v7127 = vrot.slane %v7120, 4
      %v7128 = vrot.slane %v7122, 4
      %v7129 = vrot.slane %v7124, 4
      %v7130 = vsel %vm353, %v7125, %v7126
      %v7131 = vsel %vm703, %v7116, %v7130
      %v7132 = vsel %vm353, %v7126, %v7127
      %v7133 = vsel %vm703, %v7118, %v7132
      %v7134 = vsel %vm353, %v7127, %v7128
      %v7135 = vsel %vm703, %v7120, %v7134
      %v7136 = vsel %vm353, %v7128, %v7129
      %v7137 = vsel %vm703, %v7122, %v7136
      %7142 = vst [vmem:[#allocation7 + $0xa00] sm:$0xff] %v7131
      %7143 = vst [vmem:[#allocation7 + $0xa08] sm:$0xff] %v7133
      %7144 = vst [vmem:[#allocation7 + $0xa10] sm:$0xff] %v7135
      %7145 = vst [vmem:[#allocation7 + $0xa18] sm:$0xff] %v7137
      %v7146 = vld [vmem:[#allocation7 + $0xa20] sm:$0x11]
      %v7147 = vsel %vm3261, 1065369472, %v7146
      %7148 = vst [vmem:[#allocation7 + $0xa20] sm:$0x11] %v7147
      %v7149 = vld [vmem:[#allocation7 + $0xa28] sm:$0x11]
      %v7150 = vsel %vm3261, 1065369472, %v7149
      %7151 = vst [vmem:[#allocation7 + $0xa28] sm:$0x11] %v7150
      %v7152 = vld [vmem:[#allocation7 + $0xa30] sm:$0x11]
      %v7153 = vsel %vm3261, 1065369472, %v7152
      %7154 = vst [vmem:[#allocation7 + $0xa30] sm:$0x11] %v7153
      %v7155 = vld [vmem:[#allocation7 + $0xa38] sm:$0x11]
      %v7156 = vsel %vm3261, 1065369472, %v7155
      %7157 = vst [vmem:[#allocation7 + $0xa38] sm:$0x11] %v7156
      %v7158 = vld [vmem:[%s3] sm:$0xff]
      %v7159 = vld [vmem:[%s3 + $0x8] sm:$0xff]
      %v7160 = vld [vmem:[%s3 + $0x10] sm:$0xff]
      %v7161 = vld [vmem:[#allocation7] sm:$0xff]
      %v7162 = vld [vmem:[#allocation7 + $0x8] sm:$0xff]
      %v7163 = vld [vmem:[#allocation7 + $0x10] sm:$0xff]
      %v7164 = vld [vmem:[#allocation7 + $0x18] sm:$0xff]
      %v7165 = vld [vmem:[#allocation7 + $0x20] sm:$0xff]
      %v7166 = vld [vmem:[#allocation7 + $0x28] sm:$0xff]
      %v7167 = vld [vmem:[#allocation7 + $0x30] sm:$0xff]
      %v7168 = vld [vmem:[#allocation7 + $0x38] sm:$0xff]
      %v7169 = vld [vmem:[#allocation7 + $0x40] sm:$0xff]
      %v7170 = vld [vmem:[#allocation7 + $0x48] sm:$0xff]
      %v7171 = vld [vmem:[#allocation7 + $0x50] sm:$0xff]
      %v7172 = vld [vmem:[#allocation7 + $0x58] sm:$0xff]
      %v7173 = vld [vmem:[#allocation7 + $0x60] sm:$0xff]
      %v7174 = vld [vmem:[#allocation7 + $0x68] sm:$0xff]
      %v7175 = vld [vmem:[#allocation7 + $0x70] sm:$0xff]
      %v7176 = vld [vmem:[#allocation7 + $0x78] sm:$0xff]
      %v7177 = vld [vmem:[#allocation7 + $0x80] sm:$0xff]
      %v7178 = vld [vmem:[#allocation7 + $0x88] sm:$0xff]
      %v7179 = vld [vmem:[#allocation7 + $0x90] sm:$0xff]
      %v7180 = vld [vmem:[#allocation7 + $0x98] sm:$0xff]
      %v7181 = vld [vmem:[#allocation7 + $0xa0] sm:$0xff]
      %v7182 = vld [vmem:[#allocation7 + $0xa8] sm:$0xff]
      %v7183 = vld [vmem:[#allocation7 + $0xb0] sm:$0xff]
      %v7184 = vld [vmem:[#allocation7 + $0xb8] sm:$0xff]
      %v7185 = vld [vmem:[#allocation7 + $0xc0] sm:$0xff]
      %v7186 = vld [vmem:[#allocation7 + $0xc8] sm:$0xff]
      %v7187 = vld [vmem:[#allocation7 + $0xd0] sm:$0xff]
      %v7188 = vld [vmem:[#allocation7 + $0xd8] sm:$0xff]
      %v7189 = vld [vmem:[#allocation7 + $0xe0] sm:$0xff]
      %v7190 = vld [vmem:[#allocation7 + $0xe8] sm:$0xff]
      %v7191 = vld [vmem:[#allocation7 + $0xf0] sm:$0xff]
      %v7192 = vld [vmem:[#allocation7 + $0xf8] sm:$0xff]
      %v7193 = vld [vmem:[#allocation7 + $0x100] sm:$0xff]
      %v7194 = vld [vmem:[#allocation7 + $0x108] sm:$0xff]
      %v7195 = vld [vmem:[#allocation7 + $0x110] sm:$0xff]
      %v7196 = vld [vmem:[#allocation7 + $0x118] sm:$0xff]
      %v7197 = vld [vmem:[#allocation7 + $0x120] sm:$0xff]
      %v7198 = vld [vmem:[#allocation7 + $0x128] sm:$0xff]
      %v7199 = vld [vmem:[#allocation7 + $0x130] sm:$0xff]
      %v7200 = vld [vmem:[#allocation7 + $0x138] sm:$0xff]
      %v7201 = vld [vmem:[#allocation7 + $0x140] sm:$0xff]
      %v7202 = vld [vmem:[#allocation7 + $0x148] sm:$0xff]
      %v7203 = vld [vmem:[#allocation7 + $0x150] sm:$0xff]
      %v7204 = vld [vmem:[#allocation7 + $0x158] sm:$0xff]
      %v7205 = vld [vmem:[#allocation7 + $0x160] sm:$0xff]
      %v7206 = vld [vmem:[#allocation7 + $0x168] sm:$0xff]
      %v7207 = vld [vmem:[#allocation7 + $0x170] sm:$0xff]
      %v7208 = vld [vmem:[#allocation7 + $0x178] sm:$0xff]
      %v7209 = vld [vmem:[#allocation7 + $0x180] sm:$0xff]
      %v7210 = vld [vmem:[#allocation7 + $0x188] sm:$0xff]
      %v7211 = vld [vmem:[#allocation7 + $0x190] sm:$0xff]
      %v7212 = vld [vmem:[#allocation7 + $0x198] sm:$0xff]
      %v7213 = vld [vmem:[#allocation7 + $0x1a0] sm:$0xff]
      %v7214 = vld [vmem:[#allocation7 + $0x1a8] sm:$0xff]
      %v7215 = vld [vmem:[#allocation7 + $0x1b0] sm:$0xff]
      %v7216 = vld [vmem:[#allocation7 + $0x1b8] sm:$0xff]
      %v7217 = vld [vmem:[#allocation7 + $0x1c0] sm:$0xff]
      %v7218 = vld [vmem:[#allocation7 + $0x1c8] sm:$0xff]
      %v7219 = vld [vmem:[#allocation7 + $0x1d0] sm:$0xff]
      %v7220 = vld [vmem:[#allocation7 + $0x1d8] sm:$0xff]
      %v7221 = vld [vmem:[#allocation7 + $0x1e0] sm:$0xff]
      %v7222 = vld [vmem:[#allocation7 + $0x1e8] sm:$0xff]
      %v7223 = vld [vmem:[#allocation7 + $0x1f0] sm:$0xff]
      %v7224 = vld [vmem:[#allocation7 + $0x1f8] sm:$0xff]
      %v7225 = vld [vmem:[#allocation7 + $0x200] sm:$0xff]
      %v7226 = vld [vmem:[#allocation7 + $0x208] sm:$0xff]
      %v7227 = vld [vmem:[#allocation7 + $0x210] sm:$0xff]
      %v7228 = vld [vmem:[#allocation7 + $0x218] sm:$0xff]
      %v7229 = vld [vmem:[#allocation7 + $0x220] sm:$0xff]
      %v7230 = vld [vmem:[#allocation7 + $0x228] sm:$0xff]
      %v7231 = vld [vmem:[#allocation7 + $0x230] sm:$0xff]
      %v7232 = vld [vmem:[#allocation7 + $0x238] sm:$0xff]
      %v7233 = vld [vmem:[#allocation7 + $0x240] sm:$0xff]
      %v7234 = vld [vmem:[#allocation7 + $0x248] sm:$0xff]
      %v7235 = vld [vmem:[#allocation7 + $0x250] sm:$0xff]
      %v7236 = vld [vmem:[#allocation7 + $0x258] sm:$0xff]
      %v7237 = vld [vmem:[#allocation7 + $0x260] sm:$0xff]
      %v7238 = vld [vmem:[#allocation7 + $0x268] sm:$0xff]
      %v7239 = vld [vmem:[#allocation7 + $0x270] sm:$0xff]
      %v7240 = vld [vmem:[#allocation7 + $0x278] sm:$0xff]
      %v7241 = vld [vmem:[#allocation7 + $0x280] sm:$0xff]
      %v7242 = vld [vmem:[#allocation7 + $0x288] sm:$0xff]
      %v7243 = vld [vmem:[#allocation7 + $0x290] sm:$0xff]
      %v7244 = vld [vmem:[#allocation7 + $0x298] sm:$0xff]
      %v7245 = vld [vmem:[#allocation7 + $0x2a0] sm:$0xff]
      %v7246 = vld [vmem:[#allocation7 + $0x2a8] sm:$0xff]
      %v7247 = vld [vmem:[#allocation7 + $0x2b0] sm:$0xff]
      %v7248 = vld [vmem:[#allocation7 + $0x2b8] sm:$0xff]
      %v7249 = vld [vmem:[#allocation7 + $0x2c0] sm:$0xff]
      %v7250 = vld [vmem:[#allocation7 + $0x2c8] sm:$0xff]
      %v7251 = vld [vmem:[#allocation7 + $0x2d0] sm:$0xff]
      %v7252 = vld [vmem:[#allocation7 + $0x2d8] sm:$0xff]
      %v7253 = vld [vmem:[#allocation7 + $0x2e0] sm:$0xff]
      %v7254 = vld [vmem:[#allocation7 + $0x2e8] sm:$0xff]
      %v7255 = vld [vmem:[#allocation7 + $0x2f0] sm:$0xff]
      %v7256 = vld [vmem:[#allocation7 + $0x2f8] sm:$0xff]
      %v7257 = vld [vmem:[#allocation7 + $0x300] sm:$0xff]
      %v7258 = vld [vmem:[#allocation7 + $0x308] sm:$0xff]
      %v7259 = vld [vmem:[#allocation7 + $0x310] sm:$0xff]
      %v7260 = vld [vmem:[#allocation7 + $0x318] sm:$0xff]
      %v7261 = vld [vmem:[#allocation7 + $0x320] sm:$0xff]
      %v7262 = vld [vmem:[#allocation7 + $0x328] sm:$0xff]
      %v7263 = vld [vmem:[#allocation7 + $0x330] sm:$0xff]
      %v7264 = vld [vmem:[#allocation7 + $0x338] sm:$0xff]
      %v7265 = vld [vmem:[#allocation7 + $0x340] sm:$0xff]
      %v7266 = vld [vmem:[#allocation7 + $0x348] sm:$0xff]
      %v7267 = vld [vmem:[#allocation7 + $0x350] sm:$0xff]
      %v7268 = vld [vmem:[#allocation7 + $0x358] sm:$0xff]
      %v7269 = vld [vmem:[#allocation7 + $0x360] sm:$0xff]
      %v7270 = vld [vmem:[#allocation7 + $0x368] sm:$0xff]
      %v7271 = vld [vmem:[#allocation7 + $0x370] sm:$0xff]
      %v7272 = vld [vmem:[#allocation7 + $0x378] sm:$0xff]
      %v7273 = vld [vmem:[#allocation7 + $0x380] sm:$0xff]
      %v7274 = vld [vmem:[#allocation7 + $0x388] sm:$0xff]
      %v7275 = vld [vmem:[#allocation7 + $0x390] sm:$0xff]
      %v7276 = vld [vmem:[#allocation7 + $0x398] sm:$0xff]
      %v7277 = vld [vmem:[#allocation7 + $0x3a0] sm:$0xff]
      %v7278 = vld [vmem:[#allocation7 + $0x3a8] sm:$0xff]
      %v7279 = vld [vmem:[#allocation7 + $0x3b0] sm:$0xff]
      %v7280 = vld [vmem:[#allocation7 + $0x3b8] sm:$0xff]
      %v7281 = vld [vmem:[#allocation7 + $0x3c0] sm:$0xff]
      %v7282 = vld [vmem:[#allocation7 + $0x3c8] sm:$0xff]
      %v7283 = vld [vmem:[#allocation7 + $0x3d0] sm:$0xff]
      %v7284 = vld [vmem:[#allocation7 + $0x3d8] sm:$0xff]
      %v7285 = vld [vmem:[#allocation7 + $0x3e0] sm:$0xff]
      %v7286 = vld [vmem:[#allocation7 + $0x3e8] sm:$0xff]
      %v7287 = vld [vmem:[#allocation7 + $0x3f0] sm:$0xff]
      %v7288 = vld [vmem:[#allocation7 + $0x3f8] sm:$0xff]
      %v7289 = vld [vmem:[#allocation7 + $0x400] sm:$0xff]
      %v7290 = vld [vmem:[#allocation7 + $0x408] sm:$0xff]
      %v7291 = vld [vmem:[#allocation7 + $0x410] sm:$0xff]
      %v7292 = vld [vmem:[#allocation7 + $0x418] sm:$0xff]
      %v7293 = vld [vmem:[#allocation7 + $0x420] sm:$0xff]
      %v7294 = vld [vmem:[#allocation7 + $0x428] sm:$0xff]
      %v7295 = vld [vmem:[#allocation7 + $0x430] sm:$0xff]
      %v7296 = vld [vmem:[#allocation7 + $0x438] sm:$0xff]
      %v7297 = vld [vmem:[#allocation7 + $0x440] sm:$0xff]
      %v7298 = vld [vmem:[#allocation7 + $0x448] sm:$0xff]
      %v7299 = vld [vmem:[#allocation7 + $0x450] sm:$0xff]
      %v7300 = vld [vmem:[#allocation7 + $0x458] sm:$0xff]
      %v7301 = vld [vmem:[#allocation7 + $0x460] sm:$0xff]
      %v7302 = vld [vmem:[#allocation7 + $0x468] sm:$0xff]
      %v7303 = vld [vmem:[#allocation7 + $0x470] sm:$0xff]
      %v7304 = vld [vmem:[#allocation7 + $0x478] sm:$0xff]
      %v7305 = vld [vmem:[#allocation7 + $0x480] sm:$0xff]
      %v7306 = vld [vmem:[#allocation7 + $0x488] sm:$0xff]
      %v7307 = vld [vmem:[#allocation7 + $0x490] sm:$0xff]
      %v7308 = vld [vmem:[#allocation7 + $0x498] sm:$0xff]
      %v7309 = vld [vmem:[#allocation7 + $0x4a0] sm:$0xff]
      %v7310 = vld [vmem:[#allocation7 + $0x4a8] sm:$0xff]
      %v7311 = vld [vmem:[#allocation7 + $0x4b0] sm:$0xff]
      %v7312 = vld [vmem:[#allocation7 + $0x4b8] sm:$0xff]
      %v7313 = vld [vmem:[#allocation7 + $0x4c0] sm:$0xff]
      %v7314 = vld [vmem:[#allocation7 + $0x4c8] sm:$0xff]
      %v7315 = vld [vmem:[#allocation7 + $0x4d0] sm:$0xff]
      %v7316 = vld [vmem:[#allocation7 + $0x4d8] sm:$0xff]
      %v7317 = vld [vmem:[#allocation7 + $0x4e0] sm:$0xff]
      %v7318 = vld [vmem:[#allocation7 + $0x4e8] sm:$0xff]
      %v7319 = vld [vmem:[#allocation7 + $0x4f0] sm:$0xff]
      %v7320 = vld [vmem:[#allocation7 + $0x4f8] sm:$0xff]
      %v7321 = vld [vmem:[#allocation7 + $0x500] sm:$0xff]
      %v7322 = vld [vmem:[#allocation7 + $0x508] sm:$0xff]
      %v7323 = vld [vmem:[#allocation7 + $0x510] sm:$0xff]
      %v7324 = vld [vmem:[#allocation7 + $0x518] sm:$0xff]
      %v7325 = vld [vmem:[#allocation7 + $0x520] sm:$0xff]
      %v7326 = vld [vmem:[#allocation7 + $0x528] sm:$0xff]
      %v7327 = vld [vmem:[#allocation7 + $0x530] sm:$0xff]
      %v7328 = vld [vmem:[#allocation7 + $0x538] sm:$0xff]
      %v7329 = vld [vmem:[#allocation7 + $0x540] sm:$0xff]
      %v7330 = vld [vmem:[#allocation7 + $0x548] sm:$0xff]
      %v7331 = vld [vmem:[#allocation7 + $0x550] sm:$0xff]
      %v7332 = vld [vmem:[#allocation7 + $0x558] sm:$0xff]
      %v7333 = vld [vmem:[#allocation7 + $0x560] sm:$0xff]
      %v7334 = vld [vmem:[#allocation7 + $0x568] sm:$0xff]
      %v7335 = vld [vmem:[#allocation7 + $0x570] sm:$0xff]
      %v7336 = vld [vmem:[#allocation7 + $0x578] sm:$0xff]
      %v7337 = vld [vmem:[#allocation7 + $0x580] sm:$0xff]
      %v7338 = vld [vmem:[#allocation7 + $0x588] sm:$0xff]
      %v7339 = vld [vmem:[#allocation7 + $0x590] sm:$0xff]
      %v7340 = vld [vmem:[#allocation7 + $0x598] sm:$0xff]
      %v7341 = vld [vmem:[#allocation7 + $0x5a0] sm:$0xff]
      %v7342 = vld [vmem:[#allocation7 + $0x5a8] sm:$0xff]
      %v7343 = vld [vmem:[#allocation7 + $0x5b0] sm:$0xff]
      %v7344 = vld [vmem:[#allocation7 + $0x5b8] sm:$0xff]
      %v7345 = vld [vmem:[#allocation7 + $0x5c0] sm:$0xff]
      %v7346 = vld [vmem:[#allocation7 + $0x5c8] sm:$0xff]
      %v7347 = vld [vmem:[#allocation7 + $0x5d0] sm:$0xff]
      %v7348 = vld [vmem:[#allocation7 + $0x5d8] sm:$0xff]
      %v7349 = vld [vmem:[#allocation7 + $0x5e0] sm:$0xff]
      %v7350 = vld [vmem:[#allocation7 + $0x5e8] sm:$0xff]
      %v7351 = vld [vmem:[#allocation7 + $0x5f0] sm:$0xff]
      %v7352 = vld [vmem:[#allocation7 + $0x5f8] sm:$0xff]
      %v7353 = vld [vmem:[#allocation7 + $0x600] sm:$0xff]
      %v7354 = vld [vmem:[#allocation7 + $0x608] sm:$0xff]
      %v7355 = vld [vmem:[#allocation7 + $0x610] sm:$0xff]
      %v7356 = vld [vmem:[#allocation7 + $0x618] sm:$0xff]
      %v7357 = vld [vmem:[#allocation7 + $0x620] sm:$0xff]
      %v7358 = vld [vmem:[#allocation7 + $0x628] sm:$0xff]
      %v7359 = vld [vmem:[#allocation7 + $0x630] sm:$0xff]
      %v7360 = vld [vmem:[#allocation7 + $0x638] sm:$0xff]
      %v7361 = vld [vmem:[#allocation7 + $0x640] sm:$0xff]
      %v7362 = vld [vmem:[#allocation7 + $0x648] sm:$0xff]
      %v7363 = vld [vmem:[#allocation7 + $0x650] sm:$0xff]
      %v7364 = vld [vmem:[#allocation7 + $0x658] sm:$0xff]
      %v7365 = vld [vmem:[#allocation7 + $0x660] sm:$0xff]
      %v7366 = vld [vmem:[#allocation7 + $0x668] sm:$0xff]
      %v7367 = vld [vmem:[#allocation7 + $0x670] sm:$0xff]
      %v7368 = vld [vmem:[#allocation7 + $0x678] sm:$0xff]
      %v7369 = vld [vmem:[#allocation7 + $0x680] sm:$0xff]
      %v7370 = vld [vmem:[#allocation7 + $0x688] sm:$0xff]
      %v7371 = vld [vmem:[#allocation7 + $0x690] sm:$0xff]
      %v7372 = vld [vmem:[#allocation7 + $0x698] sm:$0xff]
      %v7373 = vld [vmem:[#allocation7 + $0x6a0] sm:$0xff]
      %v7374 = vld [vmem:[#allocation7 + $0x6a8] sm:$0xff]
      %v7375 = vld [vmem:[#allocation7 + $0x6b0] sm:$0xff]
      %v7376 = vld [vmem:[#allocation7 + $0x6b8] sm:$0xff]
      %v7377 = vld [vmem:[#allocation7 + $0x6c0] sm:$0xff]
      %v7378 = vld [vmem:[#allocation7 + $0x6c8] sm:$0xff]
      %v7379 = vld [vmem:[#allocation7 + $0x6d0] sm:$0xff]
      %v7380 = vld [vmem:[#allocation7 + $0x6d8] sm:$0xff]
      %v7381 = vld [vmem:[#allocation7 + $0x6e0] sm:$0xff]
      %v7382 = vld [vmem:[#allocation7 + $0x6e8] sm:$0xff]
      %v7383 = vld [vmem:[#allocation7 + $0x6f0] sm:$0xff]
      %v7384 = vld [vmem:[#allocation7 + $0x6f8] sm:$0xff]
      %v7385 = vld [vmem:[#allocation7 + $0x700] sm:$0xff]
      %v7386 = vld [vmem:[#allocation7 + $0x708] sm:$0xff]
      %v7387 = vld [vmem:[#allocation7 + $0x710] sm:$0xff]
      %v7388 = vld [vmem:[#allocation7 + $0x718] sm:$0xff]
      %v7389 = vld [vmem:[#allocation7 + $0x720] sm:$0xff]
      %v7390 = vld [vmem:[#allocation7 + $0x728] sm:$0xff]
      %v7391 = vld [vmem:[#allocation7 + $0x730] sm:$0xff]
      %v7392 = vld [vmem:[#allocation7 + $0x738] sm:$0xff]
      %v7393 = vld [vmem:[#allocation7 + $0x740] sm:$0xff]
      %v7394 = vld [vmem:[#allocation7 + $0x748] sm:$0xff]
      %v7395 = vld [vmem:[#allocation7 + $0x750] sm:$0xff]
      %v7396 = vld [vmem:[#allocation7 + $0x758] sm:$0xff]
      %v7397 = vld [vmem:[#allocation7 + $0x760] sm:$0xff]
      %v7398 = vld [vmem:[#allocation7 + $0x768] sm:$0xff]
      %v7399 = vld [vmem:[#allocation7 + $0x770] sm:$0xff]
      %v7400 = vld [vmem:[#allocation7 + $0x778] sm:$0xff]
      %v7401 = vld [vmem:[#allocation7 + $0x780] sm:$0xff]
      %v7402 = vld [vmem:[#allocation7 + $0x788] sm:$0xff]
      %v7403 = vld [vmem:[#allocation7 + $0x790] sm:$0xff]
      %v7404 = vld [vmem:[#allocation7 + $0x798] sm:$0xff]
      %v7405 = vld [vmem:[#allocation7 + $0x7a0] sm:$0xff]
      %v7406 = vld [vmem:[#allocation7 + $0x7a8] sm:$0xff]
      %v7407 = vld [vmem:[#allocation7 + $0x7b0] sm:$0xff]
      %v7408 = vld [vmem:[#allocation7 + $0x7b8] sm:$0xff]
      %v7409 = vld [vmem:[#allocation7 + $0x7c0] sm:$0xff]
      %v7410 = vld [vmem:[#allocation7 + $0x7c8] sm:$0xff]
      %v7411 = vld [vmem:[#allocation7 + $0x7d0] sm:$0xff]
      %v7412 = vld [vmem:[#allocation7 + $0x7d8] sm:$0xff]
      %v7413 = vld [vmem:[#allocation7 + $0x7e0] sm:$0xff]
      %v7414 = vld [vmem:[#allocation7 + $0x7e8] sm:$0xff]
      %v7415 = vld [vmem:[#allocation7 + $0x7f0] sm:$0xff]
      %v7416 = vld [vmem:[#allocation7 + $0x7f8] sm:$0xff]
      %v7417 = vld [vmem:[#allocation7 + $0x800] sm:$0xff]
      %v7418 = vld [vmem:[#allocation7 + $0x808] sm:$0xff]
      %v7419 = vld [vmem:[#allocation7 + $0x810] sm:$0xff]
      %v7420 = vld [vmem:[#allocation7 + $0x818] sm:$0xff]
      %v7421 = vld [vmem:[#allocation7 + $0x820] sm:$0xff]
      %v7422 = vld [vmem:[#allocation7 + $0x828] sm:$0xff]
      %v7423 = vld [vmem:[#allocation7 + $0x830] sm:$0xff]
      %v7424 = vld [vmem:[#allocation7 + $0x838] sm:$0xff]
      %v7425 = vld [vmem:[#allocation7 + $0x840] sm:$0xff]
      %v7426 = vld [vmem:[#allocation7 + $0x848] sm:$0xff]
      %v7427 = vld [vmem:[#allocation7 + $0x850] sm:$0xff]
      %v7428 = vld [vmem:[#allocation7 + $0x858] sm:$0xff]
      %v7429 = vld [vmem:[#allocation7 + $0x860] sm:$0xff]
      %v7430 = vld [vmem:[#allocation7 + $0x868] sm:$0xff]
      %v7431 = vld [vmem:[#allocation7 + $0x870] sm:$0xff]
      %v7432 = vld [vmem:[#allocation7 + $0x878] sm:$0xff]
      %v7433 = vld [vmem:[#allocation7 + $0x880] sm:$0xff]
      %v7434 = vld [vmem:[#allocation7 + $0x888] sm:$0xff]
      %v7435 = vld [vmem:[#allocation7 + $0x890] sm:$0xff]
      %v7436 = vld [vmem:[#allocation7 + $0x898] sm:$0xff]
      %v7437 = vld [vmem:[#allocation7 + $0x8a0] sm:$0xff]
      %v7438 = vld [vmem:[#allocation7 + $0x8a8] sm:$0xff]
      %v7439 = vld [vmem:[#allocation7 + $0x8b0] sm:$0xff]
      %v7440 = vld [vmem:[#allocation7 + $0x8b8] sm:$0xff]
      %v7441 = vld [vmem:[#allocation7 + $0x8c0] sm:$0xff]
      %v7442 = vld [vmem:[#allocation7 + $0x8c8] sm:$0xff]
      %v7443 = vld [vmem:[#allocation7 + $0x8d0] sm:$0xff]
      %v7444 = vld [vmem:[#allocation7 + $0x8d8] sm:$0xff]
      %v7445 = vld [vmem:[#allocation7 + $0x8e0] sm:$0xff]
      %v7446 = vld [vmem:[#allocation7 + $0x8e8] sm:$0xff]
      %v7447 = vld [vmem:[#allocation7 + $0x8f0] sm:$0xff]
      %v7448 = vld [vmem:[#allocation7 + $0x8f8] sm:$0xff]
      %v7449 = vld [vmem:[#allocation7 + $0x900] sm:$0xff]
      %v7450 = vld [vmem:[#allocation7 + $0x908] sm:$0xff]
      %v7451 = vld [vmem:[#allocation7 + $0x910] sm:$0xff]
      %v7452 = vld [vmem:[#allocation7 + $0x918] sm:$0xff]
      %v7453 = vld [vmem:[#allocation7 + $0x920] sm:$0xff]
      %v7454 = vld [vmem:[#allocation7 + $0x928] sm:$0xff]
      %v7455 = vld [vmem:[#allocation7 + $0x930] sm:$0xff]
      %v7456 = vld [vmem:[#allocation7 + $0x938] sm:$0xff]
      %v7457 = vld [vmem:[#allocation7 + $0x940] sm:$0xff]
      %v7458 = vld [vmem:[#allocation7 + $0x948] sm:$0xff]
      %v7459 = vld [vmem:[#allocation7 + $0x950] sm:$0xff]
      %v7460 = vld [vmem:[#allocation7 + $0x958] sm:$0xff]
      %v7461 = vld [vmem:[#allocation7 + $0x960] sm:$0xff]
      %v7462 = vld [vmem:[#allocation7 + $0x968] sm:$0xff]
      %v7463 = vld [vmem:[#allocation7 + $0x970] sm:$0xff]
      %v7464 = vld [vmem:[#allocation7 + $0x978] sm:$0xff]
      %v7465 = vld [vmem:[#allocation7 + $0x980] sm:$0xff]
      %v7466 = vld [vmem:[#allocation7 + $0x988] sm:$0xff]
      %v7467 = vld [vmem:[#allocation7 + $0x990] sm:$0xff]
      %v7468 = vld [vmem:[#allocation7 + $0x998] sm:$0xff]
      %v7469 = vld [vmem:[#allocation7 + $0x9a0] sm:$0xff]
      %v7470 = vld [vmem:[#allocation7 + $0x9a8] sm:$0xff]
      %v7471 = vld [vmem:[#allocation7 + $0x9b0] sm:$0xff]
      %v7472 = vld [vmem:[#allocation7 + $0x9b8] sm:$0xff]
      %v7473 = vld [vmem:[#allocation7 + $0x9c0] sm:$0xff]
      %v7474 = vld [vmem:[#allocation7 + $0x9c8] sm:$0xff]
      %v7475 = vld [vmem:[#allocation7 + $0x9d0] sm:$0xff]
      %v7476 = vld [vmem:[#allocation7 + $0x9d8] sm:$0xff]
      %v7477 = vld [vmem:[#allocation7 + $0x9e0] sm:$0xff]
      %v7478 = vld [vmem:[#allocation7 + $0x9e8] sm:$0xff]
      %v7479 = vld [vmem:[#allocation7 + $0x9f0] sm:$0xff]
      %v7480 = vld [vmem:[#allocation7 + $0x9f8] sm:$0xff]
      %v7481 = vld [vmem:[#allocation7 + $0xa00] sm:$0xff]
      %v7482 = vld [vmem:[#allocation7 + $0xa08] sm:$0xff]
      %v7483 = vld [vmem:[#allocation7 + $0xa10] sm:$0xff]
      %v7484 = vld [vmem:[#allocation7 + $0xa18] sm:$0xff]
      %v7485 = vld [vmem:[#allocation7 + $0xa20] sm:$0x11]
      %v7486 = vld [vmem:[#allocation7 + $0xa28] sm:$0x11]
      %v7487 = vld [vmem:[#allocation7 + $0xa30] sm:$0x11]
      %v7488 = vld [vmem:[#allocation7 + $0xa38] sm:$0x11]
      %v7492 = vunpack.c.l.b16 %v7158
      %v7493 = vunpack.c.h.b16 %v7158
      %v7494 = vunpack.c.l.b16 %v7159
      %v7495 = vunpack.c.h.b16 %v7159
      %v7496 = vunpack.c.l.b16 %v7160
      %v7497 = vunpack.c.h.b16 %v7160
      %v7498 = vpack.c.b16 %v7492, %v7492
      %v7499 = vpack.c.b16 %v7493, %v7493
      %v7500 = vpack.c.b16 %v7494, %v7494
      %v7501 = vpack.c.b16 %v7495, %v7495
      %v7502 = vpack.c.b16 %v7496, %v7496
      %v7503 = vpack.c.b16 %v7497, %v7497
      %v7837 = vunpack.c.l.b16 %v7161
      %v7838 = vunpack.c.h.b16 %v7161
      %v7839 = vunpack.c.l.b16 %v7162
      %v7840 = vunpack.c.h.b16 %v7162
      %v7841 = vunpack.c.l.b16 %v7163
      %v7842 = vunpack.c.h.b16 %v7163
      %v7843 = vunpack.c.l.b16 %v7164
      %v7844 = vunpack.c.h.b16 %v7164
      %v7845 = vunpack.c.l.b16 %v7165
      %v7846 = vunpack.c.h.b16 %v7165
      %v7847 = vunpack.c.l.b16 %v7166
      %v7848 = vunpack.c.h.b16 %v7166
      %v7849 = vunpack.c.l.b16 %v7167
      %v7850 = vunpack.c.h.b16 %v7167
      %v7851 = vunpack.c.l.b16 %v7168
      %v7852 = vunpack.c.h.b16 %v7168
      %v7853 = vunpack.c.l.b16 %v7169
      %v7854 = vunpack.c.h.b16 %v7169
      %v7855 = vunpack.c.l.b16 %v7170
      %v7856 = vunpack.c.h.b16 %v7170
      %v7857 = vunpack.c.l.b16 %v7171
      %v7858 = vunpack.c.h.b16 %v7171
      %v7859 = vunpack.c.l.b16 %v7172
      %v7860 = vunpack.c.h.b16 %v7172
      %v7861 = vunpack.c.l.b16 %v7173
      %v7862 = vunpack.c.h.b16 %v7173
      %v7863 = vunpack.c.l.b16 %v7174
      %v7864 = vunpack.c.h.b16 %v7174
      %v7865 = vunpack.c.l.b16 %v7175
      %v7866 = vunpack.c.h.b16 %v7175
      %v7867 = vunpack.c.l.b16 %v7176
      %v7868 = vunpack.c.h.b16 %v7176
      %v7869 = vunpack.c.l.b16 %v7177
      %v7870 = vunpack.c.h.b16 %v7177
      %v7871 = vunpack.c.l.b16 %v7178
      %v7872 = vunpack.c.h.b16 %v7178
      %v7873 = vunpack.c.l.b16 %v7179
      %v7874 = vunpack.c.h.b16 %v7179
      %v7875 = vunpack.c.l.b16 %v7180
      %v7876 = vunpack.c.h.b16 %v7180
      %v7877 = vunpack.c.l.b16 %v7181
      %v7878 = vunpack.c.h.b16 %v7181
      %v7879 = vunpack.c.l.b16 %v7182
      %v7880 = vunpack.c.h.b16 %v7182
      %v7881 = vunpack.c.l.b16 %v7183
      %v7882 = vunpack.c.h.b16 %v7183
      %v7883 = vunpack.c.l.b16 %v7184
      %v7884 = vunpack.c.h.b16 %v7184
      %v7885 = vunpack.c.l.b16 %v7185
      %v7886 = vunpack.c.h.b16 %v7185
      %v7887 = vunpack.c.l.b16 %v7186
      %v7888 = vunpack.c.h.b16 %v7186
      %v7889 = vunpack.c.l.b16 %v7187
      %v7890 = vunpack.c.h.b16 %v7187
      %v7891 = vunpack.c.l.b16 %v7188
      %v7892 = vunpack.c.h.b16 %v7188
      %v7893 = vunpack.c.l.b16 %v7189
      %v7894 = vunpack.c.h.b16 %v7189
      %v7895 = vunpack.c.l.b16 %v7190
      %v7896 = vunpack.c.h.b16 %v7190
      %v7897 = vunpack.c.l.b16 %v7191
      %v7898 = vunpack.c.h.b16 %v7191
      %v7899 = vunpack.c.l.b16 %v7192
      %v7900 = vunpack.c.h.b16 %v7192
      %v7901 = vunpack.c.l.b16 %v7193
      %v7902 = vunpack.c.h.b16 %v7193
      %v7903 = vunpack.c.l.b16 %v7194
      %v7904 = vunpack.c.h.b16 %v7194
      %v7905 = vunpack.c.l.b16 %v7195
      %v7906 = vunpack.c.h.b16 %v7195
      %v7907 = vunpack.c.l.b16 %v7196
      %v7908 = vunpack.c.h.b16 %v7196
      %v7909 = vunpack.c.l.b16 %v7197
      %v7910 = vunpack.c.h.b16 %v7197
      %v7911 = vunpack.c.l.b16 %v7198
      %v7912 = vunpack.c.h.b16 %v7198
      %v7913 = vunpack.c.l.b16 %v7199
      %v7914 = vunpack.c.h.b16 %v7199
      %v7915 = vunpack.c.l.b16 %v7200
      %v7916 = vunpack.c.h.b16 %v7200
      %v7917 = vunpack.c.l.b16 %v7201
      %v7918 = vunpack.c.h.b16 %v7201
      %v7919 = vunpack.c.l.b16 %v7202
      %v7920 = vunpack.c.h.b16 %v7202
      %v7921 = vunpack.c.l.b16 %v7203
      %v7922 = vunpack.c.h.b16 %v7203
      %v7923 = vunpack.c.l.b16 %v7204
      %v7924 = vunpack.c.h.b16 %v7204
      %v7925 = vunpack.c.l.b16 %v7205
      %v7926 = vunpack.c.h.b16 %v7205
      %v7927 = vunpack.c.l.b16 %v7206
      %v7928 = vunpack.c.h.b16 %v7206
      %v7929 = vunpack.c.l.b16 %v7207
      %v7930 = vunpack.c.h.b16 %v7207
      %v7931 = vunpack.c.l.b16 %v7208
      %v7932 = vunpack.c.h.b16 %v7208
      %v7933 = vunpack.c.l.b16 %v7209
      %v7934 = vunpack.c.h.b16 %v7209
      %v7935 = vunpack.c.l.b16 %v7210
      %v7936 = vunpack.c.h.b16 %v7210
      %v7937 = vunpack.c.l.b16 %v7211
      %v7938 = vunpack.c.h.b16 %v7211
      %v7939 = vunpack.c.l.b16 %v7212
      %v7940 = vunpack.c.h.b16 %v7212
      %v7941 = vunpack.c.l.b16 %v7213
      %v7942 = vunpack.c.h.b16 %v7213
      %v7943 = vunpack.c.l.b16 %v7214
      %v7944 = vunpack.c.h.b16 %v7214
      %v7945 = vunpack.c.l.b16 %v7215
      %v7946 = vunpack.c.h.b16 %v7215
      %v7947 = vunpack.c.l.b16 %v7216
      %v7948 = vunpack.c.h.b16 %v7216
      %v7949 = vunpack.c.l.b16 %v7217
      %v7950 = vunpack.c.h.b16 %v7217
      %v7951 = vunpack.c.l.b16 %v7218
      %v7952 = vunpack.c.h.b16 %v7218
      %v7953 = vunpack.c.l.b16 %v7219
      %v7954 = vunpack.c.h.b16 %v7219
      %v7955 = vunpack.c.l.b16 %v7220
      %v7956 = vunpack.c.h.b16 %v7220
      %v7957 = vunpack.c.l.b16 %v7221
      %v7958 = vunpack.c.h.b16 %v7221
      %v7959 = vunpack.c.l.b16 %v7222
      %v7960 = vunpack.c.h.b16 %v7222
      %v7961 = vunpack.c.l.b16 %v7223
      %v7962 = vunpack.c.h.b16 %v7223
      %v7963 = vunpack.c.l.b16 %v7224
      %v7964 = vunpack.c.h.b16 %v7224
      %v7965 = vunpack.c.l.b16 %v7225
      %v7966 = vunpack.c.h.b16 %v7225
      %v7967 = vunpack.c.l.b16 %v7226
      %v7968 = vunpack.c.h.b16 %v7226
      %v7969 = vunpack.c.l.b16 %v7227
      %v7970 = vunpack.c.h.b16 %v7227
      %v7971 = vunpack.c.l.b16 %v7228
      %v7972 = vunpack.c.h.b16 %v7228
      %v7973 = vunpack.c.l.b16 %v7229
      %v7974 = vunpack.c.h.b16 %v7229
      %v7975 = vunpack.c.l.b16 %v7230
      %v7976 = vunpack.c.h.b16 %v7230
      %v7977 = vunpack.c.l.b16 %v7231
      %v7978 = vunpack.c.h.b16 %v7231
      %v7979 = vunpack.c.l.b16 %v7232
      %v7980 = vunpack.c.h.b16 %v7232
      %v7981 = vunpack.c.l.b16 %v7233
      %v7982 = vunpack.c.h.b16 %v7233
      %v7983 = vunpack.c.l.b16 %v7234
      %v7984 = vunpack.c.h.b16 %v7234
      %v7985 = vunpack.c.l.b16 %v7235
      %v7986 = vunpack.c.h.b16 %v7235
      %v7987 = vunpack.c.l.b16 %v7236
      %v7988 = vunpack.c.h.b16 %v7236
      %v7989 = vunpack.c.l.b16 %v7237
      %v7990 = vunpack.c.h.b16 %v7237
      %v7991 = vunpack.c.l.b16 %v7238
      %v7992 = vunpack.c.h.b16 %v7238
      %v7993 = vunpack.c.l.b16 %v7239
      %v7994 = vunpack.c.h.b16 %v7239
      %v7995 = vunpack.c.l.b16 %v7240
      %v7996 = vunpack.c.h.b16 %v7240
      %v7997 = vunpack.c.l.b16 %v7241
      %v7998 = vunpack.c.h.b16 %v7241
      %v7999 = vunpack.c.l.b16 %v7242
      %v8000 = vunpack.c.h.b16 %v7242
      %v8001 = vunpack.c.l.b16 %v7243
      %v8002 = vunpack.c.h.b16 %v7243
      %v8003 = vunpack.c.l.b16 %v7244
      %v8004 = vunpack.c.h.b16 %v7244
      %v8005 = vunpack.c.l.b16 %v7245
      %v8006 = vunpack.c.h.b16 %v7245
      %v8007 = vunpack.c.l.b16 %v7246
      %v8008 = vunpack.c.h.b16 %v7246
      %v8009 = vunpack.c.l.b16 %v7247
      %v8010 = vunpack.c.h.b16 %v7247
      %v8011 = vunpack.c.l.b16 %v7248
      %v8012 = vunpack.c.h.b16 %v7248
      %v8013 = vunpack.c.l.b16 %v7249
      %v8014 = vunpack.c.h.b16 %v7249
      %v8015 = vunpack.c.l.b16 %v7250
      %v8016 = vunpack.c.h.b16 %v7250
      %v8017 = vunpack.c.l.b16 %v7251
      %v8018 = vunpack.c.h.b16 %v7251
      %v8019 = vunpack.c.l.b16 %v7252
      %v8020 = vunpack.c.h.b16 %v7252
      %v8021 = vunpack.c.l.b16 %v7253
      %v8022 = vunpack.c.h.b16 %v7253
      %v8023 = vunpack.c.l.b16 %v7254
      %v8024 = vunpack.c.h.b16 %v7254
      %v8025 = vunpack.c.l.b16 %v7255
      %v8026 = vunpack.c.h.b16 %v7255
      %v8027 = vunpack.c.l.b16 %v7256
      %v8028 = vunpack.c.h.b16 %v7256
      %v8029 = vunpack.c.l.b16 %v7257
      %v8030 = vunpack.c.h.b16 %v7257
      %v8031 = vunpack.c.l.b16 %v7258
      %v8032 = vunpack.c.h.b16 %v7258
      %v8033 = vunpack.c.l.b16 %v7259
      %v8034 = vunpack.c.h.b16 %v7259
      %v8035 = vunpack.c.l.b16 %v7260
      %v8036 = vunpack.c.h.b16 %v7260
      %v8037 = vunpack.c.l.b16 %v7261
      %v8038 = vunpack.c.h.b16 %v7261
      %v8039 = vunpack.c.l.b16 %v7262
      %v8040 = vunpack.c.h.b16 %v7262
      %v8041 = vunpack.c.l.b16 %v7263
      %v8042 = vunpack.c.h.b16 %v7263
      %v8043 = vunpack.c.l.b16 %v7264
      %v8044 = vunpack.c.h.b16 %v7264
      %v8045 = vunpack.c.l.b16 %v7265
      %v8046 = vunpack.c.h.b16 %v7265
      %v8047 = vunpack.c.l.b16 %v7266
      %v8048 = vunpack.c.h.b16 %v7266
      %v8049 = vunpack.c.l.b16 %v7267
      %v8050 = vunpack.c.h.b16 %v7267
      %v8051 = vunpack.c.l.b16 %v7268
      %v8052 = vunpack.c.h.b16 %v7268
      %v8053 = vunpack.c.l.b16 %v7269
      %v8054 = vunpack.c.h.b16 %v7269
      %v8055 = vunpack.c.l.b16 %v7270
      %v8056 = vunpack.c.h.b16 %v7270
      %v8057 = vunpack.c.l.b16 %v7271
      %v8058 = vunpack.c.h.b16 %v7271
      %v8059 = vunpack.c.l.b16 %v7272
      %v8060 = vunpack.c.h.b16 %v7272
      %v8061 = vunpack.c.l.b16 %v7273
      %v8062 = vunpack.c.h.b16 %v7273
      %v8063 = vunpack.c.l.b16 %v7274
      %v8064 = vunpack.c.h.b16 %v7274
      %v8065 = vunpack.c.l.b16 %v7275
      %v8066 = vunpack.c.h.b16 %v7275
      %v8067 = vunpack.c.l.b16 %v7276
      %v8068 = vunpack.c.h.b16 %v7276
      %v8069 = vunpack.c.l.b16 %v7277
      %v8070 = vunpack.c.h.b16 %v7277
      %v8071 = vunpack.c.l.b16 %v7278
      %v8072 = vunpack.c.h.b16 %v7278
      %v8073 = vunpack.c.l.b16 %v7279
      %v8074 = vunpack.c.h.b16 %v7279
      %v8075 = vunpack.c.l.b16 %v7280
      %v8076 = vunpack.c.h.b16 %v7280
      %v8077 = vunpack.c.l.b16 %v7281
      %v8078 = vunpack.c.h.b16 %v7281
      %v8079 = vunpack.c.l.b16 %v7282
      %v8080 = vunpack.c.h.b16 %v7282
      %v8081 = vunpack.c.l.b16 %v7283
      %v8082 = vunpack.c.h.b16 %v7283
      %v8083 = vunpack.c.l.b16 %v7284
      %v8084 = vunpack.c.h.b16 %v7284
      %v8085 = vunpack.c.l.b16 %v7285
      %v8086 = vunpack.c.h.b16 %v7285
      %v8087 = vunpack.c.l.b16 %v7286
      %v8088 = vunpack.c.h.b16 %v7286
      %v8089 = vunpack.c.l.b16 %v7287
      %v8090 = vunpack.c.h.b16 %v7287
      %v8091 = vunpack.c.l.b16 %v7288
      %v8092 = vunpack.c.h.b16 %v7288
      %v8093 = vunpack.c.l.b16 %v7289
      %v8094 = vunpack.c.h.b16 %v7289
      %v8095 = vunpack.c.l.b16 %v7290
      %v8096 = vunpack.c.h.b16 %v7290
      %v8097 = vunpack.c.l.b16 %v7291
      %v8098 = vunpack.c.h.b16 %v7291
      %v8099 = vunpack.c.l.b16 %v7292
      %v8100 = vunpack.c.h.b16 %v7292
      %v8101 = vunpack.c.l.b16 %v7293
      %v8102 = vunpack.c.h.b16 %v7293
      %v8103 = vunpack.c.l.b16 %v7294
      %v8104 = vunpack.c.h.b16 %v7294
      %v8105 = vunpack.c.l.b16 %v7295
      %v8106 = vunpack.c.h.b16 %v7295
      %v8107 = vunpack.c.l.b16 %v7296
      %v8108 = vunpack.c.h.b16 %v7296
      %v8109 = vunpack.c.l.b16 %v7297
      %v8110 = vunpack.c.h.b16 %v7297
      %v8111 = vunpack.c.l.b16 %v7298
      %v8112 = vunpack.c.h.b16 %v7298
      %v8113 = vunpack.c.l.b16 %v7299
      %v8114 = vunpack.c.h.b16 %v7299
      %v8115 = vunpack.c.l.b16 %v7300
      %v8116 = vunpack.c.h.b16 %v7300
      %v8117 = vunpack.c.l.b16 %v7301
      %v8118 = vunpack.c.h.b16 %v7301
      %v8119 = vunpack.c.l.b16 %v7302
      %v8120 = vunpack.c.h.b16 %v7302
      %v8121 = vunpack.c.l.b16 %v7303
      %v8122 = vunpack.c.h.b16 %v7303
      %v8123 = vunpack.c.l.b16 %v7304
      %v8124 = vunpack.c.h.b16 %v7304
      %v8125 = vunpack.c.l.b16 %v7305
      %v8126 = vunpack.c.h.b16 %v7305
      %v8127 = vunpack.c.l.b16 %v7306
      %v8128 = vunpack.c.h.b16 %v7306
      %v8129 = vunpack.c.l.b16 %v7307
      %v8130 = vunpack.c.h.b16 %v7307
      %v8131 = vunpack.c.l.b16 %v7308
      %v8132 = vunpack.c.h.b16 %v7308
      %v8133 = vunpack.c.l.b16 %v7309
      %v8134 = vunpack.c.h.b16 %v7309
      %v8135 = vunpack.c.l.b16 %v7310
      %v8136 = vunpack.c.h.b16 %v7310
      %v8137 = vunpack.c.l.b16 %v7311
      %v8138 = vunpack.c.h.b16 %v7311
      %v8139 = vunpack.c.l.b16 %v7312
      %v8140 = vunpack.c.h.b16 %v7312
      %v8141 = vunpack.c.l.b16 %v7313
      %v8142 = vunpack.c.h.b16 %v7313
      %v8143 = vunpack.c.l.b16 %v7314
      %v8144 = vunpack.c.h.b16 %v7314
      %v8145 = vunpack.c.l.b16 %v7315
      %v8146 = vunpack.c.h.b16 %v7315
      %v8147 = vunpack.c.l.b16 %v7316
      %v8148 = vunpack.c.h.b16 %v7316
      %v8149 = vunpack.c.l.b16 %v7317
      %v8150 = vunpack.c.h.b16 %v7317
      %v8151 = vunpack.c.l.b16 %v7318
      %v8152 = vunpack.c.h.b16 %v7318
      %v8153 = vunpack.c.l.b16 %v7319
      %v8154 = vunpack.c.h.b16 %v7319
      %v8155 = vunpack.c.l.b16 %v7320
      %v8156 = vunpack.c.h.b16 %v7320
      %v8157 = vunpack.c.l.b16 %v7321
      %v8158 = vunpack.c.h.b16 %v7321
      %v8159 = vunpack.c.l.b16 %v7322
      %v8160 = vunpack.c.h.b16 %v7322
      %v8161 = vunpack.c.l.b16 %v7323
      %v8162 = vunpack.c.h.b16 %v7323
      %v8163 = vunpack.c.l.b16 %v7324
      %v8164 = vunpack.c.h.b16 %v7324
      %v8165 = vunpack.c.l.b16 %v7325
      %v8166 = vunpack.c.h.b16 %v7325
      %v8167 = vunpack.c.l.b16 %v7326
      %v8168 = vunpack.c.h.b16 %v7326
      %v8169 = vunpack.c.l.b16 %v7327
      %v8170 = vunpack.c.h.b16 %v7327
      %v8171 = vunpack.c.l.b16 %v7328
      %v8172 = vunpack.c.h.b16 %v7328
      %v8173 = vunpack.c.l.b16 %v7329
      %v8174 = vunpack.c.h.b16 %v7329
      %v8175 = vunpack.c.l.b16 %v7330
      %v8176 = vunpack.c.h.b16 %v7330
      %v8177 = vunpack.c.l.b16 %v7331
      %v8178 = vunpack.c.h.b16 %v7331
      %v8179 = vunpack.c.l.b16 %v7332
      %v8180 = vunpack.c.h.b16 %v7332
      %v8181 = vunpack.c.l.b16 %v7333
      %v8182 = vunpack.c.h.b16 %v7333
      %v8183 = vunpack.c.l.b16 %v7334
      %v8184 = vunpack.c.h.b16 %v7334
      %v8185 = vunpack.c.l.b16 %v7335
      %v8186 = vunpack.c.h.b16 %v7335
      %v8187 = vunpack.c.l.b16 %v7336
      %v8188 = vunpack.c.h.b16 %v7336
      %v8189 = vunpack.c.l.b16 %v7337
      %v8190 = vunpack.c.h.b16 %v7337
      %v8191 = vunpack.c.l.b16 %v7338
      %v8192 = vunpack.c.h.b16 %v7338
      %v8193 = vunpack.c.l.b16 %v7339
      %v8194 = vunpack.c.h.b16 %v7339
      %v8195 = vunpack.c.l.b16 %v7340
      %v8196 = vunpack.c.h.b16 %v7340
      %v8197 = vunpack.c.l.b16 %v7341
      %v8198 = vunpack.c.h.b16 %v7341
      %v8199 = vunpack.c.l.b16 %v7342
      %v8200 = vunpack.c.h.b16 %v7342
      %v8201 = vunpack.c.l.b16 %v7343
      %v8202 = vunpack.c.h.b16 %v7343
      %v8203 = vunpack.c.l.b16 %v7344
      %v8204 = vunpack.c.h.b16 %v7344
      %v8205 = vunpack.c.l.b16 %v7345
      %v8206 = vunpack.c.h.b16 %v7345
      %v8207 = vunpack.c.l.b16 %v7346
      %v8208 = vunpack.c.h.b16 %v7346
      %v8209 = vunpack.c.l.b16 %v7347
      %v8210 = vunpack.c.h.b16 %v7347
      %v8211 = vunpack.c.l.b16 %v7348
      %v8212 = vunpack.c.h.b16 %v7348
      %v8213 = vunpack.c.l.b16 %v7349
      %v8214 = vunpack.c.h.b16 %v7349
      %v8215 = vunpack.c.l.b16 %v7350
      %v8216 = vunpack.c.h.b16 %v7350
      %v8217 = vunpack.c.l.b16 %v7351
      %v8218 = vunpack.c.h.b16 %v7351
      %v8219 = vunpack.c.l.b16 %v7352
      %v8220 = vunpack.c.h.b16 %v7352
      %v8221 = vunpack.c.l.b16 %v7353
      %v8222 = vunpack.c.h.b16 %v7353
      %v8223 = vunpack.c.l.b16 %v7354
      %v8224 = vunpack.c.h.b16 %v7354
      %v8225 = vunpack.c.l.b16 %v7355
      %v8226 = vunpack.c.h.b16 %v7355
      %v8227 = vunpack.c.l.b16 %v7356
      %v8228 = vunpack.c.h.b16 %v7356
      %v8229 = vunpack.c.l.b16 %v7357
      %v8230 = vunpack.c.h.b16 %v7357
      %v8231 = vunpack.c.l.b16 %v7358
      %v8232 = vunpack.c.h.b16 %v7358
      %v8233 = vunpack.c.l.b16 %v7359
      %v8234 = vunpack.c.h.b16 %v7359
      %v8235 = vunpack.c.l.b16 %v7360
      %v8236 = vunpack.c.h.b16 %v7360
      %v8237 = vunpack.c.l.b16 %v7361
      %v8238 = vunpack.c.h.b16 %v7361
      %v8239 = vunpack.c.l.b16 %v7362
      %v8240 = vunpack.c.h.b16 %v7362
      %v8241 = vunpack.c.l.b16 %v7363
      %v8242 = vunpack.c.h.b16 %v7363
      %v8243 = vunpack.c.l.b16 %v7364
      %v8244 = vunpack.c.h.b16 %v7364
      %v8245 = vunpack.c.l.b16 %v7365
      %v8246 = vunpack.c.h.b16 %v7365
      %v8247 = vunpack.c.l.b16 %v7366
      %v8248 = vunpack.c.h.b16 %v7366
      %v8249 = vunpack.c.l.b16 %v7367
      %v8250 = vunpack.c.h.b16 %v7367
      %v8251 = vunpack.c.l.b16 %v7368
      %v8252 = vunpack.c.h.b16 %v7368
      %v8253 = vunpack.c.l.b16 %v7369
      %v8254 = vunpack.c.h.b16 %v7369
      %v8255 = vunpack.c.l.b16 %v7370
      %v8256 = vunpack.c.h.b16 %v7370
      %v8257 = vunpack.c.l.b16 %v7371
      %v8258 = vunpack.c.h.b16 %v7371
      %v8259 = vunpack.c.l.b16 %v7372
      %v8260 = vunpack.c.h.b16 %v7372
      %v8261 = vunpack.c.l.b16 %v7373
      %v8262 = vunpack.c.h.b16 %v7373
      %v8263 = vunpack.c.l.b16 %v7374
      %v8264 = vunpack.c.h.b16 %v7374
      %v8265 = vunpack.c.l.b16 %v7375
      %v8266 = vunpack.c.h.b16 %v7375
      %v8267 = vunpack.c.l.b16 %v7376
      %v8268 = vunpack.c.h.b16 %v7376
      %v8269 = vunpack.c.l.b16 %v7377
      %v8270 = vunpack.c.h.b16 %v7377
      %v8271 = vunpack.c.l.b16 %v7378
      %v8272 = vunpack.c.h.b16 %v7378
      %v8273 = vunpack.c.l.b16 %v7379
      %v8274 = vunpack.c.h.b16 %v7379
      %v8275 = vunpack.c.l.b16 %v7380
      %v8276 = vunpack.c.h.b16 %v7380
      %v8277 = vunpack.c.l.b16 %v7381
      %v8278 = vunpack.c.h.b16 %v7381
      %v8279 = vunpack.c.l.b16 %v7382
      %v8280 = vunpack.c.h.b16 %v7382
      %v8281 = vunpack.c.l.b16 %v7383
      %v8282 = vunpack.c.h.b16 %v7383
      %v8283 = vunpack.c.l.b16 %v7384
      %v8284 = vunpack.c.h.b16 %v7384
      %v8285 = vunpack.c.l.b16 %v7385
      %v8286 = vunpack.c.h.b16 %v7385
      %v8287 = vunpack.c.l.b16 %v7386
      %v8288 = vunpack.c.h.b16 %v7386
      %v8289 = vunpack.c.l.b16 %v7387
      %v8290 = vunpack.c.h.b16 %v7387
      %v8291 = vunpack.c.l.b16 %v7388
      %v8292 = vunpack.c.h.b16 %v7388
      %v8293 = vunpack.c.l.b16 %v7389
      %v8294 = vunpack.c.h.b16 %v7389
      %v8295 = vunpack.c.l.b16 %v7390
      %v8296 = vunpack.c.h.b16 %v7390
      %v8297 = vunpack.c.l.b16 %v7391
      %v8298 = vunpack.c.h.b16 %v7391
      %v8299 = vunpack.c.l.b16 %v7392
      %v8300 = vunpack.c.h.b16 %v7392
      %v8301 = vunpack.c.l.b16 %v7393
      %v8302 = vunpack.c.h.b16 %v7393
      %v8303 = vunpack.c.l.b16 %v7394
      %v8304 = vunpack.c.h.b16 %v7394
      %v8305 = vunpack.c.l.b16 %v7395
      %v8306 = vunpack.c.h.b16 %v7395
      %v8307 = vunpack.c.l.b16 %v7396
      %v8308 = vunpack.c.h.b16 %v7396
      %v8309 = vunpack.c.l.b16 %v7397
      %v8310 = vunpack.c.h.b16 %v7397
      %v8311 = vunpack.c.l.b16 %v7398
      %v8312 = vunpack.c.h.b16 %v7398
      %v8313 = vunpack.c.l.b16 %v7399
      %v8314 = vunpack.c.h.b16 %v7399
      %v8315 = vunpack.c.l.b16 %v7400
      %v8316 = vunpack.c.h.b16 %v7400
      %v8317 = vunpack.c.l.b16 %v7401
      %v8318 = vunpack.c.h.b16 %v7401
      %v8319 = vunpack.c.l.b16 %v7402
      %v8320 = vunpack.c.h.b16 %v7402
      %v8321 = vunpack.c.l.b16 %v7403
      %v8322 = vunpack.c.h.b16 %v7403
      %v8323 = vunpack.c.l.b16 %v7404
      %v8324 = vunpack.c.h.b16 %v7404
      %v8325 = vunpack.c.l.b16 %v7405
      %v8326 = vunpack.c.h.b16 %v7405
      %v8327 = vunpack.c.l.b16 %v7406
      %v8328 = vunpack.c.h.b16 %v7406
      %v8329 = vunpack.c.l.b16 %v7407
      %v8330 = vunpack.c.h.b16 %v7407
      %v8331 = vunpack.c.l.b16 %v7408
      %v8332 = vunpack.c.h.b16 %v7408
      %v8333 = vunpack.c.l.b16 %v7409
      %v8334 = vunpack.c.h.b16 %v7409
      %v8335 = vunpack.c.l.b16 %v7410
      %v8336 = vunpack.c.h.b16 %v7410
      %v8337 = vunpack.c.l.b16 %v7411
      %v8338 = vunpack.c.h.b16 %v7411
      %v8339 = vunpack.c.l.b16 %v7412
      %v8340 = vunpack.c.h.b16 %v7412
      %v8341 = vunpack.c.l.b16 %v7413
      %v8342 = vunpack.c.h.b16 %v7413
      %v8343 = vunpack.c.l.b16 %v7414
      %v8344 = vunpack.c.h.b16 %v7414
      %v8345 = vunpack.c.l.b16 %v7415
      %v8346 = vunpack.c.h.b16 %v7415
      %v8347 = vunpack.c.l.b16 %v7416
      %v8348 = vunpack.c.h.b16 %v7416
      %v8349 = vunpack.c.l.b16 %v7417
      %v8350 = vunpack.c.h.b16 %v7417
      %v8351 = vunpack.c.l.b16 %v7418
      %v8352 = vunpack.c.h.b16 %v7418
      %v8353 = vunpack.c.l.b16 %v7419
      %v8354 = vunpack.c.h.b16 %v7419
      %v8355 = vunpack.c.l.b16 %v7420
      %v8356 = vunpack.c.h.b16 %v7420
      %v8357 = vunpack.c.l.b16 %v7421
      %v8358 = vunpack.c.h.b16 %v7421
      %v8359 = vunpack.c.l.b16 %v7422
      %v8360 = vunpack.c.h.b16 %v7422
      %v8361 = vunpack.c.l.b16 %v7423
      %v8362 = vunpack.c.h.b16 %v7423
      %v8363 = vunpack.c.l.b16 %v7424
      %v8364 = vunpack.c.h.b16 %v7424
      %v8365 = vunpack.c.l.b16 %v7425
      %v8366 = vunpack.c.h.b16 %v7425
      %v8367 = vunpack.c.l.b16 %v7426
      %v8368 = vunpack.c.h.b16 %v7426
      %v8369 = vunpack.c.l.b16 %v7427
      %v8370 = vunpack.c.h.b16 %v7427
      %v8371 = vunpack.c.l.b16 %v7428
      %v8372 = vunpack.c.h.b16 %v7428
      %v8373 = vunpack.c.l.b16 %v7429
      %v8374 = vunpack.c.h.b16 %v7429
      %v8375 = vunpack.c.l.b16 %v7430
      %v8376 = vunpack.c.h.b16 %v7430
      %v8377 = vunpack.c.l.b16 %v7431
      %v8378 = vunpack.c.h.b16 %v7431
      %v8379 = vunpack.c.l.b16 %v7432
      %v8380 = vunpack.c.h.b16 %v7432
      %v8381 = vunpack.c.l.b16 %v7433
      %v8382 = vunpack.c.h.b16 %v7433
      %v8383 = vunpack.c.l.b16 %v7434
      %v8384 = vunpack.c.h.b16 %v7434
      %v8385 = vunpack.c.l.b16 %v7435
      %v8386 = vunpack.c.h.b16 %v7435
      %v8387 = vunpack.c.l.b16 %v7436
      %v8388 = vunpack.c.h.b16 %v7436
      %v8389 = vunpack.c.l.b16 %v7437
      %v8390 = vunpack.c.h.b16 %v7437
      %v8391 = vunpack.c.l.b16 %v7438
      %v8392 = vunpack.c.h.b16 %v7438
      %v8393 = vunpack.c.l.b16 %v7439
      %v8394 = vunpack.c.h.b16 %v7439
      %v8395 = vunpack.c.l.b16 %v7440
      %v8396 = vunpack.c.h.b16 %v7440
      %v8397 = vunpack.c.l.b16 %v7441
      %v8398 = vunpack.c.h.b16 %v7441
      %v8399 = vunpack.c.l.b16 %v7442
      %v8400 = vunpack.c.h.b16 %v7442
      %v8401 = vunpack.c.l.b16 %v7443
      %v8402 = vunpack.c.h.b16 %v7443
      %v8403 = vunpack.c.l.b16 %v7444
      %v8404 = vunpack.c.h.b16 %v7444
      %v8405 = vunpack.c.l.b16 %v7445
      %v8406 = vunpack.c.h.b16 %v7445
      %v8407 = vunpack.c.l.b16 %v7446
      %v8408 = vunpack.c.h.b16 %v7446
      %v8409 = vunpack.c.l.b16 %v7447
      %v8410 = vunpack.c.h.b16 %v7447
      %v8411 = vunpack.c.l.b16 %v7448
      %v8412 = vunpack.c.h.b16 %v7448
      %v8413 = vunpack.c.l.b16 %v7449
      %v8414 = vunpack.c.h.b16 %v7449
      %v8415 = vunpack.c.l.b16 %v7450
      %v8416 = vunpack.c.h.b16 %v7450
      %v8417 = vunpack.c.l.b16 %v7451
      %v8418 = vunpack.c.h.b16 %v7451
      %v8419 = vunpack.c.l.b16 %v7452
      %v8420 = vunpack.c.h.b16 %v7452
      %v8421 = vunpack.c.l.b16 %v7453
      %v8422 = vunpack.c.h.b16 %v7453
      %v8423 = vunpack.c.l.b16 %v7454
      %v8424 = vunpack.c.h.b16 %v7454
      %v8425 = vunpack.c.l.b16 %v7455
      %v8426 = vunpack.c.h.b16 %v7455
      %v8427 = vunpack.c.l.b16 %v7456
      %v8428 = vunpack.c.h.b16 %v7456
      %v8429 = vunpack.c.l.b16 %v7457
      %v8430 = vunpack.c.h.b16 %v7457
      %v8431 = vunpack.c.l.b16 %v7458
      %v8432 = vunpack.c.h.b16 %v7458
      %v8433 = vunpack.c.l.b16 %v7459
      %v8434 = vunpack.c.h.b16 %v7459
      %v8435 = vunpack.c.l.b16 %v7460
      %v8436 = vunpack.c.h.b16 %v7460
      %v8437 = vunpack.c.l.b16 %v7461
      %v8438 = vunpack.c.h.b16 %v7461
      %v8439 = vunpack.c.l.b16 %v7462
      %v8440 = vunpack.c.h.b16 %v7462
      %v8441 = vunpack.c.l.b16 %v7463
      %v8442 = vunpack.c.h.b16 %v7463
      %v8443 = vunpack.c.l.b16 %v7464
      %v8444 = vunpack.c.h.b16 %v7464
      %v8445 = vunpack.c.l.b16 %v7465
      %v8446 = vunpack.c.h.b16 %v7465
      %v8447 = vunpack.c.l.b16 %v7466
      %v8448 = vunpack.c.h.b16 %v7466
      %v8449 = vunpack.c.l.b16 %v7467
      %v8450 = vunpack.c.h.b16 %v7467
      %v8451 = vunpack.c.l.b16 %v7468
      %v8452 = vunpack.c.h.b16 %v7468
      %v8453 = vunpack.c.l.b16 %v7469
      %v8454 = vunpack.c.h.b16 %v7469
      %v8455 = vunpack.c.l.b16 %v7470
      %v8456 = vunpack.c.h.b16 %v7470
      %v8457 = vunpack.c.l.b16 %v7471
      %v8458 = vunpack.c.h.b16 %v7471
      %v8459 = vunpack.c.l.b16 %v7472
      %v8460 = vunpack.c.h.b16 %v7472
      %v8461 = vunpack.c.l.b16 %v7473
      %v8462 = vunpack.c.h.b16 %v7473
      %v8463 = vunpack.c.l.b16 %v7474
      %v8464 = vunpack.c.h.b16 %v7474
      %v8465 = vunpack.c.l.b16 %v7475
      %v8466 = vunpack.c.h.b16 %v7475
      %v8467 = vunpack.c.l.b16 %v7476
      %v8468 = vunpack.c.h.b16 %v7476
      %v8469 = vunpack.c.l.b16 %v7477
      %v8470 = vunpack.c.h.b16 %v7477
      %v8471 = vunpack.c.l.b16 %v7478
      %v8472 = vunpack.c.h.b16 %v7478
      %v8473 = vunpack.c.l.b16 %v7479
      %v8474 = vunpack.c.h.b16 %v7479
      %v8475 = vunpack.c.l.b16 %v7480
      %v8476 = vunpack.c.h.b16 %v7480
      %v8477 = vunpack.c.l.b16 %v7481
      %v8478 = vunpack.c.h.b16 %v7481
      %v8479 = vunpack.c.l.b16 %v7482
      %v8480 = vunpack.c.h.b16 %v7482
      %v8481 = vunpack.c.l.b16 %v7483
      %v8482 = vunpack.c.h.b16 %v7483
      %v8483 = vunpack.c.l.b16 %v7484
      %v8484 = vunpack.c.h.b16 %v7484
      %v8485 = vunpack.c.l.b16 %v7485
      %v8486 = vunpack.c.h.b16 %v7485
      %v8487 = vunpack.c.l.b16 %v7486
      %v8488 = vunpack.c.h.b16 %v7486
      %v8489 = vunpack.c.l.b16 %v7487
      %v8490 = vunpack.c.h.b16 %v7487
      %v8491 = vunpack.c.l.b16 %v7488
      %v8492 = vunpack.c.h.b16 %v7488
      %v8493 = vpack.c.b16 %v7845, %v7837
      %v8494 = vpack.c.b16 %v7846, %v7838
      %v8495 = vpack.c.b16 %v7847, %v7839
      %v8496 = vpack.c.b16 %v7848, %v7840
      %v8497 = vpack.c.b16 %v7849, %v7841
      %v8498 = vpack.c.b16 %v7850, %v7842
      %v8499 = vpack.c.b16 %v7851, %v7843
      %v8500 = vpack.c.b16 %v7852, %v7844
      %v8501 = vpack.c.b16 %v7861, %v7853
      %v8502 = vpack.c.b16 %v7862, %v7854
      %v8503 = vpack.c.b16 %v7863, %v7855
      %v8504 = vpack.c.b16 %v7864, %v7856
      %v8505 = vpack.c.b16 %v7865, %v7857
      %v8506 = vpack.c.b16 %v7866, %v7858
      %v8507 = vpack.c.b16 %v7867, %v7859
      %v8508 = vpack.c.b16 %v7868, %v7860
      %v8509 = vpack.c.b16 %v7877, %v7869
      %v8510 = vpack.c.b16 %v7878, %v7870
      %v8511 = vpack.c.b16 %v7879, %v7871
      %v8512 = vpack.c.b16 %v7880, %v7872
      %v8513 = vpack.c.b16 %v7881, %v7873
      %v8514 = vpack.c.b16 %v7882, %v7874
      %v8515 = vpack.c.b16 %v7883, %v7875
      %v8516 = vpack.c.b16 %v7884, %v7876
      %v8517 = vpack.c.b16 %v7893, %v7885
      %v8518 = vpack.c.b16 %v7894, %v7886
      %v8519 = vpack.c.b16 %v7895, %v7887
      %v8520 = vpack.c.b16 %v7896, %v7888
      %v8521 = vpack.c.b16 %v7897, %v7889
      %v8522 = vpack.c.b16 %v7898, %v7890
      %v8523 = vpack.c.b16 %v7899, %v7891
      %v8524 = vpack.c.b16 %v7900, %v7892
      %v8525 = vpack.c.b16 %v7909, %v7901
      %v8526 = vpack.c.b16 %v7910, %v7902
      %v8527 = vpack.c.b16 %v7911, %v7903
      %v8528 = vpack.c.b16 %v7912, %v7904
      %v8529 = vpack.c.b16 %v7913, %v7905
      %v8530 = vpack.c.b16 %v7914, %v7906
      %v8531 = vpack.c.b16 %v7915, %v7907
      %v8532 = vpack.c.b16 %v7916, %v7908
      %v8533 = vpack.c.b16 %v7925, %v7917
      %v8534 = vpack.c.b16 %v7926, %v7918
      %v8535 = vpack.c.b16 %v7927, %v7919
      %v8536 = vpack.c.b16 %v7928, %v7920
      %v8537 = vpack.c.b16 %v7929, %v7921
      %v8538 = vpack.c.b16 %v7930, %v7922
      %v8539 = vpack.c.b16 %v7931, %v7923
      %v8540 = vpack.c.b16 %v7932, %v7924
      %v8541 = vpack.c.b16 %v7941, %v7933
      %v8542 = vpack.c.b16 %v7942, %v7934
      %v8543 = vpack.c.b16 %v7943, %v7935
      %v8544 = vpack.c.b16 %v7944, %v7936
      %v8545 = vpack.c.b16 %v7945, %v7937
      %v8546 = vpack.c.b16 %v7946, %v7938
      %v8547 = vpack.c.b16 %v7947, %v7939
      %v8548 = vpack.c.b16 %v7948, %v7940
      %v8549 = vpack.c.b16 %v7957, %v7949
      %v8550 = vpack.c.b16 %v7958, %v7950
      %v8551 = vpack.c.b16 %v7959, %v7951
      %v8552 = vpack.c.b16 %v7960, %v7952
      %v8553 = vpack.c.b16 %v7961, %v7953
      %v8554 = vpack.c.b16 %v7962, %v7954
      %v8555 = vpack.c.b16 %v7963, %v7955
      %v8556 = vpack.c.b16 %v7964, %v7956
      %v8557 = vpack.c.b16 %v7973, %v7965
      %v8558 = vpack.c.b16 %v7974, %v7966
      %v8559 = vpack.c.b16 %v7975, %v7967
      %v8560 = vpack.c.b16 %v7976, %v7968
      %v8561 = vpack.c.b16 %v7977, %v7969
      %v8562 = vpack.c.b16 %v7978, %v7970
      %v8563 = vpack.c.b16 %v7979, %v7971
      %v8564 = vpack.c.b16 %v7980, %v7972
      %v8565 = vpack.c.b16 %v7989, %v7981
      %v8566 = vpack.c.b16 %v7990, %v7982
      %v8567 = vpack.c.b16 %v7991, %v7983
      %v8568 = vpack.c.b16 %v7992, %v7984
      %v8569 = vpack.c.b16 %v7993, %v7985
      %v8570 = vpack.c.b16 %v7994, %v7986
      %v8571 = vpack.c.b16 %v7995, %v7987
      %v8572 = vpack.c.b16 %v7996, %v7988
      %v8573 = vpack.c.b16 %v8005, %v7997
      %v8574 = vpack.c.b16 %v8006, %v7998
      %v8575 = vpack.c.b16 %v8007, %v7999
      %v8576 = vpack.c.b16 %v8008, %v8000
      %v8577 = vpack.c.b16 %v8009, %v8001
      %v8578 = vpack.c.b16 %v8010, %v8002
      %v8579 = vpack.c.b16 %v8011, %v8003
      %v8580 = vpack.c.b16 %v8012, %v8004
      %v8581 = vpack.c.b16 %v8021, %v8013
      %v8582 = vpack.c.b16 %v8022, %v8014
      %v8583 = vpack.c.b16 %v8023, %v8015
      %v8584 = vpack.c.b16 %v8024, %v8016
      %v8585 = vpack.c.b16 %v8025, %v8017
      %v8586 = vpack.c.b16 %v8026, %v8018
      %v8587 = vpack.c.b16 %v8027, %v8019
      %v8588 = vpack.c.b16 %v8028, %v8020
      %v8589 = vpack.c.b16 %v8037, %v8029
      %v8590 = vpack.c.b16 %v8038, %v8030
      %v8591 = vpack.c.b16 %v8039, %v8031
      %v8592 = vpack.c.b16 %v8040, %v8032
      %v8593 = vpack.c.b16 %v8041, %v8033
      %v8594 = vpack.c.b16 %v8042, %v8034
      %v8595 = vpack.c.b16 %v8043, %v8035
      %v8596 = vpack.c.b16 %v8044, %v8036
      %v8597 = vpack.c.b16 %v8053, %v8045
      %v8598 = vpack.c.b16 %v8054, %v8046
      %v8599 = vpack.c.b16 %v8055, %v8047
      %v8600 = vpack.c.b16 %v8056, %v8048
      %v8601 = vpack.c.b16 %v8057, %v8049
      %v8602 = vpack.c.b16 %v8058, %v8050
      %v8603 = vpack.c.b16 %v8059, %v8051
      %v8604 = vpack.c.b16 %v8060, %v8052
      %v8605 = vpack.c.b16 %v8069, %v8061
      %v8606 = vpack.c.b16 %v8070, %v8062
      %v8607 = vpack.c.b16 %v8071, %v8063
      %v8608 = vpack.c.b16 %v8072, %v8064
      %v8609 = vpack.c.b16 %v8073, %v8065
      %v8610 = vpack.c.b16 %v8074, %v8066
      %v8611 = vpack.c.b16 %v8075, %v8067
      %v8612 = vpack.c.b16 %v8076, %v8068
      %v8613 = vpack.c.b16 %v8085, %v8077
      %v8614 = vpack.c.b16 %v8086, %v8078
      %v8615 = vpack.c.b16 %v8087, %v8079
      %v8616 = vpack.c.b16 %v8088, %v8080
      %v8617 = vpack.c.b16 %v8089, %v8081
      %v8618 = vpack.c.b16 %v8090, %v8082
      %v8619 = vpack.c.b16 %v8091, %v8083
      %v8620 = vpack.c.b16 %v8092, %v8084
      %v8621 = vpack.c.b16 %v8101, %v8093
      %v8622 = vpack.c.b16 %v8102, %v8094
      %v8623 = vpack.c.b16 %v8103, %v8095
      %v8624 = vpack.c.b16 %v8104, %v8096
      %v8625 = vpack.c.b16 %v8105, %v8097
      %v8626 = vpack.c.b16 %v8106, %v8098
      %v8627 = vpack.c.b16 %v8107, %v8099
      %v8628 = vpack.c.b16 %v8108, %v8100
      %v8629 = vpack.c.b16 %v8117, %v8109
      %v8630 = vpack.c.b16 %v8118, %v8110
      %v8631 = vpack.c.b16 %v8119, %v8111
      %v8632 = vpack.c.b16 %v8120, %v8112
      %v8633 = vpack.c.b16 %v8121, %v8113
      %v8634 = vpack.c.b16 %v8122, %v8114
      %v8635 = vpack.c.b16 %v8123, %v8115
      %v8636 = vpack.c.b16 %v8124, %v8116
      %v8637 = vpack.c.b16 %v8133, %v8125
      %v8638 = vpack.c.b16 %v8134, %v8126
      %v8639 = vpack.c.b16 %v8135, %v8127
      %v8640 = vpack.c.b16 %v8136, %v8128
      %v8641 = vpack.c.b16 %v8137, %v8129
      %v8642 = vpack.c.b16 %v8138, %v8130
      %v8643 = vpack.c.b16 %v8139, %v8131
      %v8644 = vpack.c.b16 %v8140, %v8132
      %v8645 = vpack.c.b16 %v8149, %v8141
      %v8646 = vpack.c.b16 %v8150, %v8142
      %v8647 = vpack.c.b16 %v8151, %v8143
      %v8648 = vpack.c.b16 %v8152, %v8144
      %v8649 = vpack.c.b16 %v8153, %v8145
      %v8650 = vpack.c.b16 %v8154, %v8146
      %v8651 = vpack.c.b16 %v8155, %v8147
      %v8652 = vpack.c.b16 %v8156, %v8148
      %v8653 = vpack.c.b16 %v8165, %v8157
      %v8654 = vpack.c.b16 %v8166, %v8158
      %v8655 = vpack.c.b16 %v8167, %v8159
      %v8656 = vpack.c.b16 %v8168, %v8160
      %v8657 = vpack.c.b16 %v8169, %v8161
      %v8658 = vpack.c.b16 %v8170, %v8162
      %v8659 = vpack.c.b16 %v8171, %v8163
      %v8660 = vpack.c.b16 %v8172, %v8164
      %v8661 = vpack.c.b16 %v8181, %v8173
      %v8662 = vpack.c.b16 %v8182, %v8174
      %v8663 = vpack.c.b16 %v8183, %v8175
      %v8664 = vpack.c.b16 %v8184, %v8176
      %v8665 = vpack.c.b16 %v8185, %v8177
      %v8666 = vpack.c.b16 %v8186, %v8178
      %v8667 = vpack.c.b16 %v8187, %v8179
      %v8668 = vpack.c.b16 %v8188, %v8180
      %v8669 = vpack.c.b16 %v8197, %v8189
      %v8670 = vpack.c.b16 %v8198, %v8190
      %v8671 = vpack.c.b16 %v8199, %v8191
      %v8672 = vpack.c.b16 %v8200, %v8192
      %v8673 = vpack.c.b16 %v8201, %v8193
      %v8674 = vpack.c.b16 %v8202, %v8194
      %v8675 = vpack.c.b16 %v8203, %v8195
      %v8676 = vpack.c.b16 %v8204, %v8196
      %v8677 = vpack.c.b16 %v8213, %v8205
      %v8678 = vpack.c.b16 %v8214, %v8206
      %v8679 = vpack.c.b16 %v8215, %v8207
      %v8680 = vpack.c.b16 %v8216, %v8208
      %v8681 = vpack.c.b16 %v8217, %v8209
      %v8682 = vpack.c.b16 %v8218, %v8210
      %v8683 = vpack.c.b16 %v8219, %v8211
      %v8684 = vpack.c.b16 %v8220, %v8212
      %v8685 = vpack.c.b16 %v8229, %v8221
      %v8686 = vpack.c.b16 %v8230, %v8222
      %v8687 = vpack.c.b16 %v8231, %v8223
      %v8688 = vpack.c.b16 %v8232, %v8224
      %v8689 = vpack.c.b16 %v8233, %v8225
      %v8690 = vpack.c.b16 %v8234, %v8226
      %v8691 = vpack.c.b16 %v8235, %v8227
      %v8692 = vpack.c.b16 %v8236, %v8228
      %v8693 = vpack.c.b16 %v8245, %v8237
      %v8694 = vpack.c.b16 %v8246, %v8238
      %v8695 = vpack.c.b16 %v8247, %v8239
      %v8696 = vpack.c.b16 %v8248, %v8240
      %v8697 = vpack.c.b16 %v8249, %v8241
      %v8698 = vpack.c.b16 %v8250, %v8242
      %v8699 = vpack.c.b16 %v8251, %v8243
      %v8700 = vpack.c.b16 %v8252, %v8244
      %v8701 = vpack.c.b16 %v8261, %v8253
      %v8702 = vpack.c.b16 %v8262, %v8254
      %v8703 = vpack.c.b16 %v8263, %v8255
      %v8704 = vpack.c.b16 %v8264, %v8256
      %v8705 = vpack.c.b16 %v8265, %v8257
      %v8706 = vpack.c.b16 %v8266, %v8258
      %v8707 = vpack.c.b16 %v8267, %v8259
      %v8708 = vpack.c.b16 %v8268, %v8260
      %v8709 = vpack.c.b16 %v8277, %v8269
      %v8710 = vpack.c.b16 %v8278, %v8270
      %v8711 = vpack.c.b16 %v8279, %v8271
      %v8712 = vpack.c.b16 %v8280, %v8272
      %v8713 = vpack.c.b16 %v8281, %v8273
      %v8714 = vpack.c.b16 %v8282, %v8274
      %v8715 = vpack.c.b16 %v8283, %v8275
      %v8716 = vpack.c.b16 %v8284, %v8276
      %v8717 = vpack.c.b16 %v8293, %v8285
      %v8718 = vpack.c.b16 %v8294, %v8286
      %v8719 = vpack.c.b16 %v8295, %v8287
      %v8720 = vpack.c.b16 %v8296, %v8288
      %v8721 = vpack.c.b16 %v8297, %v8289
      %v8722 = vpack.c.b16 %v8298, %v8290
      %v8723 = vpack.c.b16 %v8299, %v8291
      %v8724 = vpack.c.b16 %v8300, %v8292
      %v8725 = vpack.c.b16 %v8309, %v8301
      %v8726 = vpack.c.b16 %v8310, %v8302
      %v8727 = vpack.c.b16 %v8311, %v8303
      %v8728 = vpack.c.b16 %v8312, %v8304
      %v8729 = vpack.c.b16 %v8313, %v8305
      %v8730 = vpack.c.b16 %v8314, %v8306
      %v8731 = vpack.c.b16 %v8315, %v8307
      %v8732 = vpack.c.b16 %v8316, %v8308
      %v8733 = vpack.c.b16 %v8325, %v8317
      %v8734 = vpack.c.b16 %v8326, %v8318
      %v8735 = vpack.c.b16 %v8327, %v8319
      %v8736 = vpack.c.b16 %v8328, %v8320
      %v8737 = vpack.c.b16 %v8329, %v8321
      %v8738 = vpack.c.b16 %v8330, %v8322
      %v8739 = vpack.c.b16 %v8331, %v8323
      %v8740 = vpack.c.b16 %v8332, %v8324
      %v8741 = vpack.c.b16 %v8341, %v8333
      %v8742 = vpack.c.b16 %v8342, %v8334
      %v8743 = vpack.c.b16 %v8343, %v8335
      %v8744 = vpack.c.b16 %v8344, %v8336
      %v8745 = vpack.c.b16 %v8345, %v8337
      %v8746 = vpack.c.b16 %v8346, %v8338
      %v8747 = vpack.c.b16 %v8347, %v8339
      %v8748 = vpack.c.b16 %v8348, %v8340
      %v8749 = vpack.c.b16 %v8357, %v8349
      %v8750 = vpack.c.b16 %v8358, %v8350
      %v8751 = vpack.c.b16 %v8359, %v8351
      %v8752 = vpack.c.b16 %v8360, %v8352
      %v8753 = vpack.c.b16 %v8361, %v8353
      %v8754 = vpack.c.b16 %v8362, %v8354
      %v8755 = vpack.c.b16 %v8363, %v8355
      %v8756 = vpack.c.b16 %v8364, %v8356
      %v8757 = vpack.c.b16 %v8373, %v8365
      %v8758 = vpack.c.b16 %v8374, %v8366
      %v8759 = vpack.c.b16 %v8375, %v8367
      %v8760 = vpack.c.b16 %v8376, %v8368
      %v8761 = vpack.c.b16 %v8377, %v8369
      %v8762 = vpack.c.b16 %v8378, %v8370
      %v8763 = vpack.c.b16 %v8379, %v8371
      %v8764 = vpack.c.b16 %v8380, %v8372
      %v8765 = vpack.c.b16 %v8389, %v8381
      %v8766 = vpack.c.b16 %v8390, %v8382
      %v8767 = vpack.c.b16 %v8391, %v8383
      %v8768 = vpack.c.b16 %v8392, %v8384
      %v8769 = vpack.c.b16 %v8393, %v8385
      %v8770 = vpack.c.b16 %v8394, %v8386
      %v8771 = vpack.c.b16 %v8395, %v8387
      %v8772 = vpack.c.b16 %v8396, %v8388
      %v8773 = vpack.c.b16 %v8405, %v8397
      %v8774 = vpack.c.b16 %v8406, %v8398
      %v8775 = vpack.c.b16 %v8407, %v8399
      %v8776 = vpack.c.b16 %v8408, %v8400
      %v8777 = vpack.c.b16 %v8409, %v8401
      %v8778 = vpack.c.b16 %v8410, %v8402
      %v8779 = vpack.c.b16 %v8411, %v8403
      %v8780 = vpack.c.b16 %v8412, %v8404
      %v8781 = vpack.c.b16 %v8421, %v8413
      %v8782 = vpack.c.b16 %v8422, %v8414
      %v8783 = vpack.c.b16 %v8423, %v8415
      %v8784 = vpack.c.b16 %v8424, %v8416
      %v8785 = vpack.c.b16 %v8425, %v8417
      %v8786 = vpack.c.b16 %v8426, %v8418
      %v8787 = vpack.c.b16 %v8427, %v8419
      %v8788 = vpack.c.b16 %v8428, %v8420
      %v8789 = vpack.c.b16 %v8437, %v8429
      %v8790 = vpack.c.b16 %v8438, %v8430
      %v8791 = vpack.c.b16 %v8439, %v8431
      %v8792 = vpack.c.b16 %v8440, %v8432
      %v8793 = vpack.c.b16 %v8441, %v8433
      %v8794 = vpack.c.b16 %v8442, %v8434
      %v8795 = vpack.c.b16 %v8443, %v8435
      %v8796 = vpack.c.b16 %v8444, %v8436
      %v8797 = vpack.c.b16 %v8453, %v8445
      %v8798 = vpack.c.b16 %v8454, %v8446
      %v8799 = vpack.c.b16 %v8455, %v8447
      %v8800 = vpack.c.b16 %v8456, %v8448
      %v8801 = vpack.c.b16 %v8457, %v8449
      %v8802 = vpack.c.b16 %v8458, %v8450
      %v8803 = vpack.c.b16 %v8459, %v8451
      %v8804 = vpack.c.b16 %v8460, %v8452
      %v8805 = vpack.c.b16 %v8469, %v8461
      %v8806 = vpack.c.b16 %v8470, %v8462
      %v8807 = vpack.c.b16 %v8471, %v8463
      %v8808 = vpack.c.b16 %v8472, %v8464
      %v8809 = vpack.c.b16 %v8473, %v8465
      %v8810 = vpack.c.b16 %v8474, %v8466
      %v8811 = vpack.c.b16 %v8475, %v8467
      %v8812 = vpack.c.b16 %v8476, %v8468
      %v8813 = vpack.c.b16 %v8485, %v8477
      %v8814 = vpack.c.b16 %v8486, %v8478
      %v8815 = vpack.c.b16 %v8487, %v8479
      %v8816 = vpack.c.b16 %v8488, %v8480
      %v8817 = vpack.c.b16 %v8489, %v8481
      %v8818 = vpack.c.b16 %v8490, %v8482
      %v8819 = vpack.c.b16 %v8491, %v8483
      %v8820 = vpack.c.b16 %v8492, %v8484
      %vm9141 = vcmask 72704
      %v9143 = vsel %vm9141, %v7503, 0
      %v9146 = vand.u32 %v8813, %v3617
      %v9149 = vand.u32 %v8814, %v3617
      %v9152 = vand.u32 %v8815, %v3617
      %v9155 = vand.u32 %v8816, %v3617
      %v9158 = vand.u32 %v8817, %v3617
      %v9161 = vand.u32 %v8818, %v3617
      %v9164 = vand.u32 %v8819, %v3617
      %v9167 = vand.u32 %v8820, %v3617
      %9169 = vmatpush.bf16.msra.mxu0 %v8549
      %9170 = vmatpush.bf16.msra.mxu0 %v8541
      %9171 = vmatpush.bf16.msra.mxu0 %v8533
      %9172 = vmatpush.bf16.msra.mxu0 %v8525
      %9173 = vmatpush.bf16.msra.mxu0 %v8517
      %9174 = vmatpush.bf16.msra.mxu0 %v8509
      %9175 = vmatpush.bf16.msra.mxu0 %v8501
      %9176 = vmatpush.bf16.msra.mxu0 %v8493
      %9177 = vmatmul.bf16.gmra.mxu0 %v7498
      %v9178 = vpop.f32.mrf.mxu0
      %v9179 = vadd.f32 0.0, %v9178
      %v9180 = vpop.f32.mrf.mxu0
      %9181 = vdwg.mxu0
      %9182 = vmatpush.bf16.msra.mxu0 %v8613
      %9183 = vmatpush.bf16.msra.mxu0 %v8605
      %9184 = vmatpush.bf16.msra.mxu0 %v8597
      %9185 = vmatpush.bf16.msra.mxu0 %v8589
      %9186 = vmatpush.bf16.msra.mxu0 %v8581
      %9187 = vmatpush.bf16.msra.mxu0 %v8573
      %9188 = vmatpush.bf16.msra.mxu0 %v8565
      %9189 = vmatpush.bf16.msra.mxu0 %v8557
      %9190 = vmatmul.bf16.gmra.mxu0 %v7499
      %v9191 = vpop.f32.mrf.mxu0
      %v9192 = vadd.f32 %v9179, %v9191
      %v9193 = vpop.f32.mrf.mxu0
      %9194 = vdwg.mxu0
      %9195 = vmatpush.bf16.msra.mxu0 %v8677
      %9196 = vmatpush.bf16.msra.mxu0 %v8669
      %9197 = vmatpush.bf16.msra.mxu0 %v8661
      %9198 = vmatpush.bf16.msra.mxu0 %v8653
      %9199 = vmatpush.bf16.msra.mxu0 %v8645
      %9200 = vmatpush.bf16.msra.mxu0 %v8637
      %9201 = vmatpush.bf16.msra.mxu0 %v8629
      %9202 = vmatpush.bf16.msra.mxu0 %v8621
      %9203 = vmatmul.bf16.gmra.mxu0 %v7500
      %v9204 = vpop.f32.mrf.mxu0
      %v9205 = vadd.f32 %v9192, %v9204
      %v9206 = vpop.f32.mrf.mxu0
      %9207 = vdwg.mxu0
      %9208 = vmatpush.bf16.msra.mxu0 %v8741
      %9209 = vmatpush.bf16.msra.mxu0 %v8733
      %9210 = vmatpush.bf16.msra.mxu0 %v8725
      %9211 = vmatpush.bf16.msra.mxu0 %v8717
      %9212 = vmatpush.bf16.msra.mxu0 %v8709
      %9213 = vmatpush.bf16.msra.mxu0 %v8701
      %9214 = vmatpush.bf16.msra.mxu0 %v8693
      %9215 = vmatpush.bf16.msra.mxu0 %v8685
      %9216 = vmatmul.bf16.gmra.mxu0 %v7501
      %v9217 = vpop.f32.mrf.mxu0
      %v9218 = vadd.f32 %v9205, %v9217
      %v9219 = vpop.f32.mrf.mxu0
      %9220 = vdwg.mxu0
      %9221 = vmatpush.bf16.msra.mxu0 %v8805
      %9222 = vmatpush.bf16.msra.mxu0 %v8797
      %9223 = vmatpush.bf16.msra.mxu0 %v8789
      %9224 = vmatpush.bf16.msra.mxu0 %v8781
      %9225 = vmatpush.bf16.msra.mxu0 %v8773
      %9226 = vmatpush.bf16.msra.mxu0 %v8765
      %9227 = vmatpush.bf16.msra.mxu0 %v8757
      %9228 = vmatpush.bf16.msra.mxu0 %v8749
      %9229 = vmatmul.bf16.gmra.mxu0 %v7502
      %v9230 = vpop.f32.mrf.mxu0
      %v9231 = vadd.f32 %v9218, %v9230
      %v9232 = vpop.f32.mrf.mxu0
      %9233 = vdwg.mxu0
      %9234 = vmatpush.bf16.msra.mxu0 0
      %9235 = vmatpush.bf16.msra.mxu0 0
      %9236 = vmatpush.bf16.msra.mxu0 0
      %9237 = vmatpush.bf16.msra.mxu0 0
      %9238 = vmatpush.bf16.msra.mxu0 0
      %9239 = vmatpush.bf16.msra.mxu0 0
      %9240 = vmatpush.bf16.msra.mxu0 0
      %9241 = vmatpush.bf16.msra.mxu0 %v9146
      %9242 = vmatmul.bf16.gmra.mxu0 %v9143
      %v9243 = vpop.f32.mrf.mxu0
      %v9244 = vadd.f32 %v9231, %v9243
      %v9245 = vpop.f32.mrf.mxu0
      %9246 = vdwg.mxu0
      %9247 = vmatpush.bf16.msra.mxu0 %v8550
      %9248 = vmatpush.bf16.msra.mxu0 %v8542
      %9249 = vmatpush.bf16.msra.mxu0 %v8534
      %9250 = vmatpush.bf16.msra.mxu0 %v8526
      %9251 = vmatpush.bf16.msra.mxu0 %v8518
      %9252 = vmatpush.bf16.msra.mxu0 %v8510
      %9253 = vmatpush.bf16.msra.mxu0 %v8502
      %9254 = vmatpush.bf16.msra.mxu0 %v8494
      %9255 = vmatmul.bf16.gmra.mxu0 %v7498
      %v9256 = vpop.f32.mrf.mxu0
      %v9257 = vadd.f32 0.0, %v9256
      %v9258 = vpop.f32.mrf.mxu0
      %9259 = vdwg.mxu0
      %9260 = vmatpush.bf16.msra.mxu0 %v8614
      %9261 = vmatpush.bf16.msra.mxu0 %v8606
      %9262 = vmatpush.bf16.msra.mxu0 %v8598
      %9263 = vmatpush.bf16.msra.mxu0 %v8590
      %9264 = vmatpush.bf16.msra.mxu0 %v8582
      %9265 = vmatpush.bf16.msra.mxu0 %v8574
      %9266 = vmatpush.bf16.msra.mxu0 %v8566
      %9267 = vmatpush.bf16.msra.mxu0 %v8558
      %9268 = vmatmul.bf16.gmra.mxu0 %v7499
      %v9269 = vpop.f32.mrf.mxu0
      %v9270 = vadd.f32 %v9257, %v9269
      %v9271 = vpop.f32.mrf.mxu0
      %9272 = vdwg.mxu0
      %9273 = vmatpush.bf16.msra.mxu0 %v8678
      %9274 = vmatpush.bf16.msra.mxu0 %v8670
      %9275 = vmatpush.bf16.msra.mxu0 %v8662
      %9276 = vmatpush.bf16.msra.mxu0 %v8654
      %9277 = vmatpush.bf16.msra.mxu0 %v8646
      %9278 = vmatpush.bf16.msra.mxu0 %v8638
      %9279 = vmatpush.bf16.msra.mxu0 %v8630
      %9280 = vmatpush.bf16.msra.mxu0 %v8622
      %9281 = vmatmul.bf16.gmra.mxu0 %v7500
      %v9282 = vpop.f32.mrf.mxu0
      %v9283 = vadd.f32 %v9270, %v9282
      %v9284 = vpop.f32.mrf.mxu0
      %9285 = vdwg.mxu0
      %9286 = vmatpush.bf16.msra.mxu0 %v8742
      %9287 = vmatpush.bf16.msra.mxu0 %v8734
      %9288 = vmatpush.bf16.msra.mxu0 %v8726
      %9289 = vmatpush.bf16.msra.mxu0 %v8718
      %9290 = vmatpush.bf16.msra.mxu0 %v8710
      %9291 = vmatpush.bf16.msra.mxu0 %v8702
      %9292 = vmatpush.bf16.msra.mxu0 %v8694
      %9293 = vmatpush.bf16.msra.mxu0 %v8686
      %9294 = vmatmul.bf16.gmra.mxu0 %v7501
      %v9295 = vpop.f32.mrf.mxu0
      %v9296 = vadd.f32 %v9283, %v9295
      %v9297 = vpop.f32.mrf.mxu0
      %9298 = vdwg.mxu0
      %9299 = vmatpush.bf16.msra.mxu0 %v8806
      %9300 = vmatpush.bf16.msra.mxu0 %v8798
      %9301 = vmatpush.bf16.msra.mxu0 %v8790
      %9302 = vmatpush.bf16.msra.mxu0 %v8782
      %9303 = vmatpush.bf16.msra.mxu0 %v8774
      %9304 = vmatpush.bf16.msra.mxu0 %v8766
      %9305 = vmatpush.bf16.msra.mxu0 %v8758
      %9306 = vmatpush.bf16.msra.mxu0 %v8750
      %9307 = vmatmul.bf16.gmra.mxu0 %v7502
      %v9308 = vpop.f32.mrf.mxu0
      %v9309 = vadd.f32 %v9296, %v9308
      %v9310 = vpop.f32.mrf.mxu0
      %9311 = vdwg.mxu0
      %9312 = vmatpush.bf16.msra.mxu0 0
      %9313 = vmatpush.bf16.msra.mxu0 0
      %9314 = vmatpush.bf16.msra.mxu0 0
      %9315 = vmatpush.bf16.msra.mxu0 0
      %9316 = vmatpush.bf16.msra.mxu0 0
      %9317 = vmatpush.bf16.msra.mxu0 0
      %9318 = vmatpush.bf16.msra.mxu0 0
      %9319 = vmatpush.bf16.msra.mxu0 %v9149
      %9320 = vmatmul.bf16.gmra.mxu0 %v9143
      %v9321 = vpop.f32.mrf.mxu0
      %v9322 = vadd.f32 %v9309, %v9321
      %v9323 = vpop.f32.mrf.mxu0
      %9324 = vdwg.mxu0
      %9325 = vmatpush.bf16.msra.mxu0 %v8551
      %9326 = vmatpush.bf16.msra.mxu0 %v8543
      %9327 = vmatpush.bf16.msra.mxu0 %v8535
      %9328 = vmatpush.bf16.msra.mxu0 %v8527
      %9329 = vmatpush.bf16.msra.mxu0 %v8519
      %9330 = vmatpush.bf16.msra.mxu0 %v8511
      %9331 = vmatpush.bf16.msra.mxu0 %v8503
      %9332 = vmatpush.bf16.msra.mxu0 %v8495
      %9333 = vmatmul.bf16.gmra.mxu0 %v7498
      %v9334 = vpop.f32.mrf.mxu0
      %v9335 = vadd.f32 0.0, %v9334
      %v9336 = vpop.f32.mrf.mxu0
      %9337 = vdwg.mxu0
      %9338 = vmatpush.bf16.msra.mxu0 %v8615
      %9339 = vmatpush.bf16.msra.mxu0 %v8607
      %9340 = vmatpush.bf16.msra.mxu0 %v8599
      %9341 = vmatpush.bf16.msra.mxu0 %v8591
      %9342 = vmatpush.bf16.msra.mxu0 %v8583
      %9343 = vmatpush.bf16.msra.mxu0 %v8575
      %9344 = vmatpush.bf16.msra.mxu0 %v8567
      %9345 = vmatpush.bf16.msra.mxu0 %v8559
      %9346 = vmatmul.bf16.gmra.mxu0 %v7499
      %v9347 = vpop.f32.mrf.mxu0
      %v9348 = vadd.f32 %v9335, %v9347
      %v9349 = vpop.f32.mrf.mxu0
      %9350 = vdwg.mxu0
      %9351 = vmatpush.bf16.msra.mxu0 %v8679
      %9352 = vmatpush.bf16.msra.mxu0 %v8671
      %9353 = vmatpush.bf16.msra.mxu0 %v8663
      %9354 = vmatpush.bf16.msra.mxu0 %v8655
      %9355 = vmatpush.bf16.msra.mxu0 %v8647
      %9356 = vmatpush.bf16.msra.mxu0 %v8639
      %9357 = vmatpush.bf16.msra.mxu0 %v8631
      %9358 = vmatpush.bf16.msra.mxu0 %v8623
      %9359 = vmatmul.bf16.gmra.mxu0 %v7500
      %v9360 = vpop.f32.mrf.mxu0
      %v9361 = vadd.f32 %v9348, %v9360
      %v9362 = vpop.f32.mrf.mxu0
      %9363 = vdwg.mxu0
      %9364 = vmatpush.bf16.msra.mxu0 %v8743
      %9365 = vmatpush.bf16.msra.mxu0 %v8735
      %9366 = vmatpush.bf16.msra.mxu0 %v8727
      %9367 = vmatpush.bf16.msra.mxu0 %v8719
      %9368 = vmatpush.bf16.msra.mxu0 %v8711
      %9369 = vmatpush.bf16.msra.mxu0 %v8703
      %9370 = vmatpush.bf16.msra.mxu0 %v8695
      %9371 = vmatpush.bf16.msra.mxu0 %v8687
      %9372 = vmatmul.bf16.gmra.mxu0 %v7501
      %v9373 = vpop.f32.mrf.mxu0
      %v9374 = vadd.f32 %v9361, %v9373
      %v9375 = vpop.f32.mrf.mxu0
      %9376 = vdwg.mxu0
      %9377 = vmatpush.bf16.msra.mxu0 %v8807
      %9378 = vmatpush.bf16.msra.mxu0 %v8799
      %9379 = vmatpush.bf16.msra.mxu0 %v8791
      %9380 = vmatpush.bf16.msra.mxu0 %v8783
      %9381 = vmatpush.bf16.msra.mxu0 %v8775
      %9382 = vmatpush.bf16.msra.mxu0 %v8767
      %9383 = vmatpush.bf16.msra.mxu0 %v8759
      %9384 = vmatpush.bf16.msra.mxu0 %v8751
      %9385 = vmatmul.bf16.gmra.mxu0 %v7502
      %v9386 = vpop.f32.mrf.mxu0
      %v9387 = vadd.f32 %v9374, %v9386
      %v9388 = vpop.f32.mrf.mxu0
      %9389 = vdwg.mxu0
      %9390 = vmatpush.bf16.msra.mxu0 0
      %9391 = vmatpush.bf16.msra.mxu0 0
      %9392 = vmatpush.bf16.msra.mxu0 0
      %9393 = vmatpush.bf16.msra.mxu0 0
      %9394 = vmatpush.bf16.msra.mxu0 0
      %9395 = vmatpush.bf16.msra.mxu0 0
      %9396 = vmatpush.bf16.msra.mxu0 0
      %9397 = vmatpush.bf16.msra.mxu0 %v9152
      %9398 = vmatmul.bf16.gmra.mxu0 %v9143
      %v9399 = vpop.f32.mrf.mxu0
      %v9400 = vadd.f32 %v9387, %v9399
      %v9401 = vpop.f32.mrf.mxu0
      %9402 = vdwg.mxu0
      %9403 = vmatpush.bf16.msra.mxu0 %v8552
      %9404 = vmatpush.bf16.msra.mxu0 %v8544
      %9405 = vmatpush.bf16.msra.mxu0 %v8536
      %9406 = vmatpush.bf16.msra.mxu0 %v8528
      %9407 = vmatpush.bf16.msra.mxu0 %v8520
      %9408 = vmatpush.bf16.msra.mxu0 %v8512
      %9409 = vmatpush.bf16.msra.mxu0 %v8504
      %9410 = vmatpush.bf16.msra.mxu0 %v8496
      %9411 = vmatmul.bf16.gmra.mxu0 %v7498
      %v9412 = vpop.f32.mrf.mxu0
      %v9413 = vadd.f32 0.0, %v9412
      %v9414 = vpop.f32.mrf.mxu0
      %9415 = vdwg.mxu0
      %9416 = vmatpush.bf16.msra.mxu0 %v8616
      %9417 = vmatpush.bf16.msra.mxu0 %v8608
      %9418 = vmatpush.bf16.msra.mxu0 %v8600
      %9419 = vmatpush.bf16.msra.mxu0 %v8592
      %9420 = vmatpush.bf16.msra.mxu0 %v8584
      %9421 = vmatpush.bf16.msra.mxu0 %v8576
      %9422 = vmatpush.bf16.msra.mxu0 %v8568
      %9423 = vmatpush.bf16.msra.mxu0 %v8560
      %9424 = vmatmul.bf16.gmra.mxu0 %v7499
      %v9425 = vpop.f32.mrf.mxu0
      %v9426 = vadd.f32 %v9413, %v9425
      %v9427 = vpop.f32.mrf.mxu0
      %9428 = vdwg.mxu0
      %9429 = vmatpush.bf16.msra.mxu0 %v8680
      %9430 = vmatpush.bf16.msra.mxu0 %v8672
      %9431 = vmatpush.bf16.msra.mxu0 %v8664
      %9432 = vmatpush.bf16.msra.mxu0 %v8656
      %9433 = vmatpush.bf16.msra.mxu0 %v8648
      %9434 = vmatpush.bf16.msra.mxu0 %v8640
      %9435 = vmatpush.bf16.msra.mxu0 %v8632
      %9436 = vmatpush.bf16.msra.mxu0 %v8624
      %9437 = vmatmul.bf16.gmra.mxu0 %v7500
      %v9438 = vpop.f32.mrf.mxu0
      %v9439 = vadd.f32 %v9426, %v9438
      %v9440 = vpop.f32.mrf.mxu0
      %9441 = vdwg.mxu0
      %9442 = vmatpush.bf16.msra.mxu0 %v8744
      %9443 = vmatpush.bf16.msra.mxu0 %v8736
      %9444 = vmatpush.bf16.msra.mxu0 %v8728
      %9445 = vmatpush.bf16.msra.mxu0 %v8720
      %9446 = vmatpush.bf16.msra.mxu0 %v8712
      %9447 = vmatpush.bf16.msra.mxu0 %v8704
      %9448 = vmatpush.bf16.msra.mxu0 %v8696
      %9449 = vmatpush.bf16.msra.mxu0 %v8688
      %9450 = vmatmul.bf16.gmra.mxu0 %v7501
      %v9451 = vpop.f32.mrf.mxu0
      %v9452 = vadd.f32 %v9439, %v9451
      %v9453 = vpop.f32.mrf.mxu0
      %9454 = vdwg.mxu0
      %9455 = vmatpush.bf16.msra.mxu0 %v8808
      %9456 = vmatpush.bf16.msra.mxu0 %v8800
      %9457 = vmatpush.bf16.msra.mxu0 %v8792
      %9458 = vmatpush.bf16.msra.mxu0 %v8784
      %9459 = vmatpush.bf16.msra.mxu0 %v8776
      %9460 = vmatpush.bf16.msra.mxu0 %v8768
      %9461 = vmatpush.bf16.msra.mxu0 %v8760
      %9462 = vmatpush.bf16.msra.mxu0 %v8752
      %9463 = vmatmul.bf16.gmra.mxu0 %v7502
      %v9464 = vpop.f32.mrf.mxu0
      %v9465 = vadd.f32 %v9452, %v9464
      %v9466 = vpop.f32.mrf.mxu0
      %9467 = vdwg.mxu0
      %9468 = vmatpush.bf16.msra.mxu0 0
      %9469 = vmatpush.bf16.msra.mxu0 0
      %9470 = vmatpush.bf16.msra.mxu0 0
      %9471 = vmatpush.bf16.msra.mxu0 0
      %9472 = vmatpush.bf16.msra.mxu0 0
      %9473 = vmatpush.bf16.msra.mxu0 0
      %9474 = vmatpush.bf16.msra.mxu0 0
      %9475 = vmatpush.bf16.msra.mxu0 %v9155
      %9476 = vmatmul.bf16.gmra.mxu0 %v9143
      %v9477 = vpop.f32.mrf.mxu0
      %v9478 = vadd.f32 %v9465, %v9477
      %v9479 = vpop.f32.mrf.mxu0
      %9480 = vdwg.mxu0
      %9481 = vmatpush.bf16.msra.mxu0 %v8553
      %9482 = vmatpush.bf16.msra.mxu0 %v8545
      %9483 = vmatpush.bf16.msra.mxu0 %v8537
      %9484 = vmatpush.bf16.msra.mxu0 %v8529
      %9485 = vmatpush.bf16.msra.mxu0 %v8521
      %9486 = vmatpush.bf16.msra.mxu0 %v8513
      %9487 = vmatpush.bf16.msra.mxu0 %v8505
      %9488 = vmatpush.bf16.msra.mxu0 %v8497
      %9489 = vmatmul.bf16.gmra.mxu0 %v7498
      %v9490 = vpop.f32.mrf.mxu0
      %v9491 = vadd.f32 0.0, %v9490
      %v9492 = vpop.f32.mrf.mxu0
      %9493 = vdwg.mxu0
      %9494 = vmatpush.bf16.msra.mxu0 %v8617
      %9495 = vmatpush.bf16.msra.mxu0 %v8609
      %9496 = vmatpush.bf16.msra.mxu0 %v8601
      %9497 = vmatpush.bf16.msra.mxu0 %v8593
      %9498 = vmatpush.bf16.msra.mxu0 %v8585
      %9499 = vmatpush.bf16.msra.mxu0 %v8577
      %9500 = vmatpush.bf16.msra.mxu0 %v8569
      %9501 = vmatpush.bf16.msra.mxu0 %v8561
      %9502 = vmatmul.bf16.gmra.mxu0 %v7499
      %v9503 = vpop.f32.mrf.mxu0
      %v9504 = vadd.f32 %v9491, %v9503
      %v9505 = vpop.f32.mrf.mxu0
      %9506 = vdwg.mxu0
      %9507 = vmatpush.bf16.msra.mxu0 %v8681
      %9508 = vmatpush.bf16.msra.mxu0 %v8673
      %9509 = vmatpush.bf16.msra.mxu0 %v8665
      %9510 = vmatpush.bf16.msra.mxu0 %v8657
      %9511 = vmatpush.bf16.msra.mxu0 %v8649
      %9512 = vmatpush.bf16.msra.mxu0 %v8641
      %9513 = vmatpush.bf16.msra.mxu0 %v8633
      %9514 = vmatpush.bf16.msra.mxu0 %v8625
      %9515 = vmatmul.bf16.gmra.mxu0 %v7500
      %v9516 = vpop.f32.mrf.mxu0
      %v9517 = vadd.f32 %v9504, %v9516
      %v9518 = vpop.f32.mrf.mxu0
      %9519 = vdwg.mxu0
      %9520 = vmatpush.bf16.msra.mxu0 %v8745
      %9521 = vmatpush.bf16.msra.mxu0 %v8737
      %9522 = vmatpush.bf16.msra.mxu0 %v8729
      %9523 = vmatpush.bf16.msra.mxu0 %v8721
      %9524 = vmatpush.bf16.msra.mxu0 %v8713
      %9525 = vmatpush.bf16.msra.mxu0 %v8705
      %9526 = vmatpush.bf16.msra.mxu0 %v8697
      %9527 = vmatpush.bf16.msra.mxu0 %v8689
      %9528 = vmatmul.bf16.gmra.mxu0 %v7501
      %v9529 = vpop.f32.mrf.mxu0
      %v9530 = vadd.f32 %v9517, %v9529
      %v9531 = vpop.f32.mrf.mxu0
      %9532 = vdwg.mxu0
      %9533 = vmatpush.bf16.msra.mxu0 %v8809
      %9534 = vmatpush.bf16.msra.mxu0 %v8801
      %9535 = vmatpush.bf16.msra.mxu0 %v8793
      %9536 = vmatpush.bf16.msra.mxu0 %v8785
      %9537 = vmatpush.bf16.msra.mxu0 %v8777
      %9538 = vmatpush.bf16.msra.mxu0 %v8769
      %9539 = vmatpush.bf16.msra.mxu0 %v8761
      %9540 = vmatpush.bf16.msra.mxu0 %v8753
      %9541 = vmatmul.bf16.gmra.mxu0 %v7502
      %v9542 = vpop.f32.mrf.mxu0
      %v9543 = vadd.f32 %v9530, %v9542
      %v9544 = vpop.f32.mrf.mxu0
      %9545 = vdwg.mxu0
      %9546 = vmatpush.bf16.msra.mxu0 0
      %9547 = vmatpush.bf16.msra.mxu0 0
      %9548 = vmatpush.bf16.msra.mxu0 0
      %9549 = vmatpush.bf16.msra.mxu0 0
      %9550 = vmatpush.bf16.msra.mxu0 0
      %9551 = vmatpush.bf16.msra.mxu0 0
      %9552 = vmatpush.bf16.msra.mxu0 0
      %9553 = vmatpush.bf16.msra.mxu0 %v9158
      %9554 = vmatmul.bf16.gmra.mxu0 %v9143
      %v9555 = vpop.f32.mrf.mxu0
      %v9556 = vadd.f32 %v9543, %v9555
      %v9557 = vpop.f32.mrf.mxu0
      %9558 = vdwg.mxu0
      %9559 = vmatpush.bf16.msra.mxu0 %v8554
      %9560 = vmatpush.bf16.msra.mxu0 %v8546
      %9561 = vmatpush.bf16.msra.mxu0 %v8538
      %9562 = vmatpush.bf16.msra.mxu0 %v8530
      %9563 = vmatpush.bf16.msra.mxu0 %v8522
      %9564 = vmatpush.bf16.msra.mxu0 %v8514
      %9565 = vmatpush.bf16.msra.mxu0 %v8506
      %9566 = vmatpush.bf16.msra.mxu0 %v8498
      %9567 = vmatmul.bf16.gmra.mxu0 %v7498
      %v9568 = vpop.f32.mrf.mxu0
      %v9569 = vadd.f32 0.0, %v9568
      %v9570 = vpop.f32.mrf.mxu0
      %9571 = vdwg.mxu0
      %9572 = vmatpush.bf16.msra.mxu0 %v8618
      %9573 = vmatpush.bf16.msra.mxu0 %v8610
      %9574 = vmatpush.bf16.msra.mxu0 %v8602
      %9575 = vmatpush.bf16.msra.mxu0 %v8594
      %9576 = vmatpush.bf16.msra.mxu0 %v8586
      %9577 = vmatpush.bf16.msra.mxu0 %v8578
      %9578 = vmatpush.bf16.msra.mxu0 %v8570
      %9579 = vmatpush.bf16.msra.mxu0 %v8562
      %9580 = vmatmul.bf16.gmra.mxu0 %v7499
      %v9581 = vpop.f32.mrf.mxu0
      %v9582 = vadd.f32 %v9569, %v9581
      %v9583 = vpop.f32.mrf.mxu0
      %9584 = vdwg.mxu0
      %9585 = vmatpush.bf16.msra.mxu0 %v8682
      %9586 = vmatpush.bf16.msra.mxu0 %v8674
      %9587 = vmatpush.bf16.msra.mxu0 %v8666
      %9588 = vmatpush.bf16.msra.mxu0 %v8658
      %9589 = vmatpush.bf16.msra.mxu0 %v8650
      %9590 = vmatpush.bf16.msra.mxu0 %v8642
      %9591 = vmatpush.bf16.msra.mxu0 %v8634
      %9592 = vmatpush.bf16.msra.mxu0 %v8626
      %9593 = vmatmul.bf16.gmra.mxu0 %v7500
      %v9594 = vpop.f32.mrf.mxu0
      %v9595 = vadd.f32 %v9582, %v9594
      %v9596 = vpop.f32.mrf.mxu0
      %9597 = vdwg.mxu0
      %9598 = vmatpush.bf16.msra.mxu0 %v8746
      %9599 = vmatpush.bf16.msra.mxu0 %v8738
      %9600 = vmatpush.bf16.msra.mxu0 %v8730
      %9601 = vmatpush.bf16.msra.mxu0 %v8722
      %9602 = vmatpush.bf16.msra.mxu0 %v8714
      %9603 = vmatpush.bf16.msra.mxu0 %v8706
      %9604 = vmatpush.bf16.msra.mxu0 %v8698
      %9605 = vmatpush.bf16.msra.mxu0 %v8690
      %9606 = vmatmul.bf16.gmra.mxu0 %v7501
      %v9607 = vpop.f32.mrf.mxu0
      %v9608 = vadd.f32 %v9595, %v9607
      %v9609 = vpop.f32.mrf.mxu0
      %9610 = vdwg.mxu0
      %9611 = vmatpush.bf16.msra.mxu0 %v8810
      %9612 = vmatpush.bf16.msra.mxu0 %v8802
      %9613 = vmatpush.bf16.msra.mxu0 %v8794
      %9614 = vmatpush.bf16.msra.mxu0 %v8786
      %9615 = vmatpush.bf16.msra.mxu0 %v8778
      %9616 = vmatpush.bf16.msra.mxu0 %v8770
      %9617 = vmatpush.bf16.msra.mxu0 %v8762
      %9618 = vmatpush.bf16.msra.mxu0 %v8754
      %9619 = vmatmul.bf16.gmra.mxu0 %v7502
      %v9620 = vpop.f32.mrf.mxu0
      %v9621 = vadd.f32 %v9608, %v9620
      %v9622 = vpop.f32.mrf.mxu0
      %9623 = vdwg.mxu0
      %9624 = vmatpush.bf16.msra.mxu0 0
      %9625 = vmatpush.bf16.msra.mxu0 0
      %9626 = vmatpush.bf16.msra.mxu0 0
      %9627 = vmatpush.bf16.msra.mxu0 0
      %9628 = vmatpush.bf16.msra.mxu0 0
      %9629 = vmatpush.bf16.msra.mxu0 0
      %9630 = vmatpush.bf16.msra.mxu0 0
      %9631 = vmatpush.bf16.msra.mxu0 %v9161
      %9632 = vmatmul.bf16.gmra.mxu0 %v9143
      %v9633 = vpop.f32.mrf.mxu0
      %v9634 = vadd.f32 %v9621, %v9633
      %v9635 = vpop.f32.mrf.mxu0
      %9636 = vdwg.mxu0
      %9637 = vmatpush.bf16.msra.mxu0 %v8555
      %9638 = vmatpush.bf16.msra.mxu0 %v8547
      %9639 = vmatpush.bf16.msra.mxu0 %v8539
      %9640 = vmatpush.bf16.msra.mxu0 %v8531
      %9641 = vmatpush.bf16.msra.mxu0 %v8523
      %9642 = vmatpush.bf16.msra.mxu0 %v8515
      %9643 = vmatpush.bf16.msra.mxu0 %v8507
      %9644 = vmatpush.bf16.msra.mxu0 %v8499
      %9645 = vmatmul.bf16.gmra.mxu0 %v7498
      %v9646 = vpop.f32.mrf.mxu0
      %v9647 = vadd.f32 0.0, %v9646
      %v9648 = vpop.f32.mrf.mxu0
      %9649 = vdwg.mxu0
      %9650 = vmatpush.bf16.msra.mxu0 %v8619
      %9651 = vmatpush.bf16.msra.mxu0 %v8611
      %9652 = vmatpush.bf16.msra.mxu0 %v8603
      %9653 = vmatpush.bf16.msra.mxu0 %v8595
      %9654 = vmatpush.bf16.msra.mxu0 %v8587
      %9655 = vmatpush.bf16.msra.mxu0 %v8579
      %9656 = vmatpush.bf16.msra.mxu0 %v8571
      %9657 = vmatpush.bf16.msra.mxu0 %v8563
      %9658 = vmatmul.bf16.gmra.mxu0 %v7499
      %v9659 = vpop.f32.mrf.mxu0
      %v9660 = vadd.f32 %v9647, %v9659
      %v9661 = vpop.f32.mrf.mxu0
      %9662 = vdwg.mxu0
      %9663 = vmatpush.bf16.msra.mxu0 %v8683
      %9664 = vmatpush.bf16.msra.mxu0 %v8675
      %9665 = vmatpush.bf16.msra.mxu0 %v8667
      %9666 = vmatpush.bf16.msra.mxu0 %v8659
      %9667 = vmatpush.bf16.msra.mxu0 %v8651
      %9668 = vmatpush.bf16.msra.mxu0 %v8643
      %9669 = vmatpush.bf16.msra.mxu0 %v8635
      %9670 = vmatpush.bf16.msra.mxu0 %v8627
      %9671 = vmatmul.bf16.gmra.mxu0 %v7500
      %v9672 = vpop.f32.mrf.mxu0
      %v9673 = vadd.f32 %v9660, %v9672
      %v9674 = vpop.f32.mrf.mxu0
      %9675 = vdwg.mxu0
      %9676 = vmatpush.bf16.msra.mxu0 %v8747
      %9677 = vmatpush.bf16.msra.mxu0 %v8739
      %9678 = vmatpush.bf16.msra.mxu0 %v8731
      %9679 = vmatpush.bf16.msra.mxu0 %v8723
      %9680 = vmatpush.bf16.msra.mxu0 %v8715
      %9681 = vmatpush.bf16.msra.mxu0 %v8707
      %9682 = vmatpush.bf16.msra.mxu0 %v8699
      %9683 = vmatpush.bf16.msra.mxu0 %v8691
      %9684 = vmatmul.bf16.gmra.mxu0 %v7501
      %v9685 = vpop.f32.mrf.mxu0
      %v9686 = vadd.f32 %v9673, %v9685
      %v9687 = vpop.f32.mrf.mxu0
      %9688 = vdwg.mxu0
      %9689 = vmatpush.bf16.msra.mxu0 %v8811
      %9690 = vmatpush.bf16.msra.mxu0 %v8803
      %9691 = vmatpush.bf16.msra.mxu0 %v8795
      %9692 = vmatpush.bf16.msra.mxu0 %v8787
      %9693 = vmatpush.bf16.msra.mxu0 %v8779
      %9694 = vmatpush.bf16.msra.mxu0 %v8771
      %9695 = vmatpush.bf16.msra.mxu0 %v8763
      %9696 = vmatpush.bf16.msra.mxu0 %v8755
      %9697 = vmatmul.bf16.gmra.mxu0 %v7502
      %v9698 = vpop.f32.mrf.mxu0
      %v9699 = vadd.f32 %v9686, %v9698
      %v9700 = vpop.f32.mrf.mxu0
      %9701 = vdwg.mxu0
      %9702 = vmatpush.bf16.msra.mxu0 0
      %9703 = vmatpush.bf16.msra.mxu0 0
      %9704 = vmatpush.bf16.msra.mxu0 0
      %9705 = vmatpush.bf16.msra.mxu0 0
      %9706 = vmatpush.bf16.msra.mxu0 0
      %9707 = vmatpush.bf16.msra.mxu0 0
      %9708 = vmatpush.bf16.msra.mxu0 0
      %9709 = vmatpush.bf16.msra.mxu0 %v9164
      %9710 = vmatmul.bf16.gmra.mxu0 %v9143
      %v9711 = vpop.f32.mrf.mxu0
      %v9712 = vadd.f32 %v9699, %v9711
      %v9713 = vpop.f32.mrf.mxu0
      %9714 = vdwg.mxu0
      %9715 = vmatpush.bf16.msra.mxu0 %v8556
      %9716 = vmatpush.bf16.msra.mxu0 %v8548
      %9717 = vmatpush.bf16.msra.mxu0 %v8540
      %9718 = vmatpush.bf16.msra.mxu0 %v8532
      %9719 = vmatpush.bf16.msra.mxu0 %v8524
      %9720 = vmatpush.bf16.msra.mxu0 %v8516
      %9721 = vmatpush.bf16.msra.mxu0 %v8508
      %9722 = vmatpush.bf16.msra.mxu0 %v8500
      %9723 = vmatmul.bf16.gmra.mxu0 %v7498
      %v9724 = vpop.f32.mrf.mxu0
      %v9725 = vadd.f32 0.0, %v9724
      %v9726 = vpop.f32.mrf.mxu0
      %9727 = vdwg.mxu0
      %9728 = vmatpush.bf16.msra.mxu0 %v8620
      %9729 = vmatpush.bf16.msra.mxu0 %v8612
      %9730 = vmatpush.bf16.msra.mxu0 %v8604
      %9731 = vmatpush.bf16.msra.mxu0 %v8596
      %9732 = vmatpush.bf16.msra.mxu0 %v8588
      %9733 = vmatpush.bf16.msra.mxu0 %v8580
      %9734 = vmatpush.bf16.msra.mxu0 %v8572
      %9735 = vmatpush.bf16.msra.mxu0 %v8564
      %9736 = vmatmul.bf16.gmra.mxu0 %v7499
      %v9737 = vpop.f32.mrf.mxu0
      %v9738 = vadd.f32 %v9725, %v9737
      %v9739 = vpop.f32.mrf.mxu0
      %9740 = vdwg.mxu0
      %9741 = vmatpush.bf16.msra.mxu0 %v8684
      %9742 = vmatpush.bf16.msra.mxu0 %v8676
      %9743 = vmatpush.bf16.msra.mxu0 %v8668
      %9744 = vmatpush.bf16.msra.mxu0 %v8660
      %9745 = vmatpush.bf16.msra.mxu0 %v8652
      %9746 = vmatpush.bf16.msra.mxu0 %v8644
      %9747 = vmatpush.bf16.msra.mxu0 %v8636
      %9748 = vmatpush.bf16.msra.mxu0 %v8628
      %9749 = vmatmul.bf16.gmra.mxu0 %v7500
      %v9750 = vpop.f32.mrf.mxu0
      %v9751 = vadd.f32 %v9738, %v9750
      %v9752 = vpop.f32.mrf.mxu0
      %9753 = vdwg.mxu0
      %9754 = vmatpush.bf16.msra.mxu0 %v8748
      %9755 = vmatpush.bf16.msra.mxu0 %v8740
      %9756 = vmatpush.bf16.msra.mxu0 %v8732
      %9757 = vmatpush.bf16.msra.mxu0 %v8724
      %9758 = vmatpush.bf16.msra.mxu0 %v8716
      %9759 = vmatpush.bf16.msra.mxu0 %v8708
      %9760 = vmatpush.bf16.msra.mxu0 %v8700
      %9761 = vmatpush.bf16.msra.mxu0 %v8692
      %9762 = vmatmul.bf16.gmra.mxu0 %v7501
      %v9763 = vpop.f32.mrf.mxu0
      %v9764 = vadd.f32 %v9751, %v9763
      %v9765 = vpop.f32.mrf.mxu0
      %9766 = vdwg.mxu0
      %9767 = vmatpush.bf16.msra.mxu0 %v8812
      %9768 = vmatpush.bf16.msra.mxu0 %v8804
      %9769 = vmatpush.bf16.msra.mxu0 %v8796
      %9770 = vmatpush.bf16.msra.mxu0 %v8788
      %9771 = vmatpush.bf16.msra.mxu0 %v8780
      %9772 = vmatpush.bf16.msra.mxu0 %v8772
      %9773 = vmatpush.bf16.msra.mxu0 %v8764
      %9774 = vmatpush.bf16.msra.mxu0 %v8756
      %9775 = vmatmul.bf16.gmra.mxu0 %v7502
      %v9776 = vpop.f32.mrf.mxu0
      %v9777 = vadd.f32 %v9764, %v9776
      %v9778 = vpop.f32.mrf.mxu0
      %9779 = vdwg.mxu0
      %9780 = vmatpush.bf16.msra.mxu0 0
      %9781 = vmatpush.bf16.msra.mxu0 0
      %9782 = vmatpush.bf16.msra.mxu0 0
      %9783 = vmatpush.bf16.msra.mxu0 0
      %9784 = vmatpush.bf16.msra.mxu0 0
      %9785 = vmatpush.bf16.msra.mxu0 0
      %9786 = vmatpush.bf16.msra.mxu0 0
      %9787 = vmatpush.bf16.msra.mxu0 %v9167
      %9788 = vmatmul.bf16.gmra.mxu0 %v9143
      %v9789 = vpop.f32.mrf.mxu0
      %v9790 = vadd.f32 %v9777, %v9789
      %v9791 = vpop.f32.mrf.mxu0
      %9792 = vdwg.mxu0
      %v9793 = vmax.f32 %v9244, 0.0
      %v9794 = vmax.f32 %v9322, 0.0
      %v9795 = vmax.f32 %v9400, 0.0
      %v9796 = vmax.f32 %v9478, 0.0
      %v9797 = vmax.f32 %v9556, 0.0
      %v9798 = vmax.f32 %v9634, 0.0
      %v9799 = vmax.f32 %v9712, 0.0
      %v9800 = vmax.f32 %v9790, 0.0
      %v9801 = vpack.c.bf16 %v9794, %v9793
      %v9802 = vpack.c.bf16 %v9796, %v9795
      %v9803 = vpack.c.bf16 %v9798, %v9797
      %v9804 = vpack.c.bf16 %v9800, %v9799
      %9805 = vst [vmem:[#allocation8] sm:$0xff] %v9801
      %9806 = vst [vmem:[#allocation8 + $0x8] sm:$0xff] %v9802
      %9807 = vst [vmem:[#allocation8 + $0x10] sm:$0xff] %v9803
      %9808 = vst [vmem:[#allocation8 + $0x18] sm:$0xff] %v9804
      %v9809 = vld [vmem:[#allocation8 + $0x20] sm:$0x11]
      %v9810 = vsel %vm3261, 1065369472, %v9809
      %9811 = vst [vmem:[#allocation8 + $0x20] sm:$0x11] %v9810
      %v9812 = vld [vmem:[#allocation8 + $0x28] sm:$0x11]
      %v9813 = vsel %vm3261, 1065369472, %v9812
      %9814 = vst [vmem:[#allocation8 + $0x28] sm:$0x11] %v9813
      %v9815 = vld [vmem:[#allocation8 + $0x30] sm:$0x11]
      %v9816 = vsel %vm3261, 1065369472, %v9815
      %9817 = vst [vmem:[#allocation8 + $0x30] sm:$0x11] %v9816
      %v9818 = vld [vmem:[#allocation8 + $0x38] sm:$0x11]
      %v9819 = vsel %vm3261, 1065369472, %v9818
      %9820 = vst [vmem:[#allocation8 + $0x38] sm:$0x11] %v9819
      %v9821 = vld [vmem:[%s4] sm:$0x1]
      %v9822 = vld [vmem:[#allocation8] sm:$0xff]
      %v9823 = vld [vmem:[#allocation8 + $0x8] sm:$0xff]
      %v9824 = vld [vmem:[#allocation8 + $0x10] sm:$0xff]
      %v9825 = vld [vmem:[#allocation8 + $0x18] sm:$0xff]
      %v9826 = vld [vmem:[#allocation8 + $0x20] sm:$0x11]
      %v9827 = vld [vmem:[#allocation8 + $0x28] sm:$0x11]
      %v9828 = vld [vmem:[#allocation8 + $0x30] sm:$0x11]
      %v9829 = vld [vmem:[#allocation8 + $0x38] sm:$0x11]
      %v9838 = vunpack.c.l.b16 %v9822
      %v9839 = vunpack.c.h.b16 %v9822
      %v9840 = vunpack.c.l.b16 %v9823
      %v9841 = vunpack.c.h.b16 %v9823
      %v9842 = vunpack.c.l.b16 %v9824
      %v9843 = vunpack.c.h.b16 %v9824
      %v9844 = vunpack.c.l.b16 %v9825
      %v9845 = vunpack.c.h.b16 %v9825
      %v9846 = vunpack.c.l.b16 %v9826
      %v9847 = vunpack.c.h.b16 %v9826
      %v9848 = vunpack.c.l.b16 %v9827
      %v9849 = vunpack.c.h.b16 %v9827
      %v9850 = vunpack.c.l.b16 %v9828
      %v9851 = vunpack.c.h.b16 %v9828
      %v9852 = vunpack.c.l.b16 %v9829
      %v9853 = vunpack.c.h.b16 %v9829
      %v9854 = vpack.c.b16 %v9846, %v9838
      %v9855 = vpack.c.b16 %v9847, %v9839
      %v9856 = vpack.c.b16 %v9848, %v9840
      %v9857 = vpack.c.b16 %v9849, %v9841
      %v9858 = vpack.c.b16 %v9850, %v9842
      %v9859 = vpack.c.b16 %v9851, %v9843
      %v9860 = vpack.c.b16 %v9852, %v9844
      %v9861 = vpack.c.b16 %v9853, %v9845
      %v9863 = vsel %vm9141, %v9821, 0
      %v9866 = vand.u32 %v9854, %v3617
      %v9869 = vand.u32 %v9855, %v3617
      %v9872 = vand.u32 %v9856, %v3617
      %v9875 = vand.u32 %v9857, %v3617
      %v9878 = vand.u32 %v9858, %v3617
      %v9881 = vand.u32 %v9859, %v3617
      %v9884 = vand.u32 %v9860, %v3617
      %v9887 = vand.u32 %v9861, %v3617
      %9889 = vmatpush.bf16.msra.mxu0 0
      %9890 = vmatpush.bf16.msra.mxu0 0
      %9891 = vmatpush.bf16.msra.mxu0 0
      %9892 = vmatpush.bf16.msra.mxu0 0
      %9893 = vmatpush.bf16.msra.mxu0 0
      %9894 = vmatpush.bf16.msra.mxu0 0
      %9895 = vmatpush.bf16.msra.mxu0 0
      %9896 = vmatpush.bf16.msra.mxu0 %v9866
      %9897 = vmatmul.bf16.gmra.mxu0 %v9863
      %v9898 = vpop.f32.mrf.mxu0
      %v9899 = vadd.f32 0.0, %v9898
      %v9900 = vpop.f32.mrf.mxu0
      %9901 = vdwg.mxu0
      %9902 = vmatpush.bf16.msra.mxu0 0
      %9903 = vmatpush.bf16.msra.mxu0 0
      %9904 = vmatpush.bf16.msra.mxu0 0
      %9905 = vmatpush.bf16.msra.mxu0 0
      %9906 = vmatpush.bf16.msra.mxu0 0
      %9907 = vmatpush.bf16.msra.mxu0 0
      %9908 = vmatpush.bf16.msra.mxu0 0
      %9909 = vmatpush.bf16.msra.mxu0 %v9869
      %9910 = vmatmul.bf16.gmra.mxu0 %v9863
      %v9911 = vpop.f32.mrf.mxu0
      %v9912 = vadd.f32 0.0, %v9911
      %v9913 = vpop.f32.mrf.mxu0
      %9914 = vdwg.mxu0
      %9915 = vmatpush.bf16.msra.mxu0 0
      %9916 = vmatpush.bf16.msra.mxu0 0
      %9917 = vmatpush.bf16.msra.mxu0 0
      %9918 = vmatpush.bf16.msra.mxu0 0
      %9919 = vmatpush.bf16.msra.mxu0 0
      %9920 = vmatpush.bf16.msra.mxu0 0
      %9921 = vmatpush.bf16.msra.mxu0 0
      %9922 = vmatpush.bf16.msra.mxu0 %v9872
      %9923 = vmatmul.bf16.gmra.mxu0 %v9863
      %v9924 = vpop.f32.mrf.mxu0
      %v9925 = vadd.f32 0.0, %v9924
      %v9926 = vpop.f32.mrf.mxu0
      %9927 = vdwg.mxu0
      %9928 = vmatpush.bf16.msra.mxu0 0
      %9929 = vmatpush.bf16.msra.mxu0 0
      %9930 = vmatpush.bf16.msra.mxu0 0
      %9931 = vmatpush.bf16.msra.mxu0 0
      %9932 = vmatpush.bf16.msra.mxu0 0
      %9933 = vmatpush.bf16.msra.mxu0 0
      %9934 = vmatpush.bf16.msra.mxu0 0
      %9935 = vmatpush.bf16.msra.mxu0 %v9875
      %9936 = vmatmul.bf16.gmra.mxu0 %v9863
      %v9937 = vpop.f32.mrf.mxu0
      %v9938 = vadd.f32 0.0, %v9937
      %v9939 = vpop.f32.mrf.mxu0
      %9940 = vdwg.mxu0
      %9941 = vmatpush.bf16.msra.mxu0 0
      %9942 = vmatpush.bf16.msra.mxu0 0
      %9943 = vmatpush.bf16.msra.mxu0 0
      %9944 = vmatpush.bf16.msra.mxu0 0
      %9945 = vmatpush.bf16.msra.mxu0 0
      %9946 = vmatpush.bf16.msra.mxu0 0
      %9947 = vmatpush.bf16.msra.mxu0 0
      %9948 = vmatpush.bf16.msra.mxu0 %v9878
      %9949 = vmatmul.bf16.gmra.mxu0 %v9863
      %v9950 = vpop.f32.mrf.mxu0
      %v9951 = vadd.f32 0.0, %v9950
      %v9952 = vpop.f32.mrf.mxu0
      %9953 = vdwg.mxu0
      %9954 = vmatpush.bf16.msra.mxu0 0
      %9955 = vmatpush.bf16.msra.mxu0 0
      %9956 = vmatpush.bf16.msra.mxu0 0
      %9957 = vmatpush.bf16.msra.mxu0 0
      %9958 = vmatpush.bf16.msra.mxu0 0
      %9959 = vmatpush.bf16.msra.mxu0 0
      %9960 = vmatpush.bf16.msra.mxu0 0
      %9961 = vmatpush.bf16.msra.mxu0 %v9881
      %9962 = vmatmul.bf16.gmra.mxu0 %v9863
      %v9963 = vpop.f32.mrf.mxu0
      %v9964 = vadd.f32 0.0, %v9963
      %v9965 = vpop.f32.mrf.mxu0
      %9966 = vdwg.mxu0
      %9967 = vmatpush.bf16.msra.mxu0 0
      %9968 = vmatpush.bf16.msra.mxu0 0
      %9969 = vmatpush.bf16.msra.mxu0 0
      %9970 = vmatpush.bf16.msra.mxu0 0
      %9971 = vmatpush.bf16.msra.mxu0 0
      %9972 = vmatpush.bf16.msra.mxu0 0
      %9973 = vmatpush.bf16.msra.mxu0 0
      %9974 = vmatpush.bf16.msra.mxu0 %v9884
      %9975 = vmatmul.bf16.gmra.mxu0 %v9863
      %v9976 = vpop.f32.mrf.mxu0
      %v9977 = vadd.f32 0.0, %v9976
      %v9978 = vpop.f32.mrf.mxu0
      %9979 = vdwg.mxu0
      %9980 = vmatpush.bf16.msra.mxu0 0
      %9981 = vmatpush.bf16.msra.mxu0 0
      %9982 = vmatpush.bf16.msra.mxu0 0
      %9983 = vmatpush.bf16.msra.mxu0 0
      %9984 = vmatpush.bf16.msra.mxu0 0
      %9985 = vmatpush.bf16.msra.mxu0 0
      %9986 = vmatpush.bf16.msra.mxu0 0
      %9987 = vmatpush.bf16.msra.mxu0 %v9887
      %9988 = vmatmul.bf16.gmra.mxu0 %v9863
      %v9989 = vpop.f32.mrf.mxu0
      %v9990 = vadd.f32 0.0, %v9989
      %v9991 = vpop.f32.mrf.mxu0
      %9992 = vdwg.mxu0
      %v10001 = vrot.slane %v9912, 6
      %v10002 = vrot.slane %v9925, 4
      %v10003 = vrot.slane %v9938, 2
      %v10004 = vrot.slane %v9964, 6
      %v10005 = vrot.slane %v9977, 4
      %v10006 = vrot.slane %v9990, 2
      %vm10007 = vcmask 1041408
      %v10008 = vsel %vm10007, %v9899, %v10001
      %vm10009 = vcmask 1045508
      %v10010 = vsel %vm10009, %v10002, %v10003
      %v10011 = vsel %vm1724, %v10008, %v10010
      %v10012 = vsel %vm10007, %v9951, %v10004
      %v10013 = vsel %vm10009, %v10005, %v10006
      %v10014 = vsel %vm1724, %v10012, %v10013
      %10017 = vst [vmem:[%s302] sm:$0xff] %v10011
      %10018 = vst [vmem:[%s302 + $0x8] sm:$0xff] %v10014
      %p10019 = scmp.lt.s32.totalorder %s19, 1
      %s10020 = scalar_select %p10019, %s19, 1
      %s10021 = smul.addr %s10020, 8
      %s10022 = smul.addr %s10021, 2
      %s10023 = scalar_lea.vmem %s8, %s10022
      // Predicated region
      $region53: #{tms_net_forward.1} parent=51 // pred_check
        %p10024 = pneg %p210
      $region54: #{tms_net_forward.1} parent=51 // pred_check_branch
        %10026 = sbr.rel (%p10024) target = $region56
      $region55: #{tms_net_forward.1} parent=51 // pred_region
        _
      $region56: #{tms_net_forward.1} parent=51 // pred_fallthru
        _
    $region52: #{tms_net_forward.1} parent=5 // pred_fallthru
      _
    %p10027 = scmp.le.s32.totalorder 2, %s14
    // Predicated region
    $region57: #{tms_net_forward.1} parent=5 // pred_check
      %p10028 = pneg %p10027
    $region58: #{tms_net_forward.1} parent=5 // pred_check_branch
      %10030 = sbr.rel (%p10028) target = $region60
    $region59: #{tms_net_forward.1} parent=5 // pred_region
      %s10031 = ssub.s32 %s14, 2
      // Predicated region
      $region61: #{tms_net_forward.1} parent=59 // pred_check
        %p10032 = pneg %p216
      $region62: #{tms_net_forward.1} parent=59 // pred_check_branch
        %10034 = sbr.rel (%p10032) target = $region64
      $region63: #{tms_net_forward.1} parent=59 // pred_region
        %p10035 = scmp.lt.s32.totalorder %s20, 1
        %s10036 = scalar_select %p10035, %s20, 1
        %s10037 = smul.addr %s10036, 8
        %s10038 = smul.addr %s10037, 2
        %s10039 = scalar_lea.vmem %s8, %s10038
      $region64: #{tms_net_forward.1} parent=59 // pred_fallthru
        _
    $region60: #{tms_net_forward.1} parent=5 // pred_fallthru
      _
  $region6: #{tms_net_forward.1} parent=0 // loop_footer
    %s18 = sadd.s32 1, %s14
  $region7: #{tms_net_forward.1} parent=0 // loop_footer_branch
    %13 = sbr.rel target = $region3
  $region8: #{tms_net_forward.1} parent=0 // loop_exit
    _

</llo_original>
